<compile_context>
chip_gen: v7x
topology: tpu7x:2x2x1
jax: 0.10.0
libtpu: 0.0.40
codegen_flags: <defaults>
</compile_context>

<pallas_src>
import jax
import jax.numpy as jnp
from jax.experimental import pallas as pl
from jax.experimental.pallas import tpu as pltpu


_VMEM_LIMIT = 32 * 1024 * 1024  # conservative: keeps headroom on v7x's 64 MiB VMEM


# ----------------------------- Pallas kernels ------------------------------

def _conv1_pair_kernel(xp_ref, yp_ref, w_ref, b_ref, fx_ref, fy_ref, l1_ref):
    """3x3 stride-1 conv + bias + ReLU on an (x-image, y-image) pair.

    Inputs are mean-padded raw images (the ImageNet normalization is folded
    into w/b).  The nine taps are accumulated as small MXU matmuls directly
    from the VMEM block -- no im2col matrix ever touches HBM.  The epilogue
    also emits the per-image partial L1 sum over |f1(x) - f1(y)| so the
    features are never re-read from HBM for the loss.
    """
    ho, wo, cout = fx_ref.shape[1], fx_ref.shape[2], fx_ref.shape[3]
    cin = xp_ref.shape[3]
    wmat = w_ref[...]                      # (3, 3, cin, cout) f32, VMEM-resident
    bias = b_ref[...]                      # (1, cout) f32

    def features(src_ref):
        x = src_ref[0].astype(jnp.float32)            # (ho+2, wo+2, cin)
        acc = jnp.zeros((ho * wo, cout), jnp.float32)
        for ky in range(3):                           # static unroll: 9 taps
            for kx in range(3):
                tap = x[ky:ky + ho, kx:kx + wo, :].reshape(ho * wo, cin)
                acc = acc + jnp.dot(tap, wmat[ky, kx],
                                    preferred_element_type=jnp.float32)
        return jnp.maximum(acc + bias, 0.0)           # f32 epilogue (v5e-safe)

    ax = features(xp_ref)
    ay = features(yp_ref)
    fx_ref[0] = ax.reshape(ho, wo, cout).astype(fx_ref.dtype)
    fy_ref[0] = ay.reshape(ho, wo, cout).astype(fy_ref.dtype)
    # Per-image partial L1 sum, reduced over rows only so the output block's
    # trailing dims equal the full array dims (legal block, cheap store).
    l1_ref[0] = jnp.sum(jnp.abs(ax - ay), axis=0, keepdims=True)


def _conv2_pair_kernel(xee, xeo, xoe, xoo, yee, yeo, yoe, yoo,
                       w_ref, b_ref, l1_ref):
    """3x3 stride-2 conv + bias + ReLU, fused with the final L1 reduction.

    The stride-2 access pattern is expressed as contiguous slices of the four
    even/odd parity splits of the zero-padded f1 (split in the wrapper), so no
    strided loads / im2col are needed in-kernel.  f2 is only consumed by the
    loss, so it is never written to HBM -- only per-image L1 partials are.
    """
    hs, ws, c1 = xee.shape[1], xee.shape[2], xee.shape[3]
    ho, wo = hs - 1, ws - 1
    c2 = w_ref.shape[3]
    wmat = w_ref[...]                      # (3, 3, c1, c2) f32
    bias = b_ref[...]                      # (1, c2) f32

    def features(splits):
        loaded = tuple(tuple(s[0].astype(jnp.float32) for s in row)
                       for row in splits)
        acc = jnp.zeros((ho * wo, c2), jnp.float32)
        for ky in range(3):
            for kx in range(3):
                src = loaded[ky % 2][kx % 2]
                r0, c0 = ky // 2, kx // 2
                tap = src[r0:r0 + ho, c0:c0 + wo, :].reshape(ho * wo, c1)
                acc = acc + jnp.dot(tap, wmat[ky, kx],
                                    preferred_element_type=jnp.float32)
        return jnp.maximum(acc + bias, 0.0)

    fx = features(((xee, xeo), (xoe, xoo)))
    fy = features(((yee, yeo), (yoe, yoo)))
    l1_ref[0] = jnp.sum(jnp.abs(fx - fy), axis=0, keepdims=True)


# --------------------------- pallas_call wrappers ---------------------------

def conv1_pair(xp, yp, w, b):
    """conv1 on the (x, y) pair -> (f1x, f1y, per-image L1 partial sums)."""
    n, hp, wp, cin = xp.shape
    ho, wo = hp - 2, wp - 2
    cout = w.shape[-1]
    b2d = b.reshape(1, cout).astype(jnp.float32)

    img_spec = pl.BlockSpec((1, hp, wp, cin), lambda i: (i, 0, 0, 0))
    feat_spec = pl.BlockSpec((1, ho, wo, cout), lambda i: (i, 0, 0, 0))
    l1_spec = pl.BlockSpec((1, 1, cout), lambda i: (i, 0, 0))

    return pl.pallas_call(
        _conv1_pair_kernel,
        grid=(n,),
        in_specs=[img_spec, img_spec,
                  pl.BlockSpec(w.shape, lambda i: (0, 0, 0, 0)),
                  pl.BlockSpec((1, cout), lambda i: (0, 0))],
        out_specs=(feat_spec, feat_spec, l1_spec),
        out_shape=(jax.ShapeDtypeStruct((n, ho, wo, cout), jnp.bfloat16),
                   jax.ShapeDtypeStruct((n, ho, wo, cout), jnp.bfloat16),
                   jax.ShapeDtypeStruct((n, 1, cout), jnp.float32)),
        compiler_params=pltpu.CompilerParams(
            dimension_semantics=("parallel",),
            vmem_limit_bytes=_VMEM_LIMIT),
    )(xp, yp, w.astype(jnp.float32), b2d)


def conv2_pair(sx, sy, w, b):
    """Stride-2 conv2 on parity-split padded f1 -> per-image L1 partial sums."""
    n, hs, ws, c1 = sx[0].shape
    c2 = w.shape[-1]
    b2d = b.reshape(1, c2).astype(jnp.float32)

    split_spec = pl.BlockSpec((1, hs, ws, c1), lambda i: (i, 0, 0, 0))
    l1_spec = pl.BlockSpec((1, 1, c2), lambda i: (i, 0, 0))

    return pl.pallas_call(
        _conv2_pair_kernel,
        grid=(n,),
        in_specs=[split_spec] * 8
                 + [pl.BlockSpec(w.shape, lambda i: (0, 0, 0, 0)),
                    pl.BlockSpec((1, c2), lambda i: (0, 0))],
        out_specs=l1_spec,
        out_shape=jax.ShapeDtypeStruct((n, 1, c2), jnp.float32),
        compiler_params=pltpu.CompilerParams(
            dimension_semantics=("parallel",),
            vmem_limit_bytes=_VMEM_LIMIT),
    )(*sx, *sy, w.astype(jnp.float32), b2d)


# ------------------------------- forward pass -------------------------------

_IMAGENET_MEAN = (0.485, 0.456, 0.406)
_IMAGENET_STD = (0.229, 0.224, 0.225)


def perceptual_loss(x_nchw, y_nchw, params):
    # TODO(synk): the reference wraps an arbitrary external feature_extractor
    # (e.g. VGG); a small deterministic 2-stage conv extractor is synthesized
    # here so the forward pass is complete and reproducible.
    w1, b1, w2, b2 = params                       # HWIO weights, (Cout,) biases
    mean = jnp.array(_IMAGENET_MEAN, jnp.float32)
    std = jnp.array(_IMAGENET_STD, jnp.float32)

    # --- fold (x - mean) / std into conv1 (exact algebra) --------------------
    w1f = w1 / std[None, None, :, None]
    b1f = b1 - jnp.einsum('hwio,i->o', w1, mean / std)

    # NCHW -> NHWC (channels on lanes); activations travel as bf16 in HBM.
    x = jnp.transpose(x_nchw, (0, 2, 3, 1))
    y = jnp.transpose(y_nchw, (0, 2, 3, 1))
    n, h, w, c = x.shape
    assert h % 2 == 0 and w % 2 == 0, "even spatial dims expected (stride-2 conv)"
    act_dtype = jnp.bfloat16

    # Zero-padding of the *normalized* image == mean-valued padding of the raw
    # image once the normalization is folded into conv1 (exact at the border).
    def pad_with_mean(img):
        padded = jnp.broadcast_to(mean.astype(act_dtype), (n, h + 2, w + 2, c))
        return padded.at[:, 1:-1, 1:-1, :].set(img.astype(act_dtype))

    xp = pad_with_mean(x)
    yp = pad_with_mean(y)

    # Stage 1: conv1 (+ fused per-image L1 over f1).  torch.no_grad()/detach()
    # on the y branch only affects autograd; forward values are identical.
    f1x, f1y, l1_f1 = conv1_pair(xp, yp, w1f, b1f)

    # Stage 2: stride-2 conv2.  Parity-split the zero-padded f1 so the kernel's
    # nine taps are contiguous slices (no strided loads, no HBM im2col).
    def parity_splits(f):
        p = jnp.pad(f, ((0, 0), (1, 1), (1, 1), (0, 0)))
        return tuple(p[:, a::2, b::2, :] for a in (0, 1) for b in (0, 1))

    l1_f2 = conv2_pair(parity_splits(f1x), parity_splits(f1y), w2, b2)

    # nn.L1Loss(reduction='mean') per feature map, summed over feature maps.
    numel1 = n * h * w * w1.shape[-1]
    numel2 = n * (h // 2) * (w // 2) * w2.shape[-1]
    return jnp.sum(l1_f1) / numel1 + jnp.sum(l1_f2) / numel2


# --------------------------------- main -------------------------------------

if __name__ == "__main__":
    key = jax.random.PRNGKey(0)
    k_w1, k_b1, k_w2, k_b2, k_x, k_y = jax.random.split(key, 6)

    # Deterministic synthetic feature-extractor parameters (HWIO layout).
    w1 = jax.random.normal(k_w1, (3, 3, 3, 8), jnp.float32) * 0.1
    b1 = jax.random.normal(k_b1, (8,), jnp.float32) * 0.1
    w2 = jax.random.normal(k_w2, (3, 3, 8, 16), jnp.float32) * 0.1
    b2 = jax.random.normal(k_b2, (16,), jnp.float32) * 0.1
    params = (w1, b1, w2, b2)

    # Small inputs consistent with the module (3-channel images, NCHW).
    x = jax.random.uniform(k_x, (2, 3, 16, 16), jnp.float32)
    y = jax.random.uniform(k_y, (2, 3, 16, 16), jnp.float32)

    loss_fn = jax.jit(perceptual_loss)
    loss = loss_fn(x, y, params)
    jax.block_until_ready(loss)
    assert loss.shape == () and bool(jnp.isfinite(loss))
    print("KERNEL_OK")
</pallas_src>

<mosaic_0001>
module attributes {stable_mosaic.version = 11 : i64} {
  func.func @_conv1_pair_kernel(%arg0: i32, %arg1: memref<1x18x18x3xbf16, #tpu.memory_space<vmem>>, %arg2: memref<1x18x18x3xbf16, #tpu.memory_space<vmem>>, %arg3: memref<3x3x3x8xf32, #tpu.memory_space<vmem>>, %arg4: memref<1x8xf32, #tpu.memory_space<vmem>>, %arg5: memref<1x16x16x8xbf16, #tpu.memory_space<vmem>>, %arg6: memref<1x16x16x8xbf16, #tpu.memory_space<vmem>>, %arg7: memref<1x1x8xf32, #tpu.memory_space<vmem>>) attributes {dimension_semantics = [#tpu.dimension_semantics<parallel>], iteration_bounds = array<i64: 2>, scalar_prefetch = 0 : i64, scratch_operands = 0 : i64, tpu.core_type = #tpu.core_type<tc>, window_params = [{transform_indices = @transform_0, window_bounds = array<i64: 1, 18, 18, 3>}, {transform_indices = @transform_1, window_bounds = array<i64: 1, 18, 18, 3>}, {pipeline_mode = #tpu.pipeline_mode<synchronous>, transform_indices = @transform_2, window_bounds = array<i64: 3, 3, 3, 8>}, {pipeline_mode = #tpu.pipeline_mode<synchronous>, transform_indices = @transform_3, window_bounds = array<i64: 1, 8>}, {transform_indices = @transform_4, window_bounds = array<i64: 1, 16, 16, 8>}, {transform_indices = @transform_5, window_bounds = array<i64: 1, 16, 16, 8>}, {transform_indices = @transform_6, window_bounds = array<i64: 1, 1, 8>}]} {
    %c0 = arith.constant 0 : index
    %c0_0 = arith.constant 0 : index
    %c0_1 = arith.constant 0 : index
    %c0_2 = arith.constant 0 : index
    %0 = vector.load %arg3[%c0, %c0_0, %c0_1, %c0_2] : memref<3x3x3x8xf32, #tpu.memory_space<vmem>>, vector<3x3x3x8xf32>
    %c0_3 = arith.constant 0 : index
    %c0_4 = arith.constant 0 : index
    %1 = vector.load %arg4[%c0_3, %c0_4] : memref<1x8xf32, #tpu.memory_space<vmem>>, vector<1x8xf32>
    %c0_5 = arith.constant 0 : index
    %c0_6 = arith.constant 0 : index
    %c0_7 = arith.constant 0 : index
    %c0_8 = arith.constant 0 : index
    %2 = vector.load %arg1[%c0_5, %c0_6, %c0_7, %c0_8] : memref<1x18x18x3xbf16, #tpu.memory_space<vmem>>, vector<1x18x18x3xbf16>
    %3 = vector.shape_cast %2 : vector<1x18x18x3xbf16> to vector<18x18x3xbf16>
    %4 = arith.extf %3 : vector<18x18x3xbf16> to vector<18x18x3xf32>
    %cst = arith.constant 0.000000e+00 : f32
    %5 = vector.broadcast %cst : f32 to vector<256x8xf32>
    %6 = vector.extract_strided_slice %4 {offsets = [0, 0, 0], sizes = [16, 16, 3], strides = [1, 1, 1]} : vector<18x18x3xf32> to vector<16x16x3xf32>
    %7 = vector.shape_cast %6 : vector<16x16x3xf32> to vector<256x3xf32>
    %8 = vector.extract_strided_slice %0 {offsets = [0, 0, 0, 0], sizes = [1, 1, 3, 8], strides = [1, 1, 1, 1]} : vector<3x3x3x8xf32> to vector<1x1x3x8xf32>
    %9 = vector.shape_cast %8 : vector<1x1x3x8xf32> to vector<3x8xf32>
    %cst_9 = arith.constant dense<0.000000e+00> : vector<256x8xf32>
    %10 = tpu.matmul %7, %9, %cst_9 {dimension_numbers = #tpu.dot_dimension_numbers<[1], [0], [0], [1], [0, 0, 1, 1], [], []>} : vector<256x3xf32>, vector<3x8xf32>, vector<256x8xf32> -> vector<256x8xf32>
    %11 = arith.addf %5, %10 : vector<256x8xf32>
    %12 = vector.extract_strided_slice %4 {offsets = [0, 1, 0], sizes = [16, 16, 3], strides = [1, 1, 1]} : vector<18x18x3xf32> to vector<16x16x3xf32>
    %13 = vector.shape_cast %12 : vector<16x16x3xf32> to vector<256x3xf32>
    %14 = vector.extract_strided_slice %0 {offsets = [0, 1, 0, 0], sizes = [1, 1, 3, 8], strides = [1, 1, 1, 1]} : vector<3x3x3x8xf32> to vector<1x1x3x8xf32>
    %15 = vector.shape_cast %14 : vector<1x1x3x8xf32> to vector<3x8xf32>
    %cst_10 = arith.constant dense<0.000000e+00> : vector<256x8xf32>
    %16 = tpu.matmul %13, %15, %cst_10 {dimension_numbers = #tpu.dot_dimension_numbers<[1], [0], [0], [1], [0, 0, 1, 1], [], []>} : vector<256x3xf32>, vector<3x8xf32>, vector<256x8xf32> -> vector<256x8xf32>
    %17 = arith.addf %11, %16 : vector<256x8xf32>
    %18 = vector.extract_strided_slice %4 {offsets = [0, 2, 0], sizes = [16, 16, 3], strides = [1, 1, 1]} : vector<18x18x3xf32> to vector<16x16x3xf32>
    %19 = vector.shape_cast %18 : vector<16x16x3xf32> to vector<256x3xf32>
    %20 = vector.extract_strided_slice %0 {offsets = [0, 2, 0, 0], sizes = [1, 1, 3, 8], strides = [1, 1, 1, 1]} : vector<3x3x3x8xf32> to vector<1x1x3x8xf32>
    %21 = vector.shape_cast %20 : vector<1x1x3x8xf32> to vector<3x8xf32>
    %cst_11 = arith.constant dense<0.000000e+00> : vector<256x8xf32>
    %22 = tpu.matmul %19, %21, %cst_11 {dimension_numbers = #tpu.dot_dimension_numbers<[1], [0], [0], [1], [0, 0, 1, 1], [], []>} : vector<256x3xf32>, vector<3x8xf32>, vector<256x8xf32> -> vector<256x8xf32>
    %23 = arith.addf %17, %22 : vector<256x8xf32>
    %24 = vector.extract_strided_slice %4 {offsets = [1, 0, 0], sizes = [16, 16, 3], strides = [1, 1, 1]} : vector<18x18x3xf32> to vector<16x16x3xf32>
    %25 = vector.shape_cast %24 : vector<16x16x3xf32> to vector<256x3xf32>
    %26 = vector.extract_strided_slice %0 {offsets = [1, 0, 0, 0], sizes = [1, 1, 3, 8], strides = [1, 1, 1, 1]} : vector<3x3x3x8xf32> to vector<1x1x3x8xf32>
    %27 = vector.shape_cast %26 : vector<1x1x3x8xf32> to vector<3x8xf32>
    %cst_12 = arith.constant dense<0.000000e+00> : vector<256x8xf32>
    %28 = tpu.matmul %25, %27, %cst_12 {dimension_numbers = #tpu.dot_dimension_numbers<[1], [0], [0], [1], [0, 0, 1, 1], [], []>} : vector<256x3xf32>, vector<3x8xf32>, vector<256x8xf32> -> vector<256x8xf32>
    %29 = arith.addf %23, %28 : vector<256x8xf32>
    %30 = vector.extract_strided_slice %4 {offsets = [1, 1, 0], sizes = [16, 16, 3], strides = [1, 1, 1]} : vector<18x18x3xf32> to vector<16x16x3xf32>
    %31 = vector.shape_cast %30 : vector<16x16x3xf32> to vector<256x3xf32>
    %32 = vector.extract_strided_slice %0 {offsets = [1, 1, 0, 0], sizes = [1, 1, 3, 8], strides = [1, 1, 1, 1]} : vector<3x3x3x8xf32> to vector<1x1x3x8xf32>
    %33 = vector.shape_cast %32 : vector<1x1x3x8xf32> to vector<3x8xf32>
    %cst_13 = arith.constant dense<0.000000e+00> : vector<256x8xf32>
    %34 = tpu.matmul %31, %33, %cst_13 {dimension_numbers = #tpu.dot_dimension_numbers<[1], [0], [0], [1], [0, 0, 1, 1], [], []>} : vector<256x3xf32>, vector<3x8xf32>, vector<256x8xf32> -> vector<256x8xf32>
    %35 = arith.addf %29, %34 : vector<256x8xf32>
    %36 = vector.extract_strided_slice %4 {offsets = [1, 2, 0], sizes = [16, 16, 3], strides = [1, 1, 1]} : vector<18x18x3xf32> to vector<16x16x3xf32>
    %37 = vector.shape_cast %36 : vector<16x16x3xf32> to vector<256x3xf32>
    %38 = vector.extract_strided_slice %0 {offsets = [1, 2, 0, 0], sizes = [1, 1, 3, 8], strides = [1, 1, 1, 1]} : vector<3x3x3x8xf32> to vector<1x1x3x8xf32>
    %39 = vector.shape_cast %38 : vector<1x1x3x8xf32> to vector<3x8xf32>
    %cst_14 = arith.constant dense<0.000000e+00> : vector<256x8xf32>
    %40 = tpu.matmul %37, %39, %cst_14 {dimension_numbers = #tpu.dot_dimension_numbers<[1], [0], [0], [1], [0, 0, 1, 1], [], []>} : vector<256x3xf32>, vector<3x8xf32>, vector<256x8xf32> -> vector<256x8xf32>
    %41 = arith.addf %35, %40 : vector<256x8xf32>
    %42 = vector.extract_strided_slice %4 {offsets = [2, 0, 0], sizes = [16, 16, 3], strides = [1, 1, 1]} : vector<18x18x3xf32> to vector<16x16x3xf32>
    %43 = vector.shape_cast %42 : vector<16x16x3xf32> to vector<256x3xf32>
    %44 = vector.extract_strided_slice %0 {offsets = [2, 0, 0, 0], sizes = [1, 1, 3, 8], strides = [1, 1, 1, 1]} : vector<3x3x3x8xf32> to vector<1x1x3x8xf32>
    %45 = vector.shape_cast %44 : vector<1x1x3x8xf32> to vector<3x8xf32>
    %cst_15 = arith.constant dense<0.000000e+00> : vector<256x8xf32>
    %46 = tpu.matmul %43, %45, %cst_15 {dimension_numbers = #tpu.dot_dimension_numbers<[1], [0], [0], [1], [0, 0, 1, 1], [], []>} : vector<256x3xf32>, vector<3x8xf32>, vector<256x8xf32> -> vector<256x8xf32>
    %47 = arith.addf %41, %46 : vector<256x8xf32>
    %48 = vector.extract_strided_slice %4 {offsets = [2, 1, 0], sizes = [16, 16, 3], strides = [1, 1, 1]} : vector<18x18x3xf32> to vector<16x16x3xf32>
    %49 = vector.shape_cast %48 : vector<16x16x3xf32> to vector<256x3xf32>
    %50 = vector.extract_strided_slice %0 {offsets = [2, 1, 0, 0], sizes = [1, 1, 3, 8], strides = [1, 1, 1, 1]} : vector<3x3x3x8xf32> to vector<1x1x3x8xf32>
    %51 = vector.shape_cast %50 : vector<1x1x3x8xf32> to vector<3x8xf32>
    %cst_16 = arith.constant dense<0.000000e+00> : vector<256x8xf32>
    %52 = tpu.matmul %49, %51, %cst_16 {dimension_numbers = #tpu.dot_dimension_numbers<[1], [0], [0], [1], [0, 0, 1, 1], [], []>} : vector<256x3xf32>, vector<3x8xf32>, vector<256x8xf32> -> vector<256x8xf32>
    %53 = arith.addf %47, %52 : vector<256x8xf32>
    %54 = vector.extract_strided_slice %4 {offsets = [2, 2, 0], sizes = [16, 16, 3], strides = [1, 1, 1]} : vector<18x18x3xf32> to vector<16x16x3xf32>
    %55 = vector.shape_cast %54 : vector<16x16x3xf32> to vector<256x3xf32>
    %56 = vector.extract_strided_slice %0 {offsets = [2, 2, 0, 0], sizes = [1, 1, 3, 8], strides = [1, 1, 1, 1]} : vector<3x3x3x8xf32> to vector<1x1x3x8xf32>
    %57 = vector.shape_cast %56 : vector<1x1x3x8xf32> to vector<3x8xf32>
    %cst_17 = arith.constant dense<0.000000e+00> : vector<256x8xf32>
    %58 = tpu.matmul %55, %57, %cst_17 {dimension_numbers = #tpu.dot_dimension_numbers<[1], [0], [0], [1], [0, 0, 1, 1], [], []>} : vector<256x3xf32>, vector<3x8xf32>, vector<256x8xf32> -> vector<256x8xf32>
    %59 = arith.addf %53, %58 : vector<256x8xf32>
    %60 = vector.broadcast %1 : vector<1x8xf32> to vector<256x8xf32>
    %61 = arith.addf %59, %60 : vector<256x8xf32>
    %cst_18 = arith.constant 0.000000e+00 : f32
    %62 = vector.broadcast %cst_18 : f32 to vector<256x8xf32>
    %63 = arith.maximumf %61, %62 : vector<256x8xf32>
    %c0_19 = arith.constant 0 : index
    %c0_20 = arith.constant 0 : index
    %c0_21 = arith.constant 0 : index
    %c0_22 = arith.constant 0 : index
    %64 = vector.load %arg2[%c0_19, %c0_20, %c0_21, %c0_22] : memref<1x18x18x3xbf16, #tpu.memory_space<vmem>>, vector<1x18x18x3xbf16>
    %65 = vector.shape_cast %64 : vector<1x18x18x3xbf16> to vector<18x18x3xbf16>
    %66 = arith.extf %65 : vector<18x18x3xbf16> to vector<18x18x3xf32>
    %cst_23 = arith.constant 0.000000e+00 : f32
    %67 = vector.broadcast %cst_23 : f32 to vector<256x8xf32>
    %68 = vector.extract_strided_slice %66 {offsets = [0, 0, 0], sizes = [16, 16, 3], strides = [1, 1, 1]} : vector<18x18x3xf32> to vector<16x16x3xf32>
    %69 = vector.shape_cast %68 : vector<16x16x3xf32> to vector<256x3xf32>
    %70 = vector.extract_strided_slice %0 {offsets = [0, 0, 0, 0], sizes = [1, 1, 3, 8], strides = [1, 1, 1, 1]} : vector<3x3x3x8xf32> to vector<1x1x3x8xf32>
    %71 = vector.shape_cast %70 : vector<1x1x3x8xf32> to vector<3x8xf32>
    %cst_24 = arith.constant dense<0.000000e+00> : vector<256x8xf32>
    %72 = tpu.matmul %69, %71, %cst_24 {dimension_numbers = #tpu.dot_dimension_numbers<[1], [0], [0], [1], [0, 0, 1, 1], [], []>} : vector<256x3xf32>, vector<3x8xf32>, vector<256x8xf32> -> vector<256x8xf32>
    %73 = arith.addf %67, %72 : vector<256x8xf32>
    %74 = vector.extract_strided_slice %66 {offsets = [0, 1, 0], sizes = [16, 16, 3], strides = [1, 1, 1]} : vector<18x18x3xf32> to vector<16x16x3xf32>
    %75 = vector.shape_cast %74 : vector<16x16x3xf32> to vector<256x3xf32>
    %76 = vector.extract_strided_slice %0 {offsets = [0, 1, 0, 0], sizes = [1, 1, 3, 8], strides = [1, 1, 1, 1]} : vector<3x3x3x8xf32> to vector<1x1x3x8xf32>
    %77 = vector.shape_cast %76 : vector<1x1x3x8xf32> to vector<3x8xf32>
    %cst_25 = arith.constant dense<0.000000e+00> : vector<256x8xf32>
    %78 = tpu.matmul %75, %77, %cst_25 {dimension_numbers = #tpu.dot_dimension_numbers<[1], [0], [0], [1], [0, 0, 1, 1], [], []>} : vector<256x3xf32>, vector<3x8xf32>, vector<256x8xf32> -> vector<256x8xf32>
    %79 = arith.addf %73, %78 : vector<256x8xf32>
    %80 = vector.extract_strided_slice %66 {offsets = [0, 2, 0], sizes = [16, 16, 3], strides = [1, 1, 1]} : vector<18x18x3xf32> to vector<16x16x3xf32>
    %81 = vector.shape_cast %80 : vector<16x16x3xf32> to vector<256x3xf32>
    %82 = vector.extract_strided_slice %0 {offsets = [0, 2, 0, 0], sizes = [1, 1, 3, 8], strides = [1, 1, 1, 1]} : vector<3x3x3x8xf32> to vector<1x1x3x8xf32>
    %83 = vector.shape_cast %82 : vector<1x1x3x8xf32> to vector<3x8xf32>
    %cst_26 = arith.constant dense<0.000000e+00> : vector<256x8xf32>
    %84 = tpu.matmul %81, %83, %cst_26 {dimension_numbers = #tpu.dot_dimension_numbers<[1], [0], [0], [1], [0, 0, 1, 1], [], []>} : vector<256x3xf32>, vector<3x8xf32>, vector<256x8xf32> -> vector<256x8xf32>
    %85 = arith.addf %79, %84 : vector<256x8xf32>
    %86 = vector.extract_strided_slice %66 {offsets = [1, 0, 0], sizes = [16, 16, 3], strides = [1, 1, 1]} : vector<18x18x3xf32> to vector<16x16x3xf32>
    %87 = vector.shape_cast %86 : vector<16x16x3xf32> to vector<256x3xf32>
    %88 = vector.extract_strided_slice %0 {offsets = [1, 0, 0, 0], sizes = [1, 1, 3, 8], strides = [1, 1, 1, 1]} : vector<3x3x3x8xf32> to vector<1x1x3x8xf32>
    %89 = vector.shape_cast %88 : vector<1x1x3x8xf32> to vector<3x8xf32>
    %cst_27 = arith.constant dense<0.000000e+00> : vector<256x8xf32>
    %90 = tpu.matmul %87, %89, %cst_27 {dimension_numbers = #tpu.dot_dimension_numbers<[1], [0], [0], [1], [0, 0, 1, 1], [], []>} : vector<256x3xf32>, vector<3x8xf32>, vector<256x8xf32> -> vector<256x8xf32>
    %91 = arith.addf %85, %90 : vector<256x8xf32>
    %92 = vector.extract_strided_slice %66 {offsets = [1, 1, 0], sizes = [16, 16, 3], strides = [1, 1, 1]} : vector<18x18x3xf32> to vector<16x16x3xf32>
    %93 = vector.shape_cast %92 : vector<16x16x3xf32> to vector<256x3xf32>
    %94 = vector.extract_strided_slice %0 {offsets = [1, 1, 0, 0], sizes = [1, 1, 3, 8], strides = [1, 1, 1, 1]} : vector<3x3x3x8xf32> to vector<1x1x3x8xf32>
    %95 = vector.shape_cast %94 : vector<1x1x3x8xf32> to vector<3x8xf32>
    %cst_28 = arith.constant dense<0.000000e+00> : vector<256x8xf32>
    %96 = tpu.matmul %93, %95, %cst_28 {dimension_numbers = #tpu.dot_dimension_numbers<[1], [0], [0], [1], [0, 0, 1, 1], [], []>} : vector<256x3xf32>, vector<3x8xf32>, vector<256x8xf32> -> vector<256x8xf32>
    %97 = arith.addf %91, %96 : vector<256x8xf32>
    %98 = vector.extract_strided_slice %66 {offsets = [1, 2, 0], sizes = [16, 16, 3], strides = [1, 1, 1]} : vector<18x18x3xf32> to vector<16x16x3xf32>
    %99 = vector.shape_cast %98 : vector<16x16x3xf32> to vector<256x3xf32>
    %100 = vector.extract_strided_slice %0 {offsets = [1, 2, 0, 0], sizes = [1, 1, 3, 8], strides = [1, 1, 1, 1]} : vector<3x3x3x8xf32> to vector<1x1x3x8xf32>
    %101 = vector.shape_cast %100 : vector<1x1x3x8xf32> to vector<3x8xf32>
    %cst_29 = arith.constant dense<0.000000e+00> : vector<256x8xf32>
    %102 = tpu.matmul %99, %101, %cst_29 {dimension_numbers = #tpu.dot_dimension_numbers<[1], [0], [0], [1], [0, 0, 1, 1], [], []>} : vector<256x3xf32>, vector<3x8xf32>, vector<256x8xf32> -> vector<256x8xf32>
    %103 = arith.addf %97, %102 : vector<256x8xf32>
    %104 = vector.extract_strided_slice %66 {offsets = [2, 0, 0], sizes = [16, 16, 3], strides = [1, 1, 1]} : vector<18x18x3xf32> to vector<16x16x3xf32>
    %105 = vector.shape_cast %104 : vector<16x16x3xf32> to vector<256x3xf32>
    %106 = vector.extract_strided_slice %0 {offsets = [2, 0, 0, 0], sizes = [1, 1, 3, 8], strides = [1, 1, 1, 1]} : vector<3x3x3x8xf32> to vector<1x1x3x8xf32>
    %107 = vector.shape_cast %106 : vector<1x1x3x8xf32> to vector<3x8xf32>
    %cst_30 = arith.constant dense<0.000000e+00> : vector<256x8xf32>
    %108 = tpu.matmul %105, %107, %cst_30 {dimension_numbers = #tpu.dot_dimension_numbers<[1], [0], [0], [1], [0, 0, 1, 1], [], []>} : vector<256x3xf32>, vector<3x8xf32>, vector<256x8xf32> -> vector<256x8xf32>
    %109 = arith.addf %103, %108 : vector<256x8xf32>
    %110 = vector.extract_strided_slice %66 {offsets = [2, 1, 0], sizes = [16, 16, 3], strides = [1, 1, 1]} : vector<18x18x3xf32> to vector<16x16x3xf32>
    %111 = vector.shape_cast %110 : vector<16x16x3xf32> to vector<256x3xf32>
    %112 = vector.extract_strided_slice %0 {offsets = [2, 1, 0, 0], sizes = [1, 1, 3, 8], strides = [1, 1, 1, 1]} : vector<3x3x3x8xf32> to vector<1x1x3x8xf32>
    %113 = vector.shape_cast %112 : vector<1x1x3x8xf32> to vector<3x8xf32>
    %cst_31 = arith.constant dense<0.000000e+00> : vector<256x8xf32>
    %114 = tpu.matmul %111, %113, %cst_31 {dimension_numbers = #tpu.dot_dimension_numbers<[1], [0], [0], [1], [0, 0, 1, 1], [], []>} : vector<256x3xf32>, vector<3x8xf32>, vector<256x8xf32> -> vector<256x8xf32>
    %115 = arith.addf %109, %114 : vector<256x8xf32>
    %116 = vector.extract_strided_slice %66 {offsets = [2, 2, 0], sizes = [16, 16, 3], strides = [1, 1, 1]} : vector<18x18x3xf32> to vector<16x16x3xf32>
    %117 = vector.shape_cast %116 : vector<16x16x3xf32> to vector<256x3xf32>
    %118 = vector.extract_strided_slice %0 {offsets = [2, 2, 0, 0], sizes = [1, 1, 3, 8], strides = [1, 1, 1, 1]} : vector<3x3x3x8xf32> to vector<1x1x3x8xf32>
    %119 = vector.shape_cast %118 : vector<1x1x3x8xf32> to vector<3x8xf32>
    %cst_32 = arith.constant dense<0.000000e+00> : vector<256x8xf32>
    %120 = tpu.matmul %117, %119, %cst_32 {dimension_numbers = #tpu.dot_dimension_numbers<[1], [0], [0], [1], [0, 0, 1, 1], [], []>} : vector<256x3xf32>, vector<3x8xf32>, vector<256x8xf32> -> vector<256x8xf32>
    %121 = arith.addf %115, %120 : vector<256x8xf32>
    %122 = vector.broadcast %1 : vector<1x8xf32> to vector<256x8xf32>
    %123 = arith.addf %121, %122 : vector<256x8xf32>
    %cst_33 = arith.constant 0.000000e+00 : f32
    %124 = vector.broadcast %cst_33 : f32 to vector<256x8xf32>
    %125 = arith.maximumf %123, %124 : vector<256x8xf32>
    %126 = vector.shape_cast %63 : vector<256x8xf32> to vector<16x16x8xf32>
    %127 = arith.truncf %126 : vector<16x16x8xf32> to vector<16x16x8xbf16>
    %c0_34 = arith.constant 0 : index
    %c0_35 = arith.constant 0 : index
    %c0_36 = arith.constant 0 : index
    %c0_37 = arith.constant 0 : index
    %128 = vector.load %arg5[%c0_34, %c0_35, %c0_36, %c0_37] : memref<1x16x16x8xbf16, #tpu.memory_space<vmem>>, vector<1x16x16x8xbf16>
    %129 = vector.shape_cast %128 : vector<1x16x16x8xbf16> to vector<16x16x8xbf16>
    %130 = vector.shape_cast %127 : vector<16x16x8xbf16> to vector<1x16x16x8xbf16>
    tpu.vector_store %arg5[%c0_34, %c0_35, %c0_36, %c0_37], %130 {strides = array<i32>} : memref<1x16x16x8xbf16, #tpu.memory_space<vmem>>, vector<1x16x16x8xbf16>,
    %131 = vector.shape_cast %125 : vector<256x8xf32> to vector<16x16x8xf32>
    %132 = arith.truncf %131 : vector<16x16x8xf32> to vector<16x16x8xbf16>
    %c0_38 = arith.constant 0 : index
    %c0_39 = arith.constant 0 : index
    %c0_40 = arith.constant 0 : index
    %c0_41 = arith.constant 0 : index
    %133 = vector.load %arg6[%c0_38, %c0_39, %c0_40, %c0_41] : memref<1x16x16x8xbf16, #tpu.memory_space<vmem>>, vector<1x16x16x8xbf16>
    %134 = vector.shape_cast %133 : vector<1x16x16x8xbf16> to vector<16x16x8xbf16>
    %135 = vector.shape_cast %132 : vector<16x16x8xbf16> to vector<1x16x16x8xbf16>
    tpu.vector_store %arg6[%c0_38, %c0_39, %c0_40, %c0_41], %135 {strides = array<i32>} : memref<1x16x16x8xbf16, #tpu.memory_space<vmem>>, vector<1x16x16x8xbf16>,
    %136 = arith.subf %63, %125 : vector<256x8xf32>
    %137 = math.absf %136 : vector<256x8xf32>
    %cst_42 = arith.constant dense<0.000000e+00> : vector<8xf32>
    %138 = vector.multi_reduction <add>, %137, %cst_42 [0] : vector<256x8xf32> to vector<8xf32>
    %139 = vector.shape_cast %138 : vector<8xf32> to vector<1x8xf32>
    %c0_43 = arith.constant 0 : index
    %c0_44 = arith.constant 0 : index
    %c0_45 = arith.constant 0 : index
    %140 = vector.load %arg7[%c0_43, %c0_44, %c0_45] : memref<1x1x8xf32, #tpu.memory_space<vmem>>, vector<1x1x8xf32>
    %141 = vector.shape_cast %140 : vector<1x1x8xf32> to vector<1x8xf32>
    %142 = vector.shape_cast %139 : vector<1x8xf32> to vector<1x1x8xf32>
    tpu.vector_store %arg7[%c0_43, %c0_44, %c0_45], %142 {strides = array<i32>} : memref<1x1x8xf32, #tpu.memory_space<vmem>>, vector<1x1x8xf32>,
    return
  }
  func.func @transform_0(%arg0: i32) -> (i32, i32, i32, i32) {
    %c0_i32 = arith.constant 0 : i32
    %c0_i32_0 = arith.constant 0 : i32
    %c0_i32_1 = arith.constant 0 : i32
    %c0_i32_2 = arith.constant 0 : i32
    return %arg0, %c0_i32, %c0_i32_0, %c0_i32_1 : i32, i32, i32, i32
  }
  func.func @transform_1(%arg0: i32) -> (i32, i32, i32, i32) {
    %c0_i32 = arith.constant 0 : i32
    %c0_i32_0 = arith.constant 0 : i32
    %c0_i32_1 = arith.constant 0 : i32
    %c0_i32_2 = arith.constant 0 : i32
    return %arg0, %c0_i32, %c0_i32_0, %c0_i32_1 : i32, i32, i32, i32
  }
  func.func @transform_2(%arg0: i32) -> (i32, i32, i32, i32) {
    %c0_i32 = arith.constant 0 : i32
    %c0_i32_0 = arith.constant 0 : i32
    %c0_i32_1 = arith.constant 0 : i32
    %c0_i32_2 = arith.constant 0 : i32
    %c0_i32_3 = arith.constant 0 : i32
    return %c0_i32, %c0_i32_0, %c0_i32_1, %c0_i32_2 : i32, i32, i32, i32
  }
  func.func @transform_3(%arg0: i32) -> (i32, i32) {
    %c0_i32 = arith.constant 0 : i32
    %c0_i32_0 = arith.constant 0 : i32
    %c0_i32_1 = arith.constant 0 : i32
    return %c0_i32, %c0_i32_0 : i32, i32
  }
  func.func @transform_4(%arg0: i32) -> (i32, i32, i32, i32) {
    %c0_i32 = arith.constant 0 : i32
    %c0_i32_0 = arith.constant 0 : i32
    %c0_i32_1 = arith.constant 0 : i32
    %c0_i32_2 = arith.constant 0 : i32
    return %arg0, %c0_i32, %c0_i32_0, %c0_i32_1 : i32, i32, i32, i32
  }
  func.func @transform_5(%arg0: i32) -> (i32, i32, i32, i32) {
    %c0_i32 = arith.constant 0 : i32
    %c0_i32_0 = arith.constant 0 : i32
    %c0_i32_1 = arith.constant 0 : i32
    %c0_i32_2 = arith.constant 0 : i32
    return %arg0, %c0_i32, %c0_i32_0, %c0_i32_1 : i32, i32, i32, i32
  }
  func.func @transform_6(%arg0: i32) -> (i32, i32, i32) {
    %c0_i32 = arith.constant 0 : i32
    %c0_i32_0 = arith.constant 0 : i32
    %c0_i32_1 = arith.constant 0 : i32
    return %arg0, %c0_i32, %c0_i32_0 : i32, i32, i32
  }
}

module attributes {stable_mosaic.version = 11 : i64} {
  func.func @_conv2_pair_kernel(%arg0: i32, %arg1: memref<1x9x9x8xbf16, #tpu.memory_space<vmem>>, %arg2: memref<1x9x9x8xbf16, #tpu.memory_space<vmem>>, %arg3: memref<1x9x9x8xbf16, #tpu.memory_space<vmem>>, %arg4: memref<1x9x9x8xbf16, #tpu.memory_space<vmem>>, %arg5: memref<1x9x9x8xbf16, #tpu.memory_space<vmem>>, %arg6: memref<1x9x9x8xbf16, #tpu.memory_space<vmem>>, %arg7: memref<1x9x9x8xbf16, #tpu.memory_space<vmem>>, %arg8: memref<1x9x9x8xbf16, #tpu.memory_space<vmem>>, %arg9: memref<3x3x8x16xf32, #tpu.memory_space<vmem>>, %arg10: memref<1x16xf32, #tpu.memory_space<vmem>>, %arg11: memref<1x1x16xf32, #tpu.memory_space<vmem>>) attributes {dimension_semantics = [#tpu.dimension_semantics<parallel>], iteration_bounds = array<i64: 2>, scalar_prefetch = 0 : i64, scratch_operands = 0 : i64, tpu.core_type = #tpu.core_type<tc>, window_params = [{transform_indices = @transform_0, window_bounds = array<i64: 1, 9, 9, 8>}, {transform_indices = @transform_1, window_bounds = array<i64: 1, 9, 9, 8>}, {transform_indices = @transform_2, window_bounds = array<i64: 1, 9, 9, 8>}, {transform_indices = @transform_3, window_bounds = array<i64: 1, 9, 9, 8>}, {transform_indices = @transform_4, window_bounds = array<i64: 1, 9, 9, 8>}, {transform_indices = @transform_5, window_bounds = array<i64: 1, 9, 9, 8>}, {transform_indices = @transform_6, window_bounds = array<i64: 1, 9, 9, 8>}, {transform_indices = @transform_7, window_bounds = array<i64: 1, 9, 9, 8>}, {pipeline_mode = #tpu.pipeline_mode<synchronous>, transform_indices = @transform_8, window_bounds = array<i64: 3, 3, 8, 16>}, {pipeline_mode = #tpu.pipeline_mode<synchronous>, transform_indices = @transform_9, window_bounds = array<i64: 1, 16>}, {transform_indices = @transform_10, window_bounds = array<i64: 1, 1, 16>}]} {
    %c0 = arith.constant 0 : index
    %c0_0 = arith.constant 0 : index
    %c0_1 = arith.constant 0 : index
    %c0_2 = arith.constant 0 : index
    %0 = vector.load %arg9[%c0, %c0_0, %c0_1, %c0_2] : memref<3x3x8x16xf32, #tpu.memory_space<vmem>>, vector<3x3x8x16xf32>
    %c0_3 = arith.constant 0 : index
    %c0_4 = arith.constant 0 : index
    %1 = vector.load %arg10[%c0_3, %c0_4] : memref<1x16xf32, #tpu.memory_space<vmem>>, vector<1x16xf32>
    %c0_5 = arith.constant 0 : index
    %c0_6 = arith.constant 0 : index
    %c0_7 = arith.constant 0 : index
    %c0_8 = arith.constant 0 : index
    %2 = vector.load %arg1[%c0_5, %c0_6, %c0_7, %c0_8] : memref<1x9x9x8xbf16, #tpu.memory_space<vmem>>, vector<1x9x9x8xbf16>
    %3 = vector.shape_cast %2 : vector<1x9x9x8xbf16> to vector<9x9x8xbf16>
    %4 = arith.extf %3 : vector<9x9x8xbf16> to vector<9x9x8xf32>
    %c0_9 = arith.constant 0 : index
    %c0_10 = arith.constant 0 : index
    %c0_11 = arith.constant 0 : index
    %c0_12 = arith.constant 0 : index
    %5 = vector.load %arg2[%c0_9, %c0_10, %c0_11, %c0_12] : memref<1x9x9x8xbf16, #tpu.memory_space<vmem>>, vector<1x9x9x8xbf16>
    %6 = vector.shape_cast %5 : vector<1x9x9x8xbf16> to vector<9x9x8xbf16>
    %7 = arith.extf %6 : vector<9x9x8xbf16> to vector<9x9x8xf32>
    %c0_13 = arith.constant 0 : index
    %c0_14 = arith.constant 0 : index
    %c0_15 = arith.constant 0 : index
    %c0_16 = arith.constant 0 : index
    %8 = vector.load %arg3[%c0_13, %c0_14, %c0_15, %c0_16] : memref<1x9x9x8xbf16, #tpu.memory_space<vmem>>, vector<1x9x9x8xbf16>
    %9 = vector.shape_cast %8 : vector<1x9x9x8xbf16> to vector<9x9x8xbf16>
    %10 = arith.extf %9 : vector<9x9x8xbf16> to vector<9x9x8xf32>
    %c0_17 = arith.constant 0 : index
    %c0_18 = arith.constant 0 : index
    %c0_19 = arith.constant 0 : index
    %c0_20 = arith.constant 0 : index
    %11 = vector.load %arg4[%c0_17, %c0_18, %c0_19, %c0_20] : memref<1x9x9x8xbf16, #tpu.memory_space<vmem>>, vector<1x9x9x8xbf16>
    %12 = vector.shape_cast %11 : vector<1x9x9x8xbf16> to vector<9x9x8xbf16>
    %13 = arith.extf %12 : vector<9x9x8xbf16> to vector<9x9x8xf32>
    %cst = arith.constant 0.000000e+00 : f32
    %14 = vector.broadcast %cst : f32 to vector<64x16xf32>
    %15 = vector.extract_strided_slice %4 {offsets = [0, 0, 0], sizes = [8, 8, 8], strides = [1, 1, 1]} : vector<9x9x8xf32> to vector<8x8x8xf32>
    %16 = vector.shape_cast %15 : vector<8x8x8xf32> to vector<64x8xf32>
    %17 = vector.extract_strided_slice %0 {offsets = [0, 0, 0, 0], sizes = [1, 1, 8, 16], strides = [1, 1, 1, 1]} : vector<3x3x8x16xf32> to vector<1x1x8x16xf32>
    %18 = vector.shape_cast %17 : vector<1x1x8x16xf32> to vector<8x16xf32>
    %cst_21 = arith.constant dense<0.000000e+00> : vector<64x16xf32>
    %19 = tpu.matmul %16, %18, %cst_21 {dimension_numbers = #tpu.dot_dimension_numbers<[1], [0], [0], [1], [0, 0, 1, 1], [], []>} : vector<64x8xf32>, vector<8x16xf32>, vector<64x16xf32> -> vector<64x16xf32>
    %20 = arith.addf %14, %19 : vector<64x16xf32>
    %21 = vector.extract_strided_slice %7 {offsets = [0, 0, 0], sizes = [8, 8, 8], strides = [1, 1, 1]} : vector<9x9x8xf32> to vector<8x8x8xf32>
    %22 = vector.shape_cast %21 : vector<8x8x8xf32> to vector<64x8xf32>
    %23 = vector.extract_strided_slice %0 {offsets = [0, 1, 0, 0], sizes = [1, 1, 8, 16], strides = [1, 1, 1, 1]} : vector<3x3x8x16xf32> to vector<1x1x8x16xf32>
    %24 = vector.shape_cast %23 : vector<1x1x8x16xf32> to vector<8x16xf32>
    %cst_22 = arith.constant dense<0.000000e+00> : vector<64x16xf32>
    %25 = tpu.matmul %22, %24, %cst_22 {dimension_numbers = #tpu.dot_dimension_numbers<[1], [0], [0], [1], [0, 0, 1, 1], [], []>} : vector<64x8xf32>, vector<8x16xf32>, vector<64x16xf32> -> vector<64x16xf32>
    %26 = arith.addf %20, %25 : vector<64x16xf32>
    %27 = vector.extract_strided_slice %4 {offsets = [0, 1, 0], sizes = [8, 8, 8], strides = [1, 1, 1]} : vector<9x9x8xf32> to vector<8x8x8xf32>
    %28 = vector.shape_cast %27 : vector<8x8x8xf32> to vector<64x8xf32>
    %29 = vector.extract_strided_slice %0 {offsets = [0, 2, 0, 0], sizes = [1, 1, 8, 16], strides = [1, 1, 1, 1]} : vector<3x3x8x16xf32> to vector<1x1x8x16xf32>
    %30 = vector.shape_cast %29 : vector<1x1x8x16xf32> to vector<8x16xf32>
    %cst_23 = arith.constant dense<0.000000e+00> : vector<64x16xf32>
    %31 = tpu.matmul %28, %30, %cst_23 {dimension_numbers = #tpu.dot_dimension_numbers<[1], [0], [0], [1], [0, 0, 1, 1], [], []>} : vector<64x8xf32>, vector<8x16xf32>, vector<64x16xf32> -> vector<64x16xf32>
    %32 = arith.addf %26, %31 : vector<64x16xf32>
    %33 = vector.extract_strided_slice %10 {offsets = [0, 0, 0], sizes = [8, 8, 8], strides = [1, 1, 1]} : vector<9x9x8xf32> to vector<8x8x8xf32>
    %34 = vector.shape_cast %33 : vector<8x8x8xf32> to vector<64x8xf32>
    %35 = vector.extract_strided_slice %0 {offsets = [1, 0, 0, 0], sizes = [1, 1, 8, 16], strides = [1, 1, 1, 1]} : vector<3x3x8x16xf32> to vector<1x1x8x16xf32>
    %36 = vector.shape_cast %35 : vector<1x1x8x16xf32> to vector<8x16xf32>
    %cst_24 = arith.constant dense<0.000000e+00> : vector<64x16xf32>
    %37 = tpu.matmul %34, %36, %cst_24 {dimension_numbers = #tpu.dot_dimension_numbers<[1], [0], [0], [1], [0, 0, 1, 1], [], []>} : vector<64x8xf32>, vector<8x16xf32>, vector<64x16xf32> -> vector<64x16xf32>
    %38 = arith.addf %32, %37 : vector<64x16xf32>
    %39 = vector.extract_strided_slice %13 {offsets = [0, 0, 0], sizes = [8, 8, 8], strides = [1, 1, 1]} : vector<9x9x8xf32> to vector<8x8x8xf32>
    %40 = vector.shape_cast %39 : vector<8x8x8xf32> to vector<64x8xf32>
    %41 = vector.extract_strided_slice %0 {offsets = [1, 1, 0, 0], sizes = [1, 1, 8, 16], strides = [1, 1, 1, 1]} : vector<3x3x8x16xf32> to vector<1x1x8x16xf32>
    %42 = vector.shape_cast %41 : vector<1x1x8x16xf32> to vector<8x16xf32>
    %cst_25 = arith.constant dense<0.000000e+00> : vector<64x16xf32>
    %43 = tpu.matmul %40, %42, %cst_25 {dimension_numbers = #tpu.dot_dimension_numbers<[1], [0], [0], [1], [0, 0, 1, 1], [], []>} : vector<64x8xf32>, vector<8x16xf32>, vector<64x16xf32> -> vector<64x16xf32>
    %44 = arith.addf %38, %43 : vector<64x16xf32>
    %45 = vector.extract_strided_slice %10 {offsets = [0, 1, 0], sizes = [8, 8, 8], strides = [1, 1, 1]} : vector<9x9x8xf32> to vector<8x8x8xf32>
    %46 = vector.shape_cast %45 : vector<8x8x8xf32> to vector<64x8xf32>
    %47 = vector.extract_strided_slice %0 {offsets = [1, 2, 0, 0], sizes = [1, 1, 8, 16], strides = [1, 1, 1, 1]} : vector<3x3x8x16xf32> to vector<1x1x8x16xf32>
    %48 = vector.shape_cast %47 : vector<1x1x8x16xf32> to vector<8x16xf32>
    %cst_26 = arith.constant dense<0.000000e+00> : vector<64x16xf32>
    %49 = tpu.matmul %46, %48, %cst_26 {dimension_numbers = #tpu.dot_dimension_numbers<[1], [0], [0], [1], [0, 0, 1, 1], [], []>} : vector<64x8xf32>, vector<8x16xf32>, vector<64x16xf32> -> vector<64x16xf32>
    %50 = arith.addf %44, %49 : vector<64x16xf32>
    %51 = vector.extract_strided_slice %4 {offsets = [1, 0, 0], sizes = [8, 8, 8], strides = [1, 1, 1]} : vector<9x9x8xf32> to vector<8x8x8xf32>
    %52 = vector.shape_cast %51 : vector<8x8x8xf32> to vector<64x8xf32>
    %53 = vector.extract_strided_slice %0 {offsets = [2, 0, 0, 0], sizes = [1, 1, 8, 16], strides = [1, 1, 1, 1]} : vector<3x3x8x16xf32> to vector<1x1x8x16xf32>
    %54 = vector.shape_cast %53 : vector<1x1x8x16xf32> to vector<8x16xf32>
    %cst_27 = arith.constant dense<0.000000e+00> : vector<64x16xf32>
    %55 = tpu.matmul %52, %54, %cst_27 {dimension_numbers = #tpu.dot_dimension_numbers<[1], [0], [0], [1], [0, 0, 1, 1], [], []>} : vector<64x8xf32>, vector<8x16xf32>, vector<64x16xf32> -> vector<64x16xf32>
    %56 = arith.addf %50, %55 : vector<64x16xf32>
    %57 = vector.extract_strided_slice %7 {offsets = [1, 0, 0], sizes = [8, 8, 8], strides = [1, 1, 1]} : vector<9x9x8xf32> to vector<8x8x8xf32>
    %58 = vector.shape_cast %57 : vector<8x8x8xf32> to vector<64x8xf32>
    %59 = vector.extract_strided_slice %0 {offsets = [2, 1, 0, 0], sizes = [1, 1, 8, 16], strides = [1, 1, 1, 1]} : vector<3x3x8x16xf32> to vector<1x1x8x16xf32>
    %60 = vector.shape_cast %59 : vector<1x1x8x16xf32> to vector<8x16xf32>
    %cst_28 = arith.constant dense<0.000000e+00> : vector<64x16xf32>
    %61 = tpu.matmul %58, %60, %cst_28 {dimension_numbers = #tpu.dot_dimension_numbers<[1], [0], [0], [1], [0, 0, 1, 1], [], []>} : vector<64x8xf32>, vector<8x16xf32>, vector<64x16xf32> -> vector<64x16xf32>
    %62 = arith.addf %56, %61 : vector<64x16xf32>
    %63 = vector.extract_strided_slice %4 {offsets = [1, 1, 0], sizes = [8, 8, 8], strides = [1, 1, 1]} : vector<9x9x8xf32> to vector<8x8x8xf32>
    %64 = vector.shape_cast %63 : vector<8x8x8xf32> to vector<64x8xf32>
    %65 = vector.extract_strided_slice %0 {offsets = [2, 2, 0, 0], sizes = [1, 1, 8, 16], strides = [1, 1, 1, 1]} : vector<3x3x8x16xf32> to vector<1x1x8x16xf32>
    %66 = vector.shape_cast %65 : vector<1x1x8x16xf32> to vector<8x16xf32>
    %cst_29 = arith.constant dense<0.000000e+00> : vector<64x16xf32>
    %67 = tpu.matmul %64, %66, %cst_29 {dimension_numbers = #tpu.dot_dimension_numbers<[1], [0], [0], [1], [0, 0, 1, 1], [], []>} : vector<64x8xf32>, vector<8x16xf32>, vector<64x16xf32> -> vector<64x16xf32>
    %68 = arith.addf %62, %67 : vector<64x16xf32>
    %69 = vector.broadcast %1 : vector<1x16xf32> to vector<64x16xf32>
    %70 = arith.addf %68, %69 : vector<64x16xf32>
    %cst_30 = arith.constant 0.000000e+00 : f32
    %71 = vector.broadcast %cst_30 : f32 to vector<64x16xf32>
    %72 = arith.maximumf %70, %71 : vector<64x16xf32>
    %c0_31 = arith.constant 0 : index
    %c0_32 = arith.constant 0 : index
    %c0_33 = arith.constant 0 : index
    %c0_34 = arith.constant 0 : index
    %73 = vector.load %arg5[%c0_31, %c0_32, %c0_33, %c0_34] : memref<1x9x9x8xbf16, #tpu.memory_space<vmem>>, vector<1x9x9x8xbf16>
    %74 = vector.shape_cast %73 : vector<1x9x9x8xbf16> to vector<9x9x8xbf16>
    %75 = arith.extf %74 : vector<9x9x8xbf16> to vector<9x9x8xf32>
    %c0_35 = arith.constant 0 : index
    %c0_36 = arith.constant 0 : index
    %c0_37 = arith.constant 0 : index
    %c0_38 = arith.constant 0 : index
    %76 = vector.load %arg6[%c0_35, %c0_36, %c0_37, %c0_38] : memref<1x9x9x8xbf16, #tpu.memory_space<vmem>>, vector<1x9x9x8xbf16>
    %77 = vector.shape_cast %76 : vector<1x9x9x8xbf16> to vector<9x9x8xbf16>
    %78 = arith.extf %77 : vector<9x9x8xbf16> to vector<9x9x8xf32>
    %c0_39 = arith.constant 0 : index
    %c0_40 = arith.constant 0 : index
    %c0_41 = arith.constant 0 : index
    %c0_42 = arith.constant 0 : index
    %79 = vector.load %arg7[%c0_39, %c0_40, %c0_41, %c0_42] : memref<1x9x9x8xbf16, #tpu.memory_space<vmem>>, vector<1x9x9x8xbf16>
    %80 = vector.shape_cast %79 : vector<1x9x9x8xbf16> to vector<9x9x8xbf16>
    %81 = arith.extf %80 : vector<9x9x8xbf16> to vector<9x9x8xf32>
    %c0_43 = arith.constant 0 : index
    %c0_44 = arith.constant 0 : index
    %c0_45 = arith.constant 0 : index
    %c0_46 = arith.constant 0 : index
    %82 = vector.load %arg8[%c0_43, %c0_44, %c0_45, %c0_46] : memref<1x9x9x8xbf16, #tpu.memory_space<vmem>>, vector<1x9x9x8xbf16>
    %83 = vector.shape_cast %82 : vector<1x9x9x8xbf16> to vector<9x9x8xbf16>
    %84 = arith.extf %83 : vector<9x9x8xbf16> to vector<9x9x8xf32>
    %cst_47 = arith.constant 0.000000e+00 : f32
    %85 = vector.broadcast %cst_47 : f32 to vector<64x16xf32>
    %86 = vector.extract_strided_slice %75 {offsets = [0, 0, 0], sizes = [8, 8, 8], strides = [1, 1, 1]} : vector<9x9x8xf32> to vector<8x8x8xf32>
    %87 = vector.shape_cast %86 : vector<8x8x8xf32> to vector<64x8xf32>
    %88 = vector.extract_strided_slice %0 {offsets = [0, 0, 0, 0], sizes = [1, 1, 8, 16], strides = [1, 1, 1, 1]} : vector<3x3x8x16xf32> to vector<1x1x8x16xf32>
    %89 = vector.shape_cast %88 : vector<1x1x8x16xf32> to vector<8x16xf32>
    %cst_48 = arith.constant dense<0.000000e+00> : vector<64x16xf32>
    %90 = tpu.matmul %87, %89, %cst_48 {dimension_numbers = #tpu.dot_dimension_numbers<[1], [0], [0], [1], [0, 0, 1, 1], [], []>} : vector<64x8xf32>, vector<8x16xf32>, vector<64x16xf32> -> vector<64x16xf32>
    %91 = arith.addf %85, %90 : vector<64x16xf32>
    %92 = vector.extract_strided_slice %78 {offsets = [0, 0, 0], sizes = [8, 8, 8], strides = [1, 1, 1]} : vector<9x9x8xf32> to vector<8x8x8xf32>
    %93 = vector.shape_cast %92 : vector<8x8x8xf32> to vector<64x8xf32>
    %94 = vector.extract_strided_slice %0 {offsets = [0, 1, 0, 0], sizes = [1, 1, 8, 16], strides = [1, 1, 1, 1]} : vector<3x3x8x16xf32> to vector<1x1x8x16xf32>
    %95 = vector.shape_cast %94 : vector<1x1x8x16xf32> to vector<8x16xf32>
    %cst_49 = arith.constant dense<0.000000e+00> : vector<64x16xf32>
    %96 = tpu.matmul %93, %95, %cst_49 {dimension_numbers = #tpu.dot_dimension_numbers<[1], [0], [0], [1], [0, 0, 1, 1], [], []>} : vector<64x8xf32>, vector<8x16xf32>, vector<64x16xf32> -> vector<64x16xf32>
    %97 = arith.addf %91, %96 : vector<64x16xf32>
    %98 = vector.extract_strided_slice %75 {offsets = [0, 1, 0], sizes = [8, 8, 8], strides = [1, 1, 1]} : vector<9x9x8xf32> to vector<8x8x8xf32>
    %99 = vector.shape_cast %98 : vector<8x8x8xf32> to vector<64x8xf32>
    %100 = vector.extract_strided_slice %0 {offsets = [0, 2, 0, 0], sizes = [1, 1, 8, 16], strides = [1, 1, 1, 1]} : vector<3x3x8x16xf32> to vector<1x1x8x16xf32>
    %101 = vector.shape_cast %100 : vector<1x1x8x16xf32> to vector<8x16xf32>
    %cst_50 = arith.constant dense<0.000000e+00> : vector<64x16xf32>
    %102 = tpu.matmul %99, %101, %cst_50 {dimension_numbers = #tpu.dot_dimension_numbers<[1], [0], [0], [1], [0, 0, 1, 1], [], []>} : vector<64x8xf32>, vector<8x16xf32>, vector<64x16xf32> -> vector<64x16xf32>
    %103 = arith.addf %97, %102 : vector<64x16xf32>
    %104 = vector.extract_strided_slice %81 {offsets = [0, 0, 0], sizes = [8, 8, 8], strides = [1, 1, 1]} : vector<9x9x8xf32> to vector<8x8x8xf32>
    %105 = vector.shape_cast %104 : vector<8x8x8xf32> to vector<64x8xf32>
    %106 = vector.extract_strided_slice %0 {offsets = [1, 0, 0, 0], sizes = [1, 1, 8, 16], strides = [1, 1, 1, 1]} : vector<3x3x8x16xf32> to vector<1x1x8x16xf32>
    %107 = vector.shape_cast %106 : vector<1x1x8x16xf32> to vector<8x16xf32>
    %cst_51 = arith.constant dense<0.000000e+00> : vector<64x16xf32>
    %108 = tpu.matmul %105, %107, %cst_51 {dimension_numbers = #tpu.dot_dimension_numbers<[1], [0], [0], [1], [0, 0, 1, 1], [], []>} : vector<64x8xf32>, vector<8x16xf32>, vector<64x16xf32> -> vector<64x16xf32>
    %109 = arith.addf %103, %108 : vector<64x16xf32>
    %110 = vector.extract_strided_slice %84 {offsets = [0, 0, 0], sizes = [8, 8, 8], strides = [1, 1, 1]} : vector<9x9x8xf32> to vector<8x8x8xf32>
    %111 = vector.shape_cast %110 : vector<8x8x8xf32> to vector<64x8xf32>
    %112 = vector.extract_strided_slice %0 {offsets = [1, 1, 0, 0], sizes = [1, 1, 8, 16], strides = [1, 1, 1, 1]} : vector<3x3x8x16xf32> to vector<1x1x8x16xf32>
    %113 = vector.shape_cast %112 : vector<1x1x8x16xf32> to vector<8x16xf32>
    %cst_52 = arith.constant dense<0.000000e+00> : vector<64x16xf32>
    %114 = tpu.matmul %111, %113, %cst_52 {dimension_numbers = #tpu.dot_dimension_numbers<[1], [0], [0], [1], [0, 0, 1, 1], [], []>} : vector<64x8xf32>, vector<8x16xf32>, vector<64x16xf32> -> vector<64x16xf32>
    %115 = arith.addf %109, %114 : vector<64x16xf32>
    %116 = vector.extract_strided_slice %81 {offsets = [0, 1, 0], sizes = [8, 8, 8], strides = [1, 1, 1]} : vector<9x9x8xf32> to vector<8x8x8xf32>
    %117 = vector.shape_cast %116 : vector<8x8x8xf32> to vector<64x8xf32>
    %118 = vector.extract_strided_slice %0 {offsets = [1, 2, 0, 0], sizes = [1, 1, 8, 16], strides = [1, 1, 1, 1]} : vector<3x3x8x16xf32> to vector<1x1x8x16xf32>
    %119 = vector.shape_cast %118 : vector<1x1x8x16xf32> to vector<8x16xf32>
    %cst_53 = arith.constant dense<0.000000e+00> : vector<64x16xf32>
    %120 = tpu.matmul %117, %119, %cst_53 {dimension_numbers = #tpu.dot_dimension_numbers<[1], [0], [0], [1], [0, 0, 1, 1], [], []>} : vector<64x8xf32>, vector<8x16xf32>, vector<64x16xf32> -> vector<64x16xf32>
    %121 = arith.addf %115, %120 : vector<64x16xf32>
    %122 = vector.extract_strided_slice %75 {offsets = [1, 0, 0], sizes = [8, 8, 8], strides = [1, 1, 1]} : vector<9x9x8xf32> to vector<8x8x8xf32>
    %123 = vector.shape_cast %122 : vector<8x8x8xf32> to vector<64x8xf32>
    %124 = vector.extract_strided_slice %0 {offsets = [2, 0, 0, 0], sizes = [1, 1, 8, 16], strides = [1, 1, 1, 1]} : vector<3x3x8x16xf32> to vector<1x1x8x16xf32>
    %125 = vector.shape_cast %124 : vector<1x1x8x16xf32> to vector<8x16xf32>
    %cst_54 = arith.constant dense<0.000000e+00> : vector<64x16xf32>
    %126 = tpu.matmul %123, %125, %cst_54 {dimension_numbers = #tpu.dot_dimension_numbers<[1], [0], [0], [1], [0, 0, 1, 1], [], []>} : vector<64x8xf32>, vector<8x16xf32>, vector<64x16xf32> -> vector<64x16xf32>
    %127 = arith.addf %121, %126 : vector<64x16xf32>
    %128 = vector.extract_strided_slice %78 {offsets = [1, 0, 0], sizes = [8, 8, 8], strides = [1, 1, 1]} : vector<9x9x8xf32> to vector<8x8x8xf32>
    %129 = vector.shape_cast %128 : vector<8x8x8xf32> to vector<64x8xf32>
    %130 = vector.extract_strided_slice %0 {offsets = [2, 1, 0, 0], sizes = [1, 1, 8, 16], strides = [1, 1, 1, 1]} : vector<3x3x8x16xf32> to vector<1x1x8x16xf32>
    %131 = vector.shape_cast %130 : vector<1x1x8x16xf32> to vector<8x16xf32>
    %cst_55 = arith.constant dense<0.000000e+00> : vector<64x16xf32>
    %132 = tpu.matmul %129, %131, %cst_55 {dimension_numbers = #tpu.dot_dimension_numbers<[1], [0], [0], [1], [0, 0, 1, 1], [], []>} : vector<64x8xf32>, vector<8x16xf32>, vector<64x16xf32> -> vector<64x16xf32>
    %133 = arith.addf %127, %132 : vector<64x16xf32>
    %134 = vector.extract_strided_slice %75 {offsets = [1, 1, 0], sizes = [8, 8, 8], strides = [1, 1, 1]} : vector<9x9x8xf32> to vector<8x8x8xf32>
    %135 = vector.shape_cast %134 : vector<8x8x8xf32> to vector<64x8xf32>
    %136 = vector.extract_strided_slice %0 {offsets = [2, 2, 0, 0], sizes = [1, 1, 8, 16], strides = [1, 1, 1, 1]} : vector<3x3x8x16xf32> to vector<1x1x8x16xf32>
    %137 = vector.shape_cast %136 : vector<1x1x8x16xf32> to vector<8x16xf32>
    %cst_56 = arith.constant dense<0.000000e+00> : vector<64x16xf32>
    %138 = tpu.matmul %135, %137, %cst_56 {dimension_numbers = #tpu.dot_dimension_numbers<[1], [0], [0], [1], [0, 0, 1, 1], [], []>} : vector<64x8xf32>, vector<8x16xf32>, vector<64x16xf32> -> vector<64x16xf32>
    %139 = arith.addf %133, %138 : vector<64x16xf32>
    %140 = vector.broadcast %1 : vector<1x16xf32> to vector<64x16xf32>
    %141 = arith.addf %139, %140 : vector<64x16xf32>
    %cst_57 = arith.constant 0.000000e+00 : f32
    %142 = vector.broadcast %cst_57 : f32 to vector<64x16xf32>
    %143 = arith.maximumf %141, %142 : vector<64x16xf32>
    %144 = arith.subf %72, %143 : vector<64x16xf32>
    %145 = math.absf %144 : vector<64x16xf32>
    %cst_58 = arith.constant dense<0.000000e+00> : vector<16xf32>
    %146 = vector.multi_reduction <add>, %145, %cst_58 [0] : vector<64x16xf32> to vector<16xf32>
    %147 = vector.shape_cast %146 : vector<16xf32> to vector<1x16xf32>
    %c0_59 = arith.constant 0 : index
    %c0_60 = arith.constant 0 : index
    %c0_61 = arith.constant 0 : index
    %148 = vector.load %arg11[%c0_59, %c0_60, %c0_61] : memref<1x1x16xf32, #tpu.memory_space<vmem>>, vector<1x1x16xf32>
    %149 = vector.shape_cast %148 : vector<1x1x16xf32> to vector<1x16xf32>
    %150 = vector.shape_cast %147 : vector<1x16xf32> to vector<1x1x16xf32>
    tpu.vector_store %arg11[%c0_59, %c0_60, %c0_61], %150 {strides = array<i32>} : memref<1x1x16xf32, #tpu.memory_space<vmem>>, vector<1x1x16xf32>,
    return
  }
  func.func @transform_0(%arg0: i32) -> (i32, i32, i32, i32) {
    %c0_i32 = arith.constant 0 : i32
    %c0_i32_0 = arith.constant 0 : i32
    %c0_i32_1 = arith.constant 0 : i32
    %c0_i32_2 = arith.constant 0 : i32
    return %arg0, %c0_i32, %c0_i32_0, %c0_i32_1 : i32, i32, i32, i32
  }
  func.func @transform_1(%arg0: i32) -> (i32, i32, i32, i32) {
    %c0_i32 = arith.constant 0 : i32
    %c0_i32_0 = arith.constant 0 : i32
    %c0_i32_1 = arith.constant 0 : i32
    %c0_i32_2 = arith.constant 0 : i32
    return %arg0, %c0_i32, %c0_i32_0, %c0_i32_1 : i32, i32, i32, i32
  }
  func.func @transform_2(%arg0: i32) -> (i32, i32, i32, i32) {
    %c0_i32 = arith.constant 0 : i32
    %c0_i32_0 = arith.constant 0 : i32
    %c0_i32_1 = arith.constant 0 : i32
    %c0_i32_2 = arith.constant 0 : i32
    return %arg0, %c0_i32, %c0_i32_0, %c0_i32_1 : i32, i32, i32, i32
  }
  func.func @transform_3(%arg0: i32) -> (i32, i32, i32, i32) {
    %c0_i32 = arith.constant 0 : i32
    %c0_i32_0 = arith.constant 0 : i32
    %c0_i32_1 = arith.constant 0 : i32
    %c0_i32_2 = arith.constant 0 : i32
    return %arg0, %c0_i32, %c0_i32_0, %c0_i32_1 : i32, i32, i32, i32
  }
  func.func @transform_4(%arg0: i32) -> (i32, i32, i32, i32) {
    %c0_i32 = arith.constant 0 : i32
    %c0_i32_0 = arith.constant 0 : i32
    %c0_i32_1 = arith.constant 0 : i32
    %c0_i32_2 = arith.constant 0 : i32
    return %arg0, %c0_i32, %c0_i32_0, %c0_i32_1 : i32, i32, i32, i32
  }
  func.func @transform_5(%arg0: i32) -> (i32, i32, i32, i32) {
    %c0_i32 = arith.constant 0 : i32
    %c0_i32_0 = arith.constant 0 : i32
    %c0_i32_1 = arith.constant 0 : i32
    %c0_i32_2 = arith.constant 0 : i32
    return %arg0, %c0_i32, %c0_i32_0, %c0_i32_1 : i32, i32, i32, i32
  }
  func.func @transform_6(%arg0: i32) -> (i32, i32, i32, i32) {
    %c0_i32 = arith.constant 0 : i32
    %c0_i32_0 = arith.constant 0 : i32
    %c0_i32_1 = arith.constant 0 : i32
    %c0_i32_2 = arith.constant 0 : i32
    return %arg0, %c0_i32, %c0_i32_0, %c0_i32_1 : i32, i32, i32, i32
  }
  func.func @transform_7(%arg0: i32) -> (i32, i32, i32, i32) {
    %c0_i32 = arith.constant 0 : i32
    %c0_i32_0 = arith.constant 0 : i32
    %c0_i32_1 = arith.constant 0 : i32
    %c0_i32_2 = arith.constant 0 : i32
    return %arg0, %c0_i32, %c0_i32_0, %c0_i32_1 : i32, i32, i32, i32
  }
  func.func @transform_8(%arg0: i32) -> (i32, i32, i32, i32) {
    %c0_i32 = arith.constant 0 : i32
    %c0_i32_0 = arith.constant 0 : i32
    %c0_i32_1 = arith.constant 0 : i32
    %c0_i32_2 = arith.constant 0 : i32
    %c0_i32_3 = arith.constant 0 : i32
    return %c0_i32, %c0_i32_0, %c0_i32_1, %c0_i32_2 : i32, i32, i32, i32
  }
  func.func @transform_9(%arg0: i32) -> (i32, i32) {
    %c0_i32 = arith.constant 0 : i32
    %c0_i32_0 = arith.constant 0 : i32
    %c0_i32_1 = arith.constant 0 : i32
    return %c0_i32, %c0_i32_0 : i32, i32
  }
  func.func @transform_10(%arg0: i32) -> (i32, i32, i32) {
    %c0_i32 = arith.constant 0 : i32
    %c0_i32_0 = arith.constant 0 : i32
    %c0_i32_1 = arith.constant 0 : i32
    return %arg0, %c0_i32, %c0_i32_0 : i32, i32, i32
  }
}

</mosaic_0001>

<llo_original>
// kernel: perceptual_loss.3
$region0: #{perceptual_loss.3}
  #allocation0 [shape = 'u32[]', space=smem, size = 0x4, offset = 0x4, fixed_abs, tag = 'smem constant byte address 0x4 - core index']
  #allocation1 [shape = 'u32[144,128]{1,0:T(1,128)}', space=vmem, size = 0x12000, scoped, tag = 'internal scratch']
  %s0 = inlined_call_operand.vmem [shape: bf16[2,9,9,8], index: 0, kind: input, shape index: {}]
  %s1 = inlined_call_operand.vmem [shape: bf16[2,9,9,8], index: 1, kind: input, shape index: {}]
  %s2 = inlined_call_operand.vmem [shape: bf16[2,9,9,8], index: 2, kind: input, shape index: {}]
  %s3 = inlined_call_operand.vmem [shape: bf16[2,9,9,8], index: 3, kind: input, shape index: {}]
  %s4 = inlined_call_operand.vmem [shape: bf16[2,9,9,8], index: 4, kind: input, shape index: {}]
  %s5 = inlined_call_operand.vmem [shape: bf16[2,9,9,8], index: 5, kind: input, shape index: {}]
  %s6 = inlined_call_operand.vmem [shape: bf16[2,9,9,8], index: 6, kind: input, shape index: {}]
  %s7 = inlined_call_operand.vmem [shape: bf16[2,9,9,8], index: 7, kind: input, shape index: {}]
  %s8 = inlined_call_operand.vmem [shape: f32[3,3,8,16], index: 8, kind: input, shape index: {}]
  %s9 = inlined_call_operand.vmem [shape: f32[1,16], index: 9, kind: input, shape index: {}]
  %s10 = inlined_call_operand.vmem [shape: f32[2,1,16], index: 10, kind: output, shape index: {}]
  %s11 = sld [smem:[#allocation0]]
  $region73: #{perceptual_loss.3} parent=0
    _
  %s13 = ssub.s32 1, %s11
  %s14 = scalar_select 0, %s13, %s11
  loop: start=0, step=1, limit=4
  $region2: #{perceptual_loss.3} parent=0 // loop_pre_header
    _
  $region3: #{perceptual_loss.3} parent=0 // loop_header
    %s16 = sphi 0, %s20
    %p17 = scmp.ge.s32.totalorder %s16, 4
    %s26 = sphi 0, %s28
    %s29 = sphi 0, %s26
    %s30 = sphi 0, %s29
    %s46 = sphi 0, %s30
    %s52 = sphi 0, %s54
    %s55 = sphi 0, %s52
    %s56 = sphi 0, %s55
    %s72 = sphi 0, %s56
    %s78 = sphi 0, %s80
    %s81 = sphi 0, %s78
    %s82 = sphi 0, %s81
    %s98 = sphi 0, %s82
    %s104 = sphi 0, %s106
    %s107 = sphi 0, %s104
    %s108 = sphi 0, %s107
    %s124 = sphi 0, %s108
    %s130 = sphi 0, %s132
    %s133 = sphi 0, %s130
    %s134 = sphi 0, %s133
    %s150 = sphi 0, %s134
    %s156 = sphi 0, %s158
    %s159 = sphi 0, %s156
    %s160 = sphi 0, %s159
    %s176 = sphi 0, %s160
    %s182 = sphi 0, %s184
    %s185 = sphi 0, %s182
    %s186 = sphi 0, %s185
    %s202 = sphi 0, %s186
    %s208 = sphi 0, %s210
    %s211 = sphi 0, %s208
    %s212 = sphi 0, %s211
    %s228 = sphi 0, %s212
    %s232 = sphi 0, %s232
    %s234 = sphi 0, %s232
    %s235 = sphi 0, %s234
    %s249 = sphi 0, %s235
    %s253 = sphi 0, %s253
    %s255 = sphi 0, %s253
    %s256 = sphi 0, %s255
    %s270 = sphi 0, %s256
    %s276 = sphi 0, %s278
    %s279 = sphi 0, %s276
    %s280 = sphi 0, %s279
    %s296 = sphi 0, %s280
  $region4: #{perceptual_loss.3} parent=0 // loop_header_branch
    %19 = sbr.rel (%p17) target = $region8
  $region5: #{perceptual_loss.3} parent=0 // loop_body
    %s21 = ssub.s32 %s16, 1
    %s22 = ssub.s32 %s16, 2
    %s23 = sadd.s32 %s16, 1
    %s24 = ssub.s32 %s16, %s23
    %p25 = scmp.eq.s32.totalorder %s24, 0
    %s27 = sadd.s32 %s26, 1
    %s28 = scalar_select %p25, %s26, %s27
    %p31 = pneg %p25
    %p32 = scmp.eq.s32.totalorder %s16, 1
    %p33 = por %p31, %p32
    %p34 = scmp.ne.s32.totalorder %s26, %s29
    %p35 = scmp.eq.s32.totalorder %s16, 0
    %p36 = por %p34, %p35
    %p37 = scmp.ne.s32.totalorder %s26, %s29
    %p38 = scmp.eq.s32.totalorder %s21, 1
    %p39 = por %p37, %p38
    %p40 = scmp.ne.s32.totalorder %s29, %s30
    %p41 = scmp.eq.s32.totalorder %s21, 0
    %p42 = por %p40, %p41
    %p43 = scmp.ne.s32.totalorder %s29, %s30
    %p44 = scmp.eq.s32.totalorder %s22, 1
    %p45 = por %p43, %p44
    %p47 = scmp.ne.s32.totalorder %s30, %s46
    %p48 = scmp.eq.s32.totalorder %s22, 0
    %p49 = por %p47, %p48
    %s50 = ssub.s32 %s16, %s23
    %p51 = scmp.eq.s32.totalorder %s50, 0
    %s53 = sadd.s32 %s52, 1
    %s54 = scalar_select %p51, %s52, %s53
    %p57 = pneg %p51
    %p58 = scmp.eq.s32.totalorder %s16, 1
    %p59 = por %p57, %p58
    %p60 = scmp.ne.s32.totalorder %s52, %s55
    %p61 = scmp.eq.s32.totalorder %s16, 0
    %p62 = por %p60, %p61
    %p63 = scmp.ne.s32.totalorder %s52, %s55
    %p64 = scmp.eq.s32.totalorder %s21, 1
    %p65 = por %p63, %p64
    %p66 = scmp.ne.s32.totalorder %s55, %s56
    %p67 = scmp.eq.s32.totalorder %s21, 0
    %p68 = por %p66, %p67
    %p69 = scmp.ne.s32.totalorder %s55, %s56
    %p70 = scmp.eq.s32.totalorder %s22, 1
    %p71 = por %p69, %p70
    %p73 = scmp.ne.s32.totalorder %s56, %s72
    %p74 = scmp.eq.s32.totalorder %s22, 0
    %p75 = por %p73, %p74
    %s76 = ssub.s32 %s16, %s23
    %p77 = scmp.eq.s32.totalorder %s76, 0
    %s79 = sadd.s32 %s78, 1
    %s80 = scalar_select %p77, %s78, %s79
    %p83 = pneg %p77
    %p84 = scmp.eq.s32.totalorder %s16, 1
    %p85 = por %p83, %p84
    %p86 = scmp.ne.s32.totalorder %s78, %s81
    %p87 = scmp.eq.s32.totalorder %s16, 0
    %p88 = por %p86, %p87
    %p89 = scmp.ne.s32.totalorder %s78, %s81
    %p90 = scmp.eq.s32.totalorder %s21, 1
    %p91 = por %p89, %p90
    %p92 = scmp.ne.s32.totalorder %s81, %s82
    %p93 = scmp.eq.s32.totalorder %s21, 0
    %p94 = por %p92, %p93
    %p95 = scmp.ne.s32.totalorder %s81, %s82
    %p96 = scmp.eq.s32.totalorder %s22, 1
    %p97 = por %p95, %p96
    %p99 = scmp.ne.s32.totalorder %s82, %s98
    %p100 = scmp.eq.s32.totalorder %s22, 0
    %p101 = por %p99, %p100
    %s102 = ssub.s32 %s16, %s23
    %p103 = scmp.eq.s32.totalorder %s102, 0
    %s105 = sadd.s32 %s104, 1
    %s106 = scalar_select %p103, %s104, %s105
    %p109 = pneg %p103
    %p110 = scmp.eq.s32.totalorder %s16, 1
    %p111 = por %p109, %p110
    %p112 = scmp.ne.s32.totalorder %s104, %s107
    %p113 = scmp.eq.s32.totalorder %s16, 0
    %p114 = por %p112, %p113
    %p115 = scmp.ne.s32.totalorder %s104, %s107
    %p116 = scmp.eq.s32.totalorder %s21, 1
    %p117 = por %p115, %p116
    %p118 = scmp.ne.s32.totalorder %s107, %s108
    %p119 = scmp.eq.s32.totalorder %s21, 0
    %p120 = por %p118, %p119
    %p121 = scmp.ne.s32.totalorder %s107, %s108
    %p122 = scmp.eq.s32.totalorder %s22, 1
    %p123 = por %p121, %p122
    %p125 = scmp.ne.s32.totalorder %s108, %s124
    %p126 = scmp.eq.s32.totalorder %s22, 0
    %p127 = por %p125, %p126
    %s128 = ssub.s32 %s16, %s23
    %p129 = scmp.eq.s32.totalorder %s128, 0
    %s131 = sadd.s32 %s130, 1
    %s132 = scalar_select %p129, %s130, %s131
    %p135 = pneg %p129
    %p136 = scmp.eq.s32.totalorder %s16, 1
    %p137 = por %p135, %p136
    %p138 = scmp.ne.s32.totalorder %s130, %s133
    %p139 = scmp.eq.s32.totalorder %s16, 0
    %p140 = por %p138, %p139
    %p141 = scmp.ne.s32.totalorder %s130, %s133
    %p142 = scmp.eq.s32.totalorder %s21, 1
    %p143 = por %p141, %p142
    %p144 = scmp.ne.s32.totalorder %s133, %s134
    %p145 = scmp.eq.s32.totalorder %s21, 0
    %p146 = por %p144, %p145
    %p147 = scmp.ne.s32.totalorder %s133, %s134
    %p148 = scmp.eq.s32.totalorder %s22, 1
    %p149 = por %p147, %p148
    %p151 = scmp.ne.s32.totalorder %s134, %s150
    %p152 = scmp.eq.s32.totalorder %s22, 0
    %p153 = por %p151, %p152
    %s154 = ssub.s32 %s16, %s23
    %p155 = scmp.eq.s32.totalorder %s154, 0
    %s157 = sadd.s32 %s156, 1
    %s158 = scalar_select %p155, %s156, %s157
    %p161 = pneg %p155
    %p162 = scmp.eq.s32.totalorder %s16, 1
    %p163 = por %p161, %p162
    %p164 = scmp.ne.s32.totalorder %s156, %s159
    %p165 = scmp.eq.s32.totalorder %s16, 0
    %p166 = por %p164, %p165
    %p167 = scmp.ne.s32.totalorder %s156, %s159
    %p168 = scmp.eq.s32.totalorder %s21, 1
    %p169 = por %p167, %p168
    %p170 = scmp.ne.s32.totalorder %s159, %s160
    %p171 = scmp.eq.s32.totalorder %s21, 0
    %p172 = por %p170, %p171
    %p173 = scmp.ne.s32.totalorder %s159, %s160
    %p174 = scmp.eq.s32.totalorder %s22, 1
    %p175 = por %p173, %p174
    %p177 = scmp.ne.s32.totalorder %s160, %s176
    %p178 = scmp.eq.s32.totalorder %s22, 0
    %p179 = por %p177, %p178
    %s180 = ssub.s32 %s16, %s23
    %p181 = scmp.eq.s32.totalorder %s180, 0
    %s183 = sadd.s32 %s182, 1
    %s184 = scalar_select %p181, %s182, %s183
    %p187 = pneg %p181
    %p188 = scmp.eq.s32.totalorder %s16, 1
    %p189 = por %p187, %p188
    %p190 = scmp.ne.s32.totalorder %s182, %s185
    %p191 = scmp.eq.s32.totalorder %s16, 0
    %p192 = por %p190, %p191
    %p193 = scmp.ne.s32.totalorder %s182, %s185
    %p194 = scmp.eq.s32.totalorder %s21, 1
    %p195 = por %p193, %p194
    %p196 = scmp.ne.s32.totalorder %s185, %s186
    %p197 = scmp.eq.s32.totalorder %s21, 0
    %p198 = por %p196, %p197
    %p199 = scmp.ne.s32.totalorder %s185, %s186
    %p200 = scmp.eq.s32.totalorder %s22, 1
    %p201 = por %p199, %p200
    %p203 = scmp.ne.s32.totalorder %s186, %s202
    %p204 = scmp.eq.s32.totalorder %s22, 0
    %p205 = por %p203, %p204
    %s206 = ssub.s32 %s16, %s23
    %p207 = scmp.eq.s32.totalorder %s206, 0
    %s209 = sadd.s32 %s208, 1
    %s210 = scalar_select %p207, %s208, %s209
    %p213 = pneg %p207
    %p214 = scmp.eq.s32.totalorder %s16, 1
    %p215 = por %p213, %p214
    %p216 = scmp.ne.s32.totalorder %s208, %s211
    %p217 = scmp.eq.s32.totalorder %s16, 0
    %p218 = por %p216, %p217
    %p219 = scmp.ne.s32.totalorder %s208, %s211
    %p220 = scmp.eq.s32.totalorder %s21, 1
    %p221 = por %p219, %p220
    %p222 = scmp.ne.s32.totalorder %s211, %s212
    %p223 = scmp.eq.s32.totalorder %s21, 0
    %p224 = por %p222, %p223
    %p225 = scmp.ne.s32.totalorder %s211, %s212
    %p226 = scmp.eq.s32.totalorder %s22, 1
    %p227 = por %p225, %p226
    %p229 = scmp.ne.s32.totalorder %s212, %s228
    %p230 = scmp.eq.s32.totalorder %s22, 0
    %p231 = por %p229, %p230
    %s233 = sadd.s32 %s232, 1
    %p236 = scmp.eq.s32.totalorder %s16, 1
    %p237 = scmp.ne.s32.totalorder %s232, %s234
    %p238 = scmp.eq.s32.totalorder %s16, 0
    %p239 = por %p237, %p238
    %p240 = scmp.ne.s32.totalorder %s232, %s234
    %p241 = scmp.eq.s32.totalorder %s21, 1
    %p242 = por %p240, %p241
    %p243 = scmp.ne.s32.totalorder %s234, %s235
    %p244 = scmp.eq.s32.totalorder %s21, 0
    %p245 = por %p243, %p244
    %p246 = scmp.ne.s32.totalorder %s234, %s235
    %p247 = scmp.eq.s32.totalorder %s22, 1
    %p248 = por %p246, %p247
    %p250 = scmp.ne.s32.totalorder %s235, %s249
    %p251 = scmp.eq.s32.totalorder %s22, 0
    %p252 = por %p250, %p251
    %s254 = sadd.s32 %s253, 1
    %p257 = scmp.eq.s32.totalorder %s16, 1
    %p258 = scmp.ne.s32.totalorder %s253, %s255
    %p259 = scmp.eq.s32.totalorder %s16, 0
    %p260 = por %p258, %p259
    %p261 = scmp.ne.s32.totalorder %s253, %s255
    %p262 = scmp.eq.s32.totalorder %s21, 1
    %p263 = por %p261, %p262
    %p264 = scmp.ne.s32.totalorder %s255, %s256
    %p265 = scmp.eq.s32.totalorder %s21, 0
    %p266 = por %p264, %p265
    %p267 = scmp.ne.s32.totalorder %s255, %s256
    %p268 = scmp.eq.s32.totalorder %s22, 1
    %p269 = por %p267, %p268
    %p271 = scmp.ne.s32.totalorder %s256, %s270
    %p272 = scmp.eq.s32.totalorder %s22, 0
    %p273 = por %p271, %p272
    %s274 = ssub.s32 %s16, %s23
    %p275 = scmp.eq.s32.totalorder %s274, 0
    %s277 = sadd.s32 %s276, 1
    %s278 = scalar_select %p275, %s276, %s277
    %p281 = pneg %p275
    %p282 = scmp.eq.s32.totalorder %s16, 1
    %p283 = por %p281, %p282
    %p284 = scmp.ne.s32.totalorder %s276, %s279
    %p285 = scmp.eq.s32.totalorder %s16, 0
    %p286 = por %p284, %p285
    %p287 = scmp.ne.s32.totalorder %s276, %s279
    %p288 = scmp.eq.s32.totalorder %s21, 1
    %p289 = por %p287, %p288
    %p290 = scmp.ne.s32.totalorder %s279, %s280
    %p291 = scmp.eq.s32.totalorder %s21, 0
    %p292 = por %p290, %p291
    %p293 = scmp.ne.s32.totalorder %s279, %s280
    %p294 = scmp.eq.s32.totalorder %s22, 1
    %p295 = por %p293, %p294
    %p297 = scmp.ne.s32.totalorder %s280, %s296
    %p298 = scmp.eq.s32.totalorder %s22, 0
    %p299 = por %p297, %p298
    %p300 = scmp.le.s32.totalorder 1, %s16
    %p301 = scmp.lt.s32.totalorder %s16, 3
    %p302 = pnand %p300, %p301
    %p303 = pneg %p302
    // Predicated region
    $region9: #{perceptual_loss.3} parent=5 // pred_check
      _
    $region10: #{perceptual_loss.3} parent=5 // pred_check_branch
      %305 = sbr.rel (%p302) target = $region12
    $region11: #{perceptual_loss.3} parent=5 // pred_region
      %s306 = ssub.s32 %s16, 1
      // Predicated region
      $region13: #{perceptual_loss.3} parent=11 // pred_check
        %p307 = pneg %p245
      $region14: #{perceptual_loss.3} parent=11 // pred_check_branch
        %309 = sbr.rel (%p307) target = $region16
      $region15: #{perceptual_loss.3} parent=11 // pred_region
        _
      $region16: #{perceptual_loss.3} parent=11 // pred_fallthru
        _
      // Predicated region
      $region17: #{perceptual_loss.3} parent=11 // pred_check
        %p310 = pneg %p266
      $region18: #{perceptual_loss.3} parent=11 // pred_check_branch
        %312 = sbr.rel (%p310) target = $region20
      $region19: #{perceptual_loss.3} parent=11 // pred_region
        _
      $region20: #{perceptual_loss.3} parent=11 // pred_fallthru
        _
    $region12: #{perceptual_loss.3} parent=5 // pred_fallthru
      _
    %p313 = scmp.lt.s32.totalorder %s16, 2
    // Predicated region
    $region21: #{perceptual_loss.3} parent=5 // pred_check
      %p314 = pneg %p313
    $region22: #{perceptual_loss.3} parent=5 // pred_check_branch
      %316 = sbr.rel (%p314) target = $region24
    $region23: #{perceptual_loss.3} parent=5 // pred_region
      // Predicated region
      $region25: #{perceptual_loss.3} parent=23 // pred_check
        %p317 = pneg %p36
      $region26: #{perceptual_loss.3} parent=23 // pred_check_branch
        %319 = sbr.rel (%p317) target = $region28
      $region27: #{perceptual_loss.3} parent=23 // pred_region
        %p320 = scmp.lt.s32.totalorder %s16, 1
        %s321 = scalar_select %p320, %s16, 1
        %s322 = smul.addr %s321, 18
        %s323 = smul.addr %s322, 4
        %s324 = scalar_lea.vmem %s0, %s323
      $region28: #{perceptual_loss.3} parent=23 // pred_fallthru
        _
      // Predicated region
      $region29: #{perceptual_loss.3} parent=23 // pred_check
        %p325 = pneg %p62
      $region30: #{perceptual_loss.3} parent=23 // pred_check_branch
        %327 = sbr.rel (%p325) target = $region32
      $region31: #{perceptual_loss.3} parent=23 // pred_region
        %p328 = scmp.lt.s32.totalorder %s16, 1
        %s329 = scalar_select %p328, %s16, 1
        %s330 = smul.addr %s329, 18
        %s331 = smul.addr %s330, 4
        %s332 = scalar_lea.vmem %s1, %s331
      $region32: #{perceptual_loss.3} parent=23 // pred_fallthru
        _
      // Predicated region
      $region33: #{perceptual_loss.3} parent=23 // pred_check
        %p333 = pneg %p88
      $region34: #{perceptual_loss.3} parent=23 // pred_check_branch
        %335 = sbr.rel (%p333) target = $region36
      $region35: #{perceptual_loss.3} parent=23 // pred_region
        %p336 = scmp.lt.s32.totalorder %s16, 1
        %s337 = scalar_select %p336, %s16, 1
        %s338 = smul.addr %s337, 18
        %s339 = smul.addr %s338, 4
        %s340 = scalar_lea.vmem %s2, %s339
      $region36: #{perceptual_loss.3} parent=23 // pred_fallthru
        _
      // Predicated region
      $region37: #{perceptual_loss.3} parent=23 // pred_check
        %p341 = pneg %p114
      $region38: #{perceptual_loss.3} parent=23 // pred_check_branch
        %343 = sbr.rel (%p341) target = $region40
      $region39: #{perceptual_loss.3} parent=23 // pred_region
        %p344 = scmp.lt.s32.totalorder %s16, 1
        %s345 = scalar_select %p344, %s16, 1
        %s346 = smul.addr %s345, 18
        %s347 = smul.addr %s346, 4
        %s348 = scalar_lea.vmem %s3, %s347
      $region40: #{perceptual_loss.3} parent=23 // pred_fallthru
        _
      // Predicated region
      $region41: #{perceptual_loss.3} parent=23 // pred_check
        %p349 = pneg %p140
      $region42: #{perceptual_loss.3} parent=23 // pred_check_branch
        %351 = sbr.rel (%p349) target = $region44
      $region43: #{perceptual_loss.3} parent=23 // pred_region
        %p352 = scmp.lt.s32.totalorder %s16, 1
        %s353 = scalar_select %p352, %s16, 1
        %s354 = smul.addr %s353, 18
        %s355 = smul.addr %s354, 4
        %s356 = scalar_lea.vmem %s4, %s355
      $region44: #{perceptual_loss.3} parent=23 // pred_fallthru
        _
      // Predicated region
      $region45: #{perceptual_loss.3} parent=23 // pred_check
        %p357 = pneg %p166
      $region46: #{perceptual_loss.3} parent=23 // pred_check_branch
        %359 = sbr.rel (%p357) target = $region48
      $region47: #{perceptual_loss.3} parent=23 // pred_region
        %p360 = scmp.lt.s32.totalorder %s16, 1
        %s361 = scalar_select %p360, %s16, 1
        %s362 = smul.addr %s361, 18
        %s363 = smul.addr %s362, 4
        %s364 = scalar_lea.vmem %s5, %s363
      $region48: #{perceptual_loss.3} parent=23 // pred_fallthru
        _
      // Predicated region
      $region49: #{perceptual_loss.3} parent=23 // pred_check
        %p365 = pneg %p192
      $region50: #{perceptual_loss.3} parent=23 // pred_check_branch
        %367 = sbr.rel (%p365) target = $region52
      $region51: #{perceptual_loss.3} parent=23 // pred_region
        %p368 = scmp.lt.s32.totalorder %s16, 1
        %s369 = scalar_select %p368, %s16, 1
        %s370 = smul.addr %s369, 18
        %s371 = smul.addr %s370, 4
        %s372 = scalar_lea.vmem %s6, %s371
      $region52: #{perceptual_loss.3} parent=23 // pred_fallthru
        _
      // Predicated region
      $region53: #{perceptual_loss.3} parent=23 // pred_check
        %p373 = pneg %p218
      $region54: #{perceptual_loss.3} parent=23 // pred_check_branch
        %375 = sbr.rel (%p373) target = $region56
      $region55: #{perceptual_loss.3} parent=23 // pred_region
        %p376 = scmp.lt.s32.totalorder %s16, 1
        %s377 = scalar_select %p376, %s16, 1
        %s378 = smul.addr %s377, 18
        %s379 = smul.addr %s378, 4
        %s380 = scalar_lea.vmem %s7, %s379
      $region56: #{perceptual_loss.3} parent=23 // pred_fallthru
        _
    $region24: #{perceptual_loss.3} parent=5 // pred_fallthru
      _
    %p381 = scmp.le.s32.totalorder 1, %s16
    %p382 = scmp.lt.s32.totalorder %s16, 3
    %p383 = pnand %p381, %p382
    %p384 = pneg %p383
    // Predicated region
    $region57: #{perceptual_loss.3} parent=5 // pred_check
      _
    $region58: #{perceptual_loss.3} parent=5 // pred_check_branch
      %386 = sbr.rel (%p383) target = $region60
    $region59: #{perceptual_loss.3} parent=5 // pred_region
      %s387 = ssub.s32 %s16, 1
      %p388 = scmp.lt.s32.totalorder %s21, 1
      %s389 = scalar_select %p388, %s21, 1
      %s390 = smul.addr %s389, 18
      %s391 = smul.addr %s390, 4
      %s392 = scalar_lea.vmem %s0, %s391
      %p393 = pneg %p42
      %p394 = pneg %p39
      %p395 = scmp.lt.s32.totalorder %s21, 1
      %s396 = scalar_select %p395, %s21, 1
      %s397 = smul.addr %s396, 18
      %s398 = smul.addr %s397, 4
      %s399 = scalar_lea.vmem %s1, %s398
      %p400 = pneg %p68
      %p401 = pneg %p65
      %p402 = scmp.lt.s32.totalorder %s21, 1
      %s403 = scalar_select %p402, %s21, 1
      %s404 = smul.addr %s403, 18
      %s405 = smul.addr %s404, 4
      %s406 = scalar_lea.vmem %s2, %s405
      %p407 = pneg %p94
      %p408 = pneg %p91
      %p409 = scmp.lt.s32.totalorder %s21, 1
      %s410 = scalar_select %p409, %s21, 1
      %s411 = smul.addr %s410, 18
      %s412 = smul.addr %s411, 4
      %s413 = scalar_lea.vmem %s3, %s412
      %p414 = pneg %p120
      %p415 = pneg %p117
      %p416 = scmp.lt.s32.totalorder %s21, 1
      %s417 = scalar_select %p416, %s21, 1
      %s418 = smul.addr %s417, 18
      %s419 = smul.addr %s418, 4
      %s420 = scalar_lea.vmem %s4, %s419
      %p421 = pneg %p146
      %p422 = pneg %p143
      %p423 = scmp.lt.s32.totalorder %s21, 1
      %s424 = scalar_select %p423, %s21, 1
      %s425 = smul.addr %s424, 18
      %s426 = smul.addr %s425, 4
      %s427 = scalar_lea.vmem %s5, %s426
      %p428 = pneg %p172
      %p429 = pneg %p169
      %p430 = scmp.lt.s32.totalorder %s21, 1
      %s431 = scalar_select %p430, %s21, 1
      %s432 = smul.addr %s431, 18
      %s433 = smul.addr %s432, 4
      %s434 = scalar_lea.vmem %s6, %s433
      %p435 = pneg %p198
      %p436 = pneg %p195
      %p437 = scmp.lt.s32.totalorder %s21, 1
      %s438 = scalar_select %p437, %s21, 1
      %s439 = smul.addr %s438, 18
      %s440 = smul.addr %s439, 4
      %s441 = scalar_lea.vmem %s7, %s440
      %p442 = pneg %p224
      %p443 = pneg %p221
      %p444 = pneg %p245
      %p445 = pneg %p242
      %p446 = pneg %p266
      %p447 = pneg %p263
      %p448 = pneg %p292
      %p449 = pneg %p289
      %p450 = scmp.lt.s32.totalorder %s21, 1
      %s451 = scalar_select %p450, %s21, 1
      %s452 = scalar_lea.vmem %s10, %s451
      %p453 = scmp.lt.s32.totalorder %s21, 1
      %s454 = scalar_select %p453, %s21, 1
      %s455 = smul.addr %s454, 18
      %s456 = smul.addr %s455, 4
      %s457 = scalar_lea.vmem %s0, %s456
      %p458 = scmp.lt.s32.totalorder %s21, 1
      %s459 = scalar_select %p458, %s21, 1
      %s460 = smul.addr %s459, 18
      %s461 = smul.addr %s460, 4
      %s462 = scalar_lea.vmem %s1, %s461
      %p463 = scmp.lt.s32.totalorder %s21, 1
      %s464 = scalar_select %p463, %s21, 1
      %s465 = smul.addr %s464, 18
      %s466 = smul.addr %s465, 4
      %s467 = scalar_lea.vmem %s2, %s466
      %p468 = scmp.lt.s32.totalorder %s21, 1
      %s469 = scalar_select %p468, %s21, 1
      %s470 = smul.addr %s469, 18
      %s471 = smul.addr %s470, 4
      %s472 = scalar_lea.vmem %s3, %s471
      %p473 = scmp.lt.s32.totalorder %s21, 1
      %s474 = scalar_select %p473, %s21, 1
      %s475 = smul.addr %s474, 18
      %s476 = smul.addr %s475, 4
      %s477 = scalar_lea.vmem %s4, %s476
      %p478 = scmp.lt.s32.totalorder %s21, 1
      %s479 = scalar_select %p478, %s21, 1
      %s480 = smul.addr %s479, 18
      %s481 = smul.addr %s480, 4
      %s482 = scalar_lea.vmem %s5, %s481
      %p483 = scmp.lt.s32.totalorder %s21, 1
      %s484 = scalar_select %p483, %s21, 1
      %s485 = smul.addr %s484, 18
      %s486 = smul.addr %s485, 4
      %s487 = scalar_lea.vmem %s6, %s486
      %p488 = scmp.lt.s32.totalorder %s21, 1
      %s489 = scalar_select %p488, %s21, 1
      %s490 = smul.addr %s489, 18
      %s491 = smul.addr %s490, 4
      %s492 = scalar_lea.vmem %s7, %s491
      %p493 = scmp.lt.s32.totalorder %s21, 1
      %s494 = scalar_select %p493, %s21, 1
      %s495 = scalar_lea.vmem %s10, %s494
      %v496 = vld [vmem:[%s8] sm:$0xff]
      %v497 = vld [vmem:[%s8 + $0x8] sm:$0xff]
      %v498 = vld [vmem:[%s8 + $0x10] sm:$0xff]
      %v499 = vld [vmem:[%s8 + $0x18] sm:$0xff]
      %v500 = vld [vmem:[%s8 + $0x20] sm:$0xff]
      %v501 = vld [vmem:[%s8 + $0x28] sm:$0xff]
      %v502 = vld [vmem:[%s8 + $0x30] sm:$0xff]
      %v503 = vld [vmem:[%s8 + $0x38] sm:$0xff]
      %v504 = vld [vmem:[%s8 + $0x40] sm:$0xff]
      %v505 = vld [vmem:[%s9] sm:$0x1]
      %v506 = vld [vmem:[%s457] sm:$0xf]
      %v507 = vld [vmem:[%s457 + $0x4] sm:$0x1]
      %v508 = vld [vmem:[%s457 + $0x8] sm:$0xf]
      %v509 = vld [vmem:[%s457 + $0xc] sm:$0x1]
      %v510 = vld [vmem:[%s457 + $0x10] sm:$0xf]
      %v511 = vld [vmem:[%s457 + $0x14] sm:$0x1]
      %v512 = vld [vmem:[%s457 + $0x18] sm:$0xf]
      %v513 = vld [vmem:[%s457 + $0x1c] sm:$0x1]
      %v514 = vld [vmem:[%s457 + $0x20] sm:$0xf]
      %v515 = vld [vmem:[%s457 + $0x24] sm:$0x1]
      %v516 = vld [vmem:[%s457 + $0x28] sm:$0xf]
      %v517 = vld [vmem:[%s457 + $0x2c] sm:$0x1]
      %v518 = vld [vmem:[%s457 + $0x30] sm:$0xf]
      %v519 = vld [vmem:[%s457 + $0x34] sm:$0x1]
      %v520 = vld [vmem:[%s457 + $0x38] sm:$0xf]
      %v521 = vld [vmem:[%s457 + $0x3c] sm:$0x1]
      %v522 = vld [vmem:[%s457 + $0x40] sm:$0xf]
      %v523 = vld [vmem:[%s457 + $0x44] sm:$0x1]
      %v524 = vunpack.c.l.bf16 %v506
      %v525 = vunpack.c.l.bf16 %v507
      %v526 = vunpack.c.l.bf16 %v508
      %v527 = vunpack.c.l.bf16 %v509
      %v528 = vunpack.c.l.bf16 %v510
      %v529 = vunpack.c.l.bf16 %v511
      %v530 = vunpack.c.l.bf16 %v512
      %v531 = vunpack.c.l.bf16 %v513
      %v532 = vunpack.c.l.bf16 %v514
      %v533 = vunpack.c.l.bf16 %v515
      %v534 = vunpack.c.l.bf16 %v516
      %v535 = vunpack.c.l.bf16 %v517
      %v536 = vunpack.c.l.bf16 %v518
      %v537 = vunpack.c.l.bf16 %v519
      %v538 = vunpack.c.l.bf16 %v520
      %v539 = vunpack.c.l.bf16 %v521
      %v540 = vunpack.c.l.bf16 %v522
      %v541 = vunpack.c.l.bf16 %v523
      %v542 = vld [vmem:[%s462] sm:$0xf]
      %v543 = vld [vmem:[%s462 + $0x8] sm:$0xf]
      %v544 = vld [vmem:[%s462 + $0x10] sm:$0xf]
      %v545 = vld [vmem:[%s462 + $0x18] sm:$0xf]
      %v546 = vld [vmem:[%s462 + $0x20] sm:$0xf]
      %v547 = vld [vmem:[%s462 + $0x28] sm:$0xf]
      %v548 = vld [vmem:[%s462 + $0x30] sm:$0xf]
      %v549 = vld [vmem:[%s462 + $0x38] sm:$0xf]
      %v550 = vld [vmem:[%s462 + $0x40] sm:$0xf]
      %v551 = vunpack.c.l.bf16 %v542
      %v552 = vunpack.c.l.bf16 %v543
      %v553 = vunpack.c.l.bf16 %v544
      %v554 = vunpack.c.l.bf16 %v545
      %v555 = vunpack.c.l.bf16 %v546
      %v556 = vunpack.c.l.bf16 %v547
      %v557 = vunpack.c.l.bf16 %v548
      %v558 = vunpack.c.l.bf16 %v549
      %v559 = vunpack.c.l.bf16 %v550
      %v560 = vld [vmem:[%s467] sm:$0xf]
      %v561 = vld [vmem:[%s467 + $0x4] sm:$0x1]
      %v562 = vld [vmem:[%s467 + $0x8] sm:$0xf]
      %v563 = vld [vmem:[%s467 + $0xc] sm:$0x1]
      %v564 = vld [vmem:[%s467 + $0x10] sm:$0xf]
      %v565 = vld [vmem:[%s467 + $0x14] sm:$0x1]
      %v566 = vld [vmem:[%s467 + $0x18] sm:$0xf]
      %v567 = vld [vmem:[%s467 + $0x1c] sm:$0x1]
      %v568 = vld [vmem:[%s467 + $0x20] sm:$0xf]
      %v569 = vld [vmem:[%s467 + $0x24] sm:$0x1]
      %v570 = vld [vmem:[%s467 + $0x28] sm:$0xf]
      %v571 = vld [vmem:[%s467 + $0x2c] sm:$0x1]
      %v572 = vld [vmem:[%s467 + $0x30] sm:$0xf]
      %v573 = vld [vmem:[%s467 + $0x34] sm:$0x1]
      %v574 = vld [vmem:[%s467 + $0x38] sm:$0xf]
      %v575 = vld [vmem:[%s467 + $0x3c] sm:$0x1]
      %v576 = vunpack.c.l.bf16 %v560
      %v577 = vunpack.c.l.bf16 %v561
      %v578 = vunpack.c.l.bf16 %v562
      %v579 = vunpack.c.l.bf16 %v563
      %v580 = vunpack.c.l.bf16 %v564
      %v581 = vunpack.c.l.bf16 %v565
      %v582 = vunpack.c.l.bf16 %v566
      %v583 = vunpack.c.l.bf16 %v567
      %v584 = vunpack.c.l.bf16 %v568
      %v585 = vunpack.c.l.bf16 %v569
      %v586 = vunpack.c.l.bf16 %v570
      %v587 = vunpack.c.l.bf16 %v571
      %v588 = vunpack.c.l.bf16 %v572
      %v589 = vunpack.c.l.bf16 %v573
      %v590 = vunpack.c.l.bf16 %v574
      %v591 = vunpack.c.l.bf16 %v575
      %v592 = vld [vmem:[%s472] sm:$0xf]
      %v593 = vld [vmem:[%s472 + $0x8] sm:$0xf]
      %v594 = vld [vmem:[%s472 + $0x10] sm:$0xf]
      %v595 = vld [vmem:[%s472 + $0x18] sm:$0xf]
      %v596 = vld [vmem:[%s472 + $0x20] sm:$0xf]
      %v597 = vld [vmem:[%s472 + $0x28] sm:$0xf]
      %v598 = vld [vmem:[%s472 + $0x30] sm:$0xf]
      %v599 = vld [vmem:[%s472 + $0x38] sm:$0xf]
      %v600 = vunpack.c.l.bf16 %v592
      %v601 = vunpack.c.l.bf16 %v593
      %v602 = vunpack.c.l.bf16 %v594
      %v603 = vunpack.c.l.bf16 %v595
      %v604 = vunpack.c.l.bf16 %v596
      %v605 = vunpack.c.l.bf16 %v597
      %v606 = vunpack.c.l.bf16 %v598
      %v607 = vunpack.c.l.bf16 %v599
      %vm608 = vcmask 64512
      %v610 = vsel %vm608, %v551, 0
      %v613 = vsel %vm608, %v552, 0
      %v616 = vsel %vm608, %v553, 0
      %v619 = vsel %vm608, %v554, 0
      %v622 = vsel %vm608, %v555, 0
      %v625 = vsel %vm608, %v556, 0
      %v628 = vsel %vm608, %v557, 0
      %v631 = vsel %vm608, %v558, 0
      %633 = vmatprep.subr.mxu0 0.0
      %634 = vmatpush1.msra.mxu0 %v497
      %635 = vmatprep.subr.mxu0 0.0
      %636 = vmatpush1.msra.mxu0 0.0
      %637 = vmatprep.subr.mxu0 0.0
      %638 = vmatpush1.msra.mxu0 0.0
      %639 = vmatprep.subr.mxu0 0.0
      %640 = vmatpush1.msra.mxu0 0.0
      %641 = vmatprep.subr.mxu0 0.0
      %642 = vmatpush1.msra.mxu0 0.0
      %643 = vmatprep.subr.mxu0 0.0
      %644 = vmatpush1.msra.mxu0 0.0
      %645 = vmatprep.subr.mxu0 0.0
      %646 = vmatpush1.msra.mxu0 0.0
      %647 = vmatprep.subr.mxu0 0.0
      %648 = vmatpush1.msra.mxu0 0.0
      %649 = vmatprep.subr.mxu0 0.0
      %650 = vmatpush1.msra.mxu0 0.0
      %651 = vmatprep.subr.mxu0 0.0
      %652 = vmatpush1.msra.mxu0 0.0
      %653 = vmatprep.subr.mxu0 0.0
      %654 = vmatpush1.msra.mxu0 0.0
      %655 = vmatprep.subr.mxu0 0.0
      %656 = vmatpush1.msra.mxu0 0.0
      %657 = vmatprep.subr.mxu0 0.0
      %658 = vmatpush1.msra.mxu0 0.0
      %659 = vmatprep.subr.mxu0 0.0
      %660 = vmatpush1.msra.mxu0 0.0
      %661 = vmatprep.subr.mxu0 0.0
      %662 = vmatpush1.msra.mxu0 0.0
      %663 = vmatprep.subr.mxu0 0.0
      %664 = vmatpush1.msra.mxu0 0.0
      %665 = vmatprep.subr.mxu0 0.0
      %666 = vmatpush1.msra.mxu0 0.0
      %667 = vmatprep.subr.mxu0 0.0
      %668 = vmatpush1.msra.mxu0 0.0
      %669 = vmatprep.subr.mxu0 0.0
      %670 = vmatpush1.msra.mxu0 0.0
      %671 = vmatprep.subr.mxu0 0.0
      %672 = vmatpush1.msra.mxu0 0.0
      %673 = vmatprep.subr.mxu0 0.0
      %674 = vmatpush1.msra.mxu0 0.0
      %675 = vmatprep.subr.mxu0 0.0
      %676 = vmatpush1.msra.mxu0 0.0
      %677 = vmatprep.subr.mxu0 0.0
      %678 = vmatpush1.msra.mxu0 0.0
      %679 = vmatprep.subr.mxu0 0.0
      %680 = vmatpush1.msra.mxu0 0.0
      %681 = vmatprep.subr.mxu0 0.0
      %682 = vmatpush1.msra.mxu0 0.0
      %683 = vmatprep.subr.mxu0 0.0
      %684 = vmatpush1.msra.mxu0 0.0
      %685 = vmatprep.subr.mxu0 0.0
      %686 = vmatpush1.msra.mxu0 0.0
      %687 = vmatprep.subr.mxu0 0.0
      %688 = vmatpush1.msra.mxu0 0.0
      %689 = vmatprep.subr.mxu0 0.0
      %690 = vmatpush1.msra.mxu0 0.0
      %691 = vmatprep.subr.mxu0 0.0
      %692 = vmatpush1.msra.mxu0 0.0
      %693 = vmatprep.subr.mxu0 0.0
      %694 = vmatpush1.msra.mxu0 0.0
      %695 = vmatprep.subr.mxu0 0.0
      %696 = vmatpush1.msra.mxu0 0.0
      %697 = vmatprep.mubr.f32.mxu0 0.0
      %698 = vmatmul.mubr.f32.gmra.mrb[0].mxu0 %v610
      %v699 = vpop.f32.mrb[0].mxu0
      %v700 = vadd.f32 0.0, %v699
      %v701 = vpop.f32.mrb[0].mxu0
      %702 = vmatprep.mubr.f32.mxu0 0.0
      %703 = vmatmul.mubr.f32.gmra.mrb[0].mxu0 %v613
      %v704 = vpop.f32.mrb[0].mxu0
      %v705 = vadd.f32 0.0, %v704
      %v706 = vpop.f32.mrb[0].mxu0
      %707 = vmatprep.mubr.f32.mxu0 0.0
      %708 = vmatmul.mubr.f32.gmra.mrb[0].mxu0 %v616
      %v709 = vpop.f32.mrb[0].mxu0
      %v710 = vadd.f32 0.0, %v709
      %v711 = vpop.f32.mrb[0].mxu0
      %712 = vmatprep.mubr.f32.mxu0 0.0
      %713 = vmatmul.mubr.f32.gmra.mrb[0].mxu0 %v619
      %v714 = vpop.f32.mrb[0].mxu0
      %v715 = vadd.f32 0.0, %v714
      %v716 = vpop.f32.mrb[0].mxu0
      %717 = vmatprep.mubr.f32.mxu0 0.0
      %718 = vmatmul.mubr.f32.gmra.mrb[0].mxu0 %v622
      %v719 = vpop.f32.mrb[0].mxu0
      %v720 = vadd.f32 0.0, %v719
      %v721 = vpop.f32.mrb[0].mxu0
      %722 = vmatprep.mubr.f32.mxu0 0.0
      %723 = vmatmul.mubr.f32.gmra.mrb[0].mxu0 %v625
      %v724 = vpop.f32.mrb[0].mxu0
      %v725 = vadd.f32 0.0, %v724
      %v726 = vpop.f32.mrb[0].mxu0
      %727 = vmatprep.mubr.f32.mxu0 0.0
      %728 = vmatmul.mubr.f32.gmra.mrb[0].mxu0 %v628
      %v729 = vpop.f32.mrb[0].mxu0
      %v730 = vadd.f32 0.0, %v729
      %v731 = vpop.f32.mrb[0].mxu0
      %732 = vmatprep.mubr.f32.mxu0 0.0
      %733 = vmatmul.mubr.f32.gmra.mrb[0].mxu0 %v631
      %v734 = vpop.f32.mrb[0].mxu0
      %v735 = vadd.f32 0.0, %v734
      %v736 = vpop.f32.mrb[0].mxu0
      %737 = vdwg.mxu0
      %v739 = vsel %vm608, %v524, 0
      %v742 = vsel %vm608, %v526, 0
      %v745 = vsel %vm608, %v528, 0
      %v748 = vsel %vm608, %v530, 0
      %v751 = vsel %vm608, %v532, 0
      %v754 = vsel %vm608, %v534, 0
      %v757 = vsel %vm608, %v536, 0
      %v760 = vsel %vm608, %v538, 0
      %762 = vmatprep.subr.mxu0 0.0
      %763 = vmatpush1.msra.mxu0 %v496
      %764 = vmatprep.subr.mxu0 0.0
      %765 = vmatpush1.msra.mxu0 0.0
      %766 = vmatprep.subr.mxu0 0.0
      %767 = vmatpush1.msra.mxu0 0.0
      %768 = vmatprep.subr.mxu0 0.0
      %769 = vmatpush1.msra.mxu0 0.0
      %770 = vmatprep.subr.mxu0 0.0
      %771 = vmatpush1.msra.mxu0 0.0
      %772 = vmatprep.subr.mxu0 0.0
      %773 = vmatpush1.msra.mxu0 0.0
      %774 = vmatprep.subr.mxu0 0.0
      %775 = vmatpush1.msra.mxu0 0.0
      %776 = vmatprep.subr.mxu0 0.0
      %777 = vmatpush1.msra.mxu0 0.0
      %778 = vmatprep.subr.mxu0 0.0
      %779 = vmatpush1.msra.mxu0 0.0
      %780 = vmatprep.subr.mxu0 0.0
      %781 = vmatpush1.msra.mxu0 0.0
      %782 = vmatprep.subr.mxu0 0.0
      %783 = vmatpush1.msra.mxu0 0.0
      %784 = vmatprep.subr.mxu0 0.0
      %785 = vmatpush1.msra.mxu0 0.0
      %786 = vmatprep.subr.mxu0 0.0
      %787 = vmatpush1.msra.mxu0 0.0
      %788 = vmatprep.subr.mxu0 0.0
      %789 = vmatpush1.msra.mxu0 0.0
      %790 = vmatprep.subr.mxu0 0.0
      %791 = vmatpush1.msra.mxu0 0.0
      %792 = vmatprep.subr.mxu0 0.0
      %793 = vmatpush1.msra.mxu0 0.0
      %794 = vmatprep.subr.mxu0 0.0
      %795 = vmatpush1.msra.mxu0 0.0
      %796 = vmatprep.subr.mxu0 0.0
      %797 = vmatpush1.msra.mxu0 0.0
      %798 = vmatprep.subr.mxu0 0.0
      %799 = vmatpush1.msra.mxu0 0.0
      %800 = vmatprep.subr.mxu0 0.0
      %801 = vmatpush1.msra.mxu0 0.0
      %802 = vmatprep.subr.mxu0 0.0
      %803 = vmatpush1.msra.mxu0 0.0
      %804 = vmatprep.subr.mxu0 0.0
      %805 = vmatpush1.msra.mxu0 0.0
      %806 = vmatprep.subr.mxu0 0.0
      %807 = vmatpush1.msra.mxu0 0.0
      %808 = vmatprep.subr.mxu0 0.0
      %809 = vmatpush1.msra.mxu0 0.0
      %810 = vmatprep.subr.mxu0 0.0
      %811 = vmatpush1.msra.mxu0 0.0
      %812 = vmatprep.subr.mxu0 0.0
      %813 = vmatpush1.msra.mxu0 0.0
      %814 = vmatprep.subr.mxu0 0.0
      %815 = vmatpush1.msra.mxu0 0.0
      %816 = vmatprep.subr.mxu0 0.0
      %817 = vmatpush1.msra.mxu0 0.0
      %818 = vmatprep.subr.mxu0 0.0
      %819 = vmatpush1.msra.mxu0 0.0
      %820 = vmatprep.subr.mxu0 0.0
      %821 = vmatpush1.msra.mxu0 0.0
      %822 = vmatprep.subr.mxu0 0.0
      %823 = vmatpush1.msra.mxu0 0.0
      %824 = vmatprep.subr.mxu0 0.0
      %825 = vmatpush1.msra.mxu0 0.0
      %826 = vmatprep.mubr.f32.mxu0 0.0
      %827 = vmatmul.mubr.f32.gmra.mrb[0].mxu0 %v739
      %v828 = vpop.f32.mrb[0].mxu0
      %v829 = vadd.f32 %v700, %v828
      %v830 = vpop.f32.mrb[0].mxu0
      %831 = vmatprep.mubr.f32.mxu0 0.0
      %832 = vmatmul.mubr.f32.gmra.mrb[0].mxu0 %v742
      %v833 = vpop.f32.mrb[0].mxu0
      %v834 = vadd.f32 %v705, %v833
      %v835 = vpop.f32.mrb[0].mxu0
      %836 = vmatprep.mubr.f32.mxu0 0.0
      %837 = vmatmul.mubr.f32.gmra.mrb[0].mxu0 %v745
      %v838 = vpop.f32.mrb[0].mxu0
      %v839 = vadd.f32 %v710, %v838
      %v840 = vpop.f32.mrb[0].mxu0
      %841 = vmatprep.mubr.f32.mxu0 0.0
      %842 = vmatmul.mubr.f32.gmra.mrb[0].mxu0 %v748
      %v843 = vpop.f32.mrb[0].mxu0
      %v844 = vadd.f32 %v715, %v843
      %v845 = vpop.f32.mrb[0].mxu0
      %846 = vmatprep.mubr.f32.mxu0 0.0
      %847 = vmatmul.mubr.f32.gmra.mrb[0].mxu0 %v751
      %v848 = vpop.f32.mrb[0].mxu0
      %v849 = vadd.f32 %v720, %v848
      %v850 = vpop.f32.mrb[0].mxu0
      %851 = vmatprep.mubr.f32.mxu0 0.0
      %852 = vmatmul.mubr.f32.gmra.mrb[0].mxu0 %v754
      %v853 = vpop.f32.mrb[0].mxu0
      %v854 = vadd.f32 %v725, %v853
      %v855 = vpop.f32.mrb[0].mxu0
      %856 = vmatprep.mubr.f32.mxu0 0.0
      %857 = vmatmul.mubr.f32.gmra.mrb[0].mxu0 %v757
      %v858 = vpop.f32.mrb[0].mxu0
      %v859 = vadd.f32 %v730, %v858
      %v860 = vpop.f32.mrb[0].mxu0
      %861 = vmatprep.mubr.f32.mxu0 0.0
      %862 = vmatmul.mubr.f32.gmra.mrb[0].mxu0 %v760
      %v863 = vpop.f32.mrb[0].mxu0
      %v864 = vadd.f32 %v735, %v863
      %v865 = vpop.f32.mrb[0].mxu0
      %866 = vdwg.mxu0
      %vm875 = vcmask 1046528
      %v876 = vrot.slane %v524, 1
      %v877 = vrot.slane %v525, 1
      %v878 = vsel %vm875, %v876, %v877
      %v879 = vrot.slane %v526, 1
      %v880 = vrot.slane %v527, 1
      %v881 = vsel %vm875, %v879, %v880
      %v882 = vrot.slane %v528, 1
      %v883 = vrot.slane %v529, 1
      %v884 = vsel %vm875, %v882, %v883
      %v885 = vrot.slane %v530, 1
      %v886 = vrot.slane %v531, 1
      %v887 = vsel %vm875, %v885, %v886
      %v888 = vrot.slane %v532, 1
      %v889 = vrot.slane %v533, 1
      %v890 = vsel %vm875, %v888, %v889
      %v891 = vrot.slane %v534, 1
      %v892 = vrot.slane %v535, 1
      %v893 = vsel %vm875, %v891, %v892
      %v894 = vrot.slane %v536, 1
      %v895 = vrot.slane %v537, 1
      %v896 = vsel %vm875, %v894, %v895
      %v897 = vrot.slane %v538, 1
      %v898 = vrot.slane %v539, 1
      %v899 = vsel %vm875, %v897, %v898
      %v900 = vsel %vm608, %v878, 0
      %v902 = vsel %vm608, %v881, 0
      %v904 = vsel %vm608, %v884, 0
      %v906 = vsel %vm608, %v887, 0
      %v908 = vsel %vm608, %v890, 0
      %v910 = vsel %vm608, %v893, 0
      %v912 = vsel %vm608, %v896, 0
      %v914 = vsel %vm608, %v899, 0
      %916 = vmatprep.subr.mxu0 0.0
      %917 = vmatpush1.msra.mxu0 %v498
      %918 = vmatprep.subr.mxu0 0.0
      %919 = vmatpush1.msra.mxu0 0.0
      %920 = vmatprep.subr.mxu0 0.0
      %921 = vmatpush1.msra.mxu0 0.0
      %922 = vmatprep.subr.mxu0 0.0
      %923 = vmatpush1.msra.mxu0 0.0
      %924 = vmatprep.subr.mxu0 0.0
      %925 = vmatpush1.msra.mxu0 0.0
      %926 = vmatprep.subr.mxu0 0.0
      %927 = vmatpush1.msra.mxu0 0.0
      %928 = vmatprep.subr.mxu0 0.0
      %929 = vmatpush1.msra.mxu0 0.0
      %930 = vmatprep.subr.mxu0 0.0
      %931 = vmatpush1.msra.mxu0 0.0
      %932 = vmatprep.subr.mxu0 0.0
      %933 = vmatpush1.msra.mxu0 0.0
      %934 = vmatprep.subr.mxu0 0.0
      %935 = vmatpush1.msra.mxu0 0.0
      %936 = vmatprep.subr.mxu0 0.0
      %937 = vmatpush1.msra.mxu0 0.0
      %938 = vmatprep.subr.mxu0 0.0
      %939 = vmatpush1.msra.mxu0 0.0
      %940 = vmatprep.subr.mxu0 0.0
      %941 = vmatpush1.msra.mxu0 0.0
      %942 = vmatprep.subr.mxu0 0.0
      %943 = vmatpush1.msra.mxu0 0.0
      %944 = vmatprep.subr.mxu0 0.0
      %945 = vmatpush1.msra.mxu0 0.0
      %946 = vmatprep.subr.mxu0 0.0
      %947 = vmatpush1.msra.mxu0 0.0
      %948 = vmatprep.subr.mxu0 0.0
      %949 = vmatpush1.msra.mxu0 0.0
      %950 = vmatprep.subr.mxu0 0.0
      %951 = vmatpush1.msra.mxu0 0.0
      %952 = vmatprep.subr.mxu0 0.0
      %953 = vmatpush1.msra.mxu0 0.0
      %954 = vmatprep.subr.mxu0 0.0
      %955 = vmatpush1.msra.mxu0 0.0
      %956 = vmatprep.subr.mxu0 0.0
      %957 = vmatpush1.msra.mxu0 0.0
      %958 = vmatprep.subr.mxu0 0.0
      %959 = vmatpush1.msra.mxu0 0.0
      %960 = vmatprep.subr.mxu0 0.0
      %961 = vmatpush1.msra.mxu0 0.0
      %962 = vmatprep.subr.mxu0 0.0
      %963 = vmatpush1.msra.mxu0 0.0
      %964 = vmatprep.subr.mxu0 0.0
      %965 = vmatpush1.msra.mxu0 0.0
      %966 = vmatprep.subr.mxu0 0.0
      %967 = vmatpush1.msra.mxu0 0.0
      %968 = vmatprep.subr.mxu0 0.0
      %969 = vmatpush1.msra.mxu0 0.0
      %970 = vmatprep.subr.mxu0 0.0
      %971 = vmatpush1.msra.mxu0 0.0
      %972 = vmatprep.subr.mxu0 0.0
      %973 = vmatpush1.msra.mxu0 0.0
      %974 = vmatprep.subr.mxu0 0.0
      %975 = vmatpush1.msra.mxu0 0.0
      %976 = vmatprep.subr.mxu0 0.0
      %977 = vmatpush1.msra.mxu0 0.0
      %978 = vmatprep.subr.mxu0 0.0
      %979 = vmatpush1.msra.mxu0 0.0
      %980 = vmatprep.mubr.f32.mxu0 0.0
      %981 = vmatmul.mubr.f32.gmra.mrb[0].mxu0 %v900
      %v982 = vpop.f32.mrb[0].mxu0
      %v983 = vadd.f32 0.0, %v982
      %v984 = vpop.f32.mrb[0].mxu0
      %985 = vmatprep.mubr.f32.mxu0 0.0
      %986 = vmatmul.mubr.f32.gmra.mrb[0].mxu0 %v902
      %v987 = vpop.f32.mrb[0].mxu0
      %v988 = vadd.f32 0.0, %v987
      %v989 = vpop.f32.mrb[0].mxu0
      %990 = vmatprep.mubr.f32.mxu0 0.0
      %991 = vmatmul.mubr.f32.gmra.mrb[0].mxu0 %v904
      %v992 = vpop.f32.mrb[0].mxu0
      %v993 = vadd.f32 0.0, %v992
      %v994 = vpop.f32.mrb[0].mxu0
      %995 = vmatprep.mubr.f32.mxu0 0.0
      %996 = vmatmul.mubr.f32.gmra.mrb[0].mxu0 %v906
      %v997 = vpop.f32.mrb[0].mxu0
      %v998 = vadd.f32 0.0, %v997
      %v999 = vpop.f32.mrb[0].mxu0
      %1000 = vmatprep.mubr.f32.mxu0 0.0
      %1001 = vmatmul.mubr.f32.gmra.mrb[0].mxu0 %v908
      %v1002 = vpop.f32.mrb[0].mxu0
      %v1003 = vadd.f32 0.0, %v1002
      %v1004 = vpop.f32.mrb[0].mxu0
      %1005 = vmatprep.mubr.f32.mxu0 0.0
      %1006 = vmatmul.mubr.f32.gmra.mrb[0].mxu0 %v910
      %v1007 = vpop.f32.mrb[0].mxu0
      %v1008 = vadd.f32 0.0, %v1007
      %v1009 = vpop.f32.mrb[0].mxu0
      %1010 = vmatprep.mubr.f32.mxu0 0.0
      %1011 = vmatmul.mubr.f32.gmra.mrb[0].mxu0 %v912
      %v1012 = vpop.f32.mrb[0].mxu0
      %v1013 = vadd.f32 0.0, %v1012
      %v1014 = vpop.f32.mrb[0].mxu0
      %1015 = vmatprep.mubr.f32.mxu0 0.0
      %1016 = vmatmul.mubr.f32.gmra.mrb[0].mxu0 %v914
      %v1017 = vpop.f32.mrb[0].mxu0
      %v1018 = vadd.f32 0.0, %v1017
      %v1019 = vpop.f32.mrb[0].mxu0
      %1020 = vdwg.mxu0
      %v1021 = vadd.f32 %v829, %v983
      %v1022 = vadd.f32 %v834, %v988
      %v1023 = vadd.f32 %v839, %v993
      %v1024 = vadd.f32 %v844, %v998
      %v1025 = vadd.f32 %v849, %v1003
      %v1026 = vadd.f32 %v854, %v1008
      %v1027 = vadd.f32 %v859, %v1013
      %v1028 = vadd.f32 %v864, %v1018
      %v1030 = vsel %vm608, %v576, 0
      %v1033 = vsel %vm608, %v578, 0
      %v1036 = vsel %vm608, %v580, 0
      %v1039 = vsel %vm608, %v582, 0
      %v1042 = vsel %vm608, %v584, 0
      %v1045 = vsel %vm608, %v586, 0
      %v1048 = vsel %vm608, %v588, 0
      %v1051 = vsel %vm608, %v590, 0
      %1053 = vmatprep.subr.mxu0 0.0
      %1054 = vmatpush1.msra.mxu0 %v499
      %1055 = vmatprep.subr.mxu0 0.0
      %1056 = vmatpush1.msra.mxu0 0.0
      %1057 = vmatprep.subr.mxu0 0.0
      %1058 = vmatpush1.msra.mxu0 0.0
      %1059 = vmatprep.subr.mxu0 0.0
      %1060 = vmatpush1.msra.mxu0 0.0
      %1061 = vmatprep.subr.mxu0 0.0
      %1062 = vmatpush1.msra.mxu0 0.0
      %1063 = vmatprep.subr.mxu0 0.0
      %1064 = vmatpush1.msra.mxu0 0.0
      %1065 = vmatprep.subr.mxu0 0.0
      %1066 = vmatpush1.msra.mxu0 0.0
      %1067 = vmatprep.subr.mxu0 0.0
      %1068 = vmatpush1.msra.mxu0 0.0
      %1069 = vmatprep.subr.mxu0 0.0
      %1070 = vmatpush1.msra.mxu0 0.0
      %1071 = vmatprep.subr.mxu0 0.0
      %1072 = vmatpush1.msra.mxu0 0.0
      %1073 = vmatprep.subr.mxu0 0.0
      %1074 = vmatpush1.msra.mxu0 0.0
      %1075 = vmatprep.subr.mxu0 0.0
      %1076 = vmatpush1.msra.mxu0 0.0
      %1077 = vmatprep.subr.mxu0 0.0
      %1078 = vmatpush1.msra.mxu0 0.0
      %1079 = vmatprep.subr.mxu0 0.0
      %1080 = vmatpush1.msra.mxu0 0.0
      %1081 = vmatprep.subr.mxu0 0.0
      %1082 = vmatpush1.msra.mxu0 0.0
      %1083 = vmatprep.subr.mxu0 0.0
      %1084 = vmatpush1.msra.mxu0 0.0
      %1085 = vmatprep.subr.mxu0 0.0
      %1086 = vmatpush1.msra.mxu0 0.0
      %1087 = vmatprep.subr.mxu0 0.0
      %1088 = vmatpush1.msra.mxu0 0.0
      %1089 = vmatprep.subr.mxu0 0.0
      %1090 = vmatpush1.msra.mxu0 0.0
      %1091 = vmatprep.subr.mxu0 0.0
      %1092 = vmatpush1.msra.mxu0 0.0
      %1093 = vmatprep.subr.mxu0 0.0
      %1094 = vmatpush1.msra.mxu0 0.0
      %1095 = vmatprep.subr.mxu0 0.0
      %1096 = vmatpush1.msra.mxu0 0.0
      %1097 = vmatprep.subr.mxu0 0.0
      %1098 = vmatpush1.msra.mxu0 0.0
      %1099 = vmatprep.subr.mxu0 0.0
      %1100 = vmatpush1.msra.mxu0 0.0
      %1101 = vmatprep.subr.mxu0 0.0
      %1102 = vmatpush1.msra.mxu0 0.0
      %1103 = vmatprep.subr.mxu0 0.0
      %1104 = vmatpush1.msra.mxu0 0.0
      %1105 = vmatprep.subr.mxu0 0.0
      %1106 = vmatpush1.msra.mxu0 0.0
      %1107 = vmatprep.subr.mxu0 0.0
      %1108 = vmatpush1.msra.mxu0 0.0
      %1109 = vmatprep.subr.mxu0 0.0
      %1110 = vmatpush1.msra.mxu0 0.0
      %1111 = vmatprep.subr.mxu0 0.0
      %1112 = vmatpush1.msra.mxu0 0.0
      %1113 = vmatprep.subr.mxu0 0.0
      %1114 = vmatpush1.msra.mxu0 0.0
      %1115 = vmatprep.subr.mxu0 0.0
      %1116 = vmatpush1.msra.mxu0 0.0
      %1117 = vmatprep.mubr.f32.mxu0 0.0
      %1118 = vmatmul.mubr.f32.gmra.mrb[0].mxu0 %v1030
      %v1119 = vpop.f32.mrb[0].mxu0
      %v1120 = vadd.f32 0.0, %v1119
      %v1121 = vpop.f32.mrb[0].mxu0
      %1122 = vmatprep.mubr.f32.mxu0 0.0
      %1123 = vmatmul.mubr.f32.gmra.mrb[0].mxu0 %v1033
      %v1124 = vpop.f32.mrb[0].mxu0
      %v1125 = vadd.f32 0.0, %v1124
      %v1126 = vpop.f32.mrb[0].mxu0
      %1127 = vmatprep.mubr.f32.mxu0 0.0
      %1128 = vmatmul.mubr.f32.gmra.mrb[0].mxu0 %v1036
      %v1129 = vpop.f32.mrb[0].mxu0
      %v1130 = vadd.f32 0.0, %v1129
      %v1131 = vpop.f32.mrb[0].mxu0
      %1132 = vmatprep.mubr.f32.mxu0 0.0
      %1133 = vmatmul.mubr.f32.gmra.mrb[0].mxu0 %v1039
      %v1134 = vpop.f32.mrb[0].mxu0
      %v1135 = vadd.f32 0.0, %v1134
      %v1136 = vpop.f32.mrb[0].mxu0
      %1137 = vmatprep.mubr.f32.mxu0 0.0
      %1138 = vmatmul.mubr.f32.gmra.mrb[0].mxu0 %v1042
      %v1139 = vpop.f32.mrb[0].mxu0
      %v1140 = vadd.f32 0.0, %v1139
      %v1141 = vpop.f32.mrb[0].mxu0
      %1142 = vmatprep.mubr.f32.mxu0 0.0
      %1143 = vmatmul.mubr.f32.gmra.mrb[0].mxu0 %v1045
      %v1144 = vpop.f32.mrb[0].mxu0
      %v1145 = vadd.f32 0.0, %v1144
      %v1146 = vpop.f32.mrb[0].mxu0
      %1147 = vmatprep.mubr.f32.mxu0 0.0
      %1148 = vmatmul.mubr.f32.gmra.mrb[0].mxu0 %v1048
      %v1149 = vpop.f32.mrb[0].mxu0
      %v1150 = vadd.f32 0.0, %v1149
      %v1151 = vpop.f32.mrb[0].mxu0
      %1152 = vmatprep.mubr.f32.mxu0 0.0
      %1153 = vmatmul.mubr.f32.gmra.mrb[0].mxu0 %v1051
      %v1154 = vpop.f32.mrb[0].mxu0
      %v1155 = vadd.f32 0.0, %v1154
      %v1156 = vpop.f32.mrb[0].mxu0
      %1157 = vdwg.mxu0
      %v1158 = vadd.f32 %v1021, %v1120
      %v1159 = vadd.f32 %v1022, %v1125
      %v1160 = vadd.f32 %v1023, %v1130
      %v1161 = vadd.f32 %v1024, %v1135
      %v1162 = vadd.f32 %v1025, %v1140
      %v1163 = vadd.f32 %v1026, %v1145
      %v1164 = vadd.f32 %v1027, %v1150
      %v1165 = vadd.f32 %v1028, %v1155
      %v1167 = vsel %vm608, %v600, 0
      %v1170 = vsel %vm608, %v601, 0
      %v1173 = vsel %vm608, %v602, 0
      %v1176 = vsel %vm608, %v603, 0
      %v1179 = vsel %vm608, %v604, 0
      %v1182 = vsel %vm608, %v605, 0
      %v1185 = vsel %vm608, %v606, 0
      %v1188 = vsel %vm608, %v607, 0
      %1190 = vmatprep.subr.mxu0 0.0
      %1191 = vmatpush1.msra.mxu0 %v500
      %1192 = vmatprep.subr.mxu0 0.0
      %1193 = vmatpush1.msra.mxu0 0.0
      %1194 = vmatprep.subr.mxu0 0.0
      %1195 = vmatpush1.msra.mxu0 0.0
      %1196 = vmatprep.subr.mxu0 0.0
      %1197 = vmatpush1.msra.mxu0 0.0
      %1198 = vmatprep.subr.mxu0 0.0
      %1199 = vmatpush1.msra.mxu0 0.0
      %1200 = vmatprep.subr.mxu0 0.0
      %1201 = vmatpush1.msra.mxu0 0.0
      %1202 = vmatprep.subr.mxu0 0.0
      %1203 = vmatpush1.msra.mxu0 0.0
      %1204 = vmatprep.subr.mxu0 0.0
      %1205 = vmatpush1.msra.mxu0 0.0
      %1206 = vmatprep.subr.mxu0 0.0
      %1207 = vmatpush1.msra.mxu0 0.0
      %1208 = vmatprep.subr.mxu0 0.0
      %1209 = vmatpush1.msra.mxu0 0.0
      %1210 = vmatprep.subr.mxu0 0.0
      %1211 = vmatpush1.msra.mxu0 0.0
      %1212 = vmatprep.subr.mxu0 0.0
      %1213 = vmatpush1.msra.mxu0 0.0
      %1214 = vmatprep.subr.mxu0 0.0
      %1215 = vmatpush1.msra.mxu0 0.0
      %1216 = vmatprep.subr.mxu0 0.0
      %1217 = vmatpush1.msra.mxu0 0.0
      %1218 = vmatprep.subr.mxu0 0.0
      %1219 = vmatpush1.msra.mxu0 0.0
      %1220 = vmatprep.subr.mxu0 0.0
      %1221 = vmatpush1.msra.mxu0 0.0
      %1222 = vmatprep.subr.mxu0 0.0
      %1223 = vmatpush1.msra.mxu0 0.0
      %1224 = vmatprep.subr.mxu0 0.0
      %1225 = vmatpush1.msra.mxu0 0.0
      %1226 = vmatprep.subr.mxu0 0.0
      %1227 = vmatpush1.msra.mxu0 0.0
      %1228 = vmatprep.subr.mxu0 0.0
      %1229 = vmatpush1.msra.mxu0 0.0
      %1230 = vmatprep.subr.mxu0 0.0
      %1231 = vmatpush1.msra.mxu0 0.0
      %1232 = vmatprep.subr.mxu0 0.0
      %1233 = vmatpush1.msra.mxu0 0.0
      %1234 = vmatprep.subr.mxu0 0.0
      %1235 = vmatpush1.msra.mxu0 0.0
      %1236 = vmatprep.subr.mxu0 0.0
      %1237 = vmatpush1.msra.mxu0 0.0
      %1238 = vmatprep.subr.mxu0 0.0
      %1239 = vmatpush1.msra.mxu0 0.0
      %1240 = vmatprep.subr.mxu0 0.0
      %1241 = vmatpush1.msra.mxu0 0.0
      %1242 = vmatprep.subr.mxu0 0.0
      %1243 = vmatpush1.msra.mxu0 0.0
      %1244 = vmatprep.subr.mxu0 0.0
      %1245 = vmatpush1.msra.mxu0 0.0
      %1246 = vmatprep.subr.mxu0 0.0
      %1247 = vmatpush1.msra.mxu0 0.0
      %1248 = vmatprep.subr.mxu0 0.0
      %1249 = vmatpush1.msra.mxu0 0.0
      %1250 = vmatprep.subr.mxu0 0.0
      %1251 = vmatpush1.msra.mxu0 0.0
      %1252 = vmatprep.subr.mxu0 0.0
      %1253 = vmatpush1.msra.mxu0 0.0
      %1254 = vmatprep.mubr.f32.mxu0 0.0
      %1255 = vmatmul.mubr.f32.gmra.mrb[0].mxu0 %v1167
      %v1256 = vpop.f32.mrb[0].mxu0
      %v1257 = vadd.f32 0.0, %v1256
      %v1258 = vpop.f32.mrb[0].mxu0
      %1259 = vmatprep.mubr.f32.mxu0 0.0
      %1260 = vmatmul.mubr.f32.gmra.mrb[0].mxu0 %v1170
      %v1261 = vpop.f32.mrb[0].mxu0
      %v1262 = vadd.f32 0.0, %v1261
      %v1263 = vpop.f32.mrb[0].mxu0
      %1264 = vmatprep.mubr.f32.mxu0 0.0
      %1265 = vmatmul.mubr.f32.gmra.mrb[0].mxu0 %v1173
      %v1266 = vpop.f32.mrb[0].mxu0
      %v1267 = vadd.f32 0.0, %v1266
      %v1268 = vpop.f32.mrb[0].mxu0
      %1269 = vmatprep.mubr.f32.mxu0 0.0
      %1270 = vmatmul.mubr.f32.gmra.mrb[0].mxu0 %v1176
      %v1271 = vpop.f32.mrb[0].mxu0
      %v1272 = vadd.f32 0.0, %v1271
      %v1273 = vpop.f32.mrb[0].mxu0
      %1274 = vmatprep.mubr.f32.mxu0 0.0
      %1275 = vmatmul.mubr.f32.gmra.mrb[0].mxu0 %v1179
      %v1276 = vpop.f32.mrb[0].mxu0
      %v1277 = vadd.f32 0.0, %v1276
      %v1278 = vpop.f32.mrb[0].mxu0
      %1279 = vmatprep.mubr.f32.mxu0 0.0
      %1280 = vmatmul.mubr.f32.gmra.mrb[0].mxu0 %v1182
      %v1281 = vpop.f32.mrb[0].mxu0
      %v1282 = vadd.f32 0.0, %v1281
      %v1283 = vpop.f32.mrb[0].mxu0
      %1284 = vmatprep.mubr.f32.mxu0 0.0
      %1285 = vmatmul.mubr.f32.gmra.mrb[0].mxu0 %v1185
      %v1286 = vpop.f32.mrb[0].mxu0
      %v1287 = vadd.f32 0.0, %v1286
      %v1288 = vpop.f32.mrb[0].mxu0
      %1289 = vmatprep.mubr.f32.mxu0 0.0
      %1290 = vmatmul.mubr.f32.gmra.mrb[0].mxu0 %v1188
      %v1291 = vpop.f32.mrb[0].mxu0
      %v1292 = vadd.f32 0.0, %v1291
      %v1293 = vpop.f32.mrb[0].mxu0
      %1294 = vdwg.mxu0
      %v1295 = vadd.f32 %v1158, %v1257
      %v1296 = vadd.f32 %v1159, %v1262
      %v1297 = vadd.f32 %v1160, %v1267
      %v1298 = vadd.f32 %v1161, %v1272
      %v1299 = vadd.f32 %v1162, %v1277
      %v1300 = vadd.f32 %v1163, %v1282
      %v1301 = vadd.f32 %v1164, %v1287
      %v1302 = vadd.f32 %v1165, %v1292
      %v1311 = vrot.slane %v576, 1
      %v1312 = vrot.slane %v577, 1
      %v1313 = vsel %vm875, %v1311, %v1312
      %v1314 = vrot.slane %v578, 1
      %v1315 = vrot.slane %v579, 1
      %v1316 = vsel %vm875, %v1314, %v1315
      %v1317 = vrot.slane %v580, 1
      %v1318 = vrot.slane %v581, 1
      %v1319 = vsel %vm875, %v1317, %v1318
      %v1320 = vrot.slane %v582, 1
      %v1321 = vrot.slane %v583, 1
      %v1322 = vsel %vm875, %v1320, %v1321
      %v1323 = vrot.slane %v584, 1
      %v1324 = vrot.slane %v585, 1
      %v1325 = vsel %vm875, %v1323, %v1324
      %v1326 = vrot.slane %v586, 1
      %v1327 = vrot.slane %v587, 1
      %v1328 = vsel %vm875, %v1326, %v1327
      %v1329 = vrot.slane %v588, 1
      %v1330 = vrot.slane %v589, 1
      %v1331 = vsel %vm875, %v1329, %v1330
      %v1332 = vrot.slane %v590, 1
      %v1333 = vrot.slane %v591, 1
      %v1334 = vsel %vm875, %v1332, %v1333
      %v1335 = vsel %vm608, %v1313, 0
      %v1337 = vsel %vm608, %v1316, 0
      %v1339 = vsel %vm608, %v1319, 0
      %v1341 = vsel %vm608, %v1322, 0
      %v1343 = vsel %vm608, %v1325, 0
      %v1345 = vsel %vm608, %v1328, 0
      %v1347 = vsel %vm608, %v1331, 0
      %v1349 = vsel %vm608, %v1334, 0
      %1351 = vmatprep.subr.mxu0 0.0
      %1352 = vmatpush1.msra.mxu0 %v501
      %1353 = vmatprep.subr.mxu0 0.0
      %1354 = vmatpush1.msra.mxu0 0.0
      %1355 = vmatprep.subr.mxu0 0.0
      %1356 = vmatpush1.msra.mxu0 0.0
      %1357 = vmatprep.subr.mxu0 0.0
      %1358 = vmatpush1.msra.mxu0 0.0
      %1359 = vmatprep.subr.mxu0 0.0
      %1360 = vmatpush1.msra.mxu0 0.0
      %1361 = vmatprep.subr.mxu0 0.0
      %1362 = vmatpush1.msra.mxu0 0.0
      %1363 = vmatprep.subr.mxu0 0.0
      %1364 = vmatpush1.msra.mxu0 0.0
      %1365 = vmatprep.subr.mxu0 0.0
      %1366 = vmatpush1.msra.mxu0 0.0
      %1367 = vmatprep.subr.mxu0 0.0
      %1368 = vmatpush1.msra.mxu0 0.0
      %1369 = vmatprep.subr.mxu0 0.0
      %1370 = vmatpush1.msra.mxu0 0.0
      %1371 = vmatprep.subr.mxu0 0.0
      %1372 = vmatpush1.msra.mxu0 0.0
      %1373 = vmatprep.subr.mxu0 0.0
      %1374 = vmatpush1.msra.mxu0 0.0
      %1375 = vmatprep.subr.mxu0 0.0
      %1376 = vmatpush1.msra.mxu0 0.0
      %1377 = vmatprep.subr.mxu0 0.0
      %1378 = vmatpush1.msra.mxu0 0.0
      %1379 = vmatprep.subr.mxu0 0.0
      %1380 = vmatpush1.msra.mxu0 0.0
      %1381 = vmatprep.subr.mxu0 0.0
      %1382 = vmatpush1.msra.mxu0 0.0
      %1383 = vmatprep.subr.mxu0 0.0
      %1384 = vmatpush1.msra.mxu0 0.0
      %1385 = vmatprep.subr.mxu0 0.0
      %1386 = vmatpush1.msra.mxu0 0.0
      %1387 = vmatprep.subr.mxu0 0.0
      %1388 = vmatpush1.msra.mxu0 0.0
      %1389 = vmatprep.subr.mxu0 0.0
      %1390 = vmatpush1.msra.mxu0 0.0
      %1391 = vmatprep.subr.mxu0 0.0
      %1392 = vmatpush1.msra.mxu0 0.0
      %1393 = vmatprep.subr.mxu0 0.0
      %1394 = vmatpush1.msra.mxu0 0.0
      %1395 = vmatprep.subr.mxu0 0.0
      %1396 = vmatpush1.msra.mxu0 0.0
      %1397 = vmatprep.subr.mxu0 0.0
      %1398 = vmatpush1.msra.mxu0 0.0
      %1399 = vmatprep.subr.mxu0 0.0
      %1400 = vmatpush1.msra.mxu0 0.0
      %1401 = vmatprep.subr.mxu0 0.0
      %1402 = vmatpush1.msra.mxu0 0.0
      %1403 = vmatprep.subr.mxu0 0.0
      %1404 = vmatpush1.msra.mxu0 0.0
      %1405 = vmatprep.subr.mxu0 0.0
      %1406 = vmatpush1.msra.mxu0 0.0
      %1407 = vmatprep.subr.mxu0 0.0
      %1408 = vmatpush1.msra.mxu0 0.0
      %1409 = vmatprep.subr.mxu0 0.0
      %1410 = vmatpush1.msra.mxu0 0.0
      %1411 = vmatprep.subr.mxu0 0.0
      %1412 = vmatpush1.msra.mxu0 0.0
      %1413 = vmatprep.subr.mxu0 0.0
      %1414 = vmatpush1.msra.mxu0 0.0
      %1415 = vmatprep.mubr.f32.mxu0 0.0
      %1416 = vmatmul.mubr.f32.gmra.mrb[0].mxu0 %v1335
      %v1417 = vpop.f32.mrb[0].mxu0
      %v1418 = vadd.f32 0.0, %v1417
      %v1419 = vpop.f32.mrb[0].mxu0
      %1420 = vmatprep.mubr.f32.mxu0 0.0
      %1421 = vmatmul.mubr.f32.gmra.mrb[0].mxu0 %v1337
      %v1422 = vpop.f32.mrb[0].mxu0
      %v1423 = vadd.f32 0.0, %v1422
      %v1424 = vpop.f32.mrb[0].mxu0
      %1425 = vmatprep.mubr.f32.mxu0 0.0
      %1426 = vmatmul.mubr.f32.gmra.mrb[0].mxu0 %v1339
      %v1427 = vpop.f32.mrb[0].mxu0
      %v1428 = vadd.f32 0.0, %v1427
      %v1429 = vpop.f32.mrb[0].mxu0
      %1430 = vmatprep.mubr.f32.mxu0 0.0
      %1431 = vmatmul.mubr.f32.gmra.mrb[0].mxu0 %v1341
      %v1432 = vpop.f32.mrb[0].mxu0
      %v1433 = vadd.f32 0.0, %v1432
      %v1434 = vpop.f32.mrb[0].mxu0
      %1435 = vmatprep.mubr.f32.mxu0 0.0
      %1436 = vmatmul.mubr.f32.gmra.mrb[0].mxu0 %v1343
      %v1437 = vpop.f32.mrb[0].mxu0
      %v1438 = vadd.f32 0.0, %v1437
      %v1439 = vpop.f32.mrb[0].mxu0
      %1440 = vmatprep.mubr.f32.mxu0 0.0
      %1441 = vmatmul.mubr.f32.gmra.mrb[0].mxu0 %v1345
      %v1442 = vpop.f32.mrb[0].mxu0
      %v1443 = vadd.f32 0.0, %v1442
      %v1444 = vpop.f32.mrb[0].mxu0
      %1445 = vmatprep.mubr.f32.mxu0 0.0
      %1446 = vmatmul.mubr.f32.gmra.mrb[0].mxu0 %v1347
      %v1447 = vpop.f32.mrb[0].mxu0
      %v1448 = vadd.f32 0.0, %v1447
      %v1449 = vpop.f32.mrb[0].mxu0
      %1450 = vmatprep.mubr.f32.mxu0 0.0
      %1451 = vmatmul.mubr.f32.gmra.mrb[0].mxu0 %v1349
      %v1452 = vpop.f32.mrb[0].mxu0
      %v1453 = vadd.f32 0.0, %v1452
      %v1454 = vpop.f32.mrb[0].mxu0
      %1455 = vdwg.mxu0
      %v1456 = vadd.f32 %v1295, %v1418
      %v1457 = vadd.f32 %v1296, %v1423
      %v1458 = vadd.f32 %v1297, %v1428
      %v1459 = vadd.f32 %v1298, %v1433
      %v1460 = vadd.f32 %v1299, %v1438
      %v1461 = vadd.f32 %v1300, %v1443
      %v1462 = vadd.f32 %v1301, %v1448
      %v1463 = vadd.f32 %v1302, %v1453
      %v1465 = vsel %vm608, %v540, 0
      %1467 = vmatprep.subr.mxu0 0.0
      %1468 = vmatpush1.msra.mxu0 %v502
      %1469 = vmatprep.subr.mxu0 0.0
      %1470 = vmatpush1.msra.mxu0 0.0
      %1471 = vmatprep.subr.mxu0 0.0
      %1472 = vmatpush1.msra.mxu0 0.0
      %1473 = vmatprep.subr.mxu0 0.0
      %1474 = vmatpush1.msra.mxu0 0.0
      %1475 = vmatprep.subr.mxu0 0.0
      %1476 = vmatpush1.msra.mxu0 0.0
      %1477 = vmatprep.subr.mxu0 0.0
      %1478 = vmatpush1.msra.mxu0 0.0
      %1479 = vmatprep.subr.mxu0 0.0
      %1480 = vmatpush1.msra.mxu0 0.0
      %1481 = vmatprep.subr.mxu0 0.0
      %1482 = vmatpush1.msra.mxu0 0.0
      %1483 = vmatprep.subr.mxu0 0.0
      %1484 = vmatpush1.msra.mxu0 0.0
      %1485 = vmatprep.subr.mxu0 0.0
      %1486 = vmatpush1.msra.mxu0 0.0
      %1487 = vmatprep.subr.mxu0 0.0
      %1488 = vmatpush1.msra.mxu0 0.0
      %1489 = vmatprep.subr.mxu0 0.0
      %1490 = vmatpush1.msra.mxu0 0.0
      %1491 = vmatprep.subr.mxu0 0.0
      %1492 = vmatpush1.msra.mxu0 0.0
      %1493 = vmatprep.subr.mxu0 0.0
      %1494 = vmatpush1.msra.mxu0 0.0
      %1495 = vmatprep.subr.mxu0 0.0
      %1496 = vmatpush1.msra.mxu0 0.0
      %1497 = vmatprep.subr.mxu0 0.0
      %1498 = vmatpush1.msra.mxu0 0.0
      %1499 = vmatprep.subr.mxu0 0.0
      %1500 = vmatpush1.msra.mxu0 0.0
      %1501 = vmatprep.subr.mxu0 0.0
      %1502 = vmatpush1.msra.mxu0 0.0
      %1503 = vmatprep.subr.mxu0 0.0
      %1504 = vmatpush1.msra.mxu0 0.0
      %1505 = vmatprep.subr.mxu0 0.0
      %1506 = vmatpush1.msra.mxu0 0.0
      %1507 = vmatprep.subr.mxu0 0.0
      %1508 = vmatpush1.msra.mxu0 0.0
      %1509 = vmatprep.subr.mxu0 0.0
      %1510 = vmatpush1.msra.mxu0 0.0
      %1511 = vmatprep.subr.mxu0 0.0
      %1512 = vmatpush1.msra.mxu0 0.0
      %1513 = vmatprep.subr.mxu0 0.0
      %1514 = vmatpush1.msra.mxu0 0.0
      %1515 = vmatprep.subr.mxu0 0.0
      %1516 = vmatpush1.msra.mxu0 0.0
      %1517 = vmatprep.subr.mxu0 0.0
      %1518 = vmatpush1.msra.mxu0 0.0
      %1519 = vmatprep.subr.mxu0 0.0
      %1520 = vmatpush1.msra.mxu0 0.0
      %1521 = vmatprep.subr.mxu0 0.0
      %1522 = vmatpush1.msra.mxu0 0.0
      %1523 = vmatprep.subr.mxu0 0.0
      %1524 = vmatpush1.msra.mxu0 0.0
      %1525 = vmatprep.subr.mxu0 0.0
      %1526 = vmatpush1.msra.mxu0 0.0
      %1527 = vmatprep.subr.mxu0 0.0
      %1528 = vmatpush1.msra.mxu0 0.0
      %1529 = vmatprep.subr.mxu0 0.0
      %1530 = vmatpush1.msra.mxu0 0.0
      %1531 = vmatprep.mubr.f32.mxu0 0.0
      %1532 = vmatmul.mubr.f32.gmra.mrb[0].mxu0 %v742
      %v1533 = vpop.f32.mrb[0].mxu0
      %v1534 = vadd.f32 0.0, %v1533
      %v1535 = vpop.f32.mrb[0].mxu0
      %1536 = vmatprep.mubr.f32.mxu0 0.0
      %1537 = vmatmul.mubr.f32.gmra.mrb[0].mxu0 %v745
      %v1538 = vpop.f32.mrb[0].mxu0
      %v1539 = vadd.f32 0.0, %v1538
      %v1540 = vpop.f32.mrb[0].mxu0
      %1541 = vmatprep.mubr.f32.mxu0 0.0
      %1542 = vmatmul.mubr.f32.gmra.mrb[0].mxu0 %v748
      %v1543 = vpop.f32.mrb[0].mxu0
      %v1544 = vadd.f32 0.0, %v1543
      %v1545 = vpop.f32.mrb[0].mxu0
      %1546 = vmatprep.mubr.f32.mxu0 0.0
      %1547 = vmatmul.mubr.f32.gmra.mrb[0].mxu0 %v751
      %v1548 = vpop.f32.mrb[0].mxu0
      %v1549 = vadd.f32 0.0, %v1548
      %v1550 = vpop.f32.mrb[0].mxu0
      %1551 = vmatprep.mubr.f32.mxu0 0.0
      %1552 = vmatmul.mubr.f32.gmra.mrb[0].mxu0 %v754
      %v1553 = vpop.f32.mrb[0].mxu0
      %v1554 = vadd.f32 0.0, %v1553
      %v1555 = vpop.f32.mrb[0].mxu0
      %1556 = vmatprep.mubr.f32.mxu0 0.0
      %1557 = vmatmul.mubr.f32.gmra.mrb[0].mxu0 %v757
      %v1558 = vpop.f32.mrb[0].mxu0
      %v1559 = vadd.f32 0.0, %v1558
      %v1560 = vpop.f32.mrb[0].mxu0
      %1561 = vmatprep.mubr.f32.mxu0 0.0
      %1562 = vmatmul.mubr.f32.gmra.mrb[0].mxu0 %v760
      %v1563 = vpop.f32.mrb[0].mxu0
      %v1564 = vadd.f32 0.0, %v1563
      %v1565 = vpop.f32.mrb[0].mxu0
      %1566 = vmatprep.mubr.f32.mxu0 0.0
      %1567 = vmatmul.mubr.f32.gmra.mrb[0].mxu0 %v1465
      %v1568 = vpop.f32.mrb[0].mxu0
      %v1569 = vadd.f32 0.0, %v1568
      %v1570 = vpop.f32.mrb[0].mxu0
      %1571 = vdwg.mxu0
      %v1572 = vadd.f32 %v1456, %v1534
      %v1573 = vadd.f32 %v1457, %v1539
      %v1574 = vadd.f32 %v1458, %v1544
      %v1575 = vadd.f32 %v1459, %v1549
      %v1576 = vadd.f32 %v1460, %v1554
      %v1577 = vadd.f32 %v1461, %v1559
      %v1578 = vadd.f32 %v1462, %v1564
      %v1579 = vadd.f32 %v1463, %v1569
      %v1581 = vsel %vm608, %v559, 0
      %1583 = vmatprep.subr.mxu0 0.0
      %1584 = vmatpush1.msra.mxu0 %v503
      %1585 = vmatprep.subr.mxu0 0.0
      %1586 = vmatpush1.msra.mxu0 0.0
      %1587 = vmatprep.subr.mxu0 0.0
      %1588 = vmatpush1.msra.mxu0 0.0
      %1589 = vmatprep.subr.mxu0 0.0
      %1590 = vmatpush1.msra.mxu0 0.0
      %1591 = vmatprep.subr.mxu0 0.0
      %1592 = vmatpush1.msra.mxu0 0.0
      %1593 = vmatprep.subr.mxu0 0.0
      %1594 = vmatpush1.msra.mxu0 0.0
      %1595 = vmatprep.subr.mxu0 0.0
      %1596 = vmatpush1.msra.mxu0 0.0
      %1597 = vmatprep.subr.mxu0 0.0
      %1598 = vmatpush1.msra.mxu0 0.0
      %1599 = vmatprep.subr.mxu0 0.0
      %1600 = vmatpush1.msra.mxu0 0.0
      %1601 = vmatprep.subr.mxu0 0.0
      %1602 = vmatpush1.msra.mxu0 0.0
      %1603 = vmatprep.subr.mxu0 0.0
      %1604 = vmatpush1.msra.mxu0 0.0
      %1605 = vmatprep.subr.mxu0 0.0
      %1606 = vmatpush1.msra.mxu0 0.0
      %1607 = vmatprep.subr.mxu0 0.0
      %1608 = vmatpush1.msra.mxu0 0.0
      %1609 = vmatprep.subr.mxu0 0.0
      %1610 = vmatpush1.msra.mxu0 0.0
      %1611 = vmatprep.subr.mxu0 0.0
      %1612 = vmatpush1.msra.mxu0 0.0
      %1613 = vmatprep.subr.mxu0 0.0
      %1614 = vmatpush1.msra.mxu0 0.0
      %1615 = vmatprep.subr.mxu0 0.0
      %1616 = vmatpush1.msra.mxu0 0.0
      %1617 = vmatprep.subr.mxu0 0.0
      %1618 = vmatpush1.msra.mxu0 0.0
      %1619 = vmatprep.subr.mxu0 0.0
      %1620 = vmatpush1.msra.mxu0 0.0
      %1621 = vmatprep.subr.mxu0 0.0
      %1622 = vmatpush1.msra.mxu0 0.0
      %1623 = vmatprep.subr.mxu0 0.0
      %1624 = vmatpush1.msra.mxu0 0.0
      %1625 = vmatprep.subr.mxu0 0.0
      %1626 = vmatpush1.msra.mxu0 0.0
      %1627 = vmatprep.subr.mxu0 0.0
      %1628 = vmatpush1.msra.mxu0 0.0
      %1629 = vmatprep.subr.mxu0 0.0
      %1630 = vmatpush1.msra.mxu0 0.0
      %1631 = vmatprep.subr.mxu0 0.0
      %1632 = vmatpush1.msra.mxu0 0.0
      %1633 = vmatprep.subr.mxu0 0.0
      %1634 = vmatpush1.msra.mxu0 0.0
      %1635 = vmatprep.subr.mxu0 0.0
      %1636 = vmatpush1.msra.mxu0 0.0
      %1637 = vmatprep.subr.mxu0 0.0
      %1638 = vmatpush1.msra.mxu0 0.0
      %1639 = vmatprep.subr.mxu0 0.0
      %1640 = vmatpush1.msra.mxu0 0.0
      %1641 = vmatprep.subr.mxu0 0.0
      %1642 = vmatpush1.msra.mxu0 0.0
      %1643 = vmatprep.subr.mxu0 0.0
      %1644 = vmatpush1.msra.mxu0 0.0
      %1645 = vmatprep.subr.mxu0 0.0
      %1646 = vmatpush1.msra.mxu0 0.0
      %1647 = vmatprep.mubr.f32.mxu0 0.0
      %1648 = vmatmul.mubr.f32.gmra.mrb[0].mxu0 %v613
      %v1649 = vpop.f32.mrb[0].mxu0
      %v1650 = vadd.f32 0.0, %v1649
      %v1651 = vpop.f32.mrb[0].mxu0
      %1652 = vmatprep.mubr.f32.mxu0 0.0
      %1653 = vmatmul.mubr.f32.gmra.mrb[0].mxu0 %v616
      %v1654 = vpop.f32.mrb[0].mxu0
      %v1655 = vadd.f32 0.0, %v1654
      %v1656 = vpop.f32.mrb[0].mxu0
      %1657 = vmatprep.mubr.f32.mxu0 0.0
      %1658 = vmatmul.mubr.f32.gmra.mrb[0].mxu0 %v619
      %v1659 = vpop.f32.mrb[0].mxu0
      %v1660 = vadd.f32 0.0, %v1659
      %v1661 = vpop.f32.mrb[0].mxu0
      %1662 = vmatprep.mubr.f32.mxu0 0.0
      %1663 = vmatmul.mubr.f32.gmra.mrb[0].mxu0 %v622
      %v1664 = vpop.f32.mrb[0].mxu0
      %v1665 = vadd.f32 0.0, %v1664
      %v1666 = vpop.f32.mrb[0].mxu0
      %1667 = vmatprep.mubr.f32.mxu0 0.0
      %1668 = vmatmul.mubr.f32.gmra.mrb[0].mxu0 %v625
      %v1669 = vpop.f32.mrb[0].mxu0
      %v1670 = vadd.f32 0.0, %v1669
      %v1671 = vpop.f32.mrb[0].mxu0
      %1672 = vmatprep.mubr.f32.mxu0 0.0
      %1673 = vmatmul.mubr.f32.gmra.mrb[0].mxu0 %v628
      %v1674 = vpop.f32.mrb[0].mxu0
      %v1675 = vadd.f32 0.0, %v1674
      %v1676 = vpop.f32.mrb[0].mxu0
      %1677 = vmatprep.mubr.f32.mxu0 0.0
      %1678 = vmatmul.mubr.f32.gmra.mrb[0].mxu0 %v631
      %v1679 = vpop.f32.mrb[0].mxu0
      %v1680 = vadd.f32 0.0, %v1679
      %v1681 = vpop.f32.mrb[0].mxu0
      %1682 = vmatprep.mubr.f32.mxu0 0.0
      %1683 = vmatmul.mubr.f32.gmra.mrb[0].mxu0 %v1581
      %v1684 = vpop.f32.mrb[0].mxu0
      %v1685 = vadd.f32 0.0, %v1684
      %v1686 = vpop.f32.mrb[0].mxu0
      %1687 = vdwg.mxu0
      %v1688 = vadd.f32 %v1572, %v1650
      %v1689 = vadd.f32 %v1573, %v1655
      %v1690 = vadd.f32 %v1574, %v1660
      %v1691 = vadd.f32 %v1575, %v1665
      %v1692 = vadd.f32 %v1576, %v1670
      %v1693 = vadd.f32 %v1577, %v1675
      %v1694 = vadd.f32 %v1578, %v1680
      %v1695 = vadd.f32 %v1579, %v1685
      %v1697 = vrot.slane %v540, 1
      %v1698 = vrot.slane %v541, 1
      %v1699 = vsel %vm875, %v1697, %v1698
      %v1700 = vsel %vm608, %v1699, 0
      %1702 = vmatprep.subr.mxu0 0.0
      %1703 = vmatpush1.msra.mxu0 %v504
      %1704 = vmatprep.subr.mxu0 0.0
      %1705 = vmatpush1.msra.mxu0 0.0
      %1706 = vmatprep.subr.mxu0 0.0
      %1707 = vmatpush1.msra.mxu0 0.0
      %1708 = vmatprep.subr.mxu0 0.0
      %1709 = vmatpush1.msra.mxu0 0.0
      %1710 = vmatprep.subr.mxu0 0.0
      %1711 = vmatpush1.msra.mxu0 0.0
      %1712 = vmatprep.subr.mxu0 0.0
      %1713 = vmatpush1.msra.mxu0 0.0
      %1714 = vmatprep.subr.mxu0 0.0
      %1715 = vmatpush1.msra.mxu0 0.0
      %1716 = vmatprep.subr.mxu0 0.0
      %1717 = vmatpush1.msra.mxu0 0.0
      %1718 = vmatprep.subr.mxu0 0.0
      %1719 = vmatpush1.msra.mxu0 0.0
      %1720 = vmatprep.subr.mxu0 0.0
      %1721 = vmatpush1.msra.mxu0 0.0
      %1722 = vmatprep.subr.mxu0 0.0
      %1723 = vmatpush1.msra.mxu0 0.0
      %1724 = vmatprep.subr.mxu0 0.0
      %1725 = vmatpush1.msra.mxu0 0.0
      %1726 = vmatprep.subr.mxu0 0.0
      %1727 = vmatpush1.msra.mxu0 0.0
      %1728 = vmatprep.subr.mxu0 0.0
      %1729 = vmatpush1.msra.mxu0 0.0
      %1730 = vmatprep.subr.mxu0 0.0
      %1731 = vmatpush1.msra.mxu0 0.0
      %1732 = vmatprep.subr.mxu0 0.0
      %1733 = vmatpush1.msra.mxu0 0.0
      %1734 = vmatprep.subr.mxu0 0.0
      %1735 = vmatpush1.msra.mxu0 0.0
      %1736 = vmatprep.subr.mxu0 0.0
      %1737 = vmatpush1.msra.mxu0 0.0
      %1738 = vmatprep.subr.mxu0 0.0
      %1739 = vmatpush1.msra.mxu0 0.0
      %1740 = vmatprep.subr.mxu0 0.0
      %1741 = vmatpush1.msra.mxu0 0.0
      %1742 = vmatprep.subr.mxu0 0.0
      %1743 = vmatpush1.msra.mxu0 0.0
      %1744 = vmatprep.subr.mxu0 0.0
      %1745 = vmatpush1.msra.mxu0 0.0
      %1746 = vmatprep.subr.mxu0 0.0
      %1747 = vmatpush1.msra.mxu0 0.0
      %1748 = vmatprep.subr.mxu0 0.0
      %1749 = vmatpush1.msra.mxu0 0.0
      %1750 = vmatprep.subr.mxu0 0.0
      %1751 = vmatpush1.msra.mxu0 0.0
      %1752 = vmatprep.subr.mxu0 0.0
      %1753 = vmatpush1.msra.mxu0 0.0
      %1754 = vmatprep.subr.mxu0 0.0
      %1755 = vmatpush1.msra.mxu0 0.0
      %1756 = vmatprep.subr.mxu0 0.0
      %1757 = vmatpush1.msra.mxu0 0.0
      %1758 = vmatprep.subr.mxu0 0.0
      %1759 = vmatpush1.msra.mxu0 0.0
      %1760 = vmatprep.subr.mxu0 0.0
      %1761 = vmatpush1.msra.mxu0 0.0
      %1762 = vmatprep.subr.mxu0 0.0
      %1763 = vmatpush1.msra.mxu0 0.0
      %1764 = vmatprep.subr.mxu0 0.0
      %1765 = vmatpush1.msra.mxu0 0.0
      %1766 = vmatprep.mubr.f32.mxu0 0.0
      %1767 = vmatmul.mubr.f32.gmra.mrb[0].mxu0 %v902
      %v1768 = vpop.f32.mrb[0].mxu0
      %v1769 = vadd.f32 0.0, %v1768
      %v1770 = vpop.f32.mrb[0].mxu0
      %1771 = vmatprep.mubr.f32.mxu0 0.0
      %1772 = vmatmul.mubr.f32.gmra.mrb[0].mxu0 %v904
      %v1773 = vpop.f32.mrb[0].mxu0
      %v1774 = vadd.f32 0.0, %v1773
      %v1775 = vpop.f32.mrb[0].mxu0
      %1776 = vmatprep.mubr.f32.mxu0 0.0
      %1777 = vmatmul.mubr.f32.gmra.mrb[0].mxu0 %v906
      %v1778 = vpop.f32.mrb[0].mxu0
      %v1779 = vadd.f32 0.0, %v1778
      %v1780 = vpop.f32.mrb[0].mxu0
      %1781 = vmatprep.mubr.f32.mxu0 0.0
      %1782 = vmatmul.mubr.f32.gmra.mrb[0].mxu0 %v908
      %v1783 = vpop.f32.mrb[0].mxu0
      %v1784 = vadd.f32 0.0, %v1783
      %v1785 = vpop.f32.mrb[0].mxu0
      %1786 = vmatprep.mubr.f32.mxu0 0.0
      %1787 = vmatmul.mubr.f32.gmra.mrb[0].mxu0 %v910
      %v1788 = vpop.f32.mrb[0].mxu0
      %v1789 = vadd.f32 0.0, %v1788
      %v1790 = vpop.f32.mrb[0].mxu0
      %1791 = vmatprep.mubr.f32.mxu0 0.0
      %1792 = vmatmul.mubr.f32.gmra.mrb[0].mxu0 %v912
      %v1793 = vpop.f32.mrb[0].mxu0
      %v1794 = vadd.f32 0.0, %v1793
      %v1795 = vpop.f32.mrb[0].mxu0
      %1796 = vmatprep.mubr.f32.mxu0 0.0
      %1797 = vmatmul.mubr.f32.gmra.mrb[0].mxu0 %v914
      %v1798 = vpop.f32.mrb[0].mxu0
      %v1799 = vadd.f32 0.0, %v1798
      %v1800 = vpop.f32.mrb[0].mxu0
      %1801 = vmatprep.mubr.f32.mxu0 0.0
      %1802 = vmatmul.mubr.f32.gmra.mrb[0].mxu0 %v1700
      %v1803 = vpop.f32.mrb[0].mxu0
      %v1804 = vadd.f32 0.0, %v1803
      %v1805 = vpop.f32.mrb[0].mxu0
      %1806 = vdwg.mxu0
      %v1807 = vadd.f32 %v1688, %v1769
      %v1808 = vadd.f32 %v1689, %v1774
      %v1809 = vadd.f32 %v1690, %v1779
      %v1810 = vadd.f32 %v1691, %v1784
      %v1811 = vadd.f32 %v1692, %v1789
      %v1812 = vadd.f32 %v1693, %v1794
      %v1813 = vadd.f32 %v1694, %v1799
      %v1814 = vadd.f32 %v1695, %v1804
      %v1816 = vlaneseq
      %v1817 = vshrl.u32 %v1816, 7
      %v1818 = vsub.s32 0, %v1817
      %v1819 = vrot.slane %v505, %v1818
      %v1821 = vadd.f32 %v1807, %v1819
      %v1822 = vadd.f32 %v1808, %v1819
      %v1823 = vadd.f32 %v1809, %v1819
      %v1824 = vadd.f32 %v1810, %v1819
      %v1825 = vadd.f32 %v1811, %v1819
      %v1826 = vadd.f32 %v1812, %v1819
      %v1827 = vadd.f32 %v1813, %v1819
      %v1828 = vadd.f32 %v1814, %v1819
      %v1829 = vmax.f32 %v1821, 0.0
      %v1830 = vmax.f32 %v1822, 0.0
      %v1831 = vmax.f32 %v1823, 0.0
      %v1832 = vmax.f32 %v1824, 0.0
      %v1833 = vmax.f32 %v1825, 0.0
      %v1834 = vmax.f32 %v1826, 0.0
      %v1835 = vmax.f32 %v1827, 0.0
      %v1836 = vmax.f32 %v1828, 0.0
      %v1837 = vld [vmem:[%s477] sm:$0xf]
      %v1838 = vld [vmem:[%s477 + $0x4] sm:$0x1]
      %v1839 = vld [vmem:[%s477 + $0x8] sm:$0xf]
      %v1840 = vld [vmem:[%s477 + $0xc] sm:$0x1]
      %v1841 = vld [vmem:[%s477 + $0x10] sm:$0xf]
      %v1842 = vld [vmem:[%s477 + $0x14] sm:$0x1]
      %v1843 = vld [vmem:[%s477 + $0x18] sm:$0xf]
      %v1844 = vld [vmem:[%s477 + $0x1c] sm:$0x1]
      %v1845 = vld [vmem:[%s477 + $0x20] sm:$0xf]
      %v1846 = vld [vmem:[%s477 + $0x24] sm:$0x1]
      %v1847 = vld [vmem:[%s477 + $0x28] sm:$0xf]
      %v1848 = vld [vmem:[%s477 + $0x2c] sm:$0x1]
      %v1849 = vld [vmem:[%s477 + $0x30] sm:$0xf]
      %v1850 = vld [vmem:[%s477 + $0x34] sm:$0x1]
      %v1851 = vld [vmem:[%s477 + $0x38] sm:$0xf]
      %v1852 = vld [vmem:[%s477 + $0x3c] sm:$0x1]
      %v1853 = vld [vmem:[%s477 + $0x40] sm:$0xf]
      %v1854 = vld [vmem:[%s477 + $0x44] sm:$0x1]
      %v1855 = vunpack.c.l.bf16 %v1837
      %v1856 = vunpack.c.l.bf16 %v1838
      %v1857 = vunpack.c.l.bf16 %v1839
      %v1858 = vunpack.c.l.bf16 %v1840
      %v1859 = vunpack.c.l.bf16 %v1841
      %v1860 = vunpack.c.l.bf16 %v1842
      %v1861 = vunpack.c.l.bf16 %v1843
      %v1862 = vunpack.c.l.bf16 %v1844
      %v1863 = vunpack.c.l.bf16 %v1845
      %v1864 = vunpack.c.l.bf16 %v1846
      %v1865 = vunpack.c.l.bf16 %v1847
      %v1866 = vunpack.c.l.bf16 %v1848
      %v1867 = vunpack.c.l.bf16 %v1849
      %v1868 = vunpack.c.l.bf16 %v1850
      %v1869 = vunpack.c.l.bf16 %v1851
      %v1870 = vunpack.c.l.bf16 %v1852
      %v1871 = vunpack.c.l.bf16 %v1853
      %v1872 = vunpack.c.l.bf16 %v1854
      %v1873 = vld [vmem:[%s482] sm:$0xf]
      %v1874 = vld [vmem:[%s482 + $0x8] sm:$0xf]
      %v1875 = vld [vmem:[%s482 + $0x10] sm:$0xf]
      %v1876 = vld [vmem:[%s482 + $0x18] sm:$0xf]
      %v1877 = vld [vmem:[%s482 + $0x20] sm:$0xf]
      %v1878 = vld [vmem:[%s482 + $0x28] sm:$0xf]
      %v1879 = vld [vmem:[%s482 + $0x30] sm:$0xf]
      %v1880 = vld [vmem:[%s482 + $0x38] sm:$0xf]
      %v1881 = vld [vmem:[%s482 + $0x40] sm:$0xf]
      %v1882 = vunpack.c.l.bf16 %v1873
      %v1883 = vunpack.c.l.bf16 %v1874
      %v1884 = vunpack.c.l.bf16 %v1875
      %v1885 = vunpack.c.l.bf16 %v1876
      %v1886 = vunpack.c.l.bf16 %v1877
      %v1887 = vunpack.c.l.bf16 %v1878
      %v1888 = vunpack.c.l.bf16 %v1879
      %v1889 = vunpack.c.l.bf16 %v1880
      %v1890 = vunpack.c.l.bf16 %v1881
      %v1891 = vld [vmem:[%s487] sm:$0xf]
      %v1892 = vld [vmem:[%s487 + $0x4] sm:$0x1]
      %v1893 = vld [vmem:[%s487 + $0x8] sm:$0xf]
      %v1894 = vld [vmem:[%s487 + $0xc] sm:$0x1]
      %v1895 = vld [vmem:[%s487 + $0x10] sm:$0xf]
      %v1896 = vld [vmem:[%s487 + $0x14] sm:$0x1]
      %v1897 = vld [vmem:[%s487 + $0x18] sm:$0xf]
      %v1898 = vld [vmem:[%s487 + $0x1c] sm:$0x1]
      %v1899 = vld [vmem:[%s487 + $0x20] sm:$0xf]
      %v1900 = vld [vmem:[%s487 + $0x24] sm:$0x1]
      %v1901 = vld [vmem:[%s487 + $0x28] sm:$0xf]
      %v1902 = vld [vmem:[%s487 + $0x2c] sm:$0x1]
      %v1903 = vld [vmem:[%s487 + $0x30] sm:$0xf]
      %v1904 = vld [vmem:[%s487 + $0x34] sm:$0x1]
      %v1905 = vld [vmem:[%s487 + $0x38] sm:$0xf]
      %v1906 = vld [vmem:[%s487 + $0x3c] sm:$0x1]
      %v1907 = vunpack.c.l.bf16 %v1891
      %v1908 = vunpack.c.l.bf16 %v1892
      %v1909 = vunpack.c.l.bf16 %v1893
      %v1910 = vunpack.c.l.bf16 %v1894
      %v1911 = vunpack.c.l.bf16 %v1895
      %v1912 = vunpack.c.l.bf16 %v1896
      %v1913 = vunpack.c.l.bf16 %v1897
      %v1914 = vunpack.c.l.bf16 %v1898
      %v1915 = vunpack.c.l.bf16 %v1899
      %v1916 = vunpack.c.l.bf16 %v1900
      %v1917 = vunpack.c.l.bf16 %v1901
      %v1918 = vunpack.c.l.bf16 %v1902
      %v1919 = vunpack.c.l.bf16 %v1903
      %v1920 = vunpack.c.l.bf16 %v1904
      %v1921 = vunpack.c.l.bf16 %v1905
      %v1922 = vunpack.c.l.bf16 %v1906
      %v1923 = vld [vmem:[%s492] sm:$0xf]
      %v1924 = vld [vmem:[%s492 + $0x8] sm:$0xf]
      %v1925 = vld [vmem:[%s492 + $0x10] sm:$0xf]
      %v1926 = vld [vmem:[%s492 + $0x18] sm:$0xf]
      %v1927 = vld [vmem:[%s492 + $0x20] sm:$0xf]
      %v1928 = vld [vmem:[%s492 + $0x28] sm:$0xf]
      %v1929 = vld [vmem:[%s492 + $0x30] sm:$0xf]
      %v1930 = vld [vmem:[%s492 + $0x38] sm:$0xf]
      %v1931 = vunpack.c.l.bf16 %v1923
      %v1932 = vunpack.c.l.bf16 %v1924
      %v1933 = vunpack.c.l.bf16 %v1925
      %v1934 = vunpack.c.l.bf16 %v1926
      %v1935 = vunpack.c.l.bf16 %v1927
      %v1936 = vunpack.c.l.bf16 %v1928
      %v1937 = vunpack.c.l.bf16 %v1929
      %v1938 = vunpack.c.l.bf16 %v1930
      %v1940 = vsel %vm608, %v1882, 0
      %v1943 = vsel %vm608, %v1883, 0
      %v1946 = vsel %vm608, %v1884, 0
      %v1949 = vsel %vm608, %v1885, 0
      %v1952 = vsel %vm608, %v1886, 0
      %v1955 = vsel %vm608, %v1887, 0
      %v1958 = vsel %vm608, %v1888, 0
      %v1961 = vsel %vm608, %v1889, 0
      %1963 = vmatprep.subr.mxu0 0.0
      %1964 = vmatpush1.msra.mxu0 %v497
      %1965 = vmatprep.subr.mxu0 0.0
      %1966 = vmatpush1.msra.mxu0 0.0
      %1967 = vmatprep.subr.mxu0 0.0
      %1968 = vmatpush1.msra.mxu0 0.0
      %1969 = vmatprep.subr.mxu0 0.0
      %1970 = vmatpush1.msra.mxu0 0.0
      %1971 = vmatprep.subr.mxu0 0.0
      %1972 = vmatpush1.msra.mxu0 0.0
      %1973 = vmatprep.subr.mxu0 0.0
      %1974 = vmatpush1.msra.mxu0 0.0
      %1975 = vmatprep.subr.mxu0 0.0
      %1976 = vmatpush1.msra.mxu0 0.0
      %1977 = vmatprep.subr.mxu0 0.0
      %1978 = vmatpush1.msra.mxu0 0.0
      %1979 = vmatprep.subr.mxu0 0.0
      %1980 = vmatpush1.msra.mxu0 0.0
      %1981 = vmatprep.subr.mxu0 0.0
      %1982 = vmatpush1.msra.mxu0 0.0
      %1983 = vmatprep.subr.mxu0 0.0
      %1984 = vmatpush1.msra.mxu0 0.0
      %1985 = vmatprep.subr.mxu0 0.0
      %1986 = vmatpush1.msra.mxu0 0.0
      %1987 = vmatprep.subr.mxu0 0.0
      %1988 = vmatpush1.msra.mxu0 0.0
      %1989 = vmatprep.subr.mxu0 0.0
      %1990 = vmatpush1.msra.mxu0 0.0
      %1991 = vmatprep.subr.mxu0 0.0
      %1992 = vmatpush1.msra.mxu0 0.0
      %1993 = vmatprep.subr.mxu0 0.0
      %1994 = vmatpush1.msra.mxu0 0.0
      %1995 = vmatprep.subr.mxu0 0.0
      %1996 = vmatpush1.msra.mxu0 0.0
      %1997 = vmatprep.subr.mxu0 0.0
      %1998 = vmatpush1.msra.mxu0 0.0
      %1999 = vmatprep.subr.mxu0 0.0
      %2000 = vmatpush1.msra.mxu0 0.0
      %2001 = vmatprep.subr.mxu0 0.0
      %2002 = vmatpush1.msra.mxu0 0.0
      %2003 = vmatprep.subr.mxu0 0.0
      %2004 = vmatpush1.msra.mxu0 0.0
      %2005 = vmatprep.subr.mxu0 0.0
      %2006 = vmatpush1.msra.mxu0 0.0
      %2007 = vmatprep.subr.mxu0 0.0
      %2008 = vmatpush1.msra.mxu0 0.0
      %2009 = vmatprep.subr.mxu0 0.0
      %2010 = vmatpush1.msra.mxu0 0.0
      %2011 = vmatprep.subr.mxu0 0.0
      %2012 = vmatpush1.msra.mxu0 0.0
      %2013 = vmatprep.subr.mxu0 0.0
      %2014 = vmatpush1.msra.mxu0 0.0
      %2015 = vmatprep.subr.mxu0 0.0
      %2016 = vmatpush1.msra.mxu0 0.0
      %2017 = vmatprep.subr.mxu0 0.0
      %2018 = vmatpush1.msra.mxu0 0.0
      %2019 = vmatprep.subr.mxu0 0.0
      %2020 = vmatpush1.msra.mxu0 0.0
      %2021 = vmatprep.subr.mxu0 0.0
      %2022 = vmatpush1.msra.mxu0 0.0
      %2023 = vmatprep.subr.mxu0 0.0
      %2024 = vmatpush1.msra.mxu0 0.0
      %2025 = vmatprep.subr.mxu0 0.0
      %2026 = vmatpush1.msra.mxu0 0.0
      %2027 = vmatprep.mubr.f32.mxu0 0.0
      %2028 = vmatmul.mubr.f32.gmra.mrb[0].mxu0 %v1940
      %v2029 = vpop.f32.mrb[0].mxu0
      %v2030 = vadd.f32 0.0, %v2029
      %v2031 = vpop.f32.mrb[0].mxu0
      %2032 = vmatprep.mubr.f32.mxu0 0.0
      %2033 = vmatmul.mubr.f32.gmra.mrb[0].mxu0 %v1943
      %v2034 = vpop.f32.mrb[0].mxu0
      %v2035 = vadd.f32 0.0, %v2034
      %v2036 = vpop.f32.mrb[0].mxu0
      %2037 = vmatprep.mubr.f32.mxu0 0.0
      %2038 = vmatmul.mubr.f32.gmra.mrb[0].mxu0 %v1946
      %v2039 = vpop.f32.mrb[0].mxu0
      %v2040 = vadd.f32 0.0, %v2039
      %v2041 = vpop.f32.mrb[0].mxu0
      %2042 = vmatprep.mubr.f32.mxu0 0.0
      %2043 = vmatmul.mubr.f32.gmra.mrb[0].mxu0 %v1949
      %v2044 = vpop.f32.mrb[0].mxu0
      %v2045 = vadd.f32 0.0, %v2044
      %v2046 = vpop.f32.mrb[0].mxu0
      %2047 = vmatprep.mubr.f32.mxu0 0.0
      %2048 = vmatmul.mubr.f32.gmra.mrb[0].mxu0 %v1952
      %v2049 = vpop.f32.mrb[0].mxu0
      %v2050 = vadd.f32 0.0, %v2049
      %v2051 = vpop.f32.mrb[0].mxu0
      %2052 = vmatprep.mubr.f32.mxu0 0.0
      %2053 = vmatmul.mubr.f32.gmra.mrb[0].mxu0 %v1955
      %v2054 = vpop.f32.mrb[0].mxu0
      %v2055 = vadd.f32 0.0, %v2054
      %v2056 = vpop.f32.mrb[0].mxu0
      %2057 = vmatprep.mubr.f32.mxu0 0.0
      %2058 = vmatmul.mubr.f32.gmra.mrb[0].mxu0 %v1958
      %v2059 = vpop.f32.mrb[0].mxu0
      %v2060 = vadd.f32 0.0, %v2059
      %v2061 = vpop.f32.mrb[0].mxu0
      %2062 = vmatprep.mubr.f32.mxu0 0.0
      %2063 = vmatmul.mubr.f32.gmra.mrb[0].mxu0 %v1961
      %v2064 = vpop.f32.mrb[0].mxu0
      %v2065 = vadd.f32 0.0, %v2064
      %v2066 = vpop.f32.mrb[0].mxu0
      %2067 = vdwg.mxu0
      %v2069 = vsel %vm608, %v1855, 0
      %v2072 = vsel %vm608, %v1857, 0
      %v2075 = vsel %vm608, %v1859, 0
      %v2078 = vsel %vm608, %v1861, 0
      %v2081 = vsel %vm608, %v1863, 0
      %v2084 = vsel %vm608, %v1865, 0
      %v2087 = vsel %vm608, %v1867, 0
      %v2090 = vsel %vm608, %v1869, 0
      %2092 = vmatprep.subr.mxu0 0.0
      %2093 = vmatpush1.msra.mxu0 %v496
      %2094 = vmatprep.subr.mxu0 0.0
      %2095 = vmatpush1.msra.mxu0 0.0
      %2096 = vmatprep.subr.mxu0 0.0
      %2097 = vmatpush1.msra.mxu0 0.0
      %2098 = vmatprep.subr.mxu0 0.0
      %2099 = vmatpush1.msra.mxu0 0.0
      %2100 = vmatprep.subr.mxu0 0.0
      %2101 = vmatpush1.msra.mxu0 0.0
      %2102 = vmatprep.subr.mxu0 0.0
      %2103 = vmatpush1.msra.mxu0 0.0
      %2104 = vmatprep.subr.mxu0 0.0
      %2105 = vmatpush1.msra.mxu0 0.0
      %2106 = vmatprep.subr.mxu0 0.0
      %2107 = vmatpush1.msra.mxu0 0.0
      %2108 = vmatprep.subr.mxu0 0.0
      %2109 = vmatpush1.msra.mxu0 0.0
      %2110 = vmatprep.subr.mxu0 0.0
      %2111 = vmatpush1.msra.mxu0 0.0
      %2112 = vmatprep.subr.mxu0 0.0
      %2113 = vmatpush1.msra.mxu0 0.0
      %2114 = vmatprep.subr.mxu0 0.0
      %2115 = vmatpush1.msra.mxu0 0.0
      %2116 = vmatprep.subr.mxu0 0.0
      %2117 = vmatpush1.msra.mxu0 0.0
      %2118 = vmatprep.subr.mxu0 0.0
      %2119 = vmatpush1.msra.mxu0 0.0
      %2120 = vmatprep.subr.mxu0 0.0
      %2121 = vmatpush1.msra.mxu0 0.0
      %2122 = vmatprep.subr.mxu0 0.0
      %2123 = vmatpush1.msra.mxu0 0.0
      %2124 = vmatprep.subr.mxu0 0.0
      %2125 = vmatpush1.msra.mxu0 0.0
      %2126 = vmatprep.subr.mxu0 0.0
      %2127 = vmatpush1.msra.mxu0 0.0
      %2128 = vmatprep.subr.mxu0 0.0
      %2129 = vmatpush1.msra.mxu0 0.0
      %2130 = vmatprep.subr.mxu0 0.0
      %2131 = vmatpush1.msra.mxu0 0.0
      %2132 = vmatprep.subr.mxu0 0.0
      %2133 = vmatpush1.msra.mxu0 0.0
      %2134 = vmatprep.subr.mxu0 0.0
      %2135 = vmatpush1.msra.mxu0 0.0
      %2136 = vmatprep.subr.mxu0 0.0
      %2137 = vmatpush1.msra.mxu0 0.0
      %2138 = vmatprep.subr.mxu0 0.0
      %2139 = vmatpush1.msra.mxu0 0.0
      %2140 = vmatprep.subr.mxu0 0.0
      %2141 = vmatpush1.msra.mxu0 0.0
      %2142 = vmatprep.subr.mxu0 0.0
      %2143 = vmatpush1.msra.mxu0 0.0
      %2144 = vmatprep.subr.mxu0 0.0
      %2145 = vmatpush1.msra.mxu0 0.0
      %2146 = vmatprep.subr.mxu0 0.0
      %2147 = vmatpush1.msra.mxu0 0.0
      %2148 = vmatprep.subr.mxu0 0.0
      %2149 = vmatpush1.msra.mxu0 0.0
      %2150 = vmatprep.subr.mxu0 0.0
      %2151 = vmatpush1.msra.mxu0 0.0
      %2152 = vmatprep.subr.mxu0 0.0
      %2153 = vmatpush1.msra.mxu0 0.0
      %2154 = vmatprep.subr.mxu0 0.0
      %2155 = vmatpush1.msra.mxu0 0.0
      %2156 = vmatprep.mubr.f32.mxu0 0.0
      %2157 = vmatmul.mubr.f32.gmra.mrb[0].mxu0 %v2069
      %v2158 = vpop.f32.mrb[0].mxu0
      %v2159 = vadd.f32 %v2030, %v2158
      %v2160 = vpop.f32.mrb[0].mxu0
      %2161 = vmatprep.mubr.f32.mxu0 0.0
      %2162 = vmatmul.mubr.f32.gmra.mrb[0].mxu0 %v2072
      %v2163 = vpop.f32.mrb[0].mxu0
      %v2164 = vadd.f32 %v2035, %v2163
      %v2165 = vpop.f32.mrb[0].mxu0
      %2166 = vmatprep.mubr.f32.mxu0 0.0
      %2167 = vmatmul.mubr.f32.gmra.mrb[0].mxu0 %v2075
      %v2168 = vpop.f32.mrb[0].mxu0
      %v2169 = vadd.f32 %v2040, %v2168
      %v2170 = vpop.f32.mrb[0].mxu0
      %2171 = vmatprep.mubr.f32.mxu0 0.0
      %2172 = vmatmul.mubr.f32.gmra.mrb[0].mxu0 %v2078
      %v2173 = vpop.f32.mrb[0].mxu0
      %v2174 = vadd.f32 %v2045, %v2173
      %v2175 = vpop.f32.mrb[0].mxu0
      %2176 = vmatprep.mubr.f32.mxu0 0.0
      %2177 = vmatmul.mubr.f32.gmra.mrb[0].mxu0 %v2081
      %v2178 = vpop.f32.mrb[0].mxu0
      %v2179 = vadd.f32 %v2050, %v2178
      %v2180 = vpop.f32.mrb[0].mxu0
      %2181 = vmatprep.mubr.f32.mxu0 0.0
      %2182 = vmatmul.mubr.f32.gmra.mrb[0].mxu0 %v2084
      %v2183 = vpop.f32.mrb[0].mxu0
      %v2184 = vadd.f32 %v2055, %v2183
      %v2185 = vpop.f32.mrb[0].mxu0
      %2186 = vmatprep.mubr.f32.mxu0 0.0
      %2187 = vmatmul.mubr.f32.gmra.mrb[0].mxu0 %v2087
      %v2188 = vpop.f32.mrb[0].mxu0
      %v2189 = vadd.f32 %v2060, %v2188
      %v2190 = vpop.f32.mrb[0].mxu0
      %2191 = vmatprep.mubr.f32.mxu0 0.0
      %2192 = vmatmul.mubr.f32.gmra.mrb[0].mxu0 %v2090
      %v2193 = vpop.f32.mrb[0].mxu0
      %v2194 = vadd.f32 %v2065, %v2193
      %v2195 = vpop.f32.mrb[0].mxu0
      %2196 = vdwg.mxu0
      %v2205 = vrot.slane %v1855, 1
      %v2206 = vrot.slane %v1856, 1
      %v2207 = vsel %vm875, %v2205, %v2206
      %v2208 = vrot.slane %v1857, 1
      %v2209 = vrot.slane %v1858, 1
      %v2210 = vsel %vm875, %v2208, %v2209
      %v2211 = vrot.slane %v1859, 1
      %v2212 = vrot.slane %v1860, 1
      %v2213 = vsel %vm875, %v2211, %v2212
      %v2214 = vrot.slane %v1861, 1
      %v2215 = vrot.slane %v1862, 1
      %v2216 = vsel %vm875, %v2214, %v2215
      %v2217 = vrot.slane %v1863, 1
      %v2218 = vrot.slane %v1864, 1
      %v2219 = vsel %vm875, %v2217, %v2218
      %v2220 = vrot.slane %v1865, 1
      %v2221 = vrot.slane %v1866, 1
      %v2222 = vsel %vm875, %v2220, %v2221
      %v2223 = vrot.slane %v1867, 1
      %v2224 = vrot.slane %v1868, 1
      %v2225 = vsel %vm875, %v2223, %v2224
      %v2226 = vrot.slane %v1869, 1
      %v2227 = vrot.slane %v1870, 1
      %v2228 = vsel %vm875, %v2226, %v2227
      %v2229 = vsel %vm608, %v2207, 0
      %v2231 = vsel %vm608, %v2210, 0
      %v2233 = vsel %vm608, %v2213, 0
      %v2235 = vsel %vm608, %v2216, 0
      %v2237 = vsel %vm608, %v2219, 0
      %v2239 = vsel %vm608, %v2222, 0
      %v2241 = vsel %vm608, %v2225, 0
      %v2243 = vsel %vm608, %v2228, 0
      %2245 = vmatprep.subr.mxu0 0.0
      %2246 = vmatpush1.msra.mxu0 %v498
      %2247 = vmatprep.subr.mxu0 0.0
      %2248 = vmatpush1.msra.mxu0 0.0
      %2249 = vmatprep.subr.mxu0 0.0
      %2250 = vmatpush1.msra.mxu0 0.0
      %2251 = vmatprep.subr.mxu0 0.0
      %2252 = vmatpush1.msra.mxu0 0.0
      %2253 = vmatprep.subr.mxu0 0.0
      %2254 = vmatpush1.msra.mxu0 0.0
      %2255 = vmatprep.subr.mxu0 0.0
      %2256 = vmatpush1.msra.mxu0 0.0
      %2257 = vmatprep.subr.mxu0 0.0
      %2258 = vmatpush1.msra.mxu0 0.0
      %2259 = vmatprep.subr.mxu0 0.0
      %2260 = vmatpush1.msra.mxu0 0.0
      %2261 = vmatprep.subr.mxu0 0.0
      %2262 = vmatpush1.msra.mxu0 0.0
      %2263 = vmatprep.subr.mxu0 0.0
      %2264 = vmatpush1.msra.mxu0 0.0
      %2265 = vmatprep.subr.mxu0 0.0
      %2266 = vmatpush1.msra.mxu0 0.0
      %2267 = vmatprep.subr.mxu0 0.0
      %2268 = vmatpush1.msra.mxu0 0.0
      %2269 = vmatprep.subr.mxu0 0.0
      %2270 = vmatpush1.msra.mxu0 0.0
      %2271 = vmatprep.subr.mxu0 0.0
      %2272 = vmatpush1.msra.mxu0 0.0
      %2273 = vmatprep.subr.mxu0 0.0
      %2274 = vmatpush1.msra.mxu0 0.0
      %2275 = vmatprep.subr.mxu0 0.0
      %2276 = vmatpush1.msra.mxu0 0.0
      %2277 = vmatprep.subr.mxu0 0.0
      %2278 = vmatpush1.msra.mxu0 0.0
      %2279 = vmatprep.subr.mxu0 0.0
      %2280 = vmatpush1.msra.mxu0 0.0
      %2281 = vmatprep.subr.mxu0 0.0
      %2282 = vmatpush1.msra.mxu0 0.0
      %2283 = vmatprep.subr.mxu0 0.0
      %2284 = vmatpush1.msra.mxu0 0.0
      %2285 = vmatprep.subr.mxu0 0.0
      %2286 = vmatpush1.msra.mxu0 0.0
      %2287 = vmatprep.subr.mxu0 0.0
      %2288 = vmatpush1.msra.mxu0 0.0
      %2289 = vmatprep.subr.mxu0 0.0
      %2290 = vmatpush1.msra.mxu0 0.0
      %2291 = vmatprep.subr.mxu0 0.0
      %2292 = vmatpush1.msra.mxu0 0.0
      %2293 = vmatprep.subr.mxu0 0.0
      %2294 = vmatpush1.msra.mxu0 0.0
      %2295 = vmatprep.subr.mxu0 0.0
      %2296 = vmatpush1.msra.mxu0 0.0
      %2297 = vmatprep.subr.mxu0 0.0
      %2298 = vmatpush1.msra.mxu0 0.0
      %2299 = vmatprep.subr.mxu0 0.0
      %2300 = vmatpush1.msra.mxu0 0.0
      %2301 = vmatprep.subr.mxu0 0.0
      %2302 = vmatpush1.msra.mxu0 0.0
      %2303 = vmatprep.subr.mxu0 0.0
      %2304 = vmatpush1.msra.mxu0 0.0
      %2305 = vmatprep.subr.mxu0 0.0
      %2306 = vmatpush1.msra.mxu0 0.0
      %2307 = vmatprep.subr.mxu0 0.0
      %2308 = vmatpush1.msra.mxu0 0.0
      %2309 = vmatprep.mubr.f32.mxu0 0.0
      %2310 = vmatmul.mubr.f32.gmra.mrb[0].mxu0 %v2229
      %v2311 = vpop.f32.mrb[0].mxu0
      %v2312 = vadd.f32 0.0, %v2311
      %v2313 = vpop.f32.mrb[0].mxu0
      %2314 = vmatprep.mubr.f32.mxu0 0.0
      %2315 = vmatmul.mubr.f32.gmra.mrb[0].mxu0 %v2231
      %v2316 = vpop.f32.mrb[0].mxu0
      %v2317 = vadd.f32 0.0, %v2316
      %v2318 = vpop.f32.mrb[0].mxu0
      %2319 = vmatprep.mubr.f32.mxu0 0.0
      %2320 = vmatmul.mubr.f32.gmra.mrb[0].mxu0 %v2233
      %v2321 = vpop.f32.mrb[0].mxu0
      %v2322 = vadd.f32 0.0, %v2321
      %v2323 = vpop.f32.mrb[0].mxu0
      %2324 = vmatprep.mubr.f32.mxu0 0.0
      %2325 = vmatmul.mubr.f32.gmra.mrb[0].mxu0 %v2235
      %v2326 = vpop.f32.mrb[0].mxu0
      %v2327 = vadd.f32 0.0, %v2326
      %v2328 = vpop.f32.mrb[0].mxu0
      %2329 = vmatprep.mubr.f32.mxu0 0.0
      %2330 = vmatmul.mubr.f32.gmra.mrb[0].mxu0 %v2237
      %v2331 = vpop.f32.mrb[0].mxu0
      %v2332 = vadd.f32 0.0, %v2331
      %v2333 = vpop.f32.mrb[0].mxu0
      %2334 = vmatprep.mubr.f32.mxu0 0.0
      %2335 = vmatmul.mubr.f32.gmra.mrb[0].mxu0 %v2239
      %v2336 = vpop.f32.mrb[0].mxu0
      %v2337 = vadd.f32 0.0, %v2336
      %v2338 = vpop.f32.mrb[0].mxu0
      %2339 = vmatprep.mubr.f32.mxu0 0.0
      %2340 = vmatmul.mubr.f32.gmra.mrb[0].mxu0 %v2241
      %v2341 = vpop.f32.mrb[0].mxu0
      %v2342 = vadd.f32 0.0, %v2341
      %v2343 = vpop.f32.mrb[0].mxu0
      %2344 = vmatprep.mubr.f32.mxu0 0.0
      %2345 = vmatmul.mubr.f32.gmra.mrb[0].mxu0 %v2243
      %v2346 = vpop.f32.mrb[0].mxu0
      %v2347 = vadd.f32 0.0, %v2346
      %v2348 = vpop.f32.mrb[0].mxu0
      %2349 = vdwg.mxu0
      %v2350 = vadd.f32 %v2159, %v2312
      %v2351 = vadd.f32 %v2164, %v2317
      %v2352 = vadd.f32 %v2169, %v2322
      %v2353 = vadd.f32 %v2174, %v2327
      %v2354 = vadd.f32 %v2179, %v2332
      %v2355 = vadd.f32 %v2184, %v2337
      %v2356 = vadd.f32 %v2189, %v2342
      %v2357 = vadd.f32 %v2194, %v2347
      %v2359 = vsel %vm608, %v1907, 0
      %v2362 = vsel %vm608, %v1909, 0
      %v2365 = vsel %vm608, %v1911, 0
      %v2368 = vsel %vm608, %v1913, 0
      %v2371 = vsel %vm608, %v1915, 0
      %v2374 = vsel %vm608, %v1917, 0
      %v2377 = vsel %vm608, %v1919, 0
      %v2380 = vsel %vm608, %v1921, 0
      %2382 = vmatprep.subr.mxu0 0.0
      %2383 = vmatpush1.msra.mxu0 %v499
      %2384 = vmatprep.subr.mxu0 0.0
      %2385 = vmatpush1.msra.mxu0 0.0
      %2386 = vmatprep.subr.mxu0 0.0
      %2387 = vmatpush1.msra.mxu0 0.0
      %2388 = vmatprep.subr.mxu0 0.0
      %2389 = vmatpush1.msra.mxu0 0.0
      %2390 = vmatprep.subr.mxu0 0.0
      %2391 = vmatpush1.msra.mxu0 0.0
      %2392 = vmatprep.subr.mxu0 0.0
      %2393 = vmatpush1.msra.mxu0 0.0
      %2394 = vmatprep.subr.mxu0 0.0
      %2395 = vmatpush1.msra.mxu0 0.0
      %2396 = vmatprep.subr.mxu0 0.0
      %2397 = vmatpush1.msra.mxu0 0.0
      %2398 = vmatprep.subr.mxu0 0.0
      %2399 = vmatpush1.msra.mxu0 0.0
      %2400 = vmatprep.subr.mxu0 0.0
      %2401 = vmatpush1.msra.mxu0 0.0
      %2402 = vmatprep.subr.mxu0 0.0
      %2403 = vmatpush1.msra.mxu0 0.0
      %2404 = vmatprep.subr.mxu0 0.0
      %2405 = vmatpush1.msra.mxu0 0.0
      %2406 = vmatprep.subr.mxu0 0.0
      %2407 = vmatpush1.msra.mxu0 0.0
      %2408 = vmatprep.subr.mxu0 0.0
      %2409 = vmatpush1.msra.mxu0 0.0
      %2410 = vmatprep.subr.mxu0 0.0
      %2411 = vmatpush1.msra.mxu0 0.0
      %2412 = vmatprep.subr.mxu0 0.0
      %2413 = vmatpush1.msra.mxu0 0.0
      %2414 = vmatprep.subr.mxu0 0.0
      %2415 = vmatpush1.msra.mxu0 0.0
      %2416 = vmatprep.subr.mxu0 0.0
      %2417 = vmatpush1.msra.mxu0 0.0
      %2418 = vmatprep.subr.mxu0 0.0
      %2419 = vmatpush1.msra.mxu0 0.0
      %2420 = vmatprep.subr.mxu0 0.0
      %2421 = vmatpush1.msra.mxu0 0.0
      %2422 = vmatprep.subr.mxu0 0.0
      %2423 = vmatpush1.msra.mxu0 0.0
      %2424 = vmatprep.subr.mxu0 0.0
      %2425 = vmatpush1.msra.mxu0 0.0
      %2426 = vmatprep.subr.mxu0 0.0
      %2427 = vmatpush1.msra.mxu0 0.0
      %2428 = vmatprep.subr.mxu0 0.0
      %2429 = vmatpush1.msra.mxu0 0.0
      %2430 = vmatprep.subr.mxu0 0.0
      %2431 = vmatpush1.msra.mxu0 0.0
      %2432 = vmatprep.subr.mxu0 0.0
      %2433 = vmatpush1.msra.mxu0 0.0
      %2434 = vmatprep.subr.mxu0 0.0
      %2435 = vmatpush1.msra.mxu0 0.0
      %2436 = vmatprep.subr.mxu0 0.0
      %2437 = vmatpush1.msra.mxu0 0.0
      %2438 = vmatprep.subr.mxu0 0.0
      %2439 = vmatpush1.msra.mxu0 0.0
      %2440 = vmatprep.subr.mxu0 0.0
      %2441 = vmatpush1.msra.mxu0 0.0
      %2442 = vmatprep.subr.mxu0 0.0
      %2443 = vmatpush1.msra.mxu0 0.0
      %2444 = vmatprep.subr.mxu0 0.0
      %2445 = vmatpush1.msra.mxu0 0.0
      %2446 = vmatprep.mubr.f32.mxu0 0.0
      %2447 = vmatmul.mubr.f32.gmra.mrb[0].mxu0 %v2359
      %v2448 = vpop.f32.mrb[0].mxu0
      %v2449 = vadd.f32 0.0, %v2448
      %v2450 = vpop.f32.mrb[0].mxu0
      %2451 = vmatprep.mubr.f32.mxu0 0.0
      %2452 = vmatmul.mubr.f32.gmra.mrb[0].mxu0 %v2362
      %v2453 = vpop.f32.mrb[0].mxu0
      %v2454 = vadd.f32 0.0, %v2453
      %v2455 = vpop.f32.mrb[0].mxu0
      %2456 = vmatprep.mubr.f32.mxu0 0.0
      %2457 = vmatmul.mubr.f32.gmra.mrb[0].mxu0 %v2365
      %v2458 = vpop.f32.mrb[0].mxu0
      %v2459 = vadd.f32 0.0, %v2458
      %v2460 = vpop.f32.mrb[0].mxu0
      %2461 = vmatprep.mubr.f32.mxu0 0.0
      %2462 = vmatmul.mubr.f32.gmra.mrb[0].mxu0 %v2368
      %v2463 = vpop.f32.mrb[0].mxu0
      %v2464 = vadd.f32 0.0, %v2463
      %v2465 = vpop.f32.mrb[0].mxu0
      %2466 = vmatprep.mubr.f32.mxu0 0.0
      %2467 = vmatmul.mubr.f32.gmra.mrb[0].mxu0 %v2371
      %v2468 = vpop.f32.mrb[0].mxu0
      %v2469 = vadd.f32 0.0, %v2468
      %v2470 = vpop.f32.mrb[0].mxu0
      %2471 = vmatprep.mubr.f32.mxu0 0.0
      %2472 = vmatmul.mubr.f32.gmra.mrb[0].mxu0 %v2374
      %v2473 = vpop.f32.mrb[0].mxu0
      %v2474 = vadd.f32 0.0, %v2473
      %v2475 = vpop.f32.mrb[0].mxu0
      %2476 = vmatprep.mubr.f32.mxu0 0.0
      %2477 = vmatmul.mubr.f32.gmra.mrb[0].mxu0 %v2377
      %v2478 = vpop.f32.mrb[0].mxu0
      %v2479 = vadd.f32 0.0, %v2478
      %v2480 = vpop.f32.mrb[0].mxu0
      %2481 = vmatprep.mubr.f32.mxu0 0.0
      %2482 = vmatmul.mubr.f32.gmra.mrb[0].mxu0 %v2380
      %v2483 = vpop.f32.mrb[0].mxu0
      %v2484 = vadd.f32 0.0, %v2483
      %v2485 = vpop.f32.mrb[0].mxu0
      %2486 = vdwg.mxu0
      %v2487 = vadd.f32 %v2350, %v2449
      %v2488 = vadd.f32 %v2351, %v2454
      %v2489 = vadd.f32 %v2352, %v2459
      %v2490 = vadd.f32 %v2353, %v2464
      %v2491 = vadd.f32 %v2354, %v2469
      %v2492 = vadd.f32 %v2355, %v2474
      %v2493 = vadd.f32 %v2356, %v2479
      %v2494 = vadd.f32 %v2357, %v2484
      %v2496 = vsel %vm608, %v1931, 0
      %v2499 = vsel %vm608, %v1932, 0
      %v2502 = vsel %vm608, %v1933, 0
      %v2505 = vsel %vm608, %v1934, 0
      %v2508 = vsel %vm608, %v1935, 0
      %v2511 = vsel %vm608, %v1936, 0
      %v2514 = vsel %vm608, %v1937, 0
      %v2517 = vsel %vm608, %v1938, 0
      %2519 = vmatprep.subr.mxu0 0.0
      %2520 = vmatpush1.msra.mxu0 %v500
      %2521 = vmatprep.subr.mxu0 0.0
      %2522 = vmatpush1.msra.mxu0 0.0
      %2523 = vmatprep.subr.mxu0 0.0
      %2524 = vmatpush1.msra.mxu0 0.0
      %2525 = vmatprep.subr.mxu0 0.0
      %2526 = vmatpush1.msra.mxu0 0.0
      %2527 = vmatprep.subr.mxu0 0.0
      %2528 = vmatpush1.msra.mxu0 0.0
      %2529 = vmatprep.subr.mxu0 0.0
      %2530 = vmatpush1.msra.mxu0 0.0
      %2531 = vmatprep.subr.mxu0 0.0
      %2532 = vmatpush1.msra.mxu0 0.0
      %2533 = vmatprep.subr.mxu0 0.0
      %2534 = vmatpush1.msra.mxu0 0.0
      %2535 = vmatprep.subr.mxu0 0.0
      %2536 = vmatpush1.msra.mxu0 0.0
      %2537 = vmatprep.subr.mxu0 0.0
      %2538 = vmatpush1.msra.mxu0 0.0
      %2539 = vmatprep.subr.mxu0 0.0
      %2540 = vmatpush1.msra.mxu0 0.0
      %2541 = vmatprep.subr.mxu0 0.0
      %2542 = vmatpush1.msra.mxu0 0.0
      %2543 = vmatprep.subr.mxu0 0.0
      %2544 = vmatpush1.msra.mxu0 0.0
      %2545 = vmatprep.subr.mxu0 0.0
      %2546 = vmatpush1.msra.mxu0 0.0
      %2547 = vmatprep.subr.mxu0 0.0
      %2548 = vmatpush1.msra.mxu0 0.0
      %2549 = vmatprep.subr.mxu0 0.0
      %2550 = vmatpush1.msra.mxu0 0.0
      %2551 = vmatprep.subr.mxu0 0.0
      %2552 = vmatpush1.msra.mxu0 0.0
      %2553 = vmatprep.subr.mxu0 0.0
      %2554 = vmatpush1.msra.mxu0 0.0
      %2555 = vmatprep.subr.mxu0 0.0
      %2556 = vmatpush1.msra.mxu0 0.0
      %2557 = vmatprep.subr.mxu0 0.0
      %2558 = vmatpush1.msra.mxu0 0.0
      %2559 = vmatprep.subr.mxu0 0.0
      %2560 = vmatpush1.msra.mxu0 0.0
      %2561 = vmatprep.subr.mxu0 0.0
      %2562 = vmatpush1.msra.mxu0 0.0
      %2563 = vmatprep.subr.mxu0 0.0
      %2564 = vmatpush1.msra.mxu0 0.0
      %2565 = vmatprep.subr.mxu0 0.0
      %2566 = vmatpush1.msra.mxu0 0.0
      %2567 = vmatprep.subr.mxu0 0.0
      %2568 = vmatpush1.msra.mxu0 0.0
      %2569 = vmatprep.subr.mxu0 0.0
      %2570 = vmatpush1.msra.mxu0 0.0
      %2571 = vmatprep.subr.mxu0 0.0
      %2572 = vmatpush1.msra.mxu0 0.0
      %2573 = vmatprep.subr.mxu0 0.0
      %2574 = vmatpush1.msra.mxu0 0.0
      %2575 = vmatprep.subr.mxu0 0.0
      %2576 = vmatpush1.msra.mxu0 0.0
      %2577 = vmatprep.subr.mxu0 0.0
      %2578 = vmatpush1.msra.mxu0 0.0
      %2579 = vmatprep.subr.mxu0 0.0
      %2580 = vmatpush1.msra.mxu0 0.0
      %2581 = vmatprep.subr.mxu0 0.0
      %2582 = vmatpush1.msra.mxu0 0.0
      %2583 = vmatprep.mubr.f32.mxu0 0.0
      %2584 = vmatmul.mubr.f32.gmra.mrb[0].mxu0 %v2496
      %v2585 = vpop.f32.mrb[0].mxu0
      %v2586 = vadd.f32 0.0, %v2585
      %v2587 = vpop.f32.mrb[0].mxu0
      %2588 = vmatprep.mubr.f32.mxu0 0.0
      %2589 = vmatmul.mubr.f32.gmra.mrb[0].mxu0 %v2499
      %v2590 = vpop.f32.mrb[0].mxu0
      %v2591 = vadd.f32 0.0, %v2590
      %v2592 = vpop.f32.mrb[0].mxu0
      %2593 = vmatprep.mubr.f32.mxu0 0.0
      %2594 = vmatmul.mubr.f32.gmra.mrb[0].mxu0 %v2502
      %v2595 = vpop.f32.mrb[0].mxu0
      %v2596 = vadd.f32 0.0, %v2595
      %v2597 = vpop.f32.mrb[0].mxu0
      %2598 = vmatprep.mubr.f32.mxu0 0.0
      %2599 = vmatmul.mubr.f32.gmra.mrb[0].mxu0 %v2505
      %v2600 = vpop.f32.mrb[0].mxu0
      %v2601 = vadd.f32 0.0, %v2600
      %v2602 = vpop.f32.mrb[0].mxu0
      %2603 = vmatprep.mubr.f32.mxu0 0.0
      %2604 = vmatmul.mubr.f32.gmra.mrb[0].mxu0 %v2508
      %v2605 = vpop.f32.mrb[0].mxu0
      %v2606 = vadd.f32 0.0, %v2605
      %v2607 = vpop.f32.mrb[0].mxu0
      %2608 = vmatprep.mubr.f32.mxu0 0.0
      %2609 = vmatmul.mubr.f32.gmra.mrb[0].mxu0 %v2511
      %v2610 = vpop.f32.mrb[0].mxu0
      %v2611 = vadd.f32 0.0, %v2610
      %v2612 = vpop.f32.mrb[0].mxu0
      %2613 = vmatprep.mubr.f32.mxu0 0.0
      %2614 = vmatmul.mubr.f32.gmra.mrb[0].mxu0 %v2514
      %v2615 = vpop.f32.mrb[0].mxu0
      %v2616 = vadd.f32 0.0, %v2615
      %v2617 = vpop.f32.mrb[0].mxu0
      %2618 = vmatprep.mubr.f32.mxu0 0.0
      %2619 = vmatmul.mubr.f32.gmra.mrb[0].mxu0 %v2517
      %v2620 = vpop.f32.mrb[0].mxu0
      %v2621 = vadd.f32 0.0, %v2620
      %v2622 = vpop.f32.mrb[0].mxu0
      %2623 = vdwg.mxu0
      %v2624 = vadd.f32 %v2487, %v2586
      %v2625 = vadd.f32 %v2488, %v2591
      %v2626 = vadd.f32 %v2489, %v2596
      %v2627 = vadd.f32 %v2490, %v2601
      %v2628 = vadd.f32 %v2491, %v2606
      %v2629 = vadd.f32 %v2492, %v2611
      %v2630 = vadd.f32 %v2493, %v2616
      %v2631 = vadd.f32 %v2494, %v2621
      %v2640 = vrot.slane %v1907, 1
      %v2641 = vrot.slane %v1908, 1
      %v2642 = vsel %vm875, %v2640, %v2641
      %v2643 = vrot.slane %v1909, 1
      %v2644 = vrot.slane %v1910, 1
      %v2645 = vsel %vm875, %v2643, %v2644
      %v2646 = vrot.slane %v1911, 1
      %v2647 = vrot.slane %v1912, 1
      %v2648 = vsel %vm875, %v2646, %v2647
      %v2649 = vrot.slane %v1913, 1
      %v2650 = vrot.slane %v1914, 1
      %v2651 = vsel %vm875, %v2649, %v2650
      %v2652 = vrot.slane %v1915, 1
      %v2653 = vrot.slane %v1916, 1
      %v2654 = vsel %vm875, %v2652, %v2653
      %v2655 = vrot.slane %v1917, 1
      %v2656 = vrot.slane %v1918, 1
      %v2657 = vsel %vm875, %v2655, %v2656
      %v2658 = vrot.slane %v1919, 1
      %v2659 = vrot.slane %v1920, 1
      %v2660 = vsel %vm875, %v2658, %v2659
      %v2661 = vrot.slane %v1921, 1
      %v2662 = vrot.slane %v1922, 1
      %v2663 = vsel %vm875, %v2661, %v2662
      %v2664 = vsel %vm608, %v2642, 0
      %v2666 = vsel %vm608, %v2645, 0
      %v2668 = vsel %vm608, %v2648, 0
      %v2670 = vsel %vm608, %v2651, 0
      %v2672 = vsel %vm608, %v2654, 0
      %v2674 = vsel %vm608, %v2657, 0
      %v2676 = vsel %vm608, %v2660, 0
      %v2678 = vsel %vm608, %v2663, 0
      %2680 = vmatprep.subr.mxu0 0.0
      %2681 = vmatpush1.msra.mxu0 %v501
      %2682 = vmatprep.subr.mxu0 0.0
      %2683 = vmatpush1.msra.mxu0 0.0
      %2684 = vmatprep.subr.mxu0 0.0
      %2685 = vmatpush1.msra.mxu0 0.0
      %2686 = vmatprep.subr.mxu0 0.0
      %2687 = vmatpush1.msra.mxu0 0.0
      %2688 = vmatprep.subr.mxu0 0.0
      %2689 = vmatpush1.msra.mxu0 0.0
      %2690 = vmatprep.subr.mxu0 0.0
      %2691 = vmatpush1.msra.mxu0 0.0
      %2692 = vmatprep.subr.mxu0 0.0
      %2693 = vmatpush1.msra.mxu0 0.0
      %2694 = vmatprep.subr.mxu0 0.0
      %2695 = vmatpush1.msra.mxu0 0.0
      %2696 = vmatprep.subr.mxu0 0.0
      %2697 = vmatpush1.msra.mxu0 0.0
      %2698 = vmatprep.subr.mxu0 0.0
      %2699 = vmatpush1.msra.mxu0 0.0
      %2700 = vmatprep.subr.mxu0 0.0
      %2701 = vmatpush1.msra.mxu0 0.0
      %2702 = vmatprep.subr.mxu0 0.0
      %2703 = vmatpush1.msra.mxu0 0.0
      %2704 = vmatprep.subr.mxu0 0.0
      %2705 = vmatpush1.msra.mxu0 0.0
      %2706 = vmatprep.subr.mxu0 0.0
      %2707 = vmatpush1.msra.mxu0 0.0
      %2708 = vmatprep.subr.mxu0 0.0
      %2709 = vmatpush1.msra.mxu0 0.0
      %2710 = vmatprep.subr.mxu0 0.0
      %2711 = vmatpush1.msra.mxu0 0.0
      %2712 = vmatprep.subr.mxu0 0.0
      %2713 = vmatpush1.msra.mxu0 0.0
      %2714 = vmatprep.subr.mxu0 0.0
      %2715 = vmatpush1.msra.mxu0 0.0
      %2716 = vmatprep.subr.mxu0 0.0
      %2717 = vmatpush1.msra.mxu0 0.0
      %2718 = vmatprep.subr.mxu0 0.0
      %2719 = vmatpush1.msra.mxu0 0.0
      %2720 = vmatprep.subr.mxu0 0.0
      %2721 = vmatpush1.msra.mxu0 0.0
      %2722 = vmatprep.subr.mxu0 0.0
      %2723 = vmatpush1.msra.mxu0 0.0
      %2724 = vmatprep.subr.mxu0 0.0
      %2725 = vmatpush1.msra.mxu0 0.0
      %2726 = vmatprep.subr.mxu0 0.0
      %2727 = vmatpush1.msra.mxu0 0.0
      %2728 = vmatprep.subr.mxu0 0.0
      %2729 = vmatpush1.msra.mxu0 0.0
      %2730 = vmatprep.subr.mxu0 0.0
      %2731 = vmatpush1.msra.mxu0 0.0
      %2732 = vmatprep.subr.mxu0 0.0
      %2733 = vmatpush1.msra.mxu0 0.0
      %2734 = vmatprep.subr.mxu0 0.0
      %2735 = vmatpush1.msra.mxu0 0.0
      %2736 = vmatprep.subr.mxu0 0.0
      %2737 = vmatpush1.msra.mxu0 0.0
      %2738 = vmatprep.subr.mxu0 0.0
      %2739 = vmatpush1.msra.mxu0 0.0
      %2740 = vmatprep.subr.mxu0 0.0
      %2741 = vmatpush1.msra.mxu0 0.0
      %2742 = vmatprep.subr.mxu0 0.0
      %2743 = vmatpush1.msra.mxu0 0.0
      %2744 = vmatprep.mubr.f32.mxu0 0.0
      %2745 = vmatmul.mubr.f32.gmra.mrb[0].mxu0 %v2664
      %v2746 = vpop.f32.mrb[0].mxu0
      %v2747 = vadd.f32 0.0, %v2746
      %v2748 = vpop.f32.mrb[0].mxu0
      %2749 = vmatprep.mubr.f32.mxu0 0.0
      %2750 = vmatmul.mubr.f32.gmra.mrb[0].mxu0 %v2666
      %v2751 = vpop.f32.mrb[0].mxu0
      %v2752 = vadd.f32 0.0, %v2751
      %v2753 = vpop.f32.mrb[0].mxu0
      %2754 = vmatprep.mubr.f32.mxu0 0.0
      %2755 = vmatmul.mubr.f32.gmra.mrb[0].mxu0 %v2668
      %v2756 = vpop.f32.mrb[0].mxu0
      %v2757 = vadd.f32 0.0, %v2756
      %v2758 = vpop.f32.mrb[0].mxu0
      %2759 = vmatprep.mubr.f32.mxu0 0.0
      %2760 = vmatmul.mubr.f32.gmra.mrb[0].mxu0 %v2670
      %v2761 = vpop.f32.mrb[0].mxu0
      %v2762 = vadd.f32 0.0, %v2761
      %v2763 = vpop.f32.mrb[0].mxu0
      %2764 = vmatprep.mubr.f32.mxu0 0.0
      %2765 = vmatmul.mubr.f32.gmra.mrb[0].mxu0 %v2672
      %v2766 = vpop.f32.mrb[0].mxu0
      %v2767 = vadd.f32 0.0, %v2766
      %v2768 = vpop.f32.mrb[0].mxu0
      %2769 = vmatprep.mubr.f32.mxu0 0.0
      %2770 = vmatmul.mubr.f32.gmra.mrb[0].mxu0 %v2674
      %v2771 = vpop.f32.mrb[0].mxu0
      %v2772 = vadd.f32 0.0, %v2771
      %v2773 = vpop.f32.mrb[0].mxu0
      %2774 = vmatprep.mubr.f32.mxu0 0.0
      %2775 = vmatmul.mubr.f32.gmra.mrb[0].mxu0 %v2676
      %v2776 = vpop.f32.mrb[0].mxu0
      %v2777 = vadd.f32 0.0, %v2776
      %v2778 = vpop.f32.mrb[0].mxu0
      %2779 = vmatprep.mubr.f32.mxu0 0.0
      %2780 = vmatmul.mubr.f32.gmra.mrb[0].mxu0 %v2678
      %v2781 = vpop.f32.mrb[0].mxu0
      %v2782 = vadd.f32 0.0, %v2781
      %v2783 = vpop.f32.mrb[0].mxu0
      %2784 = vdwg.mxu0
      %v2785 = vadd.f32 %v2624, %v2747
      %v2786 = vadd.f32 %v2625, %v2752
      %v2787 = vadd.f32 %v2626, %v2757
      %v2788 = vadd.f32 %v2627, %v2762
      %v2789 = vadd.f32 %v2628, %v2767
      %v2790 = vadd.f32 %v2629, %v2772
      %v2791 = vadd.f32 %v2630, %v2777
      %v2792 = vadd.f32 %v2631, %v2782
      %v2794 = vsel %vm608, %v1871, 0
      %2796 = vmatprep.subr.mxu0 0.0
      %2797 = vmatpush1.msra.mxu0 %v502
      %2798 = vmatprep.subr.mxu0 0.0
      %2799 = vmatpush1.msra.mxu0 0.0
      %2800 = vmatprep.subr.mxu0 0.0
      %2801 = vmatpush1.msra.mxu0 0.0
      %2802 = vmatprep.subr.mxu0 0.0
      %2803 = vmatpush1.msra.mxu0 0.0
      %2804 = vmatprep.subr.mxu0 0.0
      %2805 = vmatpush1.msra.mxu0 0.0
      %2806 = vmatprep.subr.mxu0 0.0
      %2807 = vmatpush1.msra.mxu0 0.0
      %2808 = vmatprep.subr.mxu0 0.0
      %2809 = vmatpush1.msra.mxu0 0.0
      %2810 = vmatprep.subr.mxu0 0.0
      %2811 = vmatpush1.msra.mxu0 0.0
      %2812 = vmatprep.subr.mxu0 0.0
      %2813 = vmatpush1.msra.mxu0 0.0
      %2814 = vmatprep.subr.mxu0 0.0
      %2815 = vmatpush1.msra.mxu0 0.0
      %2816 = vmatprep.subr.mxu0 0.0
      %2817 = vmatpush1.msra.mxu0 0.0
      %2818 = vmatprep.subr.mxu0 0.0
      %2819 = vmatpush1.msra.mxu0 0.0
      %2820 = vmatprep.subr.mxu0 0.0
      %2821 = vmatpush1.msra.mxu0 0.0
      %2822 = vmatprep.subr.mxu0 0.0
      %2823 = vmatpush1.msra.mxu0 0.0
      %2824 = vmatprep.subr.mxu0 0.0
      %2825 = vmatpush1.msra.mxu0 0.0
      %2826 = vmatprep.subr.mxu0 0.0
      %2827 = vmatpush1.msra.mxu0 0.0
      %2828 = vmatprep.subr.mxu0 0.0
      %2829 = vmatpush1.msra.mxu0 0.0
      %2830 = vmatprep.subr.mxu0 0.0
      %2831 = vmatpush1.msra.mxu0 0.0
      %2832 = vmatprep.subr.mxu0 0.0
      %2833 = vmatpush1.msra.mxu0 0.0
      %2834 = vmatprep.subr.mxu0 0.0
      %2835 = vmatpush1.msra.mxu0 0.0
      %2836 = vmatprep.subr.mxu0 0.0
      %2837 = vmatpush1.msra.mxu0 0.0
      %2838 = vmatprep.subr.mxu0 0.0
      %2839 = vmatpush1.msra.mxu0 0.0
      %2840 = vmatprep.subr.mxu0 0.0
      %2841 = vmatpush1.msra.mxu0 0.0
      %2842 = vmatprep.subr.mxu0 0.0
      %2843 = vmatpush1.msra.mxu0 0.0
      %2844 = vmatprep.subr.mxu0 0.0
      %2845 = vmatpush1.msra.mxu0 0.0
      %2846 = vmatprep.subr.mxu0 0.0
      %2847 = vmatpush1.msra.mxu0 0.0
      %2848 = vmatprep.subr.mxu0 0.0
      %2849 = vmatpush1.msra.mxu0 0.0
      %2850 = vmatprep.subr.mxu0 0.0
      %2851 = vmatpush1.msra.mxu0 0.0
      %2852 = vmatprep.subr.mxu0 0.0
      %2853 = vmatpush1.msra.mxu0 0.0
      %2854 = vmatprep.subr.mxu0 0.0
      %2855 = vmatpush1.msra.mxu0 0.0
      %2856 = vmatprep.subr.mxu0 0.0
      %2857 = vmatpush1.msra.mxu0 0.0
      %2858 = vmatprep.subr.mxu0 0.0
      %2859 = vmatpush1.msra.mxu0 0.0
      %2860 = vmatprep.mubr.f32.mxu0 0.0
      %2861 = vmatmul.mubr.f32.gmra.mrb[0].mxu0 %v2072
      %v2862 = vpop.f32.mrb[0].mxu0
      %v2863 = vadd.f32 0.0, %v2862
      %v2864 = vpop.f32.mrb[0].mxu0
      %2865 = vmatprep.mubr.f32.mxu0 0.0
      %2866 = vmatmul.mubr.f32.gmra.mrb[0].mxu0 %v2075
      %v2867 = vpop.f32.mrb[0].mxu0
      %v2868 = vadd.f32 0.0, %v2867
      %v2869 = vpop.f32.mrb[0].mxu0
      %2870 = vmatprep.mubr.f32.mxu0 0.0
      %2871 = vmatmul.mubr.f32.gmra.mrb[0].mxu0 %v2078
      %v2872 = vpop.f32.mrb[0].mxu0
      %v2873 = vadd.f32 0.0, %v2872
      %v2874 = vpop.f32.mrb[0].mxu0
      %2875 = vmatprep.mubr.f32.mxu0 0.0
      %2876 = vmatmul.mubr.f32.gmra.mrb[0].mxu0 %v2081
      %v2877 = vpop.f32.mrb[0].mxu0
      %v2878 = vadd.f32 0.0, %v2877
      %v2879 = vpop.f32.mrb[0].mxu0
      %2880 = vmatprep.mubr.f32.mxu0 0.0
      %2881 = vmatmul.mubr.f32.gmra.mrb[0].mxu0 %v2084
      %v2882 = vpop.f32.mrb[0].mxu0
      %v2883 = vadd.f32 0.0, %v2882
      %v2884 = vpop.f32.mrb[0].mxu0
      %2885 = vmatprep.mubr.f32.mxu0 0.0
      %2886 = vmatmul.mubr.f32.gmra.mrb[0].mxu0 %v2087
      %v2887 = vpop.f32.mrb[0].mxu0
      %v2888 = vadd.f32 0.0, %v2887
      %v2889 = vpop.f32.mrb[0].mxu0
      %2890 = vmatprep.mubr.f32.mxu0 0.0
      %2891 = vmatmul.mubr.f32.gmra.mrb[0].mxu0 %v2090
      %v2892 = vpop.f32.mrb[0].mxu0
      %v2893 = vadd.f32 0.0, %v2892
      %v2894 = vpop.f32.mrb[0].mxu0
      %2895 = vmatprep.mubr.f32.mxu0 0.0
      %2896 = vmatmul.mubr.f32.gmra.mrb[0].mxu0 %v2794
      %v2897 = vpop.f32.mrb[0].mxu0
      %v2898 = vadd.f32 0.0, %v2897
      %v2899 = vpop.f32.mrb[0].mxu0
      %2900 = vdwg.mxu0
      %v2901 = vadd.f32 %v2785, %v2863
      %v2902 = vadd.f32 %v2786, %v2868
      %v2903 = vadd.f32 %v2787, %v2873
      %v2904 = vadd.f32 %v2788, %v2878
      %v2905 = vadd.f32 %v2789, %v2883
      %v2906 = vadd.f32 %v2790, %v2888
      %v2907 = vadd.f32 %v2791, %v2893
      %v2908 = vadd.f32 %v2792, %v2898
      %v2910 = vsel %vm608, %v1890, 0
      %2912 = vmatprep.subr.mxu0 0.0
      %2913 = vmatpush1.msra.mxu0 %v503
      %2914 = vmatprep.subr.mxu0 0.0
      %2915 = vmatpush1.msra.mxu0 0.0
      %2916 = vmatprep.subr.mxu0 0.0
      %2917 = vmatpush1.msra.mxu0 0.0
      %2918 = vmatprep.subr.mxu0 0.0
      %2919 = vmatpush1.msra.mxu0 0.0
      %2920 = vmatprep.subr.mxu0 0.0
      %2921 = vmatpush1.msra.mxu0 0.0
      %2922 = vmatprep.subr.mxu0 0.0
      %2923 = vmatpush1.msra.mxu0 0.0
      %2924 = vmatprep.subr.mxu0 0.0
      %2925 = vmatpush1.msra.mxu0 0.0
      %2926 = vmatprep.subr.mxu0 0.0
      %2927 = vmatpush1.msra.mxu0 0.0
      %2928 = vmatprep.subr.mxu0 0.0
      %2929 = vmatpush1.msra.mxu0 0.0
      %2930 = vmatprep.subr.mxu0 0.0
      %2931 = vmatpush1.msra.mxu0 0.0
      %2932 = vmatprep.subr.mxu0 0.0
      %2933 = vmatpush1.msra.mxu0 0.0
      %2934 = vmatprep.subr.mxu0 0.0
      %2935 = vmatpush1.msra.mxu0 0.0
      %2936 = vmatprep.subr.mxu0 0.0
      %2937 = vmatpush1.msra.mxu0 0.0
      %2938 = vmatprep.subr.mxu0 0.0
      %2939 = vmatpush1.msra.mxu0 0.0
      %2940 = vmatprep.subr.mxu0 0.0
      %2941 = vmatpush1.msra.mxu0 0.0
      %2942 = vmatprep.subr.mxu0 0.0
      %2943 = vmatpush1.msra.mxu0 0.0
      %2944 = vmatprep.subr.mxu0 0.0
      %2945 = vmatpush1.msra.mxu0 0.0
      %2946 = vmatprep.subr.mxu0 0.0
      %2947 = vmatpush1.msra.mxu0 0.0
      %2948 = vmatprep.subr.mxu0 0.0
      %2949 = vmatpush1.msra.mxu0 0.0
      %2950 = vmatprep.subr.mxu0 0.0
      %2951 = vmatpush1.msra.mxu0 0.0
      %2952 = vmatprep.subr.mxu0 0.0
      %2953 = vmatpush1.msra.mxu0 0.0
      %2954 = vmatprep.subr.mxu0 0.0
      %2955 = vmatpush1.msra.mxu0 0.0
      %2956 = vmatprep.subr.mxu0 0.0
      %2957 = vmatpush1.msra.mxu0 0.0
      %2958 = vmatprep.subr.mxu0 0.0
      %2959 = vmatpush1.msra.mxu0 0.0
      %2960 = vmatprep.subr.mxu0 0.0
      %2961 = vmatpush1.msra.mxu0 0.0
      %2962 = vmatprep.subr.mxu0 0.0
      %2963 = vmatpush1.msra.mxu0 0.0
      %2964 = vmatprep.subr.mxu0 0.0
      %2965 = vmatpush1.msra.mxu0 0.0
      %2966 = vmatprep.subr.mxu0 0.0
      %2967 = vmatpush1.msra.mxu0 0.0
      %2968 = vmatprep.subr.mxu0 0.0
      %2969 = vmatpush1.msra.mxu0 0.0
      %2970 = vmatprep.subr.mxu0 0.0
      %2971 = vmatpush1.msra.mxu0 0.0
      %2972 = vmatprep.subr.mxu0 0.0
      %2973 = vmatpush1.msra.mxu0 0.0
      %2974 = vmatprep.subr.mxu0 0.0
      %2975 = vmatpush1.msra.mxu0 0.0
      %2976 = vmatprep.mubr.f32.mxu0 0.0
      %2977 = vmatmul.mubr.f32.gmra.mrb[0].mxu0 %v1943
      %v2978 = vpop.f32.mrb[0].mxu0
      %v2979 = vadd.f32 0.0, %v2978
      %v2980 = vpop.f32.mrb[0].mxu0
      %2981 = vmatprep.mubr.f32.mxu0 0.0
      %2982 = vmatmul.mubr.f32.gmra.mrb[0].mxu0 %v1946
      %v2983 = vpop.f32.mrb[0].mxu0
      %v2984 = vadd.f32 0.0, %v2983
      %v2985 = vpop.f32.mrb[0].mxu0
      %2986 = vmatprep.mubr.f32.mxu0 0.0
      %2987 = vmatmul.mubr.f32.gmra.mrb[0].mxu0 %v1949
      %v2988 = vpop.f32.mrb[0].mxu0
      %v2989 = vadd.f32 0.0, %v2988
      %v2990 = vpop.f32.mrb[0].mxu0
      %2991 = vmatprep.mubr.f32.mxu0 0.0
      %2992 = vmatmul.mubr.f32.gmra.mrb[0].mxu0 %v1952
      %v2993 = vpop.f32.mrb[0].mxu0
      %v2994 = vadd.f32 0.0, %v2993
      %v2995 = vpop.f32.mrb[0].mxu0
      %2996 = vmatprep.mubr.f32.mxu0 0.0
      %2997 = vmatmul.mubr.f32.gmra.mrb[0].mxu0 %v1955
      %v2998 = vpop.f32.mrb[0].mxu0
      %v2999 = vadd.f32 0.0, %v2998
      %v3000 = vpop.f32.mrb[0].mxu0
      %3001 = vmatprep.mubr.f32.mxu0 0.0
      %3002 = vmatmul.mubr.f32.gmra.mrb[0].mxu0 %v1958
      %v3003 = vpop.f32.mrb[0].mxu0
      %v3004 = vadd.f32 0.0, %v3003
      %v3005 = vpop.f32.mrb[0].mxu0
      %3006 = vmatprep.mubr.f32.mxu0 0.0
      %3007 = vmatmul.mubr.f32.gmra.mrb[0].mxu0 %v1961
      %v3008 = vpop.f32.mrb[0].mxu0
      %v3009 = vadd.f32 0.0, %v3008
      %v3010 = vpop.f32.mrb[0].mxu0
      %3011 = vmatprep.mubr.f32.mxu0 0.0
      %3012 = vmatmul.mubr.f32.gmra.mrb[0].mxu0 %v2910
      %v3013 = vpop.f32.mrb[0].mxu0
      %v3014 = vadd.f32 0.0, %v3013
      %v3015 = vpop.f32.mrb[0].mxu0
      %3016 = vdwg.mxu0
      %v3017 = vadd.f32 %v2901, %v2979
      %v3018 = vadd.f32 %v2902, %v2984
      %v3019 = vadd.f32 %v2903, %v2989
      %v3020 = vadd.f32 %v2904, %v2994
      %v3021 = vadd.f32 %v2905, %v2999
      %v3022 = vadd.f32 %v2906, %v3004
      %v3023 = vadd.f32 %v2907, %v3009
      %v3024 = vadd.f32 %v2908, %v3014
      %v3026 = vrot.slane %v1871, 1
      %v3027 = vrot.slane %v1872, 1
      %v3028 = vsel %vm875, %v3026, %v3027
      %v3029 = vsel %vm608, %v3028, 0
      %3031 = vmatprep.subr.mxu0 0.0
      %3032 = vmatpush1.msra.mxu0 %v504
      %3033 = vmatprep.subr.mxu0 0.0
      %3034 = vmatpush1.msra.mxu0 0.0
      %3035 = vmatprep.subr.mxu0 0.0
      %3036 = vmatpush1.msra.mxu0 0.0
      %3037 = vmatprep.subr.mxu0 0.0
      %3038 = vmatpush1.msra.mxu0 0.0
      %3039 = vmatprep.subr.mxu0 0.0
      %3040 = vmatpush1.msra.mxu0 0.0
      %3041 = vmatprep.subr.mxu0 0.0
      %3042 = vmatpush1.msra.mxu0 0.0
      %3043 = vmatprep.subr.mxu0 0.0
      %3044 = vmatpush1.msra.mxu0 0.0
      %3045 = vmatprep.subr.mxu0 0.0
      %3046 = vmatpush1.msra.mxu0 0.0
      %3047 = vmatprep.subr.mxu0 0.0
      %3048 = vmatpush1.msra.mxu0 0.0
      %3049 = vmatprep.subr.mxu0 0.0
      %3050 = vmatpush1.msra.mxu0 0.0
      %3051 = vmatprep.subr.mxu0 0.0
      %3052 = vmatpush1.msra.mxu0 0.0
      %3053 = vmatprep.subr.mxu0 0.0
      %3054 = vmatpush1.msra.mxu0 0.0
      %3055 = vmatprep.subr.mxu0 0.0
      %3056 = vmatpush1.msra.mxu0 0.0
      %3057 = vmatprep.subr.mxu0 0.0
      %3058 = vmatpush1.msra.mxu0 0.0
      %3059 = vmatprep.subr.mxu0 0.0
      %3060 = vmatpush1.msra.mxu0 0.0
      %3061 = vmatprep.subr.mxu0 0.0
      %3062 = vmatpush1.msra.mxu0 0.0
      %3063 = vmatprep.subr.mxu0 0.0
      %3064 = vmatpush1.msra.mxu0 0.0
      %3065 = vmatprep.subr.mxu0 0.0
      %3066 = vmatpush1.msra.mxu0 0.0
      %3067 = vmatprep.subr.mxu0 0.0
      %3068 = vmatpush1.msra.mxu0 0.0
      %3069 = vmatprep.subr.mxu0 0.0
      %3070 = vmatpush1.msra.mxu0 0.0
      %3071 = vmatprep.subr.mxu0 0.0
      %3072 = vmatpush1.msra.mxu0 0.0
      %3073 = vmatprep.subr.mxu0 0.0
      %3074 = vmatpush1.msra.mxu0 0.0
      %3075 = vmatprep.subr.mxu0 0.0
      %3076 = vmatpush1.msra.mxu0 0.0
      %3077 = vmatprep.subr.mxu0 0.0
      %3078 = vmatpush1.msra.mxu0 0.0
      %3079 = vmatprep.subr.mxu0 0.0
      %3080 = vmatpush1.msra.mxu0 0.0
      %3081 = vmatprep.subr.mxu0 0.0
      %3082 = vmatpush1.msra.mxu0 0.0
      %3083 = vmatprep.subr.mxu0 0.0
      %3084 = vmatpush1.msra.mxu0 0.0
      %3085 = vmatprep.subr.mxu0 0.0
      %3086 = vmatpush1.msra.mxu0 0.0
      %3087 = vmatprep.subr.mxu0 0.0
      %3088 = vmatpush1.msra.mxu0 0.0
      %3089 = vmatprep.subr.mxu0 0.0
      %3090 = vmatpush1.msra.mxu0 0.0
      %3091 = vmatprep.subr.mxu0 0.0
      %3092 = vmatpush1.msra.mxu0 0.0
      %3093 = vmatprep.subr.mxu0 0.0
      %3094 = vmatpush1.msra.mxu0 0.0
      %3095 = vmatprep.mubr.f32.mxu0 0.0
      %3096 = vmatmul.mubr.f32.gmra.mrb[0].mxu0 %v2231
      %v3097 = vpop.f32.mrb[0].mxu0
      %v3098 = vadd.f32 0.0, %v3097
      %v3099 = vpop.f32.mrb[0].mxu0
      %3100 = vmatprep.mubr.f32.mxu0 0.0
      %3101 = vmatmul.mubr.f32.gmra.mrb[0].mxu0 %v2233
      %v3102 = vpop.f32.mrb[0].mxu0
      %v3103 = vadd.f32 0.0, %v3102
      %v3104 = vpop.f32.mrb[0].mxu0
      %3105 = vmatprep.mubr.f32.mxu0 0.0
      %3106 = vmatmul.mubr.f32.gmra.mrb[0].mxu0 %v2235
      %v3107 = vpop.f32.mrb[0].mxu0
      %v3108 = vadd.f32 0.0, %v3107
      %v3109 = vpop.f32.mrb[0].mxu0
      %3110 = vmatprep.mubr.f32.mxu0 0.0
      %3111 = vmatmul.mubr.f32.gmra.mrb[0].mxu0 %v2237
      %v3112 = vpop.f32.mrb[0].mxu0
      %v3113 = vadd.f32 0.0, %v3112
      %v3114 = vpop.f32.mrb[0].mxu0
      %3115 = vmatprep.mubr.f32.mxu0 0.0
      %3116 = vmatmul.mubr.f32.gmra.mrb[0].mxu0 %v2239
      %v3117 = vpop.f32.mrb[0].mxu0
      %v3118 = vadd.f32 0.0, %v3117
      %v3119 = vpop.f32.mrb[0].mxu0
      %3120 = vmatprep.mubr.f32.mxu0 0.0
      %3121 = vmatmul.mubr.f32.gmra.mrb[0].mxu0 %v2241
      %v3122 = vpop.f32.mrb[0].mxu0
      %v3123 = vadd.f32 0.0, %v3122
      %v3124 = vpop.f32.mrb[0].mxu0
      %3125 = vmatprep.mubr.f32.mxu0 0.0
      %3126 = vmatmul.mubr.f32.gmra.mrb[0].mxu0 %v2243
      %v3127 = vpop.f32.mrb[0].mxu0
      %v3128 = vadd.f32 0.0, %v3127
      %v3129 = vpop.f32.mrb[0].mxu0
      %3130 = vmatprep.mubr.f32.mxu0 0.0
      %3131 = vmatmul.mubr.f32.gmra.mrb[0].mxu0 %v3029
      %v3132 = vpop.f32.mrb[0].mxu0
      %v3133 = vadd.f32 0.0, %v3132
      %v3134 = vpop.f32.mrb[0].mxu0
      %3135 = vdwg.mxu0
      %v3136 = vadd.f32 %v3017, %v3098
      %v3137 = vadd.f32 %v3018, %v3103
      %v3138 = vadd.f32 %v3019, %v3108
      %v3139 = vadd.f32 %v3020, %v3113
      %v3140 = vadd.f32 %v3021, %v3118
      %v3141 = vadd.f32 %v3022, %v3123
      %v3142 = vadd.f32 %v3023, %v3128
      %v3143 = vadd.f32 %v3024, %v3133
      %v3144 = vadd.f32 %v3136, %v1819
      %v3145 = vadd.f32 %v3137, %v1819
      %v3146 = vadd.f32 %v3138, %v1819
      %v3147 = vadd.f32 %v3139, %v1819
      %v3148 = vadd.f32 %v3140, %v1819
      %v3149 = vadd.f32 %v3141, %v1819
      %v3150 = vadd.f32 %v3142, %v1819
      %v3151 = vadd.f32 %v3143, %v1819
      %v3152 = vmax.f32 %v3144, 0.0
      %v3153 = vmax.f32 %v3145, 0.0
      %v3154 = vmax.f32 %v3146, 0.0
      %v3155 = vmax.f32 %v3147, 0.0
      %v3156 = vmax.f32 %v3148, 0.0
      %v3157 = vmax.f32 %v3149, 0.0
      %v3158 = vmax.f32 %v3150, 0.0
      %v3159 = vmax.f32 %v3151, 0.0
      %v3160 = vsub.f32 %v1829, %v3152
      %v3161 = vsub.f32 %v1830, %v3153
      %v3162 = vsub.f32 %v1831, %v3154
      %v3163 = vsub.f32 %v1832, %v3155
      %v3164 = vsub.f32 %v1833, %v3156
      %v3165 = vsub.f32 %v1834, %v3157
      %v3166 = vsub.f32 %v1835, %v3158
      %v3167 = vsub.f32 %v1836, %v3159
      %v3168 = vand.u32 2147483647, %v3160
      %v3169 = vand.u32 2147483647, %v3161
      %v3170 = vand.u32 2147483647, %v3162
      %v3171 = vand.u32 2147483647, %v3163
      %v3172 = vand.u32 2147483647, %v3164
      %v3173 = vand.u32 2147483647, %v3165
      %v3174 = vand.u32 2147483647, %v3166
      %v3175 = vand.u32 2147483647, %v3167
      %vm3176 = vcmask 130048
      %v3177 = vsel %vm3176, %v3168, 0.0
      %v3178 = vsel %vm3176, %v3169, 0.0
      %v3179 = vadd.f32 %v3177, %v3178
      %v3180 = vsel %vm3176, %v3170, 0.0
      %v3181 = vadd.f32 %v3179, %v3180
      %v3182 = vsel %vm3176, %v3171, 0.0
      %v3183 = vadd.f32 %v3181, %v3182
      %v3184 = vsel %vm3176, %v3172, 0.0
      %v3185 = vadd.f32 %v3183, %v3184
      %v3186 = vsel %vm3176, %v3173, 0.0
      %v3187 = vadd.f32 %v3185, %v3186
      %v3188 = vsel %vm3176, %v3174, 0.0
      %v3189 = vadd.f32 %v3187, %v3188
      %v3190 = vsel %vm3176, %v3175, 0.0
      %v3191 = vadd.f32 %v3189, %v3190
      %v3192 = vrot.slane %v3191, 4
      %v3193 = vadd.f32 %v3191, %v3192
      %v3194 = vrot.slane %v3193, 2
      %v3195 = vadd.f32 %v3193, %v3194
      %v3196 = vrot.slane %v3195, 1
      %v3197 = vadd.f32 %v3195, %v3196
      %vm3198 = vcmask 122880
      %3199 = vst.msk [vmem:[%s495] sm:$0x1] %vm3198, %v3197
      %p3200 = scmp.lt.s32.totalorder %s21, 1
      %s3201 = scalar_select %p3200, %s21, 1
      %s3202 = scalar_lea.vmem %s10, %s3201
      // Predicated region
      $region61: #{perceptual_loss.3} parent=59 // pred_check
        %p3203 = pneg %p289
      $region62: #{perceptual_loss.3} parent=59 // pred_check_branch
        %3205 = sbr.rel (%p3203) target = $region64
      $region63: #{perceptual_loss.3} parent=59 // pred_region
        _
      $region64: #{perceptual_loss.3} parent=59 // pred_fallthru
        _
    $region60: #{perceptual_loss.3} parent=5 // pred_fallthru
      _
    %p3206 = scmp.le.s32.totalorder 2, %s16
    // Predicated region
    $region65: #{perceptual_loss.3} parent=5 // pred_check
      %p3207 = pneg %p3206
    $region66: #{perceptual_loss.3} parent=5 // pred_check_branch
      %3209 = sbr.rel (%p3207) target = $region68
    $region67: #{perceptual_loss.3} parent=5 // pred_region
      %s3210 = ssub.s32 %s16, 2
      // Predicated region
      $region69: #{perceptual_loss.3} parent=67 // pred_check
        %p3211 = pneg %p295
      $region70: #{perceptual_loss.3} parent=67 // pred_check_branch
        %3213 = sbr.rel (%p3211) target = $region72
      $region71: #{perceptual_loss.3} parent=67 // pred_region
        %p3214 = scmp.lt.s32.totalorder %s22, 1
        %s3215 = scalar_select %p3214, %s22, 1
        %s3216 = scalar_lea.vmem %s10, %s3215
      $region72: #{perceptual_loss.3} parent=67 // pred_fallthru
        _
    $region68: #{perceptual_loss.3} parent=5 // pred_fallthru
      _
  $region6: #{perceptual_loss.3} parent=0 // loop_footer
    %s20 = sadd.s32 1, %s16
  $region7: #{perceptual_loss.3} parent=0 // loop_footer_branch
    %15 = sbr.rel target = $region3
  $region8: #{perceptual_loss.3} parent=0 // loop_exit
    _

// kernel: perceptual_loss.2
$region0: #{perceptual_loss.2}
  #allocation0 [shape = 'u32[]', space=smem, size = 0x4, offset = 0x4, fixed_abs, tag = 'smem constant byte address 0x4 - core index']
  #allocation1 [shape = 'u32[144,128]{1,0:T(1,128)}', space=vmem, size = 0x12000, scoped, tag = 'internal scratch']
  %s0 = inlined_call_operand.vmem [shape: bf16[2,18,18,3], index: 0, kind: input, shape index: {}]
  %s1 = inlined_call_operand.vmem [shape: bf16[2,18,18,3], index: 1, kind: input, shape index: {}]
  %s2 = inlined_call_operand.vmem [shape: f32[3,3,3,8], index: 2, kind: input, shape index: {}]
  %s3 = inlined_call_operand.vmem [shape: f32[1,8], index: 3, kind: input, shape index: {}]
  %s4 = inlined_call_operand.vmem [shape: bf16[2,16,16,8], index: 4, kind: output, shape index: {0}]
  %s5 = inlined_call_operand.vmem [shape: bf16[2,16,16,8], index: 5, kind: output, shape index: {1}]
  %s6 = inlined_call_operand.vmem [shape: f32[2,1,8], index: 6, kind: output, shape index: {2}]
  %7 = xla_tuple %s4, %s5, %s6
  %s8 = sld [smem:[#allocation0]]
  $region65: #{perceptual_loss.2} parent=0
    _
  %s10 = ssub.s32 1, %s8
  %s11 = scalar_select 0, %s10, %s8
  loop: start=0, step=1, limit=4
  $region2: #{perceptual_loss.2} parent=0 // loop_pre_header
    _
  $region3: #{perceptual_loss.2} parent=0 // loop_header
    %s13 = sphi 0, %s17
    %p14 = scmp.ge.s32.totalorder %s13, 4
    %s23 = sphi 0, %s25
    %s26 = sphi 0, %s23
    %s27 = sphi 0, %s26
    %s43 = sphi 0, %s27
    %s49 = sphi 0, %s51
    %s52 = sphi 0, %s49
    %s53 = sphi 0, %s52
    %s69 = sphi 0, %s53
    %s73 = sphi 0, %s73
    %s75 = sphi 0, %s73
    %s76 = sphi 0, %s75
    %s90 = sphi 0, %s76
    %s94 = sphi 0, %s94
    %s96 = sphi 0, %s94
    %s97 = sphi 0, %s96
    %s111 = sphi 0, %s97
    %s117 = sphi 0, %s119
    %s120 = sphi 0, %s117
    %s121 = sphi 0, %s120
    %s137 = sphi 0, %s121
    %s143 = sphi 0, %s145
    %s146 = sphi 0, %s143
    %s147 = sphi 0, %s146
    %s163 = sphi 0, %s147
    %s169 = sphi 0, %s171
    %s172 = sphi 0, %s169
    %s173 = sphi 0, %s172
    %s189 = sphi 0, %s173
  $region4: #{perceptual_loss.2} parent=0 // loop_header_branch
    %16 = sbr.rel (%p14) target = $region8
  $region5: #{perceptual_loss.2} parent=0 // loop_body
    %s18 = ssub.s32 %s13, 1
    %s19 = ssub.s32 %s13, 2
    %s20 = sadd.s32 %s13, 1
    %s21 = ssub.s32 %s13, %s20
    %p22 = scmp.eq.s32.totalorder %s21, 0
    %s24 = sadd.s32 %s23, 1
    %s25 = scalar_select %p22, %s23, %s24
    %p28 = pneg %p22
    %p29 = scmp.eq.s32.totalorder %s13, 1
    %p30 = por %p28, %p29
    %p31 = scmp.ne.s32.totalorder %s23, %s26
    %p32 = scmp.eq.s32.totalorder %s13, 0
    %p33 = por %p31, %p32
    %p34 = scmp.ne.s32.totalorder %s23, %s26
    %p35 = scmp.eq.s32.totalorder %s18, 1
    %p36 = por %p34, %p35
    %p37 = scmp.ne.s32.totalorder %s26, %s27
    %p38 = scmp.eq.s32.totalorder %s18, 0
    %p39 = por %p37, %p38
    %p40 = scmp.ne.s32.totalorder %s26, %s27
    %p41 = scmp.eq.s32.totalorder %s19, 1
    %p42 = por %p40, %p41
    %p44 = scmp.ne.s32.totalorder %s27, %s43
    %p45 = scmp.eq.s32.totalorder %s19, 0
    %p46 = por %p44, %p45
    %s47 = ssub.s32 %s13, %s20
    %p48 = scmp.eq.s32.totalorder %s47, 0
    %s50 = sadd.s32 %s49, 1
    %s51 = scalar_select %p48, %s49, %s50
    %p54 = pneg %p48
    %p55 = scmp.eq.s32.totalorder %s13, 1
    %p56 = por %p54, %p55
    %p57 = scmp.ne.s32.totalorder %s49, %s52
    %p58 = scmp.eq.s32.totalorder %s13, 0
    %p59 = por %p57, %p58
    %p60 = scmp.ne.s32.totalorder %s49, %s52
    %p61 = scmp.eq.s32.totalorder %s18, 1
    %p62 = por %p60, %p61
    %p63 = scmp.ne.s32.totalorder %s52, %s53
    %p64 = scmp.eq.s32.totalorder %s18, 0
    %p65 = por %p63, %p64
    %p66 = scmp.ne.s32.totalorder %s52, %s53
    %p67 = scmp.eq.s32.totalorder %s19, 1
    %p68 = por %p66, %p67
    %p70 = scmp.ne.s32.totalorder %s53, %s69
    %p71 = scmp.eq.s32.totalorder %s19, 0
    %p72 = por %p70, %p71
    %s74 = sadd.s32 %s73, 1
    %p77 = scmp.eq.s32.totalorder %s13, 1
    %p78 = scmp.ne.s32.totalorder %s73, %s75
    %p79 = scmp.eq.s32.totalorder %s13, 0
    %p80 = por %p78, %p79
    %p81 = scmp.ne.s32.totalorder %s73, %s75
    %p82 = scmp.eq.s32.totalorder %s18, 1
    %p83 = por %p81, %p82
    %p84 = scmp.ne.s32.totalorder %s75, %s76
    %p85 = scmp.eq.s32.totalorder %s18, 0
    %p86 = por %p84, %p85
    %p87 = scmp.ne.s32.totalorder %s75, %s76
    %p88 = scmp.eq.s32.totalorder %s19, 1
    %p89 = por %p87, %p88
    %p91 = scmp.ne.s32.totalorder %s76, %s90
    %p92 = scmp.eq.s32.totalorder %s19, 0
    %p93 = por %p91, %p92
    %s95 = sadd.s32 %s94, 1
    %p98 = scmp.eq.s32.totalorder %s13, 1
    %p99 = scmp.ne.s32.totalorder %s94, %s96
    %p100 = scmp.eq.s32.totalorder %s13, 0
    %p101 = por %p99, %p100
    %p102 = scmp.ne.s32.totalorder %s94, %s96
    %p103 = scmp.eq.s32.totalorder %s18, 1
    %p104 = por %p102, %p103
    %p105 = scmp.ne.s32.totalorder %s96, %s97
    %p106 = scmp.eq.s32.totalorder %s18, 0
    %p107 = por %p105, %p106
    %p108 = scmp.ne.s32.totalorder %s96, %s97
    %p109 = scmp.eq.s32.totalorder %s19, 1
    %p110 = por %p108, %p109
    %p112 = scmp.ne.s32.totalorder %s97, %s111
    %p113 = scmp.eq.s32.totalorder %s19, 0
    %p114 = por %p112, %p113
    %s115 = ssub.s32 %s13, %s20
    %p116 = scmp.eq.s32.totalorder %s115, 0
    %s118 = sadd.s32 %s117, 1
    %s119 = scalar_select %p116, %s117, %s118
    %p122 = pneg %p116
    %p123 = scmp.eq.s32.totalorder %s13, 1
    %p124 = por %p122, %p123
    %p125 = scmp.ne.s32.totalorder %s117, %s120
    %p126 = scmp.eq.s32.totalorder %s13, 0
    %p127 = por %p125, %p126
    %p128 = scmp.ne.s32.totalorder %s117, %s120
    %p129 = scmp.eq.s32.totalorder %s18, 1
    %p130 = por %p128, %p129
    %p131 = scmp.ne.s32.totalorder %s120, %s121
    %p132 = scmp.eq.s32.totalorder %s18, 0
    %p133 = por %p131, %p132
    %p134 = scmp.ne.s32.totalorder %s120, %s121
    %p135 = scmp.eq.s32.totalorder %s19, 1
    %p136 = por %p134, %p135
    %p138 = scmp.ne.s32.totalorder %s121, %s137
    %p139 = scmp.eq.s32.totalorder %s19, 0
    %p140 = por %p138, %p139
    %s141 = ssub.s32 %s13, %s20
    %p142 = scmp.eq.s32.totalorder %s141, 0
    %s144 = sadd.s32 %s143, 1
    %s145 = scalar_select %p142, %s143, %s144
    %p148 = pneg %p142
    %p149 = scmp.eq.s32.totalorder %s13, 1
    %p150 = por %p148, %p149
    %p151 = scmp.ne.s32.totalorder %s143, %s146
    %p152 = scmp.eq.s32.totalorder %s13, 0
    %p153 = por %p151, %p152
    %p154 = scmp.ne.s32.totalorder %s143, %s146
    %p155 = scmp.eq.s32.totalorder %s18, 1
    %p156 = por %p154, %p155
    %p157 = scmp.ne.s32.totalorder %s146, %s147
    %p158 = scmp.eq.s32.totalorder %s18, 0
    %p159 = por %p157, %p158
    %p160 = scmp.ne.s32.totalorder %s146, %s147
    %p161 = scmp.eq.s32.totalorder %s19, 1
    %p162 = por %p160, %p161
    %p164 = scmp.ne.s32.totalorder %s147, %s163
    %p165 = scmp.eq.s32.totalorder %s19, 0
    %p166 = por %p164, %p165
    %s167 = ssub.s32 %s13, %s20
    %p168 = scmp.eq.s32.totalorder %s167, 0
    %s170 = sadd.s32 %s169, 1
    %s171 = scalar_select %p168, %s169, %s170
    %p174 = pneg %p168
    %p175 = scmp.eq.s32.totalorder %s13, 1
    %p176 = por %p174, %p175
    %p177 = scmp.ne.s32.totalorder %s169, %s172
    %p178 = scmp.eq.s32.totalorder %s13, 0
    %p179 = por %p177, %p178
    %p180 = scmp.ne.s32.totalorder %s169, %s172
    %p181 = scmp.eq.s32.totalorder %s18, 1
    %p182 = por %p180, %p181
    %p183 = scmp.ne.s32.totalorder %s172, %s173
    %p184 = scmp.eq.s32.totalorder %s18, 0
    %p185 = por %p183, %p184
    %p186 = scmp.ne.s32.totalorder %s172, %s173
    %p187 = scmp.eq.s32.totalorder %s19, 1
    %p188 = por %p186, %p187
    %p190 = scmp.ne.s32.totalorder %s173, %s189
    %p191 = scmp.eq.s32.totalorder %s19, 0
    %p192 = por %p190, %p191
    %p193 = scmp.le.s32.totalorder 1, %s13
    %p194 = scmp.lt.s32.totalorder %s13, 3
    %p195 = pnand %p193, %p194
    %p196 = pneg %p195
    // Predicated region
    $region9: #{perceptual_loss.2} parent=5 // pred_check
      _
    $region10: #{perceptual_loss.2} parent=5 // pred_check_branch
      %198 = sbr.rel (%p195) target = $region12
    $region11: #{perceptual_loss.2} parent=5 // pred_region
      %s199 = ssub.s32 %s13, 1
      // Predicated region
      $region13: #{perceptual_loss.2} parent=11 // pred_check
        %p200 = pneg %p86
      $region14: #{perceptual_loss.2} parent=11 // pred_check_branch
        %202 = sbr.rel (%p200) target = $region16
      $region15: #{perceptual_loss.2} parent=11 // pred_region
        _
      $region16: #{perceptual_loss.2} parent=11 // pred_fallthru
        _
      // Predicated region
      $region17: #{perceptual_loss.2} parent=11 // pred_check
        %p203 = pneg %p107
      $region18: #{perceptual_loss.2} parent=11 // pred_check_branch
        %205 = sbr.rel (%p203) target = $region20
      $region19: #{perceptual_loss.2} parent=11 // pred_region
        _
      $region20: #{perceptual_loss.2} parent=11 // pred_fallthru
        _
    $region12: #{perceptual_loss.2} parent=5 // pred_fallthru
      _
    %p206 = scmp.lt.s32.totalorder %s13, 2
    // Predicated region
    $region21: #{perceptual_loss.2} parent=5 // pred_check
      %p207 = pneg %p206
    $region22: #{perceptual_loss.2} parent=5 // pred_check_branch
      %209 = sbr.rel (%p207) target = $region24
    $region23: #{perceptual_loss.2} parent=5 // pred_region
      // Predicated region
      $region25: #{perceptual_loss.2} parent=23 // pred_check
        %p210 = pneg %p33
      $region26: #{perceptual_loss.2} parent=23 // pred_check_branch
        %212 = sbr.rel (%p210) target = $region28
      $region27: #{perceptual_loss.2} parent=23 // pred_region
        %p213 = scmp.lt.s32.totalorder %s13, 1
        %s214 = scalar_select %p213, %s13, 1
        %s215 = smul.addr %s214, 54
        %s216 = smul.addr %s215, 4
        %s217 = scalar_lea.vmem %s0, %s216
      $region28: #{perceptual_loss.2} parent=23 // pred_fallthru
        _
      // Predicated region
      $region29: #{perceptual_loss.2} parent=23 // pred_check
        %p218 = pneg %p59
      $region30: #{perceptual_loss.2} parent=23 // pred_check_branch
        %220 = sbr.rel (%p218) target = $region32
      $region31: #{perceptual_loss.2} parent=23 // pred_region
        %p221 = scmp.lt.s32.totalorder %s13, 1
        %s222 = scalar_select %p221, %s13, 1
        %s223 = smul.addr %s222, 54
        %s224 = smul.addr %s223, 4
        %s225 = scalar_lea.vmem %s1, %s224
      $region32: #{perceptual_loss.2} parent=23 // pred_fallthru
        _
    $region24: #{perceptual_loss.2} parent=5 // pred_fallthru
      _
    %p226 = scmp.le.s32.totalorder 1, %s13
    %p227 = scmp.lt.s32.totalorder %s13, 3
    %p228 = pnand %p226, %p227
    %p229 = pneg %p228
    // Predicated region
    $region33: #{perceptual_loss.2} parent=5 // pred_check
      _
    $region34: #{perceptual_loss.2} parent=5 // pred_check_branch
      %231 = sbr.rel (%p228) target = $region36
    $region35: #{perceptual_loss.2} parent=5 // pred_region
      %s232 = ssub.s32 %s13, 1
      %p233 = scmp.lt.s32.totalorder %s18, 1
      %s234 = scalar_select %p233, %s18, 1
      %s235 = smul.addr %s234, 54
      %s236 = smul.addr %s235, 4
      %s237 = scalar_lea.vmem %s0, %s236
      %p238 = pneg %p39
      %p239 = pneg %p36
      %p240 = scmp.lt.s32.totalorder %s18, 1
      %s241 = scalar_select %p240, %s18, 1
      %s242 = smul.addr %s241, 54
      %s243 = smul.addr %s242, 4
      %s244 = scalar_lea.vmem %s1, %s243
      %p245 = pneg %p65
      %p246 = pneg %p62
      %p247 = pneg %p86
      %p248 = pneg %p83
      %p249 = pneg %p107
      %p250 = pneg %p104
      %p251 = pneg %p133
      %p252 = pneg %p130
      %p253 = scmp.lt.s32.totalorder %s18, 1
      %s254 = scalar_select %p253, %s18, 1
      %s255 = smul.addr %s254, 32
      %s256 = smul.addr %s255, 4
      %s257 = scalar_lea.vmem %s4, %s256
      %p258 = pneg %p159
      %p259 = pneg %p156
      %p260 = scmp.lt.s32.totalorder %s18, 1
      %s261 = scalar_select %p260, %s18, 1
      %s262 = smul.addr %s261, 32
      %s263 = smul.addr %s262, 4
      %s264 = scalar_lea.vmem %s5, %s263
      %p265 = pneg %p185
      %p266 = pneg %p182
      %p267 = scmp.lt.s32.totalorder %s18, 1
      %s268 = scalar_select %p267, %s18, 1
      %s269 = scalar_lea.vmem %s6, %s268
      %p270 = scmp.lt.s32.totalorder %s18, 1
      %s271 = scalar_select %p270, %s18, 1
      %s272 = smul.addr %s271, 54
      %s273 = smul.addr %s272, 4
      %s274 = scalar_lea.vmem %s0, %s273
      %p275 = scmp.lt.s32.totalorder %s18, 1
      %s276 = scalar_select %p275, %s18, 1
      %s277 = smul.addr %s276, 54
      %s278 = smul.addr %s277, 4
      %s279 = scalar_lea.vmem %s1, %s278
      %p280 = scmp.lt.s32.totalorder %s18, 1
      %s281 = scalar_select %p280, %s18, 1
      %s282 = smul.addr %s281, 32
      %s283 = smul.addr %s282, 4
      %s284 = scalar_lea.vmem %s4, %s283
      %p285 = scmp.lt.s32.totalorder %s18, 1
      %s286 = scalar_select %p285, %s18, 1
      %s287 = smul.addr %s286, 32
      %s288 = smul.addr %s287, 4
      %s289 = scalar_lea.vmem %s5, %s288
      %p290 = scmp.lt.s32.totalorder %s18, 1
      %s291 = scalar_select %p290, %s18, 1
      %s292 = scalar_lea.vmem %s6, %s291
      %v293 = vld [vmem:[%s2] sm:$0x7]
      %v294 = vld [vmem:[%s2 + $0x4] sm:$0x7]
      %v295 = vld [vmem:[%s2 + $0x8] sm:$0x7]
      %v296 = vld [vmem:[%s2 + $0xc] sm:$0x7]
      %v297 = vld [vmem:[%s2 + $0x10] sm:$0x7]
      %v298 = vld [vmem:[%s2 + $0x14] sm:$0x7]
      %v299 = vld [vmem:[%s2 + $0x18] sm:$0x7]
      %v300 = vld [vmem:[%s2 + $0x1c] sm:$0x7]
      %v301 = vld [vmem:[%s2 + $0x20] sm:$0x7]
      %v302 = vld [vmem:[%s3] sm:$0x1]
      %v303 = vld [vmem:[%s274] sm:$0xf]
      %v304 = vld [vmem:[%s274 + $0x4] sm:$0xf]
      %v305 = vld [vmem:[%s274 + $0x8] sm:$0x1]
      %v306 = vld [vmem:[%s274 + $0xc] sm:$0xf]
      %v307 = vld [vmem:[%s274 + $0x10] sm:$0xf]
      %v308 = vld [vmem:[%s274 + $0x14] sm:$0x1]
      %v309 = vld [vmem:[%s274 + $0x18] sm:$0xf]
      %v310 = vld [vmem:[%s274 + $0x1c] sm:$0xf]
      %v311 = vld [vmem:[%s274 + $0x20] sm:$0x1]
      %v312 = vld [vmem:[%s274 + $0x24] sm:$0xf]
      %v313 = vld [vmem:[%s274 + $0x28] sm:$0xf]
      %v314 = vld [vmem:[%s274 + $0x2c] sm:$0x1]
      %v315 = vld [vmem:[%s274 + $0x30] sm:$0xf]
      %v316 = vld [vmem:[%s274 + $0x34] sm:$0xf]
      %v317 = vld [vmem:[%s274 + $0x38] sm:$0x1]
      %v318 = vld [vmem:[%s274 + $0x3c] sm:$0xf]
      %v319 = vld [vmem:[%s274 + $0x40] sm:$0xf]
      %v320 = vld [vmem:[%s274 + $0x44] sm:$0x1]
      %v321 = vld [vmem:[%s274 + $0x48] sm:$0xf]
      %v322 = vld [vmem:[%s274 + $0x4c] sm:$0xf]
      %v323 = vld [vmem:[%s274 + $0x50] sm:$0x1]
      %v324 = vld [vmem:[%s274 + $0x54] sm:$0xf]
      %v325 = vld [vmem:[%s274 + $0x58] sm:$0xf]
      %v326 = vld [vmem:[%s274 + $0x5c] sm:$0x1]
      %v327 = vld [vmem:[%s274 + $0x60] sm:$0xf]
      %v328 = vld [vmem:[%s274 + $0x64] sm:$0xf]
      %v329 = vld [vmem:[%s274 + $0x68] sm:$0x1]
      %v330 = vld [vmem:[%s274 + $0x6c] sm:$0xf]
      %v331 = vld [vmem:[%s274 + $0x70] sm:$0xf]
      %v332 = vld [vmem:[%s274 + $0x74] sm:$0x1]
      %v333 = vld [vmem:[%s274 + $0x78] sm:$0xf]
      %v334 = vld [vmem:[%s274 + $0x7c] sm:$0xf]
      %v335 = vld [vmem:[%s274 + $0x80] sm:$0x1]
      %v336 = vld [vmem:[%s274 + $0x84] sm:$0xf]
      %v337 = vld [vmem:[%s274 + $0x88] sm:$0xf]
      %v338 = vld [vmem:[%s274 + $0x8c] sm:$0x1]
      %v339 = vld [vmem:[%s274 + $0x90] sm:$0xf]
      %v340 = vld [vmem:[%s274 + $0x94] sm:$0xf]
      %v341 = vld [vmem:[%s274 + $0x98] sm:$0x1]
      %v342 = vld [vmem:[%s274 + $0x9c] sm:$0xf]
      %v343 = vld [vmem:[%s274 + $0xa0] sm:$0xf]
      %v344 = vld [vmem:[%s274 + $0xa4] sm:$0x1]
      %v345 = vld [vmem:[%s274 + $0xa8] sm:$0xf]
      %v346 = vld [vmem:[%s274 + $0xac] sm:$0xf]
      %v347 = vld [vmem:[%s274 + $0xb0] sm:$0x1]
      %v348 = vld [vmem:[%s274 + $0xb4] sm:$0xf]
      %v349 = vld [vmem:[%s274 + $0xb8] sm:$0xf]
      %v350 = vld [vmem:[%s274 + $0xbc] sm:$0x1]
      %v351 = vld [vmem:[%s274 + $0xc0] sm:$0xf]
      %v352 = vld [vmem:[%s274 + $0xc4] sm:$0xf]
      %v353 = vld [vmem:[%s274 + $0xc8] sm:$0x1]
      %v354 = vld [vmem:[%s274 + $0xcc] sm:$0xf]
      %v355 = vld [vmem:[%s274 + $0xd0] sm:$0xf]
      %v356 = vld [vmem:[%s274 + $0xd4] sm:$0x1]
      %v357 = vunpack.c.l.bf16 %v303
      %v358 = vunpack.c.l.bf16 %v304
      %v359 = vunpack.c.l.bf16 %v305
      %v360 = vunpack.c.l.bf16 %v306
      %v361 = vunpack.c.l.bf16 %v307
      %v362 = vunpack.c.l.bf16 %v308
      %v363 = vunpack.c.l.bf16 %v309
      %v364 = vunpack.c.l.bf16 %v310
      %v365 = vunpack.c.l.bf16 %v311
      %v366 = vunpack.c.l.bf16 %v312
      %v367 = vunpack.c.l.bf16 %v313
      %v368 = vunpack.c.l.bf16 %v314
      %v369 = vunpack.c.l.bf16 %v315
      %v370 = vunpack.c.l.bf16 %v316
      %v371 = vunpack.c.l.bf16 %v317
      %v372 = vunpack.c.l.bf16 %v318
      %v373 = vunpack.c.l.bf16 %v319
      %v374 = vunpack.c.l.bf16 %v320
      %v375 = vunpack.c.l.bf16 %v321
      %v376 = vunpack.c.l.bf16 %v322
      %v377 = vunpack.c.l.bf16 %v323
      %v378 = vunpack.c.l.bf16 %v324
      %v379 = vunpack.c.l.bf16 %v325
      %v380 = vunpack.c.l.bf16 %v326
      %v381 = vunpack.c.l.bf16 %v327
      %v382 = vunpack.c.l.bf16 %v328
      %v383 = vunpack.c.l.bf16 %v329
      %v384 = vunpack.c.l.bf16 %v330
      %v385 = vunpack.c.l.bf16 %v331
      %v386 = vunpack.c.l.bf16 %v332
      %v387 = vunpack.c.l.bf16 %v333
      %v388 = vunpack.c.l.bf16 %v334
      %v389 = vunpack.c.l.bf16 %v335
      %v390 = vunpack.c.l.bf16 %v336
      %v391 = vunpack.c.l.bf16 %v337
      %v392 = vunpack.c.l.bf16 %v338
      %v393 = vunpack.c.l.bf16 %v339
      %v394 = vunpack.c.l.bf16 %v340
      %v395 = vunpack.c.l.bf16 %v341
      %v396 = vunpack.c.l.bf16 %v342
      %v397 = vunpack.c.l.bf16 %v343
      %v398 = vunpack.c.l.bf16 %v344
      %v399 = vunpack.c.l.bf16 %v345
      %v400 = vunpack.c.l.bf16 %v346
      %v401 = vunpack.c.l.bf16 %v347
      %v402 = vunpack.c.l.bf16 %v348
      %v403 = vunpack.c.l.bf16 %v349
      %v404 = vunpack.c.l.bf16 %v350
      %v405 = vunpack.c.l.bf16 %v351
      %v406 = vunpack.c.l.bf16 %v352
      %v407 = vunpack.c.l.bf16 %v353
      %v408 = vunpack.c.l.bf16 %v354
      %v409 = vunpack.c.l.bf16 %v355
      %v410 = vunpack.c.l.bf16 %v356
      %vm459 = vcmask 1046528
      %v460 = vrot.slane %v357, 1
      %v461 = vrot.slane %v358, 1
      %v462 = vsel %vm459, %v460, %v461
      %v463 = vrot.slane %v359, 1
      %v464 = vsel %vm459, %v461, %v463
      %v465 = vrot.slane %v360, 1
      %v466 = vrot.slane %v361, 1
      %v467 = vsel %vm459, %v465, %v466
      %v468 = vrot.slane %v362, 1
      %v469 = vsel %vm459, %v466, %v468
      %v470 = vrot.slane %v363, 1
      %v471 = vrot.slane %v364, 1
      %v472 = vsel %vm459, %v470, %v471
      %v473 = vrot.slane %v365, 1
      %v474 = vsel %vm459, %v471, %v473
      %v475 = vrot.slane %v366, 1
      %v476 = vrot.slane %v367, 1
      %v477 = vsel %vm459, %v475, %v476
      %v478 = vrot.slane %v368, 1
      %v479 = vsel %vm459, %v476, %v478
      %v480 = vrot.slane %v369, 1
      %v481 = vrot.slane %v370, 1
      %v482 = vsel %vm459, %v480, %v481
      %v483 = vrot.slane %v371, 1
      %v484 = vsel %vm459, %v481, %v483
      %v485 = vrot.slane %v372, 1
      %v486 = vrot.slane %v373, 1
      %v487 = vsel %vm459, %v485, %v486
      %v488 = vrot.slane %v374, 1
      %v489 = vsel %vm459, %v486, %v488
      %v490 = vrot.slane %v375, 1
      %v491 = vrot.slane %v376, 1
      %v492 = vsel %vm459, %v490, %v491
      %v493 = vrot.slane %v377, 1
      %v494 = vsel %vm459, %v491, %v493
      %v495 = vrot.slane %v378, 1
      %v496 = vrot.slane %v379, 1
      %v497 = vsel %vm459, %v495, %v496
      %v498 = vrot.slane %v380, 1
      %v499 = vsel %vm459, %v496, %v498
      %v500 = vrot.slane %v381, 1
      %v501 = vrot.slane %v382, 1
      %v502 = vsel %vm459, %v500, %v501
      %v503 = vrot.slane %v383, 1
      %v504 = vsel %vm459, %v501, %v503
      %v505 = vrot.slane %v384, 1
      %v506 = vrot.slane %v385, 1
      %v507 = vsel %vm459, %v505, %v506
      %v508 = vrot.slane %v386, 1
      %v509 = vsel %vm459, %v506, %v508
      %v510 = vrot.slane %v387, 1
      %v511 = vrot.slane %v388, 1
      %v512 = vsel %vm459, %v510, %v511
      %v513 = vrot.slane %v389, 1
      %v514 = vsel %vm459, %v511, %v513
      %v515 = vrot.slane %v390, 1
      %v516 = vrot.slane %v391, 1
      %v517 = vsel %vm459, %v515, %v516
      %v518 = vrot.slane %v392, 1
      %v519 = vsel %vm459, %v516, %v518
      %v520 = vrot.slane %v393, 1
      %v521 = vrot.slane %v394, 1
      %v522 = vsel %vm459, %v520, %v521
      %v523 = vrot.slane %v395, 1
      %v524 = vsel %vm459, %v521, %v523
      %v525 = vrot.slane %v396, 1
      %v526 = vrot.slane %v397, 1
      %v527 = vsel %vm459, %v525, %v526
      %v528 = vrot.slane %v398, 1
      %v529 = vsel %vm459, %v526, %v528
      %v530 = vrot.slane %v399, 1
      %v531 = vrot.slane %v400, 1
      %v532 = vsel %vm459, %v530, %v531
      %v533 = vrot.slane %v401, 1
      %v534 = vsel %vm459, %v531, %v533
      %v535 = vrot.slane %v402, 1
      %v536 = vrot.slane %v403, 1
      %v537 = vsel %vm459, %v535, %v536
      %v538 = vrot.slane %v404, 1
      %v539 = vsel %vm459, %v536, %v538
      %vm540 = vcmask 23552
      %v541 = vsel %vm540, %v462, 0
      %v543 = vsel %vm540, %v464, 0
      %v545 = vsel %vm540, %v467, 0
      %v547 = vsel %vm540, %v469, 0
      %v549 = vsel %vm540, %v472, 0
      %v551 = vsel %vm540, %v474, 0
      %v553 = vsel %vm540, %v477, 0
      %v555 = vsel %vm540, %v479, 0
      %v557 = vsel %vm540, %v482, 0
      %v559 = vsel %vm540, %v484, 0
      %v561 = vsel %vm540, %v487, 0
      %v563 = vsel %vm540, %v489, 0
      %v565 = vsel %vm540, %v492, 0
      %v567 = vsel %vm540, %v494, 0
      %v569 = vsel %vm540, %v497, 0
      %v571 = vsel %vm540, %v499, 0
      %v573 = vsel %vm540, %v502, 0
      %v575 = vsel %vm540, %v504, 0
      %v577 = vsel %vm540, %v507, 0
      %v579 = vsel %vm540, %v509, 0
      %v581 = vsel %vm540, %v512, 0
      %v583 = vsel %vm540, %v514, 0
      %v585 = vsel %vm540, %v517, 0
      %v587 = vsel %vm540, %v519, 0
      %v589 = vsel %vm540, %v522, 0
      %v591 = vsel %vm540, %v524, 0
      %v593 = vsel %vm540, %v527, 0
      %v595 = vsel %vm540, %v529, 0
      %v597 = vsel %vm540, %v532, 0
      %v599 = vsel %vm540, %v534, 0
      %v601 = vsel %vm540, %v537, 0
      %v603 = vsel %vm540, %v539, 0
      %vm605 = vcmask 1042432
      %v607 = vsel %vm605, %v294, 0
      %609 = vmatprep.subr.mxu0 0.0
      %610 = vmatpush1.msra.mxu0 %v607
      %611 = vmatprep.subr.mxu0 0.0
      %612 = vmatpush1.msra.mxu0 0.0
      %613 = vmatprep.subr.mxu0 0.0
      %614 = vmatpush1.msra.mxu0 0.0
      %615 = vmatprep.subr.mxu0 0.0
      %616 = vmatpush1.msra.mxu0 0.0
      %617 = vmatprep.subr.mxu0 0.0
      %618 = vmatpush1.msra.mxu0 0.0
      %619 = vmatprep.subr.mxu0 0.0
      %620 = vmatpush1.msra.mxu0 0.0
      %621 = vmatprep.subr.mxu0 0.0
      %622 = vmatpush1.msra.mxu0 0.0
      %623 = vmatprep.subr.mxu0 0.0
      %624 = vmatpush1.msra.mxu0 0.0
      %625 = vmatprep.subr.mxu0 0.0
      %626 = vmatpush1.msra.mxu0 0.0
      %627 = vmatprep.subr.mxu0 0.0
      %628 = vmatpush1.msra.mxu0 0.0
      %629 = vmatprep.subr.mxu0 0.0
      %630 = vmatpush1.msra.mxu0 0.0
      %631 = vmatprep.subr.mxu0 0.0
      %632 = vmatpush1.msra.mxu0 0.0
      %633 = vmatprep.subr.mxu0 0.0
      %634 = vmatpush1.msra.mxu0 0.0
      %635 = vmatprep.subr.mxu0 0.0
      %636 = vmatpush1.msra.mxu0 0.0
      %637 = vmatprep.subr.mxu0 0.0
      %638 = vmatpush1.msra.mxu0 0.0
      %639 = vmatprep.subr.mxu0 0.0
      %640 = vmatpush1.msra.mxu0 0.0
      %641 = vmatprep.subr.mxu0 0.0
      %642 = vmatpush1.msra.mxu0 0.0
      %643 = vmatprep.subr.mxu0 0.0
      %644 = vmatpush1.msra.mxu0 0.0
      %645 = vmatprep.subr.mxu0 0.0
      %646 = vmatpush1.msra.mxu0 0.0
      %647 = vmatprep.subr.mxu0 0.0
      %648 = vmatpush1.msra.mxu0 0.0
      %649 = vmatprep.subr.mxu0 0.0
      %650 = vmatpush1.msra.mxu0 0.0
      %651 = vmatprep.subr.mxu0 0.0
      %652 = vmatpush1.msra.mxu0 0.0
      %653 = vmatprep.subr.mxu0 0.0
      %654 = vmatpush1.msra.mxu0 0.0
      %655 = vmatprep.subr.mxu0 0.0
      %656 = vmatpush1.msra.mxu0 0.0
      %657 = vmatprep.subr.mxu0 0.0
      %658 = vmatpush1.msra.mxu0 0.0
      %659 = vmatprep.subr.mxu0 0.0
      %660 = vmatpush1.msra.mxu0 0.0
      %661 = vmatprep.subr.mxu0 0.0
      %662 = vmatpush1.msra.mxu0 0.0
      %663 = vmatprep.subr.mxu0 0.0
      %664 = vmatpush1.msra.mxu0 0.0
      %665 = vmatprep.subr.mxu0 0.0
      %666 = vmatpush1.msra.mxu0 0.0
      %667 = vmatprep.subr.mxu0 0.0
      %668 = vmatpush1.msra.mxu0 0.0
      %669 = vmatprep.subr.mxu0 0.0
      %670 = vmatpush1.msra.mxu0 0.0
      %671 = vmatprep.subr.mxu0 0.0
      %672 = vmatpush1.msra.mxu0 0.0
      %673 = vmatprep.mubr.f32.mxu0 0.0
      %674 = vmatmul.mubr.f32.gmra.mrb[0].mxu0 %v541
      %v675 = vpop.f32.mrb[0].mxu0
      %v676 = vadd.f32 0.0, %v675
      %v677 = vpop.f32.mrb[0].mxu0
      %678 = vmatprep.mubr.f32.mxu0 0.0
      %679 = vmatmul.mubr.f32.gmra.mrb[0].mxu0 %v543
      %v680 = vpop.f32.mrb[0].mxu0
      %v681 = vadd.f32 0.0, %v680
      %v682 = vpop.f32.mrb[0].mxu0
      %683 = vmatprep.mubr.f32.mxu0 0.0
      %684 = vmatmul.mubr.f32.gmra.mrb[0].mxu0 %v545
      %v685 = vpop.f32.mrb[0].mxu0
      %v686 = vadd.f32 0.0, %v685
      %v687 = vpop.f32.mrb[0].mxu0
      %688 = vmatprep.mubr.f32.mxu0 0.0
      %689 = vmatmul.mubr.f32.gmra.mrb[0].mxu0 %v547
      %v690 = vpop.f32.mrb[0].mxu0
      %v691 = vadd.f32 0.0, %v690
      %v692 = vpop.f32.mrb[0].mxu0
      %693 = vmatprep.mubr.f32.mxu0 0.0
      %694 = vmatmul.mubr.f32.gmra.mrb[0].mxu0 %v549
      %v695 = vpop.f32.mrb[0].mxu0
      %v696 = vadd.f32 0.0, %v695
      %v697 = vpop.f32.mrb[0].mxu0
      %698 = vmatprep.mubr.f32.mxu0 0.0
      %699 = vmatmul.mubr.f32.gmra.mrb[0].mxu0 %v551
      %v700 = vpop.f32.mrb[0].mxu0
      %v701 = vadd.f32 0.0, %v700
      %v702 = vpop.f32.mrb[0].mxu0
      %703 = vmatprep.mubr.f32.mxu0 0.0
      %704 = vmatmul.mubr.f32.gmra.mrb[0].mxu0 %v553
      %v705 = vpop.f32.mrb[0].mxu0
      %v706 = vadd.f32 0.0, %v705
      %v707 = vpop.f32.mrb[0].mxu0
      %708 = vmatprep.mubr.f32.mxu0 0.0
      %709 = vmatmul.mubr.f32.gmra.mrb[0].mxu0 %v555
      %v710 = vpop.f32.mrb[0].mxu0
      %v711 = vadd.f32 0.0, %v710
      %v712 = vpop.f32.mrb[0].mxu0
      %713 = vmatprep.mubr.f32.mxu0 0.0
      %714 = vmatmul.mubr.f32.gmra.mrb[0].mxu0 %v557
      %v715 = vpop.f32.mrb[0].mxu0
      %v716 = vadd.f32 0.0, %v715
      %v717 = vpop.f32.mrb[0].mxu0
      %718 = vmatprep.mubr.f32.mxu0 0.0
      %719 = vmatmul.mubr.f32.gmra.mrb[0].mxu0 %v559
      %v720 = vpop.f32.mrb[0].mxu0
      %v721 = vadd.f32 0.0, %v720
      %v722 = vpop.f32.mrb[0].mxu0
      %723 = vmatprep.mubr.f32.mxu0 0.0
      %724 = vmatmul.mubr.f32.gmra.mrb[0].mxu0 %v561
      %v725 = vpop.f32.mrb[0].mxu0
      %v726 = vadd.f32 0.0, %v725
      %v727 = vpop.f32.mrb[0].mxu0
      %728 = vmatprep.mubr.f32.mxu0 0.0
      %729 = vmatmul.mubr.f32.gmra.mrb[0].mxu0 %v563
      %v730 = vpop.f32.mrb[0].mxu0
      %v731 = vadd.f32 0.0, %v730
      %v732 = vpop.f32.mrb[0].mxu0
      %733 = vmatprep.mubr.f32.mxu0 0.0
      %734 = vmatmul.mubr.f32.gmra.mrb[0].mxu0 %v565
      %v735 = vpop.f32.mrb[0].mxu0
      %v736 = vadd.f32 0.0, %v735
      %v737 = vpop.f32.mrb[0].mxu0
      %738 = vmatprep.mubr.f32.mxu0 0.0
      %739 = vmatmul.mubr.f32.gmra.mrb[0].mxu0 %v567
      %v740 = vpop.f32.mrb[0].mxu0
      %v741 = vadd.f32 0.0, %v740
      %v742 = vpop.f32.mrb[0].mxu0
      %743 = vmatprep.mubr.f32.mxu0 0.0
      %744 = vmatmul.mubr.f32.gmra.mrb[0].mxu0 %v569
      %v745 = vpop.f32.mrb[0].mxu0
      %v746 = vadd.f32 0.0, %v745
      %v747 = vpop.f32.mrb[0].mxu0
      %748 = vmatprep.mubr.f32.mxu0 0.0
      %749 = vmatmul.mubr.f32.gmra.mrb[0].mxu0 %v571
      %v750 = vpop.f32.mrb[0].mxu0
      %v751 = vadd.f32 0.0, %v750
      %v752 = vpop.f32.mrb[0].mxu0
      %753 = vmatprep.mubr.f32.mxu0 0.0
      %754 = vmatmul.mubr.f32.gmra.mrb[0].mxu0 %v573
      %v755 = vpop.f32.mrb[0].mxu0
      %v756 = vadd.f32 0.0, %v755
      %v757 = vpop.f32.mrb[0].mxu0
      %758 = vmatprep.mubr.f32.mxu0 0.0
      %759 = vmatmul.mubr.f32.gmra.mrb[0].mxu0 %v575
      %v760 = vpop.f32.mrb[0].mxu0
      %v761 = vadd.f32 0.0, %v760
      %v762 = vpop.f32.mrb[0].mxu0
      %763 = vmatprep.mubr.f32.mxu0 0.0
      %764 = vmatmul.mubr.f32.gmra.mrb[0].mxu0 %v577
      %v765 = vpop.f32.mrb[0].mxu0
      %v766 = vadd.f32 0.0, %v765
      %v767 = vpop.f32.mrb[0].mxu0
      %768 = vmatprep.mubr.f32.mxu0 0.0
      %769 = vmatmul.mubr.f32.gmra.mrb[0].mxu0 %v579
      %v770 = vpop.f32.mrb[0].mxu0
      %v771 = vadd.f32 0.0, %v770
      %v772 = vpop.f32.mrb[0].mxu0
      %773 = vmatprep.mubr.f32.mxu0 0.0
      %774 = vmatmul.mubr.f32.gmra.mrb[0].mxu0 %v581
      %v775 = vpop.f32.mrb[0].mxu0
      %v776 = vadd.f32 0.0, %v775
      %v777 = vpop.f32.mrb[0].mxu0
      %778 = vmatprep.mubr.f32.mxu0 0.0
      %779 = vmatmul.mubr.f32.gmra.mrb[0].mxu0 %v583
      %v780 = vpop.f32.mrb[0].mxu0
      %v781 = vadd.f32 0.0, %v780
      %v782 = vpop.f32.mrb[0].mxu0
      %783 = vmatprep.mubr.f32.mxu0 0.0
      %784 = vmatmul.mubr.f32.gmra.mrb[0].mxu0 %v585
      %v785 = vpop.f32.mrb[0].mxu0
      %v786 = vadd.f32 0.0, %v785
      %v787 = vpop.f32.mrb[0].mxu0
      %788 = vmatprep.mubr.f32.mxu0 0.0
      %789 = vmatmul.mubr.f32.gmra.mrb[0].mxu0 %v587
      %v790 = vpop.f32.mrb[0].mxu0
      %v791 = vadd.f32 0.0, %v790
      %v792 = vpop.f32.mrb[0].mxu0
      %793 = vmatprep.mubr.f32.mxu0 0.0
      %794 = vmatmul.mubr.f32.gmra.mrb[0].mxu0 %v589
      %v795 = vpop.f32.mrb[0].mxu0
      %v796 = vadd.f32 0.0, %v795
      %v797 = vpop.f32.mrb[0].mxu0
      %798 = vmatprep.mubr.f32.mxu0 0.0
      %799 = vmatmul.mubr.f32.gmra.mrb[0].mxu0 %v591
      %v800 = vpop.f32.mrb[0].mxu0
      %v801 = vadd.f32 0.0, %v800
      %v802 = vpop.f32.mrb[0].mxu0
      %803 = vmatprep.mubr.f32.mxu0 0.0
      %804 = vmatmul.mubr.f32.gmra.mrb[0].mxu0 %v593
      %v805 = vpop.f32.mrb[0].mxu0
      %v806 = vadd.f32 0.0, %v805
      %v807 = vpop.f32.mrb[0].mxu0
      %808 = vmatprep.mubr.f32.mxu0 0.0
      %809 = vmatmul.mubr.f32.gmra.mrb[0].mxu0 %v595
      %v810 = vpop.f32.mrb[0].mxu0
      %v811 = vadd.f32 0.0, %v810
      %v812 = vpop.f32.mrb[0].mxu0
      %813 = vmatprep.mubr.f32.mxu0 0.0
      %814 = vmatmul.mubr.f32.gmra.mrb[0].mxu0 %v597
      %v815 = vpop.f32.mrb[0].mxu0
      %v816 = vadd.f32 0.0, %v815
      %v817 = vpop.f32.mrb[0].mxu0
      %818 = vmatprep.mubr.f32.mxu0 0.0
      %819 = vmatmul.mubr.f32.gmra.mrb[0].mxu0 %v599
      %v820 = vpop.f32.mrb[0].mxu0
      %v821 = vadd.f32 0.0, %v820
      %v822 = vpop.f32.mrb[0].mxu0
      %823 = vmatprep.mubr.f32.mxu0 0.0
      %824 = vmatmul.mubr.f32.gmra.mrb[0].mxu0 %v601
      %v825 = vpop.f32.mrb[0].mxu0
      %v826 = vadd.f32 0.0, %v825
      %v827 = vpop.f32.mrb[0].mxu0
      %828 = vmatprep.mubr.f32.mxu0 0.0
      %829 = vmatmul.mubr.f32.gmra.mrb[0].mxu0 %v603
      %v830 = vpop.f32.mrb[0].mxu0
      %v831 = vadd.f32 0.0, %v830
      %v832 = vpop.f32.mrb[0].mxu0
      %833 = vdwg.mxu0
      %v834 = vsel %vm540, %v357, 0
      %v836 = vsel %vm540, %v358, 0
      %v838 = vsel %vm540, %v360, 0
      %v840 = vsel %vm540, %v361, 0
      %v842 = vsel %vm540, %v363, 0
      %v844 = vsel %vm540, %v364, 0
      %v846 = vsel %vm540, %v366, 0
      %v848 = vsel %vm540, %v367, 0
      %v850 = vsel %vm540, %v369, 0
      %v852 = vsel %vm540, %v370, 0
      %v854 = vsel %vm540, %v372, 0
      %v856 = vsel %vm540, %v373, 0
      %v858 = vsel %vm540, %v375, 0
      %v860 = vsel %vm540, %v376, 0
      %v862 = vsel %vm540, %v378, 0
      %v864 = vsel %vm540, %v379, 0
      %v866 = vsel %vm540, %v381, 0
      %v868 = vsel %vm540, %v382, 0
      %v870 = vsel %vm540, %v384, 0
      %v872 = vsel %vm540, %v385, 0
      %v874 = vsel %vm540, %v387, 0
      %v876 = vsel %vm540, %v388, 0
      %v878 = vsel %vm540, %v390, 0
      %v880 = vsel %vm540, %v391, 0
      %v882 = vsel %vm540, %v393, 0
      %v884 = vsel %vm540, %v394, 0
      %v886 = vsel %vm540, %v396, 0
      %v888 = vsel %vm540, %v397, 0
      %v890 = vsel %vm540, %v399, 0
      %v892 = vsel %vm540, %v400, 0
      %v894 = vsel %vm540, %v402, 0
      %v896 = vsel %vm540, %v403, 0
      %v899 = vsel %vm605, %v293, 0
      %901 = vmatprep.subr.mxu0 0.0
      %902 = vmatpush1.msra.mxu0 %v899
      %903 = vmatprep.subr.mxu0 0.0
      %904 = vmatpush1.msra.mxu0 0.0
      %905 = vmatprep.subr.mxu0 0.0
      %906 = vmatpush1.msra.mxu0 0.0
      %907 = vmatprep.subr.mxu0 0.0
      %908 = vmatpush1.msra.mxu0 0.0
      %909 = vmatprep.subr.mxu0 0.0
      %910 = vmatpush1.msra.mxu0 0.0
      %911 = vmatprep.subr.mxu0 0.0
      %912 = vmatpush1.msra.mxu0 0.0
      %913 = vmatprep.subr.mxu0 0.0
      %914 = vmatpush1.msra.mxu0 0.0
      %915 = vmatprep.subr.mxu0 0.0
      %916 = vmatpush1.msra.mxu0 0.0
      %917 = vmatprep.subr.mxu0 0.0
      %918 = vmatpush1.msra.mxu0 0.0
      %919 = vmatprep.subr.mxu0 0.0
      %920 = vmatpush1.msra.mxu0 0.0
      %921 = vmatprep.subr.mxu0 0.0
      %922 = vmatpush1.msra.mxu0 0.0
      %923 = vmatprep.subr.mxu0 0.0
      %924 = vmatpush1.msra.mxu0 0.0
      %925 = vmatprep.subr.mxu0 0.0
      %926 = vmatpush1.msra.mxu0 0.0
      %927 = vmatprep.subr.mxu0 0.0
      %928 = vmatpush1.msra.mxu0 0.0
      %929 = vmatprep.subr.mxu0 0.0
      %930 = vmatpush1.msra.mxu0 0.0
      %931 = vmatprep.subr.mxu0 0.0
      %932 = vmatpush1.msra.mxu0 0.0
      %933 = vmatprep.subr.mxu0 0.0
      %934 = vmatpush1.msra.mxu0 0.0
      %935 = vmatprep.subr.mxu0 0.0
      %936 = vmatpush1.msra.mxu0 0.0
      %937 = vmatprep.subr.mxu0 0.0
      %938 = vmatpush1.msra.mxu0 0.0
      %939 = vmatprep.subr.mxu0 0.0
      %940 = vmatpush1.msra.mxu0 0.0
      %941 = vmatprep.subr.mxu0 0.0
      %942 = vmatpush1.msra.mxu0 0.0
      %943 = vmatprep.subr.mxu0 0.0
      %944 = vmatpush1.msra.mxu0 0.0
      %945 = vmatprep.subr.mxu0 0.0
      %946 = vmatpush1.msra.mxu0 0.0
      %947 = vmatprep.subr.mxu0 0.0
      %948 = vmatpush1.msra.mxu0 0.0
      %949 = vmatprep.subr.mxu0 0.0
      %950 = vmatpush1.msra.mxu0 0.0
      %951 = vmatprep.subr.mxu0 0.0
      %952 = vmatpush1.msra.mxu0 0.0
      %953 = vmatprep.subr.mxu0 0.0
      %954 = vmatpush1.msra.mxu0 0.0
      %955 = vmatprep.subr.mxu0 0.0
      %956 = vmatpush1.msra.mxu0 0.0
      %957 = vmatprep.subr.mxu0 0.0
      %958 = vmatpush1.msra.mxu0 0.0
      %959 = vmatprep.subr.mxu0 0.0
      %960 = vmatpush1.msra.mxu0 0.0
      %961 = vmatprep.subr.mxu0 0.0
      %962 = vmatpush1.msra.mxu0 0.0
      %963 = vmatprep.subr.mxu0 0.0
      %964 = vmatpush1.msra.mxu0 0.0
      %965 = vmatprep.mubr.f32.mxu0 0.0
      %966 = vmatmul.mubr.f32.gmra.mrb[0].mxu0 %v834
      %v967 = vpop.f32.mrb[0].mxu0
      %v968 = vadd.f32 %v676, %v967
      %v969 = vpop.f32.mrb[0].mxu0
      %970 = vmatprep.mubr.f32.mxu0 0.0
      %971 = vmatmul.mubr.f32.gmra.mrb[0].mxu0 %v836
      %v972 = vpop.f32.mrb[0].mxu0
      %v973 = vadd.f32 %v681, %v972
      %v974 = vpop.f32.mrb[0].mxu0
      %975 = vmatprep.mubr.f32.mxu0 0.0
      %976 = vmatmul.mubr.f32.gmra.mrb[0].mxu0 %v838
      %v977 = vpop.f32.mrb[0].mxu0
      %v978 = vadd.f32 %v686, %v977
      %v979 = vpop.f32.mrb[0].mxu0
      %980 = vmatprep.mubr.f32.mxu0 0.0
      %981 = vmatmul.mubr.f32.gmra.mrb[0].mxu0 %v840
      %v982 = vpop.f32.mrb[0].mxu0
      %v983 = vadd.f32 %v691, %v982
      %v984 = vpop.f32.mrb[0].mxu0
      %985 = vmatprep.mubr.f32.mxu0 0.0
      %986 = vmatmul.mubr.f32.gmra.mrb[0].mxu0 %v842
      %v987 = vpop.f32.mrb[0].mxu0
      %v988 = vadd.f32 %v696, %v987
      %v989 = vpop.f32.mrb[0].mxu0
      %990 = vmatprep.mubr.f32.mxu0 0.0
      %991 = vmatmul.mubr.f32.gmra.mrb[0].mxu0 %v844
      %v992 = vpop.f32.mrb[0].mxu0
      %v993 = vadd.f32 %v701, %v992
      %v994 = vpop.f32.mrb[0].mxu0
      %995 = vmatprep.mubr.f32.mxu0 0.0
      %996 = vmatmul.mubr.f32.gmra.mrb[0].mxu0 %v846
      %v997 = vpop.f32.mrb[0].mxu0
      %v998 = vadd.f32 %v706, %v997
      %v999 = vpop.f32.mrb[0].mxu0
      %1000 = vmatprep.mubr.f32.mxu0 0.0
      %1001 = vmatmul.mubr.f32.gmra.mrb[0].mxu0 %v848
      %v1002 = vpop.f32.mrb[0].mxu0
      %v1003 = vadd.f32 %v711, %v1002
      %v1004 = vpop.f32.mrb[0].mxu0
      %1005 = vmatprep.mubr.f32.mxu0 0.0
      %1006 = vmatmul.mubr.f32.gmra.mrb[0].mxu0 %v850
      %v1007 = vpop.f32.mrb[0].mxu0
      %v1008 = vadd.f32 %v716, %v1007
      %v1009 = vpop.f32.mrb[0].mxu0
      %1010 = vmatprep.mubr.f32.mxu0 0.0
      %1011 = vmatmul.mubr.f32.gmra.mrb[0].mxu0 %v852
      %v1012 = vpop.f32.mrb[0].mxu0
      %v1013 = vadd.f32 %v721, %v1012
      %v1014 = vpop.f32.mrb[0].mxu0
      %1015 = vmatprep.mubr.f32.mxu0 0.0
      %1016 = vmatmul.mubr.f32.gmra.mrb[0].mxu0 %v854
      %v1017 = vpop.f32.mrb[0].mxu0
      %v1018 = vadd.f32 %v726, %v1017
      %v1019 = vpop.f32.mrb[0].mxu0
      %1020 = vmatprep.mubr.f32.mxu0 0.0
      %1021 = vmatmul.mubr.f32.gmra.mrb[0].mxu0 %v856
      %v1022 = vpop.f32.mrb[0].mxu0
      %v1023 = vadd.f32 %v731, %v1022
      %v1024 = vpop.f32.mrb[0].mxu0
      %1025 = vmatprep.mubr.f32.mxu0 0.0
      %1026 = vmatmul.mubr.f32.gmra.mrb[0].mxu0 %v858
      %v1027 = vpop.f32.mrb[0].mxu0
      %v1028 = vadd.f32 %v736, %v1027
      %v1029 = vpop.f32.mrb[0].mxu0
      %1030 = vmatprep.mubr.f32.mxu0 0.0
      %1031 = vmatmul.mubr.f32.gmra.mrb[0].mxu0 %v860
      %v1032 = vpop.f32.mrb[0].mxu0
      %v1033 = vadd.f32 %v741, %v1032
      %v1034 = vpop.f32.mrb[0].mxu0
      %1035 = vmatprep.mubr.f32.mxu0 0.0
      %1036 = vmatmul.mubr.f32.gmra.mrb[0].mxu0 %v862
      %v1037 = vpop.f32.mrb[0].mxu0
      %v1038 = vadd.f32 %v746, %v1037
      %v1039 = vpop.f32.mrb[0].mxu0
      %1040 = vmatprep.mubr.f32.mxu0 0.0
      %1041 = vmatmul.mubr.f32.gmra.mrb[0].mxu0 %v864
      %v1042 = vpop.f32.mrb[0].mxu0
      %v1043 = vadd.f32 %v751, %v1042
      %v1044 = vpop.f32.mrb[0].mxu0
      %1045 = vmatprep.mubr.f32.mxu0 0.0
      %1046 = vmatmul.mubr.f32.gmra.mrb[0].mxu0 %v866
      %v1047 = vpop.f32.mrb[0].mxu0
      %v1048 = vadd.f32 %v756, %v1047
      %v1049 = vpop.f32.mrb[0].mxu0
      %1050 = vmatprep.mubr.f32.mxu0 0.0
      %1051 = vmatmul.mubr.f32.gmra.mrb[0].mxu0 %v868
      %v1052 = vpop.f32.mrb[0].mxu0
      %v1053 = vadd.f32 %v761, %v1052
      %v1054 = vpop.f32.mrb[0].mxu0
      %1055 = vmatprep.mubr.f32.mxu0 0.0
      %1056 = vmatmul.mubr.f32.gmra.mrb[0].mxu0 %v870
      %v1057 = vpop.f32.mrb[0].mxu0
      %v1058 = vadd.f32 %v766, %v1057
      %v1059 = vpop.f32.mrb[0].mxu0
      %1060 = vmatprep.mubr.f32.mxu0 0.0
      %1061 = vmatmul.mubr.f32.gmra.mrb[0].mxu0 %v872
      %v1062 = vpop.f32.mrb[0].mxu0
      %v1063 = vadd.f32 %v771, %v1062
      %v1064 = vpop.f32.mrb[0].mxu0
      %1065 = vmatprep.mubr.f32.mxu0 0.0
      %1066 = vmatmul.mubr.f32.gmra.mrb[0].mxu0 %v874
      %v1067 = vpop.f32.mrb[0].mxu0
      %v1068 = vadd.f32 %v776, %v1067
      %v1069 = vpop.f32.mrb[0].mxu0
      %1070 = vmatprep.mubr.f32.mxu0 0.0
      %1071 = vmatmul.mubr.f32.gmra.mrb[0].mxu0 %v876
      %v1072 = vpop.f32.mrb[0].mxu0
      %v1073 = vadd.f32 %v781, %v1072
      %v1074 = vpop.f32.mrb[0].mxu0
      %1075 = vmatprep.mubr.f32.mxu0 0.0
      %1076 = vmatmul.mubr.f32.gmra.mrb[0].mxu0 %v878
      %v1077 = vpop.f32.mrb[0].mxu0
      %v1078 = vadd.f32 %v786, %v1077
      %v1079 = vpop.f32.mrb[0].mxu0
      %1080 = vmatprep.mubr.f32.mxu0 0.0
      %1081 = vmatmul.mubr.f32.gmra.mrb[0].mxu0 %v880
      %v1082 = vpop.f32.mrb[0].mxu0
      %v1083 = vadd.f32 %v791, %v1082
      %v1084 = vpop.f32.mrb[0].mxu0
      %1085 = vmatprep.mubr.f32.mxu0 0.0
      %1086 = vmatmul.mubr.f32.gmra.mrb[0].mxu0 %v882
      %v1087 = vpop.f32.mrb[0].mxu0
      %v1088 = vadd.f32 %v796, %v1087
      %v1089 = vpop.f32.mrb[0].mxu0
      %1090 = vmatprep.mubr.f32.mxu0 0.0
      %1091 = vmatmul.mubr.f32.gmra.mrb[0].mxu0 %v884
      %v1092 = vpop.f32.mrb[0].mxu0
      %v1093 = vadd.f32 %v801, %v1092
      %v1094 = vpop.f32.mrb[0].mxu0
      %1095 = vmatprep.mubr.f32.mxu0 0.0
      %1096 = vmatmul.mubr.f32.gmra.mrb[0].mxu0 %v886
      %v1097 = vpop.f32.mrb[0].mxu0
      %v1098 = vadd.f32 %v806, %v1097
      %v1099 = vpop.f32.mrb[0].mxu0
      %1100 = vmatprep.mubr.f32.mxu0 0.0
      %1101 = vmatmul.mubr.f32.gmra.mrb[0].mxu0 %v888
      %v1102 = vpop.f32.mrb[0].mxu0
      %v1103 = vadd.f32 %v811, %v1102
      %v1104 = vpop.f32.mrb[0].mxu0
      %1105 = vmatprep.mubr.f32.mxu0 0.0
      %1106 = vmatmul.mubr.f32.gmra.mrb[0].mxu0 %v890
      %v1107 = vpop.f32.mrb[0].mxu0
      %v1108 = vadd.f32 %v816, %v1107
      %v1109 = vpop.f32.mrb[0].mxu0
      %1110 = vmatprep.mubr.f32.mxu0 0.0
      %1111 = vmatmul.mubr.f32.gmra.mrb[0].mxu0 %v892
      %v1112 = vpop.f32.mrb[0].mxu0
      %v1113 = vadd.f32 %v821, %v1112
      %v1114 = vpop.f32.mrb[0].mxu0
      %1115 = vmatprep.mubr.f32.mxu0 0.0
      %1116 = vmatmul.mubr.f32.gmra.mrb[0].mxu0 %v894
      %v1117 = vpop.f32.mrb[0].mxu0
      %v1118 = vadd.f32 %v826, %v1117
      %v1119 = vpop.f32.mrb[0].mxu0
      %1120 = vmatprep.mubr.f32.mxu0 0.0
      %1121 = vmatmul.mubr.f32.gmra.mrb[0].mxu0 %v896
      %v1122 = vpop.f32.mrb[0].mxu0
      %v1123 = vadd.f32 %v831, %v1122
      %v1124 = vpop.f32.mrb[0].mxu0
      %1125 = vdwg.mxu0
      %vm1126 = vcmask 1045504
      %v1127 = vrot.slane %v357, 2
      %v1128 = vrot.slane %v358, 2
      %v1129 = vsel %vm1126, %v1127, %v1128
      %v1130 = vrot.slane %v359, 2
      %v1131 = vsel %vm1126, %v1128, %v1130
      %v1132 = vrot.slane %v360, 2
      %v1133 = vrot.slane %v361, 2
      %v1134 = vsel %vm1126, %v1132, %v1133
      %v1135 = vrot.slane %v362, 2
      %v1136 = vsel %vm1126, %v1133, %v1135
      %v1137 = vrot.slane %v363, 2
      %v1138 = vrot.slane %v364, 2
      %v1139 = vsel %vm1126, %v1137, %v1138
      %v1140 = vrot.slane %v365, 2
      %v1141 = vsel %vm1126, %v1138, %v1140
      %v1142 = vrot.slane %v366, 2
      %v1143 = vrot.slane %v367, 2
      %v1144 = vsel %vm1126, %v1142, %v1143
      %v1145 = vrot.slane %v368, 2
      %v1146 = vsel %vm1126, %v1143, %v1145
      %v1147 = vrot.slane %v369, 2
      %v1148 = vrot.slane %v370, 2
      %v1149 = vsel %vm1126, %v1147, %v1148
      %v1150 = vrot.slane %v371, 2
      %v1151 = vsel %vm1126, %v1148, %v1150
      %v1152 = vrot.slane %v372, 2
      %v1153 = vrot.slane %v373, 2
      %v1154 = vsel %vm1126, %v1152, %v1153
      %v1155 = vrot.slane %v374, 2
      %v1156 = vsel %vm1126, %v1153, %v1155
      %v1157 = vrot.slane %v375, 2
      %v1158 = vrot.slane %v376, 2
      %v1159 = vsel %vm1126, %v1157, %v1158
      %v1160 = vrot.slane %v377, 2
      %v1161 = vsel %vm1126, %v1158, %v1160
      %v1162 = vrot.slane %v378, 2
      %v1163 = vrot.slane %v379, 2
      %v1164 = vsel %vm1126, %v1162, %v1163
      %v1165 = vrot.slane %v380, 2
      %v1166 = vsel %vm1126, %v1163, %v1165
      %v1167 = vrot.slane %v381, 2
      %v1168 = vrot.slane %v382, 2
      %v1169 = vsel %vm1126, %v1167, %v1168
      %v1170 = vrot.slane %v383, 2
      %v1171 = vsel %vm1126, %v1168, %v1170
      %v1172 = vrot.slane %v384, 2
      %v1173 = vrot.slane %v385, 2
      %v1174 = vsel %vm1126, %v1172, %v1173
      %v1175 = vrot.slane %v386, 2
      %v1176 = vsel %vm1126, %v1173, %v1175
      %v1177 = vrot.slane %v387, 2
      %v1178 = vrot.slane %v388, 2
      %v1179 = vsel %vm1126, %v1177, %v1178
      %v1180 = vrot.slane %v389, 2
      %v1181 = vsel %vm1126, %v1178, %v1180
      %v1182 = vrot.slane %v390, 2
      %v1183 = vrot.slane %v391, 2
      %v1184 = vsel %vm1126, %v1182, %v1183
      %v1185 = vrot.slane %v392, 2
      %v1186 = vsel %vm1126, %v1183, %v1185
      %v1187 = vrot.slane %v393, 2
      %v1188 = vrot.slane %v394, 2
      %v1189 = vsel %vm1126, %v1187, %v1188
      %v1190 = vrot.slane %v395, 2
      %v1191 = vsel %vm1126, %v1188, %v1190
      %v1192 = vrot.slane %v396, 2
      %v1193 = vrot.slane %v397, 2
      %v1194 = vsel %vm1126, %v1192, %v1193
      %v1195 = vrot.slane %v398, 2
      %v1196 = vsel %vm1126, %v1193, %v1195
      %v1197 = vrot.slane %v399, 2
      %v1198 = vrot.slane %v400, 2
      %v1199 = vsel %vm1126, %v1197, %v1198
      %v1200 = vrot.slane %v401, 2
      %v1201 = vsel %vm1126, %v1198, %v1200
      %v1202 = vrot.slane %v402, 2
      %v1203 = vrot.slane %v403, 2
      %v1204 = vsel %vm1126, %v1202, %v1203
      %v1205 = vrot.slane %v404, 2
      %v1206 = vsel %vm1126, %v1203, %v1205
      %v1207 = vsel %vm540, %v1129, 0
      %v1209 = vsel %vm540, %v1131, 0
      %v1211 = vsel %vm540, %v1134, 0
      %v1213 = vsel %vm540, %v1136, 0
      %v1215 = vsel %vm540, %v1139, 0
      %v1217 = vsel %vm540, %v1141, 0
      %v1219 = vsel %vm540, %v1144, 0
      %v1221 = vsel %vm540, %v1146, 0
      %v1223 = vsel %vm540, %v1149, 0
      %v1225 = vsel %vm540, %v1151, 0
      %v1227 = vsel %vm540, %v1154, 0
      %v1229 = vsel %vm540, %v1156, 0
      %v1231 = vsel %vm540, %v1159, 0
      %v1233 = vsel %vm540, %v1161, 0
      %v1235 = vsel %vm540, %v1164, 0
      %v1237 = vsel %vm540, %v1166, 0
      %v1239 = vsel %vm540, %v1169, 0
      %v1241 = vsel %vm540, %v1171, 0
      %v1243 = vsel %vm540, %v1174, 0
      %v1245 = vsel %vm540, %v1176, 0
      %v1247 = vsel %vm540, %v1179, 0
      %v1249 = vsel %vm540, %v1181, 0
      %v1251 = vsel %vm540, %v1184, 0
      %v1253 = vsel %vm540, %v1186, 0
      %v1255 = vsel %vm540, %v1189, 0
      %v1257 = vsel %vm540, %v1191, 0
      %v1259 = vsel %vm540, %v1194, 0
      %v1261 = vsel %vm540, %v1196, 0
      %v1263 = vsel %vm540, %v1199, 0
      %v1265 = vsel %vm540, %v1201, 0
      %v1267 = vsel %vm540, %v1204, 0
      %v1269 = vsel %vm540, %v1206, 0
      %v1272 = vsel %vm605, %v295, 0
      %1274 = vmatprep.subr.mxu0 0.0
      %1275 = vmatpush1.msra.mxu0 %v1272
      %1276 = vmatprep.subr.mxu0 0.0
      %1277 = vmatpush1.msra.mxu0 0.0
      %1278 = vmatprep.subr.mxu0 0.0
      %1279 = vmatpush1.msra.mxu0 0.0
      %1280 = vmatprep.subr.mxu0 0.0
      %1281 = vmatpush1.msra.mxu0 0.0
      %1282 = vmatprep.subr.mxu0 0.0
      %1283 = vmatpush1.msra.mxu0 0.0
      %1284 = vmatprep.subr.mxu0 0.0
      %1285 = vmatpush1.msra.mxu0 0.0
      %1286 = vmatprep.subr.mxu0 0.0
      %1287 = vmatpush1.msra.mxu0 0.0
      %1288 = vmatprep.subr.mxu0 0.0
      %1289 = vmatpush1.msra.mxu0 0.0
      %1290 = vmatprep.subr.mxu0 0.0
      %1291 = vmatpush1.msra.mxu0 0.0
      %1292 = vmatprep.subr.mxu0 0.0
      %1293 = vmatpush1.msra.mxu0 0.0
      %1294 = vmatprep.subr.mxu0 0.0
      %1295 = vmatpush1.msra.mxu0 0.0
      %1296 = vmatprep.subr.mxu0 0.0
      %1297 = vmatpush1.msra.mxu0 0.0
      %1298 = vmatprep.subr.mxu0 0.0
      %1299 = vmatpush1.msra.mxu0 0.0
      %1300 = vmatprep.subr.mxu0 0.0
      %1301 = vmatpush1.msra.mxu0 0.0
      %1302 = vmatprep.subr.mxu0 0.0
      %1303 = vmatpush1.msra.mxu0 0.0
      %1304 = vmatprep.subr.mxu0 0.0
      %1305 = vmatpush1.msra.mxu0 0.0
      %1306 = vmatprep.subr.mxu0 0.0
      %1307 = vmatpush1.msra.mxu0 0.0
      %1308 = vmatprep.subr.mxu0 0.0
      %1309 = vmatpush1.msra.mxu0 0.0
      %1310 = vmatprep.subr.mxu0 0.0
      %1311 = vmatpush1.msra.mxu0 0.0
      %1312 = vmatprep.subr.mxu0 0.0
      %1313 = vmatpush1.msra.mxu0 0.0
      %1314 = vmatprep.subr.mxu0 0.0
      %1315 = vmatpush1.msra.mxu0 0.0
      %1316 = vmatprep.subr.mxu0 0.0
      %1317 = vmatpush1.msra.mxu0 0.0
      %1318 = vmatprep.subr.mxu0 0.0
      %1319 = vmatpush1.msra.mxu0 0.0
      %1320 = vmatprep.subr.mxu0 0.0
      %1321 = vmatpush1.msra.mxu0 0.0
      %1322 = vmatprep.subr.mxu0 0.0
      %1323 = vmatpush1.msra.mxu0 0.0
      %1324 = vmatprep.subr.mxu0 0.0
      %1325 = vmatpush1.msra.mxu0 0.0
      %1326 = vmatprep.subr.mxu0 0.0
      %1327 = vmatpush1.msra.mxu0 0.0
      %1328 = vmatprep.subr.mxu0 0.0
      %1329 = vmatpush1.msra.mxu0 0.0
      %1330 = vmatprep.subr.mxu0 0.0
      %1331 = vmatpush1.msra.mxu0 0.0
      %1332 = vmatprep.subr.mxu0 0.0
      %1333 = vmatpush1.msra.mxu0 0.0
      %1334 = vmatprep.subr.mxu0 0.0
      %1335 = vmatpush1.msra.mxu0 0.0
      %1336 = vmatprep.subr.mxu0 0.0
      %1337 = vmatpush1.msra.mxu0 0.0
      %1338 = vmatprep.mubr.f32.mxu0 0.0
      %1339 = vmatmul.mubr.f32.gmra.mrb[0].mxu0 %v1207
      %v1340 = vpop.f32.mrb[0].mxu0
      %v1341 = vadd.f32 0.0, %v1340
      %v1342 = vpop.f32.mrb[0].mxu0
      %1343 = vmatprep.mubr.f32.mxu0 0.0
      %1344 = vmatmul.mubr.f32.gmra.mrb[0].mxu0 %v1209
      %v1345 = vpop.f32.mrb[0].mxu0
      %v1346 = vadd.f32 0.0, %v1345
      %v1347 = vpop.f32.mrb[0].mxu0
      %1348 = vmatprep.mubr.f32.mxu0 0.0
      %1349 = vmatmul.mubr.f32.gmra.mrb[0].mxu0 %v1211
      %v1350 = vpop.f32.mrb[0].mxu0
      %v1351 = vadd.f32 0.0, %v1350
      %v1352 = vpop.f32.mrb[0].mxu0
      %1353 = vmatprep.mubr.f32.mxu0 0.0
      %1354 = vmatmul.mubr.f32.gmra.mrb[0].mxu0 %v1213
      %v1355 = vpop.f32.mrb[0].mxu0
      %v1356 = vadd.f32 0.0, %v1355
      %v1357 = vpop.f32.mrb[0].mxu0
      %1358 = vmatprep.mubr.f32.mxu0 0.0
      %1359 = vmatmul.mubr.f32.gmra.mrb[0].mxu0 %v1215
      %v1360 = vpop.f32.mrb[0].mxu0
      %v1361 = vadd.f32 0.0, %v1360
      %v1362 = vpop.f32.mrb[0].mxu0
      %1363 = vmatprep.mubr.f32.mxu0 0.0
      %1364 = vmatmul.mubr.f32.gmra.mrb[0].mxu0 %v1217
      %v1365 = vpop.f32.mrb[0].mxu0
      %v1366 = vadd.f32 0.0, %v1365
      %v1367 = vpop.f32.mrb[0].mxu0
      %1368 = vmatprep.mubr.f32.mxu0 0.0
      %1369 = vmatmul.mubr.f32.gmra.mrb[0].mxu0 %v1219
      %v1370 = vpop.f32.mrb[0].mxu0
      %v1371 = vadd.f32 0.0, %v1370
      %v1372 = vpop.f32.mrb[0].mxu0
      %1373 = vmatprep.mubr.f32.mxu0 0.0
      %1374 = vmatmul.mubr.f32.gmra.mrb[0].mxu0 %v1221
      %v1375 = vpop.f32.mrb[0].mxu0
      %v1376 = vadd.f32 0.0, %v1375
      %v1377 = vpop.f32.mrb[0].mxu0
      %1378 = vmatprep.mubr.f32.mxu0 0.0
      %1379 = vmatmul.mubr.f32.gmra.mrb[0].mxu0 %v1223
      %v1380 = vpop.f32.mrb[0].mxu0
      %v1381 = vadd.f32 0.0, %v1380
      %v1382 = vpop.f32.mrb[0].mxu0
      %1383 = vmatprep.mubr.f32.mxu0 0.0
      %1384 = vmatmul.mubr.f32.gmra.mrb[0].mxu0 %v1225
      %v1385 = vpop.f32.mrb[0].mxu0
      %v1386 = vadd.f32 0.0, %v1385
      %v1387 = vpop.f32.mrb[0].mxu0
      %1388 = vmatprep.mubr.f32.mxu0 0.0
      %1389 = vmatmul.mubr.f32.gmra.mrb[0].mxu0 %v1227
      %v1390 = vpop.f32.mrb[0].mxu0
      %v1391 = vadd.f32 0.0, %v1390
      %v1392 = vpop.f32.mrb[0].mxu0
      %1393 = vmatprep.mubr.f32.mxu0 0.0
      %1394 = vmatmul.mubr.f32.gmra.mrb[0].mxu0 %v1229
      %v1395 = vpop.f32.mrb[0].mxu0
      %v1396 = vadd.f32 0.0, %v1395
      %v1397 = vpop.f32.mrb[0].mxu0
      %1398 = vmatprep.mubr.f32.mxu0 0.0
      %1399 = vmatmul.mubr.f32.gmra.mrb[0].mxu0 %v1231
      %v1400 = vpop.f32.mrb[0].mxu0
      %v1401 = vadd.f32 0.0, %v1400
      %v1402 = vpop.f32.mrb[0].mxu0
      %1403 = vmatprep.mubr.f32.mxu0 0.0
      %1404 = vmatmul.mubr.f32.gmra.mrb[0].mxu0 %v1233
      %v1405 = vpop.f32.mrb[0].mxu0
      %v1406 = vadd.f32 0.0, %v1405
      %v1407 = vpop.f32.mrb[0].mxu0
      %1408 = vmatprep.mubr.f32.mxu0 0.0
      %1409 = vmatmul.mubr.f32.gmra.mrb[0].mxu0 %v1235
      %v1410 = vpop.f32.mrb[0].mxu0
      %v1411 = vadd.f32 0.0, %v1410
      %v1412 = vpop.f32.mrb[0].mxu0
      %1413 = vmatprep.mubr.f32.mxu0 0.0
      %1414 = vmatmul.mubr.f32.gmra.mrb[0].mxu0 %v1237
      %v1415 = vpop.f32.mrb[0].mxu0
      %v1416 = vadd.f32 0.0, %v1415
      %v1417 = vpop.f32.mrb[0].mxu0
      %1418 = vmatprep.mubr.f32.mxu0 0.0
      %1419 = vmatmul.mubr.f32.gmra.mrb[0].mxu0 %v1239
      %v1420 = vpop.f32.mrb[0].mxu0
      %v1421 = vadd.f32 0.0, %v1420
      %v1422 = vpop.f32.mrb[0].mxu0
      %1423 = vmatprep.mubr.f32.mxu0 0.0
      %1424 = vmatmul.mubr.f32.gmra.mrb[0].mxu0 %v1241
      %v1425 = vpop.f32.mrb[0].mxu0
      %v1426 = vadd.f32 0.0, %v1425
      %v1427 = vpop.f32.mrb[0].mxu0
      %1428 = vmatprep.mubr.f32.mxu0 0.0
      %1429 = vmatmul.mubr.f32.gmra.mrb[0].mxu0 %v1243
      %v1430 = vpop.f32.mrb[0].mxu0
      %v1431 = vadd.f32 0.0, %v1430
      %v1432 = vpop.f32.mrb[0].mxu0
      %1433 = vmatprep.mubr.f32.mxu0 0.0
      %1434 = vmatmul.mubr.f32.gmra.mrb[0].mxu0 %v1245
      %v1435 = vpop.f32.mrb[0].mxu0
      %v1436 = vadd.f32 0.0, %v1435
      %v1437 = vpop.f32.mrb[0].mxu0
      %1438 = vmatprep.mubr.f32.mxu0 0.0
      %1439 = vmatmul.mubr.f32.gmra.mrb[0].mxu0 %v1247
      %v1440 = vpop.f32.mrb[0].mxu0
      %v1441 = vadd.f32 0.0, %v1440
      %v1442 = vpop.f32.mrb[0].mxu0
      %1443 = vmatprep.mubr.f32.mxu0 0.0
      %1444 = vmatmul.mubr.f32.gmra.mrb[0].mxu0 %v1249
      %v1445 = vpop.f32.mrb[0].mxu0
      %v1446 = vadd.f32 0.0, %v1445
      %v1447 = vpop.f32.mrb[0].mxu0
      %1448 = vmatprep.mubr.f32.mxu0 0.0
      %1449 = vmatmul.mubr.f32.gmra.mrb[0].mxu0 %v1251
      %v1450 = vpop.f32.mrb[0].mxu0
      %v1451 = vadd.f32 0.0, %v1450
      %v1452 = vpop.f32.mrb[0].mxu0
      %1453 = vmatprep.mubr.f32.mxu0 0.0
      %1454 = vmatmul.mubr.f32.gmra.mrb[0].mxu0 %v1253
      %v1455 = vpop.f32.mrb[0].mxu0
      %v1456 = vadd.f32 0.0, %v1455
      %v1457 = vpop.f32.mrb[0].mxu0
      %1458 = vmatprep.mubr.f32.mxu0 0.0
      %1459 = vmatmul.mubr.f32.gmra.mrb[0].mxu0 %v1255
      %v1460 = vpop.f32.mrb[0].mxu0
      %v1461 = vadd.f32 0.0, %v1460
      %v1462 = vpop.f32.mrb[0].mxu0
      %1463 = vmatprep.mubr.f32.mxu0 0.0
      %1464 = vmatmul.mubr.f32.gmra.mrb[0].mxu0 %v1257
      %v1465 = vpop.f32.mrb[0].mxu0
      %v1466 = vadd.f32 0.0, %v1465
      %v1467 = vpop.f32.mrb[0].mxu0
      %1468 = vmatprep.mubr.f32.mxu0 0.0
      %1469 = vmatmul.mubr.f32.gmra.mrb[0].mxu0 %v1259
      %v1470 = vpop.f32.mrb[0].mxu0
      %v1471 = vadd.f32 0.0, %v1470
      %v1472 = vpop.f32.mrb[0].mxu0
      %1473 = vmatprep.mubr.f32.mxu0 0.0
      %1474 = vmatmul.mubr.f32.gmra.mrb[0].mxu0 %v1261
      %v1475 = vpop.f32.mrb[0].mxu0
      %v1476 = vadd.f32 0.0, %v1475
      %v1477 = vpop.f32.mrb[0].mxu0
      %1478 = vmatprep.mubr.f32.mxu0 0.0
      %1479 = vmatmul.mubr.f32.gmra.mrb[0].mxu0 %v1263
      %v1480 = vpop.f32.mrb[0].mxu0
      %v1481 = vadd.f32 0.0, %v1480
      %v1482 = vpop.f32.mrb[0].mxu0
      %1483 = vmatprep.mubr.f32.mxu0 0.0
      %1484 = vmatmul.mubr.f32.gmra.mrb[0].mxu0 %v1265
      %v1485 = vpop.f32.mrb[0].mxu0
      %v1486 = vadd.f32 0.0, %v1485
      %v1487 = vpop.f32.mrb[0].mxu0
      %1488 = vmatprep.mubr.f32.mxu0 0.0
      %1489 = vmatmul.mubr.f32.gmra.mrb[0].mxu0 %v1267
      %v1490 = vpop.f32.mrb[0].mxu0
      %v1491 = vadd.f32 0.0, %v1490
      %v1492 = vpop.f32.mrb[0].mxu0
      %1493 = vmatprep.mubr.f32.mxu0 0.0
      %1494 = vmatmul.mubr.f32.gmra.mrb[0].mxu0 %v1269
      %v1495 = vpop.f32.mrb[0].mxu0
      %v1496 = vadd.f32 0.0, %v1495
      %v1497 = vpop.f32.mrb[0].mxu0
      %1498 = vdwg.mxu0
      %v1499 = vadd.f32 %v968, %v1341
      %v1500 = vadd.f32 %v973, %v1346
      %v1501 = vadd.f32 %v978, %v1351
      %v1502 = vadd.f32 %v983, %v1356
      %v1503 = vadd.f32 %v988, %v1361
      %v1504 = vadd.f32 %v993, %v1366
      %v1505 = vadd.f32 %v998, %v1371
      %v1506 = vadd.f32 %v1003, %v1376
      %v1507 = vadd.f32 %v1008, %v1381
      %v1508 = vadd.f32 %v1013, %v1386
      %v1509 = vadd.f32 %v1018, %v1391
      %v1510 = vadd.f32 %v1023, %v1396
      %v1511 = vadd.f32 %v1028, %v1401
      %v1512 = vadd.f32 %v1033, %v1406
      %v1513 = vadd.f32 %v1038, %v1411
      %v1514 = vadd.f32 %v1043, %v1416
      %v1515 = vadd.f32 %v1048, %v1421
      %v1516 = vadd.f32 %v1053, %v1426
      %v1517 = vadd.f32 %v1058, %v1431
      %v1518 = vadd.f32 %v1063, %v1436
      %v1519 = vadd.f32 %v1068, %v1441
      %v1520 = vadd.f32 %v1073, %v1446
      %v1521 = vadd.f32 %v1078, %v1451
      %v1522 = vadd.f32 %v1083, %v1456
      %v1523 = vadd.f32 %v1088, %v1461
      %v1524 = vadd.f32 %v1093, %v1466
      %v1525 = vadd.f32 %v1098, %v1471
      %v1526 = vadd.f32 %v1103, %v1476
      %v1527 = vadd.f32 %v1108, %v1481
      %v1528 = vadd.f32 %v1113, %v1486
      %v1529 = vadd.f32 %v1118, %v1491
      %v1530 = vadd.f32 %v1123, %v1496
      %v1532 = vsel %vm540, %v405, 0
      %v1535 = vsel %vm540, %v406, 0
      %v1538 = vsel %vm605, %v296, 0
      %1540 = vmatprep.subr.mxu0 0.0
      %1541 = vmatpush1.msra.mxu0 %v1538
      %1542 = vmatprep.subr.mxu0 0.0
      %1543 = vmatpush1.msra.mxu0 0.0
      %1544 = vmatprep.subr.mxu0 0.0
      %1545 = vmatpush1.msra.mxu0 0.0
      %1546 = vmatprep.subr.mxu0 0.0
      %1547 = vmatpush1.msra.mxu0 0.0
      %1548 = vmatprep.subr.mxu0 0.0
      %1549 = vmatpush1.msra.mxu0 0.0
      %1550 = vmatprep.subr.mxu0 0.0
      %1551 = vmatpush1.msra.mxu0 0.0
      %1552 = vmatprep.subr.mxu0 0.0
      %1553 = vmatpush1.msra.mxu0 0.0
      %1554 = vmatprep.subr.mxu0 0.0
      %1555 = vmatpush1.msra.mxu0 0.0
      %1556 = vmatprep.subr.mxu0 0.0
      %1557 = vmatpush1.msra.mxu0 0.0
      %1558 = vmatprep.subr.mxu0 0.0
      %1559 = vmatpush1.msra.mxu0 0.0
      %1560 = vmatprep.subr.mxu0 0.0
      %1561 = vmatpush1.msra.mxu0 0.0
      %1562 = vmatprep.subr.mxu0 0.0
      %1563 = vmatpush1.msra.mxu0 0.0
      %1564 = vmatprep.subr.mxu0 0.0
      %1565 = vmatpush1.msra.mxu0 0.0
      %1566 = vmatprep.subr.mxu0 0.0
      %1567 = vmatpush1.msra.mxu0 0.0
      %1568 = vmatprep.subr.mxu0 0.0
      %1569 = vmatpush1.msra.mxu0 0.0
      %1570 = vmatprep.subr.mxu0 0.0
      %1571 = vmatpush1.msra.mxu0 0.0
      %1572 = vmatprep.subr.mxu0 0.0
      %1573 = vmatpush1.msra.mxu0 0.0
      %1574 = vmatprep.subr.mxu0 0.0
      %1575 = vmatpush1.msra.mxu0 0.0
      %1576 = vmatprep.subr.mxu0 0.0
      %1577 = vmatpush1.msra.mxu0 0.0
      %1578 = vmatprep.subr.mxu0 0.0
      %1579 = vmatpush1.msra.mxu0 0.0
      %1580 = vmatprep.subr.mxu0 0.0
      %1581 = vmatpush1.msra.mxu0 0.0
      %1582 = vmatprep.subr.mxu0 0.0
      %1583 = vmatpush1.msra.mxu0 0.0
      %1584 = vmatprep.subr.mxu0 0.0
      %1585 = vmatpush1.msra.mxu0 0.0
      %1586 = vmatprep.subr.mxu0 0.0
      %1587 = vmatpush1.msra.mxu0 0.0
      %1588 = vmatprep.subr.mxu0 0.0
      %1589 = vmatpush1.msra.mxu0 0.0
      %1590 = vmatprep.subr.mxu0 0.0
      %1591 = vmatpush1.msra.mxu0 0.0
      %1592 = vmatprep.subr.mxu0 0.0
      %1593 = vmatpush1.msra.mxu0 0.0
      %1594 = vmatprep.subr.mxu0 0.0
      %1595 = vmatpush1.msra.mxu0 0.0
      %1596 = vmatprep.subr.mxu0 0.0
      %1597 = vmatpush1.msra.mxu0 0.0
      %1598 = vmatprep.subr.mxu0 0.0
      %1599 = vmatpush1.msra.mxu0 0.0
      %1600 = vmatprep.subr.mxu0 0.0
      %1601 = vmatpush1.msra.mxu0 0.0
      %1602 = vmatprep.subr.mxu0 0.0
      %1603 = vmatpush1.msra.mxu0 0.0
      %1604 = vmatprep.mubr.f32.mxu0 0.0
      %1605 = vmatmul.mubr.f32.gmra.mrb[0].mxu0 %v838
      %v1606 = vpop.f32.mrb[0].mxu0
      %v1607 = vadd.f32 0.0, %v1606
      %v1608 = vpop.f32.mrb[0].mxu0
      %1609 = vmatprep.mubr.f32.mxu0 0.0
      %1610 = vmatmul.mubr.f32.gmra.mrb[0].mxu0 %v840
      %v1611 = vpop.f32.mrb[0].mxu0
      %v1612 = vadd.f32 0.0, %v1611
      %v1613 = vpop.f32.mrb[0].mxu0
      %1614 = vmatprep.mubr.f32.mxu0 0.0
      %1615 = vmatmul.mubr.f32.gmra.mrb[0].mxu0 %v842
      %v1616 = vpop.f32.mrb[0].mxu0
      %v1617 = vadd.f32 0.0, %v1616
      %v1618 = vpop.f32.mrb[0].mxu0
      %1619 = vmatprep.mubr.f32.mxu0 0.0
      %1620 = vmatmul.mubr.f32.gmra.mrb[0].mxu0 %v844
      %v1621 = vpop.f32.mrb[0].mxu0
      %v1622 = vadd.f32 0.0, %v1621
      %v1623 = vpop.f32.mrb[0].mxu0
      %1624 = vmatprep.mubr.f32.mxu0 0.0
      %1625 = vmatmul.mubr.f32.gmra.mrb[0].mxu0 %v846
      %v1626 = vpop.f32.mrb[0].mxu0
      %v1627 = vadd.f32 0.0, %v1626
      %v1628 = vpop.f32.mrb[0].mxu0
      %1629 = vmatprep.mubr.f32.mxu0 0.0
      %1630 = vmatmul.mubr.f32.gmra.mrb[0].mxu0 %v848
      %v1631 = vpop.f32.mrb[0].mxu0
      %v1632 = vadd.f32 0.0, %v1631
      %v1633 = vpop.f32.mrb[0].mxu0
      %1634 = vmatprep.mubr.f32.mxu0 0.0
      %1635 = vmatmul.mubr.f32.gmra.mrb[0].mxu0 %v850
      %v1636 = vpop.f32.mrb[0].mxu0
      %v1637 = vadd.f32 0.0, %v1636
      %v1638 = vpop.f32.mrb[0].mxu0
      %1639 = vmatprep.mubr.f32.mxu0 0.0
      %1640 = vmatmul.mubr.f32.gmra.mrb[0].mxu0 %v852
      %v1641 = vpop.f32.mrb[0].mxu0
      %v1642 = vadd.f32 0.0, %v1641
      %v1643 = vpop.f32.mrb[0].mxu0
      %1644 = vmatprep.mubr.f32.mxu0 0.0
      %1645 = vmatmul.mubr.f32.gmra.mrb[0].mxu0 %v854
      %v1646 = vpop.f32.mrb[0].mxu0
      %v1647 = vadd.f32 0.0, %v1646
      %v1648 = vpop.f32.mrb[0].mxu0
      %1649 = vmatprep.mubr.f32.mxu0 0.0
      %1650 = vmatmul.mubr.f32.gmra.mrb[0].mxu0 %v856
      %v1651 = vpop.f32.mrb[0].mxu0
      %v1652 = vadd.f32 0.0, %v1651
      %v1653 = vpop.f32.mrb[0].mxu0
      %1654 = vmatprep.mubr.f32.mxu0 0.0
      %1655 = vmatmul.mubr.f32.gmra.mrb[0].mxu0 %v858
      %v1656 = vpop.f32.mrb[0].mxu0
      %v1657 = vadd.f32 0.0, %v1656
      %v1658 = vpop.f32.mrb[0].mxu0
      %1659 = vmatprep.mubr.f32.mxu0 0.0
      %1660 = vmatmul.mubr.f32.gmra.mrb[0].mxu0 %v860
      %v1661 = vpop.f32.mrb[0].mxu0
      %v1662 = vadd.f32 0.0, %v1661
      %v1663 = vpop.f32.mrb[0].mxu0
      %1664 = vmatprep.mubr.f32.mxu0 0.0
      %1665 = vmatmul.mubr.f32.gmra.mrb[0].mxu0 %v862
      %v1666 = vpop.f32.mrb[0].mxu0
      %v1667 = vadd.f32 0.0, %v1666
      %v1668 = vpop.f32.mrb[0].mxu0
      %1669 = vmatprep.mubr.f32.mxu0 0.0
      %1670 = vmatmul.mubr.f32.gmra.mrb[0].mxu0 %v864
      %v1671 = vpop.f32.mrb[0].mxu0
      %v1672 = vadd.f32 0.0, %v1671
      %v1673 = vpop.f32.mrb[0].mxu0
      %1674 = vmatprep.mubr.f32.mxu0 0.0
      %1675 = vmatmul.mubr.f32.gmra.mrb[0].mxu0 %v866
      %v1676 = vpop.f32.mrb[0].mxu0
      %v1677 = vadd.f32 0.0, %v1676
      %v1678 = vpop.f32.mrb[0].mxu0
      %1679 = vmatprep.mubr.f32.mxu0 0.0
      %1680 = vmatmul.mubr.f32.gmra.mrb[0].mxu0 %v868
      %v1681 = vpop.f32.mrb[0].mxu0
      %v1682 = vadd.f32 0.0, %v1681
      %v1683 = vpop.f32.mrb[0].mxu0
      %1684 = vmatprep.mubr.f32.mxu0 0.0
      %1685 = vmatmul.mubr.f32.gmra.mrb[0].mxu0 %v870
      %v1686 = vpop.f32.mrb[0].mxu0
      %v1687 = vadd.f32 0.0, %v1686
      %v1688 = vpop.f32.mrb[0].mxu0
      %1689 = vmatprep.mubr.f32.mxu0 0.0
      %1690 = vmatmul.mubr.f32.gmra.mrb[0].mxu0 %v872
      %v1691 = vpop.f32.mrb[0].mxu0
      %v1692 = vadd.f32 0.0, %v1691
      %v1693 = vpop.f32.mrb[0].mxu0
      %1694 = vmatprep.mubr.f32.mxu0 0.0
      %1695 = vmatmul.mubr.f32.gmra.mrb[0].mxu0 %v874
      %v1696 = vpop.f32.mrb[0].mxu0
      %v1697 = vadd.f32 0.0, %v1696
      %v1698 = vpop.f32.mrb[0].mxu0
      %1699 = vmatprep.mubr.f32.mxu0 0.0
      %1700 = vmatmul.mubr.f32.gmra.mrb[0].mxu0 %v876
      %v1701 = vpop.f32.mrb[0].mxu0
      %v1702 = vadd.f32 0.0, %v1701
      %v1703 = vpop.f32.mrb[0].mxu0
      %1704 = vmatprep.mubr.f32.mxu0 0.0
      %1705 = vmatmul.mubr.f32.gmra.mrb[0].mxu0 %v878
      %v1706 = vpop.f32.mrb[0].mxu0
      %v1707 = vadd.f32 0.0, %v1706
      %v1708 = vpop.f32.mrb[0].mxu0
      %1709 = vmatprep.mubr.f32.mxu0 0.0
      %1710 = vmatmul.mubr.f32.gmra.mrb[0].mxu0 %v880
      %v1711 = vpop.f32.mrb[0].mxu0
      %v1712 = vadd.f32 0.0, %v1711
      %v1713 = vpop.f32.mrb[0].mxu0
      %1714 = vmatprep.mubr.f32.mxu0 0.0
      %1715 = vmatmul.mubr.f32.gmra.mrb[0].mxu0 %v882
      %v1716 = vpop.f32.mrb[0].mxu0
      %v1717 = vadd.f32 0.0, %v1716
      %v1718 = vpop.f32.mrb[0].mxu0
      %1719 = vmatprep.mubr.f32.mxu0 0.0
      %1720 = vmatmul.mubr.f32.gmra.mrb[0].mxu0 %v884
      %v1721 = vpop.f32.mrb[0].mxu0
      %v1722 = vadd.f32 0.0, %v1721
      %v1723 = vpop.f32.mrb[0].mxu0
      %1724 = vmatprep.mubr.f32.mxu0 0.0
      %1725 = vmatmul.mubr.f32.gmra.mrb[0].mxu0 %v886
      %v1726 = vpop.f32.mrb[0].mxu0
      %v1727 = vadd.f32 0.0, %v1726
      %v1728 = vpop.f32.mrb[0].mxu0
      %1729 = vmatprep.mubr.f32.mxu0 0.0
      %1730 = vmatmul.mubr.f32.gmra.mrb[0].mxu0 %v888
      %v1731 = vpop.f32.mrb[0].mxu0
      %v1732 = vadd.f32 0.0, %v1731
      %v1733 = vpop.f32.mrb[0].mxu0
      %1734 = vmatprep.mubr.f32.mxu0 0.0
      %1735 = vmatmul.mubr.f32.gmra.mrb[0].mxu0 %v890
      %v1736 = vpop.f32.mrb[0].mxu0
      %v1737 = vadd.f32 0.0, %v1736
      %v1738 = vpop.f32.mrb[0].mxu0
      %1739 = vmatprep.mubr.f32.mxu0 0.0
      %1740 = vmatmul.mubr.f32.gmra.mrb[0].mxu0 %v892
      %v1741 = vpop.f32.mrb[0].mxu0
      %v1742 = vadd.f32 0.0, %v1741
      %v1743 = vpop.f32.mrb[0].mxu0
      %1744 = vmatprep.mubr.f32.mxu0 0.0
      %1745 = vmatmul.mubr.f32.gmra.mrb[0].mxu0 %v894
      %v1746 = vpop.f32.mrb[0].mxu0
      %v1747 = vadd.f32 0.0, %v1746
      %v1748 = vpop.f32.mrb[0].mxu0
      %1749 = vmatprep.mubr.f32.mxu0 0.0
      %1750 = vmatmul.mubr.f32.gmra.mrb[0].mxu0 %v896
      %v1751 = vpop.f32.mrb[0].mxu0
      %v1752 = vadd.f32 0.0, %v1751
      %v1753 = vpop.f32.mrb[0].mxu0
      %1754 = vmatprep.mubr.f32.mxu0 0.0
      %1755 = vmatmul.mubr.f32.gmra.mrb[0].mxu0 %v1532
      %v1756 = vpop.f32.mrb[0].mxu0
      %v1757 = vadd.f32 0.0, %v1756
      %v1758 = vpop.f32.mrb[0].mxu0
      %1759 = vmatprep.mubr.f32.mxu0 0.0
      %1760 = vmatmul.mubr.f32.gmra.mrb[0].mxu0 %v1535
      %v1761 = vpop.f32.mrb[0].mxu0
      %v1762 = vadd.f32 0.0, %v1761
      %v1763 = vpop.f32.mrb[0].mxu0
      %1764 = vdwg.mxu0
      %v1765 = vadd.f32 %v1499, %v1607
      %v1766 = vadd.f32 %v1500, %v1612
      %v1767 = vadd.f32 %v1501, %v1617
      %v1768 = vadd.f32 %v1502, %v1622
      %v1769 = vadd.f32 %v1503, %v1627
      %v1770 = vadd.f32 %v1504, %v1632
      %v1771 = vadd.f32 %v1505, %v1637
      %v1772 = vadd.f32 %v1506, %v1642
      %v1773 = vadd.f32 %v1507, %v1647
      %v1774 = vadd.f32 %v1508, %v1652
      %v1775 = vadd.f32 %v1509, %v1657
      %v1776 = vadd.f32 %v1510, %v1662
      %v1777 = vadd.f32 %v1511, %v1667
      %v1778 = vadd.f32 %v1512, %v1672
      %v1779 = vadd.f32 %v1513, %v1677
      %v1780 = vadd.f32 %v1514, %v1682
      %v1781 = vadd.f32 %v1515, %v1687
      %v1782 = vadd.f32 %v1516, %v1692
      %v1783 = vadd.f32 %v1517, %v1697
      %v1784 = vadd.f32 %v1518, %v1702
      %v1785 = vadd.f32 %v1519, %v1707
      %v1786 = vadd.f32 %v1520, %v1712
      %v1787 = vadd.f32 %v1521, %v1717
      %v1788 = vadd.f32 %v1522, %v1722
      %v1789 = vadd.f32 %v1523, %v1727
      %v1790 = vadd.f32 %v1524, %v1732
      %v1791 = vadd.f32 %v1525, %v1737
      %v1792 = vadd.f32 %v1526, %v1742
      %v1793 = vadd.f32 %v1527, %v1747
      %v1794 = vadd.f32 %v1528, %v1752
      %v1795 = vadd.f32 %v1529, %v1757
      %v1796 = vadd.f32 %v1530, %v1762
      %v1798 = vrot.slane %v405, 1
      %v1799 = vrot.slane %v406, 1
      %v1800 = vsel %vm459, %v1798, %v1799
      %v1801 = vrot.slane %v407, 1
      %v1802 = vsel %vm459, %v1799, %v1801
      %v1803 = vsel %vm540, %v1800, 0
      %v1805 = vsel %vm540, %v1802, 0
      %v1808 = vsel %vm605, %v297, 0
      %1810 = vmatprep.subr.mxu0 0.0
      %1811 = vmatpush1.msra.mxu0 %v1808
      %1812 = vmatprep.subr.mxu0 0.0
      %1813 = vmatpush1.msra.mxu0 0.0
      %1814 = vmatprep.subr.mxu0 0.0
      %1815 = vmatpush1.msra.mxu0 0.0
      %1816 = vmatprep.subr.mxu0 0.0
      %1817 = vmatpush1.msra.mxu0 0.0
      %1818 = vmatprep.subr.mxu0 0.0
      %1819 = vmatpush1.msra.mxu0 0.0
      %1820 = vmatprep.subr.mxu0 0.0
      %1821 = vmatpush1.msra.mxu0 0.0
      %1822 = vmatprep.subr.mxu0 0.0
      %1823 = vmatpush1.msra.mxu0 0.0
      %1824 = vmatprep.subr.mxu0 0.0
      %1825 = vmatpush1.msra.mxu0 0.0
      %1826 = vmatprep.subr.mxu0 0.0
      %1827 = vmatpush1.msra.mxu0 0.0
      %1828 = vmatprep.subr.mxu0 0.0
      %1829 = vmatpush1.msra.mxu0 0.0
      %1830 = vmatprep.subr.mxu0 0.0
      %1831 = vmatpush1.msra.mxu0 0.0
      %1832 = vmatprep.subr.mxu0 0.0
      %1833 = vmatpush1.msra.mxu0 0.0
      %1834 = vmatprep.subr.mxu0 0.0
      %1835 = vmatpush1.msra.mxu0 0.0
      %1836 = vmatprep.subr.mxu0 0.0
      %1837 = vmatpush1.msra.mxu0 0.0
      %1838 = vmatprep.subr.mxu0 0.0
      %1839 = vmatpush1.msra.mxu0 0.0
      %1840 = vmatprep.subr.mxu0 0.0
      %1841 = vmatpush1.msra.mxu0 0.0
      %1842 = vmatprep.subr.mxu0 0.0
      %1843 = vmatpush1.msra.mxu0 0.0
      %1844 = vmatprep.subr.mxu0 0.0
      %1845 = vmatpush1.msra.mxu0 0.0
      %1846 = vmatprep.subr.mxu0 0.0
      %1847 = vmatpush1.msra.mxu0 0.0
      %1848 = vmatprep.subr.mxu0 0.0
      %1849 = vmatpush1.msra.mxu0 0.0
      %1850 = vmatprep.subr.mxu0 0.0
      %1851 = vmatpush1.msra.mxu0 0.0
      %1852 = vmatprep.subr.mxu0 0.0
      %1853 = vmatpush1.msra.mxu0 0.0
      %1854 = vmatprep.subr.mxu0 0.0
      %1855 = vmatpush1.msra.mxu0 0.0
      %1856 = vmatprep.subr.mxu0 0.0
      %1857 = vmatpush1.msra.mxu0 0.0
      %1858 = vmatprep.subr.mxu0 0.0
      %1859 = vmatpush1.msra.mxu0 0.0
      %1860 = vmatprep.subr.mxu0 0.0
      %1861 = vmatpush1.msra.mxu0 0.0
      %1862 = vmatprep.subr.mxu0 0.0
      %1863 = vmatpush1.msra.mxu0 0.0
      %1864 = vmatprep.subr.mxu0 0.0
      %1865 = vmatpush1.msra.mxu0 0.0
      %1866 = vmatprep.subr.mxu0 0.0
      %1867 = vmatpush1.msra.mxu0 0.0
      %1868 = vmatprep.subr.mxu0 0.0
      %1869 = vmatpush1.msra.mxu0 0.0
      %1870 = vmatprep.subr.mxu0 0.0
      %1871 = vmatpush1.msra.mxu0 0.0
      %1872 = vmatprep.subr.mxu0 0.0
      %1873 = vmatpush1.msra.mxu0 0.0
      %1874 = vmatprep.mubr.f32.mxu0 0.0
      %1875 = vmatmul.mubr.f32.gmra.mrb[0].mxu0 %v545
      %v1876 = vpop.f32.mrb[0].mxu0
      %v1877 = vadd.f32 0.0, %v1876
      %v1878 = vpop.f32.mrb[0].mxu0
      %1879 = vmatprep.mubr.f32.mxu0 0.0
      %1880 = vmatmul.mubr.f32.gmra.mrb[0].mxu0 %v547
      %v1881 = vpop.f32.mrb[0].mxu0
      %v1882 = vadd.f32 0.0, %v1881
      %v1883 = vpop.f32.mrb[0].mxu0
      %1884 = vmatprep.mubr.f32.mxu0 0.0
      %1885 = vmatmul.mubr.f32.gmra.mrb[0].mxu0 %v549
      %v1886 = vpop.f32.mrb[0].mxu0
      %v1887 = vadd.f32 0.0, %v1886
      %v1888 = vpop.f32.mrb[0].mxu0
      %1889 = vmatprep.mubr.f32.mxu0 0.0
      %1890 = vmatmul.mubr.f32.gmra.mrb[0].mxu0 %v551
      %v1891 = vpop.f32.mrb[0].mxu0
      %v1892 = vadd.f32 0.0, %v1891
      %v1893 = vpop.f32.mrb[0].mxu0
      %1894 = vmatprep.mubr.f32.mxu0 0.0
      %1895 = vmatmul.mubr.f32.gmra.mrb[0].mxu0 %v553
      %v1896 = vpop.f32.mrb[0].mxu0
      %v1897 = vadd.f32 0.0, %v1896
      %v1898 = vpop.f32.mrb[0].mxu0
      %1899 = vmatprep.mubr.f32.mxu0 0.0
      %1900 = vmatmul.mubr.f32.gmra.mrb[0].mxu0 %v555
      %v1901 = vpop.f32.mrb[0].mxu0
      %v1902 = vadd.f32 0.0, %v1901
      %v1903 = vpop.f32.mrb[0].mxu0
      %1904 = vmatprep.mubr.f32.mxu0 0.0
      %1905 = vmatmul.mubr.f32.gmra.mrb[0].mxu0 %v557
      %v1906 = vpop.f32.mrb[0].mxu0
      %v1907 = vadd.f32 0.0, %v1906
      %v1908 = vpop.f32.mrb[0].mxu0
      %1909 = vmatprep.mubr.f32.mxu0 0.0
      %1910 = vmatmul.mubr.f32.gmra.mrb[0].mxu0 %v559
      %v1911 = vpop.f32.mrb[0].mxu0
      %v1912 = vadd.f32 0.0, %v1911
      %v1913 = vpop.f32.mrb[0].mxu0
      %1914 = vmatprep.mubr.f32.mxu0 0.0
      %1915 = vmatmul.mubr.f32.gmra.mrb[0].mxu0 %v561
      %v1916 = vpop.f32.mrb[0].mxu0
      %v1917 = vadd.f32 0.0, %v1916
      %v1918 = vpop.f32.mrb[0].mxu0
      %1919 = vmatprep.mubr.f32.mxu0 0.0
      %1920 = vmatmul.mubr.f32.gmra.mrb[0].mxu0 %v563
      %v1921 = vpop.f32.mrb[0].mxu0
      %v1922 = vadd.f32 0.0, %v1921
      %v1923 = vpop.f32.mrb[0].mxu0
      %1924 = vmatprep.mubr.f32.mxu0 0.0
      %1925 = vmatmul.mubr.f32.gmra.mrb[0].mxu0 %v565
      %v1926 = vpop.f32.mrb[0].mxu0
      %v1927 = vadd.f32 0.0, %v1926
      %v1928 = vpop.f32.mrb[0].mxu0
      %1929 = vmatprep.mubr.f32.mxu0 0.0
      %1930 = vmatmul.mubr.f32.gmra.mrb[0].mxu0 %v567
      %v1931 = vpop.f32.mrb[0].mxu0
      %v1932 = vadd.f32 0.0, %v1931
      %v1933 = vpop.f32.mrb[0].mxu0
      %1934 = vmatprep.mubr.f32.mxu0 0.0
      %1935 = vmatmul.mubr.f32.gmra.mrb[0].mxu0 %v569
      %v1936 = vpop.f32.mrb[0].mxu0
      %v1937 = vadd.f32 0.0, %v1936
      %v1938 = vpop.f32.mrb[0].mxu0
      %1939 = vmatprep.mubr.f32.mxu0 0.0
      %1940 = vmatmul.mubr.f32.gmra.mrb[0].mxu0 %v571
      %v1941 = vpop.f32.mrb[0].mxu0
      %v1942 = vadd.f32 0.0, %v1941
      %v1943 = vpop.f32.mrb[0].mxu0
      %1944 = vmatprep.mubr.f32.mxu0 0.0
      %1945 = vmatmul.mubr.f32.gmra.mrb[0].mxu0 %v573
      %v1946 = vpop.f32.mrb[0].mxu0
      %v1947 = vadd.f32 0.0, %v1946
      %v1948 = vpop.f32.mrb[0].mxu0
      %1949 = vmatprep.mubr.f32.mxu0 0.0
      %1950 = vmatmul.mubr.f32.gmra.mrb[0].mxu0 %v575
      %v1951 = vpop.f32.mrb[0].mxu0
      %v1952 = vadd.f32 0.0, %v1951
      %v1953 = vpop.f32.mrb[0].mxu0
      %1954 = vmatprep.mubr.f32.mxu0 0.0
      %1955 = vmatmul.mubr.f32.gmra.mrb[0].mxu0 %v577
      %v1956 = vpop.f32.mrb[0].mxu0
      %v1957 = vadd.f32 0.0, %v1956
      %v1958 = vpop.f32.mrb[0].mxu0
      %1959 = vmatprep.mubr.f32.mxu0 0.0
      %1960 = vmatmul.mubr.f32.gmra.mrb[0].mxu0 %v579
      %v1961 = vpop.f32.mrb[0].mxu0
      %v1962 = vadd.f32 0.0, %v1961
      %v1963 = vpop.f32.mrb[0].mxu0
      %1964 = vmatprep.mubr.f32.mxu0 0.0
      %1965 = vmatmul.mubr.f32.gmra.mrb[0].mxu0 %v581
      %v1966 = vpop.f32.mrb[0].mxu0
      %v1967 = vadd.f32 0.0, %v1966
      %v1968 = vpop.f32.mrb[0].mxu0
      %1969 = vmatprep.mubr.f32.mxu0 0.0
      %1970 = vmatmul.mubr.f32.gmra.mrb[0].mxu0 %v583
      %v1971 = vpop.f32.mrb[0].mxu0
      %v1972 = vadd.f32 0.0, %v1971
      %v1973 = vpop.f32.mrb[0].mxu0
      %1974 = vmatprep.mubr.f32.mxu0 0.0
      %1975 = vmatmul.mubr.f32.gmra.mrb[0].mxu0 %v585
      %v1976 = vpop.f32.mrb[0].mxu0
      %v1977 = vadd.f32 0.0, %v1976
      %v1978 = vpop.f32.mrb[0].mxu0
      %1979 = vmatprep.mubr.f32.mxu0 0.0
      %1980 = vmatmul.mubr.f32.gmra.mrb[0].mxu0 %v587
      %v1981 = vpop.f32.mrb[0].mxu0
      %v1982 = vadd.f32 0.0, %v1981
      %v1983 = vpop.f32.mrb[0].mxu0
      %1984 = vmatprep.mubr.f32.mxu0 0.0
      %1985 = vmatmul.mubr.f32.gmra.mrb[0].mxu0 %v589
      %v1986 = vpop.f32.mrb[0].mxu0
      %v1987 = vadd.f32 0.0, %v1986
      %v1988 = vpop.f32.mrb[0].mxu0
      %1989 = vmatprep.mubr.f32.mxu0 0.0
      %1990 = vmatmul.mubr.f32.gmra.mrb[0].mxu0 %v591
      %v1991 = vpop.f32.mrb[0].mxu0
      %v1992 = vadd.f32 0.0, %v1991
      %v1993 = vpop.f32.mrb[0].mxu0
      %1994 = vmatprep.mubr.f32.mxu0 0.0
      %1995 = vmatmul.mubr.f32.gmra.mrb[0].mxu0 %v593
      %v1996 = vpop.f32.mrb[0].mxu0
      %v1997 = vadd.f32 0.0, %v1996
      %v1998 = vpop.f32.mrb[0].mxu0
      %1999 = vmatprep.mubr.f32.mxu0 0.0
      %2000 = vmatmul.mubr.f32.gmra.mrb[0].mxu0 %v595
      %v2001 = vpop.f32.mrb[0].mxu0
      %v2002 = vadd.f32 0.0, %v2001
      %v2003 = vpop.f32.mrb[0].mxu0
      %2004 = vmatprep.mubr.f32.mxu0 0.0
      %2005 = vmatmul.mubr.f32.gmra.mrb[0].mxu0 %v597
      %v2006 = vpop.f32.mrb[0].mxu0
      %v2007 = vadd.f32 0.0, %v2006
      %v2008 = vpop.f32.mrb[0].mxu0
      %2009 = vmatprep.mubr.f32.mxu0 0.0
      %2010 = vmatmul.mubr.f32.gmra.mrb[0].mxu0 %v599
      %v2011 = vpop.f32.mrb[0].mxu0
      %v2012 = vadd.f32 0.0, %v2011
      %v2013 = vpop.f32.mrb[0].mxu0
      %2014 = vmatprep.mubr.f32.mxu0 0.0
      %2015 = vmatmul.mubr.f32.gmra.mrb[0].mxu0 %v601
      %v2016 = vpop.f32.mrb[0].mxu0
      %v2017 = vadd.f32 0.0, %v2016
      %v2018 = vpop.f32.mrb[0].mxu0
      %2019 = vmatprep.mubr.f32.mxu0 0.0
      %2020 = vmatmul.mubr.f32.gmra.mrb[0].mxu0 %v603
      %v2021 = vpop.f32.mrb[0].mxu0
      %v2022 = vadd.f32 0.0, %v2021
      %v2023 = vpop.f32.mrb[0].mxu0
      %2024 = vmatprep.mubr.f32.mxu0 0.0
      %2025 = vmatmul.mubr.f32.gmra.mrb[0].mxu0 %v1803
      %v2026 = vpop.f32.mrb[0].mxu0
      %v2027 = vadd.f32 0.0, %v2026
      %v2028 = vpop.f32.mrb[0].mxu0
      %2029 = vmatprep.mubr.f32.mxu0 0.0
      %2030 = vmatmul.mubr.f32.gmra.mrb[0].mxu0 %v1805
      %v2031 = vpop.f32.mrb[0].mxu0
      %v2032 = vadd.f32 0.0, %v2031
      %v2033 = vpop.f32.mrb[0].mxu0
      %2034 = vdwg.mxu0
      %v2035 = vadd.f32 %v1765, %v1877
      %v2036 = vadd.f32 %v1766, %v1882
      %v2037 = vadd.f32 %v1767, %v1887
      %v2038 = vadd.f32 %v1768, %v1892
      %v2039 = vadd.f32 %v1769, %v1897
      %v2040 = vadd.f32 %v1770, %v1902
      %v2041 = vadd.f32 %v1771, %v1907
      %v2042 = vadd.f32 %v1772, %v1912
      %v2043 = vadd.f32 %v1773, %v1917
      %v2044 = vadd.f32 %v1774, %v1922
      %v2045 = vadd.f32 %v1775, %v1927
      %v2046 = vadd.f32 %v1776, %v1932
      %v2047 = vadd.f32 %v1777, %v1937
      %v2048 = vadd.f32 %v1778, %v1942
      %v2049 = vadd.f32 %v1779, %v1947
      %v2050 = vadd.f32 %v1780, %v1952
      %v2051 = vadd.f32 %v1781, %v1957
      %v2052 = vadd.f32 %v1782, %v1962
      %v2053 = vadd.f32 %v1783, %v1967
      %v2054 = vadd.f32 %v1784, %v1972
      %v2055 = vadd.f32 %v1785, %v1977
      %v2056 = vadd.f32 %v1786, %v1982
      %v2057 = vadd.f32 %v1787, %v1987
      %v2058 = vadd.f32 %v1788, %v1992
      %v2059 = vadd.f32 %v1789, %v1997
      %v2060 = vadd.f32 %v1790, %v2002
      %v2061 = vadd.f32 %v1791, %v2007
      %v2062 = vadd.f32 %v1792, %v2012
      %v2063 = vadd.f32 %v1793, %v2017
      %v2064 = vadd.f32 %v1794, %v2022
      %v2065 = vadd.f32 %v1795, %v2027
      %v2066 = vadd.f32 %v1796, %v2032
      %v2067 = vrot.slane %v405, 2
      %v2068 = vrot.slane %v406, 2
      %v2069 = vsel %vm1126, %v2067, %v2068
      %v2070 = vrot.slane %v407, 2
      %v2071 = vsel %vm1126, %v2068, %v2070
      %v2072 = vsel %vm540, %v2069, 0
      %v2074 = vsel %vm540, %v2071, 0
      %v2077 = vsel %vm605, %v298, 0
      %2079 = vmatprep.subr.mxu0 0.0
      %2080 = vmatpush1.msra.mxu0 %v2077
      %2081 = vmatprep.subr.mxu0 0.0
      %2082 = vmatpush1.msra.mxu0 0.0
      %2083 = vmatprep.subr.mxu0 0.0
      %2084 = vmatpush1.msra.mxu0 0.0
      %2085 = vmatprep.subr.mxu0 0.0
      %2086 = vmatpush1.msra.mxu0 0.0
      %2087 = vmatprep.subr.mxu0 0.0
      %2088 = vmatpush1.msra.mxu0 0.0
      %2089 = vmatprep.subr.mxu0 0.0
      %2090 = vmatpush1.msra.mxu0 0.0
      %2091 = vmatprep.subr.mxu0 0.0
      %2092 = vmatpush1.msra.mxu0 0.0
      %2093 = vmatprep.subr.mxu0 0.0
      %2094 = vmatpush1.msra.mxu0 0.0
      %2095 = vmatprep.subr.mxu0 0.0
      %2096 = vmatpush1.msra.mxu0 0.0
      %2097 = vmatprep.subr.mxu0 0.0
      %2098 = vmatpush1.msra.mxu0 0.0
      %2099 = vmatprep.subr.mxu0 0.0
      %2100 = vmatpush1.msra.mxu0 0.0
      %2101 = vmatprep.subr.mxu0 0.0
      %2102 = vmatpush1.msra.mxu0 0.0
      %2103 = vmatprep.subr.mxu0 0.0
      %2104 = vmatpush1.msra.mxu0 0.0
      %2105 = vmatprep.subr.mxu0 0.0
      %2106 = vmatpush1.msra.mxu0 0.0
      %2107 = vmatprep.subr.mxu0 0.0
      %2108 = vmatpush1.msra.mxu0 0.0
      %2109 = vmatprep.subr.mxu0 0.0
      %2110 = vmatpush1.msra.mxu0 0.0
      %2111 = vmatprep.subr.mxu0 0.0
      %2112 = vmatpush1.msra.mxu0 0.0
      %2113 = vmatprep.subr.mxu0 0.0
      %2114 = vmatpush1.msra.mxu0 0.0
      %2115 = vmatprep.subr.mxu0 0.0
      %2116 = vmatpush1.msra.mxu0 0.0
      %2117 = vmatprep.subr.mxu0 0.0
      %2118 = vmatpush1.msra.mxu0 0.0
      %2119 = vmatprep.subr.mxu0 0.0
      %2120 = vmatpush1.msra.mxu0 0.0
      %2121 = vmatprep.subr.mxu0 0.0
      %2122 = vmatpush1.msra.mxu0 0.0
      %2123 = vmatprep.subr.mxu0 0.0
      %2124 = vmatpush1.msra.mxu0 0.0
      %2125 = vmatprep.subr.mxu0 0.0
      %2126 = vmatpush1.msra.mxu0 0.0
      %2127 = vmatprep.subr.mxu0 0.0
      %2128 = vmatpush1.msra.mxu0 0.0
      %2129 = vmatprep.subr.mxu0 0.0
      %2130 = vmatpush1.msra.mxu0 0.0
      %2131 = vmatprep.subr.mxu0 0.0
      %2132 = vmatpush1.msra.mxu0 0.0
      %2133 = vmatprep.subr.mxu0 0.0
      %2134 = vmatpush1.msra.mxu0 0.0
      %2135 = vmatprep.subr.mxu0 0.0
      %2136 = vmatpush1.msra.mxu0 0.0
      %2137 = vmatprep.subr.mxu0 0.0
      %2138 = vmatpush1.msra.mxu0 0.0
      %2139 = vmatprep.subr.mxu0 0.0
      %2140 = vmatpush1.msra.mxu0 0.0
      %2141 = vmatprep.subr.mxu0 0.0
      %2142 = vmatpush1.msra.mxu0 0.0
      %2143 = vmatprep.mubr.f32.mxu0 0.0
      %2144 = vmatmul.mubr.f32.gmra.mrb[0].mxu0 %v1211
      %v2145 = vpop.f32.mrb[0].mxu0
      %v2146 = vadd.f32 0.0, %v2145
      %v2147 = vpop.f32.mrb[0].mxu0
      %2148 = vmatprep.mubr.f32.mxu0 0.0
      %2149 = vmatmul.mubr.f32.gmra.mrb[0].mxu0 %v1213
      %v2150 = vpop.f32.mrb[0].mxu0
      %v2151 = vadd.f32 0.0, %v2150
      %v2152 = vpop.f32.mrb[0].mxu0
      %2153 = vmatprep.mubr.f32.mxu0 0.0
      %2154 = vmatmul.mubr.f32.gmra.mrb[0].mxu0 %v1215
      %v2155 = vpop.f32.mrb[0].mxu0
      %v2156 = vadd.f32 0.0, %v2155
      %v2157 = vpop.f32.mrb[0].mxu0
      %2158 = vmatprep.mubr.f32.mxu0 0.0
      %2159 = vmatmul.mubr.f32.gmra.mrb[0].mxu0 %v1217
      %v2160 = vpop.f32.mrb[0].mxu0
      %v2161 = vadd.f32 0.0, %v2160
      %v2162 = vpop.f32.mrb[0].mxu0
      %2163 = vmatprep.mubr.f32.mxu0 0.0
      %2164 = vmatmul.mubr.f32.gmra.mrb[0].mxu0 %v1219
      %v2165 = vpop.f32.mrb[0].mxu0
      %v2166 = vadd.f32 0.0, %v2165
      %v2167 = vpop.f32.mrb[0].mxu0
      %2168 = vmatprep.mubr.f32.mxu0 0.0
      %2169 = vmatmul.mubr.f32.gmra.mrb[0].mxu0 %v1221
      %v2170 = vpop.f32.mrb[0].mxu0
      %v2171 = vadd.f32 0.0, %v2170
      %v2172 = vpop.f32.mrb[0].mxu0
      %2173 = vmatprep.mubr.f32.mxu0 0.0
      %2174 = vmatmul.mubr.f32.gmra.mrb[0].mxu0 %v1223
      %v2175 = vpop.f32.mrb[0].mxu0
      %v2176 = vadd.f32 0.0, %v2175
      %v2177 = vpop.f32.mrb[0].mxu0
      %2178 = vmatprep.mubr.f32.mxu0 0.0
      %2179 = vmatmul.mubr.f32.gmra.mrb[0].mxu0 %v1225
      %v2180 = vpop.f32.mrb[0].mxu0
      %v2181 = vadd.f32 0.0, %v2180
      %v2182 = vpop.f32.mrb[0].mxu0
      %2183 = vmatprep.mubr.f32.mxu0 0.0
      %2184 = vmatmul.mubr.f32.gmra.mrb[0].mxu0 %v1227
      %v2185 = vpop.f32.mrb[0].mxu0
      %v2186 = vadd.f32 0.0, %v2185
      %v2187 = vpop.f32.mrb[0].mxu0
      %2188 = vmatprep.mubr.f32.mxu0 0.0
      %2189 = vmatmul.mubr.f32.gmra.mrb[0].mxu0 %v1229
      %v2190 = vpop.f32.mrb[0].mxu0
      %v2191 = vadd.f32 0.0, %v2190
      %v2192 = vpop.f32.mrb[0].mxu0
      %2193 = vmatprep.mubr.f32.mxu0 0.0
      %2194 = vmatmul.mubr.f32.gmra.mrb[0].mxu0 %v1231
      %v2195 = vpop.f32.mrb[0].mxu0
      %v2196 = vadd.f32 0.0, %v2195
      %v2197 = vpop.f32.mrb[0].mxu0
      %2198 = vmatprep.mubr.f32.mxu0 0.0
      %2199 = vmatmul.mubr.f32.gmra.mrb[0].mxu0 %v1233
      %v2200 = vpop.f32.mrb[0].mxu0
      %v2201 = vadd.f32 0.0, %v2200
      %v2202 = vpop.f32.mrb[0].mxu0
      %2203 = vmatprep.mubr.f32.mxu0 0.0
      %2204 = vmatmul.mubr.f32.gmra.mrb[0].mxu0 %v1235
      %v2205 = vpop.f32.mrb[0].mxu0
      %v2206 = vadd.f32 0.0, %v2205
      %v2207 = vpop.f32.mrb[0].mxu0
      %2208 = vmatprep.mubr.f32.mxu0 0.0
      %2209 = vmatmul.mubr.f32.gmra.mrb[0].mxu0 %v1237
      %v2210 = vpop.f32.mrb[0].mxu0
      %v2211 = vadd.f32 0.0, %v2210
      %v2212 = vpop.f32.mrb[0].mxu0
      %2213 = vmatprep.mubr.f32.mxu0 0.0
      %2214 = vmatmul.mubr.f32.gmra.mrb[0].mxu0 %v1239
      %v2215 = vpop.f32.mrb[0].mxu0
      %v2216 = vadd.f32 0.0, %v2215
      %v2217 = vpop.f32.mrb[0].mxu0
      %2218 = vmatprep.mubr.f32.mxu0 0.0
      %2219 = vmatmul.mubr.f32.gmra.mrb[0].mxu0 %v1241
      %v2220 = vpop.f32.mrb[0].mxu0
      %v2221 = vadd.f32 0.0, %v2220
      %v2222 = vpop.f32.mrb[0].mxu0
      %2223 = vmatprep.mubr.f32.mxu0 0.0
      %2224 = vmatmul.mubr.f32.gmra.mrb[0].mxu0 %v1243
      %v2225 = vpop.f32.mrb[0].mxu0
      %v2226 = vadd.f32 0.0, %v2225
      %v2227 = vpop.f32.mrb[0].mxu0
      %2228 = vmatprep.mubr.f32.mxu0 0.0
      %2229 = vmatmul.mubr.f32.gmra.mrb[0].mxu0 %v1245
      %v2230 = vpop.f32.mrb[0].mxu0
      %v2231 = vadd.f32 0.0, %v2230
      %v2232 = vpop.f32.mrb[0].mxu0
      %2233 = vmatprep.mubr.f32.mxu0 0.0
      %2234 = vmatmul.mubr.f32.gmra.mrb[0].mxu0 %v1247
      %v2235 = vpop.f32.mrb[0].mxu0
      %v2236 = vadd.f32 0.0, %v2235
      %v2237 = vpop.f32.mrb[0].mxu0
      %2238 = vmatprep.mubr.f32.mxu0 0.0
      %2239 = vmatmul.mubr.f32.gmra.mrb[0].mxu0 %v1249
      %v2240 = vpop.f32.mrb[0].mxu0
      %v2241 = vadd.f32 0.0, %v2240
      %v2242 = vpop.f32.mrb[0].mxu0
      %2243 = vmatprep.mubr.f32.mxu0 0.0
      %2244 = vmatmul.mubr.f32.gmra.mrb[0].mxu0 %v1251
      %v2245 = vpop.f32.mrb[0].mxu0
      %v2246 = vadd.f32 0.0, %v2245
      %v2247 = vpop.f32.mrb[0].mxu0
      %2248 = vmatprep.mubr.f32.mxu0 0.0
      %2249 = vmatmul.mubr.f32.gmra.mrb[0].mxu0 %v1253
      %v2250 = vpop.f32.mrb[0].mxu0
      %v2251 = vadd.f32 0.0, %v2250
      %v2252 = vpop.f32.mrb[0].mxu0
      %2253 = vmatprep.mubr.f32.mxu0 0.0
      %2254 = vmatmul.mubr.f32.gmra.mrb[0].mxu0 %v1255
      %v2255 = vpop.f32.mrb[0].mxu0
      %v2256 = vadd.f32 0.0, %v2255
      %v2257 = vpop.f32.mrb[0].mxu0
      %2258 = vmatprep.mubr.f32.mxu0 0.0
      %2259 = vmatmul.mubr.f32.gmra.mrb[0].mxu0 %v1257
      %v2260 = vpop.f32.mrb[0].mxu0
      %v2261 = vadd.f32 0.0, %v2260
      %v2262 = vpop.f32.mrb[0].mxu0
      %2263 = vmatprep.mubr.f32.mxu0 0.0
      %2264 = vmatmul.mubr.f32.gmra.mrb[0].mxu0 %v1259
      %v2265 = vpop.f32.mrb[0].mxu0
      %v2266 = vadd.f32 0.0, %v2265
      %v2267 = vpop.f32.mrb[0].mxu0
      %2268 = vmatprep.mubr.f32.mxu0 0.0
      %2269 = vmatmul.mubr.f32.gmra.mrb[0].mxu0 %v1261
      %v2270 = vpop.f32.mrb[0].mxu0
      %v2271 = vadd.f32 0.0, %v2270
      %v2272 = vpop.f32.mrb[0].mxu0
      %2273 = vmatprep.mubr.f32.mxu0 0.0
      %2274 = vmatmul.mubr.f32.gmra.mrb[0].mxu0 %v1263
      %v2275 = vpop.f32.mrb[0].mxu0
      %v2276 = vadd.f32 0.0, %v2275
      %v2277 = vpop.f32.mrb[0].mxu0
      %2278 = vmatprep.mubr.f32.mxu0 0.0
      %2279 = vmatmul.mubr.f32.gmra.mrb[0].mxu0 %v1265
      %v2280 = vpop.f32.mrb[0].mxu0
      %v2281 = vadd.f32 0.0, %v2280
      %v2282 = vpop.f32.mrb[0].mxu0
      %2283 = vmatprep.mubr.f32.mxu0 0.0
      %2284 = vmatmul.mubr.f32.gmra.mrb[0].mxu0 %v1267
      %v2285 = vpop.f32.mrb[0].mxu0
      %v2286 = vadd.f32 0.0, %v2285
      %v2287 = vpop.f32.mrb[0].mxu0
      %2288 = vmatprep.mubr.f32.mxu0 0.0
      %2289 = vmatmul.mubr.f32.gmra.mrb[0].mxu0 %v1269
      %v2290 = vpop.f32.mrb[0].mxu0
      %v2291 = vadd.f32 0.0, %v2290
      %v2292 = vpop.f32.mrb[0].mxu0
      %2293 = vmatprep.mubr.f32.mxu0 0.0
      %2294 = vmatmul.mubr.f32.gmra.mrb[0].mxu0 %v2072
      %v2295 = vpop.f32.mrb[0].mxu0
      %v2296 = vadd.f32 0.0, %v2295
      %v2297 = vpop.f32.mrb[0].mxu0
      %2298 = vmatprep.mubr.f32.mxu0 0.0
      %2299 = vmatmul.mubr.f32.gmra.mrb[0].mxu0 %v2074
      %v2300 = vpop.f32.mrb[0].mxu0
      %v2301 = vadd.f32 0.0, %v2300
      %v2302 = vpop.f32.mrb[0].mxu0
      %2303 = vdwg.mxu0
      %v2304 = vadd.f32 %v2035, %v2146
      %v2305 = vadd.f32 %v2036, %v2151
      %v2306 = vadd.f32 %v2037, %v2156
      %v2307 = vadd.f32 %v2038, %v2161
      %v2308 = vadd.f32 %v2039, %v2166
      %v2309 = vadd.f32 %v2040, %v2171
      %v2310 = vadd.f32 %v2041, %v2176
      %v2311 = vadd.f32 %v2042, %v2181
      %v2312 = vadd.f32 %v2043, %v2186
      %v2313 = vadd.f32 %v2044, %v2191
      %v2314 = vadd.f32 %v2045, %v2196
      %v2315 = vadd.f32 %v2046, %v2201
      %v2316 = vadd.f32 %v2047, %v2206
      %v2317 = vadd.f32 %v2048, %v2211
      %v2318 = vadd.f32 %v2049, %v2216
      %v2319 = vadd.f32 %v2050, %v2221
      %v2320 = vadd.f32 %v2051, %v2226
      %v2321 = vadd.f32 %v2052, %v2231
      %v2322 = vadd.f32 %v2053, %v2236
      %v2323 = vadd.f32 %v2054, %v2241
      %v2324 = vadd.f32 %v2055, %v2246
      %v2325 = vadd.f32 %v2056, %v2251
      %v2326 = vadd.f32 %v2057, %v2256
      %v2327 = vadd.f32 %v2058, %v2261
      %v2328 = vadd.f32 %v2059, %v2266
      %v2329 = vadd.f32 %v2060, %v2271
      %v2330 = vadd.f32 %v2061, %v2276
      %v2331 = vadd.f32 %v2062, %v2281
      %v2332 = vadd.f32 %v2063, %v2286
      %v2333 = vadd.f32 %v2064, %v2291
      %v2334 = vadd.f32 %v2065, %v2296
      %v2335 = vadd.f32 %v2066, %v2301
      %v2337 = vsel %vm540, %v408, 0
      %v2340 = vsel %vm540, %v409, 0
      %v2343 = vsel %vm605, %v299, 0
      %2345 = vmatprep.subr.mxu0 0.0
      %2346 = vmatpush1.msra.mxu0 %v2343
      %2347 = vmatprep.subr.mxu0 0.0
      %2348 = vmatpush1.msra.mxu0 0.0
      %2349 = vmatprep.subr.mxu0 0.0
      %2350 = vmatpush1.msra.mxu0 0.0
      %2351 = vmatprep.subr.mxu0 0.0
      %2352 = vmatpush1.msra.mxu0 0.0
      %2353 = vmatprep.subr.mxu0 0.0
      %2354 = vmatpush1.msra.mxu0 0.0
      %2355 = vmatprep.subr.mxu0 0.0
      %2356 = vmatpush1.msra.mxu0 0.0
      %2357 = vmatprep.subr.mxu0 0.0
      %2358 = vmatpush1.msra.mxu0 0.0
      %2359 = vmatprep.subr.mxu0 0.0
      %2360 = vmatpush1.msra.mxu0 0.0
      %2361 = vmatprep.subr.mxu0 0.0
      %2362 = vmatpush1.msra.mxu0 0.0
      %2363 = vmatprep.subr.mxu0 0.0
      %2364 = vmatpush1.msra.mxu0 0.0
      %2365 = vmatprep.subr.mxu0 0.0
      %2366 = vmatpush1.msra.mxu0 0.0
      %2367 = vmatprep.subr.mxu0 0.0
      %2368 = vmatpush1.msra.mxu0 0.0
      %2369 = vmatprep.subr.mxu0 0.0
      %2370 = vmatpush1.msra.mxu0 0.0
      %2371 = vmatprep.subr.mxu0 0.0
      %2372 = vmatpush1.msra.mxu0 0.0
      %2373 = vmatprep.subr.mxu0 0.0
      %2374 = vmatpush1.msra.mxu0 0.0
      %2375 = vmatprep.subr.mxu0 0.0
      %2376 = vmatpush1.msra.mxu0 0.0
      %2377 = vmatprep.subr.mxu0 0.0
      %2378 = vmatpush1.msra.mxu0 0.0
      %2379 = vmatprep.subr.mxu0 0.0
      %2380 = vmatpush1.msra.mxu0 0.0
      %2381 = vmatprep.subr.mxu0 0.0
      %2382 = vmatpush1.msra.mxu0 0.0
      %2383 = vmatprep.subr.mxu0 0.0
      %2384 = vmatpush1.msra.mxu0 0.0
      %2385 = vmatprep.subr.mxu0 0.0
      %2386 = vmatpush1.msra.mxu0 0.0
      %2387 = vmatprep.subr.mxu0 0.0
      %2388 = vmatpush1.msra.mxu0 0.0
      %2389 = vmatprep.subr.mxu0 0.0
      %2390 = vmatpush1.msra.mxu0 0.0
      %2391 = vmatprep.subr.mxu0 0.0
      %2392 = vmatpush1.msra.mxu0 0.0
      %2393 = vmatprep.subr.mxu0 0.0
      %2394 = vmatpush1.msra.mxu0 0.0
      %2395 = vmatprep.subr.mxu0 0.0
      %2396 = vmatpush1.msra.mxu0 0.0
      %2397 = vmatprep.subr.mxu0 0.0
      %2398 = vmatpush1.msra.mxu0 0.0
      %2399 = vmatprep.subr.mxu0 0.0
      %2400 = vmatpush1.msra.mxu0 0.0
      %2401 = vmatprep.subr.mxu0 0.0
      %2402 = vmatpush1.msra.mxu0 0.0
      %2403 = vmatprep.subr.mxu0 0.0
      %2404 = vmatpush1.msra.mxu0 0.0
      %2405 = vmatprep.subr.mxu0 0.0
      %2406 = vmatpush1.msra.mxu0 0.0
      %2407 = vmatprep.subr.mxu0 0.0
      %2408 = vmatpush1.msra.mxu0 0.0
      %2409 = vmatprep.mubr.f32.mxu0 0.0
      %2410 = vmatmul.mubr.f32.gmra.mrb[0].mxu0 %v842
      %v2411 = vpop.f32.mrb[0].mxu0
      %v2412 = vadd.f32 0.0, %v2411
      %v2413 = vpop.f32.mrb[0].mxu0
      %2414 = vmatprep.mubr.f32.mxu0 0.0
      %2415 = vmatmul.mubr.f32.gmra.mrb[0].mxu0 %v844
      %v2416 = vpop.f32.mrb[0].mxu0
      %v2417 = vadd.f32 0.0, %v2416
      %v2418 = vpop.f32.mrb[0].mxu0
      %2419 = vmatprep.mubr.f32.mxu0 0.0
      %2420 = vmatmul.mubr.f32.gmra.mrb[0].mxu0 %v846
      %v2421 = vpop.f32.mrb[0].mxu0
      %v2422 = vadd.f32 0.0, %v2421
      %v2423 = vpop.f32.mrb[0].mxu0
      %2424 = vmatprep.mubr.f32.mxu0 0.0
      %2425 = vmatmul.mubr.f32.gmra.mrb[0].mxu0 %v848
      %v2426 = vpop.f32.mrb[0].mxu0
      %v2427 = vadd.f32 0.0, %v2426
      %v2428 = vpop.f32.mrb[0].mxu0
      %2429 = vmatprep.mubr.f32.mxu0 0.0
      %2430 = vmatmul.mubr.f32.gmra.mrb[0].mxu0 %v850
      %v2431 = vpop.f32.mrb[0].mxu0
      %v2432 = vadd.f32 0.0, %v2431
      %v2433 = vpop.f32.mrb[0].mxu0
      %2434 = vmatprep.mubr.f32.mxu0 0.0
      %2435 = vmatmul.mubr.f32.gmra.mrb[0].mxu0 %v852
      %v2436 = vpop.f32.mrb[0].mxu0
      %v2437 = vadd.f32 0.0, %v2436
      %v2438 = vpop.f32.mrb[0].mxu0
      %2439 = vmatprep.mubr.f32.mxu0 0.0
      %2440 = vmatmul.mubr.f32.gmra.mrb[0].mxu0 %v854
      %v2441 = vpop.f32.mrb[0].mxu0
      %v2442 = vadd.f32 0.0, %v2441
      %v2443 = vpop.f32.mrb[0].mxu0
      %2444 = vmatprep.mubr.f32.mxu0 0.0
      %2445 = vmatmul.mubr.f32.gmra.mrb[0].mxu0 %v856
      %v2446 = vpop.f32.mrb[0].mxu0
      %v2447 = vadd.f32 0.0, %v2446
      %v2448 = vpop.f32.mrb[0].mxu0
      %2449 = vmatprep.mubr.f32.mxu0 0.0
      %2450 = vmatmul.mubr.f32.gmra.mrb[0].mxu0 %v858
      %v2451 = vpop.f32.mrb[0].mxu0
      %v2452 = vadd.f32 0.0, %v2451
      %v2453 = vpop.f32.mrb[0].mxu0
      %2454 = vmatprep.mubr.f32.mxu0 0.0
      %2455 = vmatmul.mubr.f32.gmra.mrb[0].mxu0 %v860
      %v2456 = vpop.f32.mrb[0].mxu0
      %v2457 = vadd.f32 0.0, %v2456
      %v2458 = vpop.f32.mrb[0].mxu0
      %2459 = vmatprep.mubr.f32.mxu0 0.0
      %2460 = vmatmul.mubr.f32.gmra.mrb[0].mxu0 %v862
      %v2461 = vpop.f32.mrb[0].mxu0
      %v2462 = vadd.f32 0.0, %v2461
      %v2463 = vpop.f32.mrb[0].mxu0
      %2464 = vmatprep.mubr.f32.mxu0 0.0
      %2465 = vmatmul.mubr.f32.gmra.mrb[0].mxu0 %v864
      %v2466 = vpop.f32.mrb[0].mxu0
      %v2467 = vadd.f32 0.0, %v2466
      %v2468 = vpop.f32.mrb[0].mxu0
      %2469 = vmatprep.mubr.f32.mxu0 0.0
      %2470 = vmatmul.mubr.f32.gmra.mrb[0].mxu0 %v866
      %v2471 = vpop.f32.mrb[0].mxu0
      %v2472 = vadd.f32 0.0, %v2471
      %v2473 = vpop.f32.mrb[0].mxu0
      %2474 = vmatprep.mubr.f32.mxu0 0.0
      %2475 = vmatmul.mubr.f32.gmra.mrb[0].mxu0 %v868
      %v2476 = vpop.f32.mrb[0].mxu0
      %v2477 = vadd.f32 0.0, %v2476
      %v2478 = vpop.f32.mrb[0].mxu0
      %2479 = vmatprep.mubr.f32.mxu0 0.0
      %2480 = vmatmul.mubr.f32.gmra.mrb[0].mxu0 %v870
      %v2481 = vpop.f32.mrb[0].mxu0
      %v2482 = vadd.f32 0.0, %v2481
      %v2483 = vpop.f32.mrb[0].mxu0
      %2484 = vmatprep.mubr.f32.mxu0 0.0
      %2485 = vmatmul.mubr.f32.gmra.mrb[0].mxu0 %v872
      %v2486 = vpop.f32.mrb[0].mxu0
      %v2487 = vadd.f32 0.0, %v2486
      %v2488 = vpop.f32.mrb[0].mxu0
      %2489 = vmatprep.mubr.f32.mxu0 0.0
      %2490 = vmatmul.mubr.f32.gmra.mrb[0].mxu0 %v874
      %v2491 = vpop.f32.mrb[0].mxu0
      %v2492 = vadd.f32 0.0, %v2491
      %v2493 = vpop.f32.mrb[0].mxu0
      %2494 = vmatprep.mubr.f32.mxu0 0.0
      %2495 = vmatmul.mubr.f32.gmra.mrb[0].mxu0 %v876
      %v2496 = vpop.f32.mrb[0].mxu0
      %v2497 = vadd.f32 0.0, %v2496
      %v2498 = vpop.f32.mrb[0].mxu0
      %2499 = vmatprep.mubr.f32.mxu0 0.0
      %2500 = vmatmul.mubr.f32.gmra.mrb[0].mxu0 %v878
      %v2501 = vpop.f32.mrb[0].mxu0
      %v2502 = vadd.f32 0.0, %v2501
      %v2503 = vpop.f32.mrb[0].mxu0
      %2504 = vmatprep.mubr.f32.mxu0 0.0
      %2505 = vmatmul.mubr.f32.gmra.mrb[0].mxu0 %v880
      %v2506 = vpop.f32.mrb[0].mxu0
      %v2507 = vadd.f32 0.0, %v2506
      %v2508 = vpop.f32.mrb[0].mxu0
      %2509 = vmatprep.mubr.f32.mxu0 0.0
      %2510 = vmatmul.mubr.f32.gmra.mrb[0].mxu0 %v882
      %v2511 = vpop.f32.mrb[0].mxu0
      %v2512 = vadd.f32 0.0, %v2511
      %v2513 = vpop.f32.mrb[0].mxu0
      %2514 = vmatprep.mubr.f32.mxu0 0.0
      %2515 = vmatmul.mubr.f32.gmra.mrb[0].mxu0 %v884
      %v2516 = vpop.f32.mrb[0].mxu0
      %v2517 = vadd.f32 0.0, %v2516
      %v2518 = vpop.f32.mrb[0].mxu0
      %2519 = vmatprep.mubr.f32.mxu0 0.0
      %2520 = vmatmul.mubr.f32.gmra.mrb[0].mxu0 %v886
      %v2521 = vpop.f32.mrb[0].mxu0
      %v2522 = vadd.f32 0.0, %v2521
      %v2523 = vpop.f32.mrb[0].mxu0
      %2524 = vmatprep.mubr.f32.mxu0 0.0
      %2525 = vmatmul.mubr.f32.gmra.mrb[0].mxu0 %v888
      %v2526 = vpop.f32.mrb[0].mxu0
      %v2527 = vadd.f32 0.0, %v2526
      %v2528 = vpop.f32.mrb[0].mxu0
      %2529 = vmatprep.mubr.f32.mxu0 0.0
      %2530 = vmatmul.mubr.f32.gmra.mrb[0].mxu0 %v890
      %v2531 = vpop.f32.mrb[0].mxu0
      %v2532 = vadd.f32 0.0, %v2531
      %v2533 = vpop.f32.mrb[0].mxu0
      %2534 = vmatprep.mubr.f32.mxu0 0.0
      %2535 = vmatmul.mubr.f32.gmra.mrb[0].mxu0 %v892
      %v2536 = vpop.f32.mrb[0].mxu0
      %v2537 = vadd.f32 0.0, %v2536
      %v2538 = vpop.f32.mrb[0].mxu0
      %2539 = vmatprep.mubr.f32.mxu0 0.0
      %2540 = vmatmul.mubr.f32.gmra.mrb[0].mxu0 %v894
      %v2541 = vpop.f32.mrb[0].mxu0
      %v2542 = vadd.f32 0.0, %v2541
      %v2543 = vpop.f32.mrb[0].mxu0
      %2544 = vmatprep.mubr.f32.mxu0 0.0
      %2545 = vmatmul.mubr.f32.gmra.mrb[0].mxu0 %v896
      %v2546 = vpop.f32.mrb[0].mxu0
      %v2547 = vadd.f32 0.0, %v2546
      %v2548 = vpop.f32.mrb[0].mxu0
      %2549 = vmatprep.mubr.f32.mxu0 0.0
      %2550 = vmatmul.mubr.f32.gmra.mrb[0].mxu0 %v1532
      %v2551 = vpop.f32.mrb[0].mxu0
      %v2552 = vadd.f32 0.0, %v2551
      %v2553 = vpop.f32.mrb[0].mxu0
      %2554 = vmatprep.mubr.f32.mxu0 0.0
      %2555 = vmatmul.mubr.f32.gmra.mrb[0].mxu0 %v1535
      %v2556 = vpop.f32.mrb[0].mxu0
      %v2557 = vadd.f32 0.0, %v2556
      %v2558 = vpop.f32.mrb[0].mxu0
      %2559 = vmatprep.mubr.f32.mxu0 0.0
      %2560 = vmatmul.mubr.f32.gmra.mrb[0].mxu0 %v2337
      %v2561 = vpop.f32.mrb[0].mxu0
      %v2562 = vadd.f32 0.0, %v2561
      %v2563 = vpop.f32.mrb[0].mxu0
      %2564 = vmatprep.mubr.f32.mxu0 0.0
      %2565 = vmatmul.mubr.f32.gmra.mrb[0].mxu0 %v2340
      %v2566 = vpop.f32.mrb[0].mxu0
      %v2567 = vadd.f32 0.0, %v2566
      %v2568 = vpop.f32.mrb[0].mxu0
      %2569 = vdwg.mxu0
      %v2570 = vadd.f32 %v2304, %v2412
      %v2571 = vadd.f32 %v2305, %v2417
      %v2572 = vadd.f32 %v2306, %v2422
      %v2573 = vadd.f32 %v2307, %v2427
      %v2574 = vadd.f32 %v2308, %v2432
      %v2575 = vadd.f32 %v2309, %v2437
      %v2576 = vadd.f32 %v2310, %v2442
      %v2577 = vadd.f32 %v2311, %v2447
      %v2578 = vadd.f32 %v2312, %v2452
      %v2579 = vadd.f32 %v2313, %v2457
      %v2580 = vadd.f32 %v2314, %v2462
      %v2581 = vadd.f32 %v2315, %v2467
      %v2582 = vadd.f32 %v2316, %v2472
      %v2583 = vadd.f32 %v2317, %v2477
      %v2584 = vadd.f32 %v2318, %v2482
      %v2585 = vadd.f32 %v2319, %v2487
      %v2586 = vadd.f32 %v2320, %v2492
      %v2587 = vadd.f32 %v2321, %v2497
      %v2588 = vadd.f32 %v2322, %v2502
      %v2589 = vadd.f32 %v2323, %v2507
      %v2590 = vadd.f32 %v2324, %v2512
      %v2591 = vadd.f32 %v2325, %v2517
      %v2592 = vadd.f32 %v2326, %v2522
      %v2593 = vadd.f32 %v2327, %v2527
      %v2594 = vadd.f32 %v2328, %v2532
      %v2595 = vadd.f32 %v2329, %v2537
      %v2596 = vadd.f32 %v2330, %v2542
      %v2597 = vadd.f32 %v2331, %v2547
      %v2598 = vadd.f32 %v2332, %v2552
      %v2599 = vadd.f32 %v2333, %v2557
      %v2600 = vadd.f32 %v2334, %v2562
      %v2601 = vadd.f32 %v2335, %v2567
      %v2603 = vrot.slane %v408, 1
      %v2604 = vrot.slane %v409, 1
      %v2605 = vsel %vm459, %v2603, %v2604
      %v2606 = vrot.slane %v410, 1
      %v2607 = vsel %vm459, %v2604, %v2606
      %v2608 = vsel %vm540, %v2605, 0
      %v2610 = vsel %vm540, %v2607, 0
      %v2613 = vsel %vm605, %v300, 0
      %2615 = vmatprep.subr.mxu0 0.0
      %2616 = vmatpush1.msra.mxu0 %v2613
      %2617 = vmatprep.subr.mxu0 0.0
      %2618 = vmatpush1.msra.mxu0 0.0
      %2619 = vmatprep.subr.mxu0 0.0
      %2620 = vmatpush1.msra.mxu0 0.0
      %2621 = vmatprep.subr.mxu0 0.0
      %2622 = vmatpush1.msra.mxu0 0.0
      %2623 = vmatprep.subr.mxu0 0.0
      %2624 = vmatpush1.msra.mxu0 0.0
      %2625 = vmatprep.subr.mxu0 0.0
      %2626 = vmatpush1.msra.mxu0 0.0
      %2627 = vmatprep.subr.mxu0 0.0
      %2628 = vmatpush1.msra.mxu0 0.0
      %2629 = vmatprep.subr.mxu0 0.0
      %2630 = vmatpush1.msra.mxu0 0.0
      %2631 = vmatprep.subr.mxu0 0.0
      %2632 = vmatpush1.msra.mxu0 0.0
      %2633 = vmatprep.subr.mxu0 0.0
      %2634 = vmatpush1.msra.mxu0 0.0
      %2635 = vmatprep.subr.mxu0 0.0
      %2636 = vmatpush1.msra.mxu0 0.0
      %2637 = vmatprep.subr.mxu0 0.0
      %2638 = vmatpush1.msra.mxu0 0.0
      %2639 = vmatprep.subr.mxu0 0.0
      %2640 = vmatpush1.msra.mxu0 0.0
      %2641 = vmatprep.subr.mxu0 0.0
      %2642 = vmatpush1.msra.mxu0 0.0
      %2643 = vmatprep.subr.mxu0 0.0
      %2644 = vmatpush1.msra.mxu0 0.0
      %2645 = vmatprep.subr.mxu0 0.0
      %2646 = vmatpush1.msra.mxu0 0.0
      %2647 = vmatprep.subr.mxu0 0.0
      %2648 = vmatpush1.msra.mxu0 0.0
      %2649 = vmatprep.subr.mxu0 0.0
      %2650 = vmatpush1.msra.mxu0 0.0
      %2651 = vmatprep.subr.mxu0 0.0
      %2652 = vmatpush1.msra.mxu0 0.0
      %2653 = vmatprep.subr.mxu0 0.0
      %2654 = vmatpush1.msra.mxu0 0.0
      %2655 = vmatprep.subr.mxu0 0.0
      %2656 = vmatpush1.msra.mxu0 0.0
      %2657 = vmatprep.subr.mxu0 0.0
      %2658 = vmatpush1.msra.mxu0 0.0
      %2659 = vmatprep.subr.mxu0 0.0
      %2660 = vmatpush1.msra.mxu0 0.0
      %2661 = vmatprep.subr.mxu0 0.0
      %2662 = vmatpush1.msra.mxu0 0.0
      %2663 = vmatprep.subr.mxu0 0.0
      %2664 = vmatpush1.msra.mxu0 0.0
      %2665 = vmatprep.subr.mxu0 0.0
      %2666 = vmatpush1.msra.mxu0 0.0
      %2667 = vmatprep.subr.mxu0 0.0
      %2668 = vmatpush1.msra.mxu0 0.0
      %2669 = vmatprep.subr.mxu0 0.0
      %2670 = vmatpush1.msra.mxu0 0.0
      %2671 = vmatprep.subr.mxu0 0.0
      %2672 = vmatpush1.msra.mxu0 0.0
      %2673 = vmatprep.subr.mxu0 0.0
      %2674 = vmatpush1.msra.mxu0 0.0
      %2675 = vmatprep.subr.mxu0 0.0
      %2676 = vmatpush1.msra.mxu0 0.0
      %2677 = vmatprep.subr.mxu0 0.0
      %2678 = vmatpush1.msra.mxu0 0.0
      %2679 = vmatprep.mubr.f32.mxu0 0.0
      %2680 = vmatmul.mubr.f32.gmra.mrb[0].mxu0 %v549
      %v2681 = vpop.f32.mrb[0].mxu0
      %v2682 = vadd.f32 0.0, %v2681
      %v2683 = vpop.f32.mrb[0].mxu0
      %2684 = vmatprep.mubr.f32.mxu0 0.0
      %2685 = vmatmul.mubr.f32.gmra.mrb[0].mxu0 %v551
      %v2686 = vpop.f32.mrb[0].mxu0
      %v2687 = vadd.f32 0.0, %v2686
      %v2688 = vpop.f32.mrb[0].mxu0
      %2689 = vmatprep.mubr.f32.mxu0 0.0
      %2690 = vmatmul.mubr.f32.gmra.mrb[0].mxu0 %v553
      %v2691 = vpop.f32.mrb[0].mxu0
      %v2692 = vadd.f32 0.0, %v2691
      %v2693 = vpop.f32.mrb[0].mxu0
      %2694 = vmatprep.mubr.f32.mxu0 0.0
      %2695 = vmatmul.mubr.f32.gmra.mrb[0].mxu0 %v555
      %v2696 = vpop.f32.mrb[0].mxu0
      %v2697 = vadd.f32 0.0, %v2696
      %v2698 = vpop.f32.mrb[0].mxu0
      %2699 = vmatprep.mubr.f32.mxu0 0.0
      %2700 = vmatmul.mubr.f32.gmra.mrb[0].mxu0 %v557
      %v2701 = vpop.f32.mrb[0].mxu0
      %v2702 = vadd.f32 0.0, %v2701
      %v2703 = vpop.f32.mrb[0].mxu0
      %2704 = vmatprep.mubr.f32.mxu0 0.0
      %2705 = vmatmul.mubr.f32.gmra.mrb[0].mxu0 %v559
      %v2706 = vpop.f32.mrb[0].mxu0
      %v2707 = vadd.f32 0.0, %v2706
      %v2708 = vpop.f32.mrb[0].mxu0
      %2709 = vmatprep.mubr.f32.mxu0 0.0
      %2710 = vmatmul.mubr.f32.gmra.mrb[0].mxu0 %v561
      %v2711 = vpop.f32.mrb[0].mxu0
      %v2712 = vadd.f32 0.0, %v2711
      %v2713 = vpop.f32.mrb[0].mxu0
      %2714 = vmatprep.mubr.f32.mxu0 0.0
      %2715 = vmatmul.mubr.f32.gmra.mrb[0].mxu0 %v563
      %v2716 = vpop.f32.mrb[0].mxu0
      %v2717 = vadd.f32 0.0, %v2716
      %v2718 = vpop.f32.mrb[0].mxu0
      %2719 = vmatprep.mubr.f32.mxu0 0.0
      %2720 = vmatmul.mubr.f32.gmra.mrb[0].mxu0 %v565
      %v2721 = vpop.f32.mrb[0].mxu0
      %v2722 = vadd.f32 0.0, %v2721
      %v2723 = vpop.f32.mrb[0].mxu0
      %2724 = vmatprep.mubr.f32.mxu0 0.0
      %2725 = vmatmul.mubr.f32.gmra.mrb[0].mxu0 %v567
      %v2726 = vpop.f32.mrb[0].mxu0
      %v2727 = vadd.f32 0.0, %v2726
      %v2728 = vpop.f32.mrb[0].mxu0
      %2729 = vmatprep.mubr.f32.mxu0 0.0
      %2730 = vmatmul.mubr.f32.gmra.mrb[0].mxu0 %v569
      %v2731 = vpop.f32.mrb[0].mxu0
      %v2732 = vadd.f32 0.0, %v2731
      %v2733 = vpop.f32.mrb[0].mxu0
      %2734 = vmatprep.mubr.f32.mxu0 0.0
      %2735 = vmatmul.mubr.f32.gmra.mrb[0].mxu0 %v571
      %v2736 = vpop.f32.mrb[0].mxu0
      %v2737 = vadd.f32 0.0, %v2736
      %v2738 = vpop.f32.mrb[0].mxu0
      %2739 = vmatprep.mubr.f32.mxu0 0.0
      %2740 = vmatmul.mubr.f32.gmra.mrb[0].mxu0 %v573
      %v2741 = vpop.f32.mrb[0].mxu0
      %v2742 = vadd.f32 0.0, %v2741
      %v2743 = vpop.f32.mrb[0].mxu0
      %2744 = vmatprep.mubr.f32.mxu0 0.0
      %2745 = vmatmul.mubr.f32.gmra.mrb[0].mxu0 %v575
      %v2746 = vpop.f32.mrb[0].mxu0
      %v2747 = vadd.f32 0.0, %v2746
      %v2748 = vpop.f32.mrb[0].mxu0
      %2749 = vmatprep.mubr.f32.mxu0 0.0
      %2750 = vmatmul.mubr.f32.gmra.mrb[0].mxu0 %v577
      %v2751 = vpop.f32.mrb[0].mxu0
      %v2752 = vadd.f32 0.0, %v2751
      %v2753 = vpop.f32.mrb[0].mxu0
      %2754 = vmatprep.mubr.f32.mxu0 0.0
      %2755 = vmatmul.mubr.f32.gmra.mrb[0].mxu0 %v579
      %v2756 = vpop.f32.mrb[0].mxu0
      %v2757 = vadd.f32 0.0, %v2756
      %v2758 = vpop.f32.mrb[0].mxu0
      %2759 = vmatprep.mubr.f32.mxu0 0.0
      %2760 = vmatmul.mubr.f32.gmra.mrb[0].mxu0 %v581
      %v2761 = vpop.f32.mrb[0].mxu0
      %v2762 = vadd.f32 0.0, %v2761
      %v2763 = vpop.f32.mrb[0].mxu0
      %2764 = vmatprep.mubr.f32.mxu0 0.0
      %2765 = vmatmul.mubr.f32.gmra.mrb[0].mxu0 %v583
      %v2766 = vpop.f32.mrb[0].mxu0
      %v2767 = vadd.f32 0.0, %v2766
      %v2768 = vpop.f32.mrb[0].mxu0
      %2769 = vmatprep.mubr.f32.mxu0 0.0
      %2770 = vmatmul.mubr.f32.gmra.mrb[0].mxu0 %v585
      %v2771 = vpop.f32.mrb[0].mxu0
      %v2772 = vadd.f32 0.0, %v2771
      %v2773 = vpop.f32.mrb[0].mxu0
      %2774 = vmatprep.mubr.f32.mxu0 0.0
      %2775 = vmatmul.mubr.f32.gmra.mrb[0].mxu0 %v587
      %v2776 = vpop.f32.mrb[0].mxu0
      %v2777 = vadd.f32 0.0, %v2776
      %v2778 = vpop.f32.mrb[0].mxu0
      %2779 = vmatprep.mubr.f32.mxu0 0.0
      %2780 = vmatmul.mubr.f32.gmra.mrb[0].mxu0 %v589
      %v2781 = vpop.f32.mrb[0].mxu0
      %v2782 = vadd.f32 0.0, %v2781
      %v2783 = vpop.f32.mrb[0].mxu0
      %2784 = vmatprep.mubr.f32.mxu0 0.0
      %2785 = vmatmul.mubr.f32.gmra.mrb[0].mxu0 %v591
      %v2786 = vpop.f32.mrb[0].mxu0
      %v2787 = vadd.f32 0.0, %v2786
      %v2788 = vpop.f32.mrb[0].mxu0
      %2789 = vmatprep.mubr.f32.mxu0 0.0
      %2790 = vmatmul.mubr.f32.gmra.mrb[0].mxu0 %v593
      %v2791 = vpop.f32.mrb[0].mxu0
      %v2792 = vadd.f32 0.0, %v2791
      %v2793 = vpop.f32.mrb[0].mxu0
      %2794 = vmatprep.mubr.f32.mxu0 0.0
      %2795 = vmatmul.mubr.f32.gmra.mrb[0].mxu0 %v595
      %v2796 = vpop.f32.mrb[0].mxu0
      %v2797 = vadd.f32 0.0, %v2796
      %v2798 = vpop.f32.mrb[0].mxu0
      %2799 = vmatprep.mubr.f32.mxu0 0.0
      %2800 = vmatmul.mubr.f32.gmra.mrb[0].mxu0 %v597
      %v2801 = vpop.f32.mrb[0].mxu0
      %v2802 = vadd.f32 0.0, %v2801
      %v2803 = vpop.f32.mrb[0].mxu0
      %2804 = vmatprep.mubr.f32.mxu0 0.0
      %2805 = vmatmul.mubr.f32.gmra.mrb[0].mxu0 %v599
      %v2806 = vpop.f32.mrb[0].mxu0
      %v2807 = vadd.f32 0.0, %v2806
      %v2808 = vpop.f32.mrb[0].mxu0
      %2809 = vmatprep.mubr.f32.mxu0 0.0
      %2810 = vmatmul.mubr.f32.gmra.mrb[0].mxu0 %v601
      %v2811 = vpop.f32.mrb[0].mxu0
      %v2812 = vadd.f32 0.0, %v2811
      %v2813 = vpop.f32.mrb[0].mxu0
      %2814 = vmatprep.mubr.f32.mxu0 0.0
      %2815 = vmatmul.mubr.f32.gmra.mrb[0].mxu0 %v603
      %v2816 = vpop.f32.mrb[0].mxu0
      %v2817 = vadd.f32 0.0, %v2816
      %v2818 = vpop.f32.mrb[0].mxu0
      %2819 = vmatprep.mubr.f32.mxu0 0.0
      %2820 = vmatmul.mubr.f32.gmra.mrb[0].mxu0 %v1803
      %v2821 = vpop.f32.mrb[0].mxu0
      %v2822 = vadd.f32 0.0, %v2821
      %v2823 = vpop.f32.mrb[0].mxu0
      %2824 = vmatprep.mubr.f32.mxu0 0.0
      %2825 = vmatmul.mubr.f32.gmra.mrb[0].mxu0 %v1805
      %v2826 = vpop.f32.mrb[0].mxu0
      %v2827 = vadd.f32 0.0, %v2826
      %v2828 = vpop.f32.mrb[0].mxu0
      %2829 = vmatprep.mubr.f32.mxu0 0.0
      %2830 = vmatmul.mubr.f32.gmra.mrb[0].mxu0 %v2608
      %v2831 = vpop.f32.mrb[0].mxu0
      %v2832 = vadd.f32 0.0, %v2831
      %v2833 = vpop.f32.mrb[0].mxu0
      %2834 = vmatprep.mubr.f32.mxu0 0.0
      %2835 = vmatmul.mubr.f32.gmra.mrb[0].mxu0 %v2610
      %v2836 = vpop.f32.mrb[0].mxu0
      %v2837 = vadd.f32 0.0, %v2836
      %v2838 = vpop.f32.mrb[0].mxu0
      %2839 = vdwg.mxu0
      %v2840 = vadd.f32 %v2570, %v2682
      %v2841 = vadd.f32 %v2571, %v2687
      %v2842 = vadd.f32 %v2572, %v2692
      %v2843 = vadd.f32 %v2573, %v2697
      %v2844 = vadd.f32 %v2574, %v2702
      %v2845 = vadd.f32 %v2575, %v2707
      %v2846 = vadd.f32 %v2576, %v2712
      %v2847 = vadd.f32 %v2577, %v2717
      %v2848 = vadd.f32 %v2578, %v2722
      %v2849 = vadd.f32 %v2579, %v2727
      %v2850 = vadd.f32 %v2580, %v2732
      %v2851 = vadd.f32 %v2581, %v2737
      %v2852 = vadd.f32 %v2582, %v2742
      %v2853 = vadd.f32 %v2583, %v2747
      %v2854 = vadd.f32 %v2584, %v2752
      %v2855 = vadd.f32 %v2585, %v2757
      %v2856 = vadd.f32 %v2586, %v2762
      %v2857 = vadd.f32 %v2587, %v2767
      %v2858 = vadd.f32 %v2588, %v2772
      %v2859 = vadd.f32 %v2589, %v2777
      %v2860 = vadd.f32 %v2590, %v2782
      %v2861 = vadd.f32 %v2591, %v2787
      %v2862 = vadd.f32 %v2592, %v2792
      %v2863 = vadd.f32 %v2593, %v2797
      %v2864 = vadd.f32 %v2594, %v2802
      %v2865 = vadd.f32 %v2595, %v2807
      %v2866 = vadd.f32 %v2596, %v2812
      %v2867 = vadd.f32 %v2597, %v2817
      %v2868 = vadd.f32 %v2598, %v2822
      %v2869 = vadd.f32 %v2599, %v2827
      %v2870 = vadd.f32 %v2600, %v2832
      %v2871 = vadd.f32 %v2601, %v2837
      %v2872 = vrot.slane %v408, 2
      %v2873 = vrot.slane %v409, 2
      %v2874 = vsel %vm1126, %v2872, %v2873
      %v2875 = vrot.slane %v410, 2
      %v2876 = vsel %vm1126, %v2873, %v2875
      %v2877 = vsel %vm540, %v2874, 0
      %v2879 = vsel %vm540, %v2876, 0
      %v2882 = vsel %vm605, %v301, 0
      %2884 = vmatprep.subr.mxu0 0.0
      %2885 = vmatpush1.msra.mxu0 %v2882
      %2886 = vmatprep.subr.mxu0 0.0
      %2887 = vmatpush1.msra.mxu0 0.0
      %2888 = vmatprep.subr.mxu0 0.0
      %2889 = vmatpush1.msra.mxu0 0.0
      %2890 = vmatprep.subr.mxu0 0.0
      %2891 = vmatpush1.msra.mxu0 0.0
      %2892 = vmatprep.subr.mxu0 0.0
      %2893 = vmatpush1.msra.mxu0 0.0
      %2894 = vmatprep.subr.mxu0 0.0
      %2895 = vmatpush1.msra.mxu0 0.0
      %2896 = vmatprep.subr.mxu0 0.0
      %2897 = vmatpush1.msra.mxu0 0.0
      %2898 = vmatprep.subr.mxu0 0.0
      %2899 = vmatpush1.msra.mxu0 0.0
      %2900 = vmatprep.subr.mxu0 0.0
      %2901 = vmatpush1.msra.mxu0 0.0
      %2902 = vmatprep.subr.mxu0 0.0
      %2903 = vmatpush1.msra.mxu0 0.0
      %2904 = vmatprep.subr.mxu0 0.0
      %2905 = vmatpush1.msra.mxu0 0.0
      %2906 = vmatprep.subr.mxu0 0.0
      %2907 = vmatpush1.msra.mxu0 0.0
      %2908 = vmatprep.subr.mxu0 0.0
      %2909 = vmatpush1.msra.mxu0 0.0
      %2910 = vmatprep.subr.mxu0 0.0
      %2911 = vmatpush1.msra.mxu0 0.0
      %2912 = vmatprep.subr.mxu0 0.0
      %2913 = vmatpush1.msra.mxu0 0.0
      %2914 = vmatprep.subr.mxu0 0.0
      %2915 = vmatpush1.msra.mxu0 0.0
      %2916 = vmatprep.subr.mxu0 0.0
      %2917 = vmatpush1.msra.mxu0 0.0
      %2918 = vmatprep.subr.mxu0 0.0
      %2919 = vmatpush1.msra.mxu0 0.0
      %2920 = vmatprep.subr.mxu0 0.0
      %2921 = vmatpush1.msra.mxu0 0.0
      %2922 = vmatprep.subr.mxu0 0.0
      %2923 = vmatpush1.msra.mxu0 0.0
      %2924 = vmatprep.subr.mxu0 0.0
      %2925 = vmatpush1.msra.mxu0 0.0
      %2926 = vmatprep.subr.mxu0 0.0
      %2927 = vmatpush1.msra.mxu0 0.0
      %2928 = vmatprep.subr.mxu0 0.0
      %2929 = vmatpush1.msra.mxu0 0.0
      %2930 = vmatprep.subr.mxu0 0.0
      %2931 = vmatpush1.msra.mxu0 0.0
      %2932 = vmatprep.subr.mxu0 0.0
      %2933 = vmatpush1.msra.mxu0 0.0
      %2934 = vmatprep.subr.mxu0 0.0
      %2935 = vmatpush1.msra.mxu0 0.0
      %2936 = vmatprep.subr.mxu0 0.0
      %2937 = vmatpush1.msra.mxu0 0.0
      %2938 = vmatprep.subr.mxu0 0.0
      %2939 = vmatpush1.msra.mxu0 0.0
      %2940 = vmatprep.subr.mxu0 0.0
      %2941 = vmatpush1.msra.mxu0 0.0
      %2942 = vmatprep.subr.mxu0 0.0
      %2943 = vmatpush1.msra.mxu0 0.0
      %2944 = vmatprep.subr.mxu0 0.0
      %2945 = vmatpush1.msra.mxu0 0.0
      %2946 = vmatprep.subr.mxu0 0.0
      %2947 = vmatpush1.msra.mxu0 0.0
      %2948 = vmatprep.mubr.f32.mxu0 0.0
      %2949 = vmatmul.mubr.f32.gmra.mrb[0].mxu0 %v1215
      %v2950 = vpop.f32.mrb[0].mxu0
      %v2951 = vadd.f32 0.0, %v2950
      %v2952 = vpop.f32.mrb[0].mxu0
      %2953 = vmatprep.mubr.f32.mxu0 0.0
      %2954 = vmatmul.mubr.f32.gmra.mrb[0].mxu0 %v1217
      %v2955 = vpop.f32.mrb[0].mxu0
      %v2956 = vadd.f32 0.0, %v2955
      %v2957 = vpop.f32.mrb[0].mxu0
      %2958 = vmatprep.mubr.f32.mxu0 0.0
      %2959 = vmatmul.mubr.f32.gmra.mrb[0].mxu0 %v1219
      %v2960 = vpop.f32.mrb[0].mxu0
      %v2961 = vadd.f32 0.0, %v2960
      %v2962 = vpop.f32.mrb[0].mxu0
      %2963 = vmatprep.mubr.f32.mxu0 0.0
      %2964 = vmatmul.mubr.f32.gmra.mrb[0].mxu0 %v1221
      %v2965 = vpop.f32.mrb[0].mxu0
      %v2966 = vadd.f32 0.0, %v2965
      %v2967 = vpop.f32.mrb[0].mxu0
      %2968 = vmatprep.mubr.f32.mxu0 0.0
      %2969 = vmatmul.mubr.f32.gmra.mrb[0].mxu0 %v1223
      %v2970 = vpop.f32.mrb[0].mxu0
      %v2971 = vadd.f32 0.0, %v2970
      %v2972 = vpop.f32.mrb[0].mxu0
      %2973 = vmatprep.mubr.f32.mxu0 0.0
      %2974 = vmatmul.mubr.f32.gmra.mrb[0].mxu0 %v1225
      %v2975 = vpop.f32.mrb[0].mxu0
      %v2976 = vadd.f32 0.0, %v2975
      %v2977 = vpop.f32.mrb[0].mxu0
      %2978 = vmatprep.mubr.f32.mxu0 0.0
      %2979 = vmatmul.mubr.f32.gmra.mrb[0].mxu0 %v1227
      %v2980 = vpop.f32.mrb[0].mxu0
      %v2981 = vadd.f32 0.0, %v2980
      %v2982 = vpop.f32.mrb[0].mxu0
      %2983 = vmatprep.mubr.f32.mxu0 0.0
      %2984 = vmatmul.mubr.f32.gmra.mrb[0].mxu0 %v1229
      %v2985 = vpop.f32.mrb[0].mxu0
      %v2986 = vadd.f32 0.0, %v2985
      %v2987 = vpop.f32.mrb[0].mxu0
      %2988 = vmatprep.mubr.f32.mxu0 0.0
      %2989 = vmatmul.mubr.f32.gmra.mrb[0].mxu0 %v1231
      %v2990 = vpop.f32.mrb[0].mxu0
      %v2991 = vadd.f32 0.0, %v2990
      %v2992 = vpop.f32.mrb[0].mxu0
      %2993 = vmatprep.mubr.f32.mxu0 0.0
      %2994 = vmatmul.mubr.f32.gmra.mrb[0].mxu0 %v1233
      %v2995 = vpop.f32.mrb[0].mxu0
      %v2996 = vadd.f32 0.0, %v2995
      %v2997 = vpop.f32.mrb[0].mxu0
      %2998 = vmatprep.mubr.f32.mxu0 0.0
      %2999 = vmatmul.mubr.f32.gmra.mrb[0].mxu0 %v1235
      %v3000 = vpop.f32.mrb[0].mxu0
      %v3001 = vadd.f32 0.0, %v3000
      %v3002 = vpop.f32.mrb[0].mxu0
      %3003 = vmatprep.mubr.f32.mxu0 0.0
      %3004 = vmatmul.mubr.f32.gmra.mrb[0].mxu0 %v1237
      %v3005 = vpop.f32.mrb[0].mxu0
      %v3006 = vadd.f32 0.0, %v3005
      %v3007 = vpop.f32.mrb[0].mxu0
      %3008 = vmatprep.mubr.f32.mxu0 0.0
      %3009 = vmatmul.mubr.f32.gmra.mrb[0].mxu0 %v1239
      %v3010 = vpop.f32.mrb[0].mxu0
      %v3011 = vadd.f32 0.0, %v3010
      %v3012 = vpop.f32.mrb[0].mxu0
      %3013 = vmatprep.mubr.f32.mxu0 0.0
      %3014 = vmatmul.mubr.f32.gmra.mrb[0].mxu0 %v1241
      %v3015 = vpop.f32.mrb[0].mxu0
      %v3016 = vadd.f32 0.0, %v3015
      %v3017 = vpop.f32.mrb[0].mxu0
      %3018 = vmatprep.mubr.f32.mxu0 0.0
      %3019 = vmatmul.mubr.f32.gmra.mrb[0].mxu0 %v1243
      %v3020 = vpop.f32.mrb[0].mxu0
      %v3021 = vadd.f32 0.0, %v3020
      %v3022 = vpop.f32.mrb[0].mxu0
      %3023 = vmatprep.mubr.f32.mxu0 0.0
      %3024 = vmatmul.mubr.f32.gmra.mrb[0].mxu0 %v1245
      %v3025 = vpop.f32.mrb[0].mxu0
      %v3026 = vadd.f32 0.0, %v3025
      %v3027 = vpop.f32.mrb[0].mxu0
      %3028 = vmatprep.mubr.f32.mxu0 0.0
      %3029 = vmatmul.mubr.f32.gmra.mrb[0].mxu0 %v1247
      %v3030 = vpop.f32.mrb[0].mxu0
      %v3031 = vadd.f32 0.0, %v3030
      %v3032 = vpop.f32.mrb[0].mxu0
      %3033 = vmatprep.mubr.f32.mxu0 0.0
      %3034 = vmatmul.mubr.f32.gmra.mrb[0].mxu0 %v1249
      %v3035 = vpop.f32.mrb[0].mxu0
      %v3036 = vadd.f32 0.0, %v3035
      %v3037 = vpop.f32.mrb[0].mxu0
      %3038 = vmatprep.mubr.f32.mxu0 0.0
      %3039 = vmatmul.mubr.f32.gmra.mrb[0].mxu0 %v1251
      %v3040 = vpop.f32.mrb[0].mxu0
      %v3041 = vadd.f32 0.0, %v3040
      %v3042 = vpop.f32.mrb[0].mxu0
      %3043 = vmatprep.mubr.f32.mxu0 0.0
      %3044 = vmatmul.mubr.f32.gmra.mrb[0].mxu0 %v1253
      %v3045 = vpop.f32.mrb[0].mxu0
      %v3046 = vadd.f32 0.0, %v3045
      %v3047 = vpop.f32.mrb[0].mxu0
      %3048 = vmatprep.mubr.f32.mxu0 0.0
      %3049 = vmatmul.mubr.f32.gmra.mrb[0].mxu0 %v1255
      %v3050 = vpop.f32.mrb[0].mxu0
      %v3051 = vadd.f32 0.0, %v3050
      %v3052 = vpop.f32.mrb[0].mxu0
      %3053 = vmatprep.mubr.f32.mxu0 0.0
      %3054 = vmatmul.mubr.f32.gmra.mrb[0].mxu0 %v1257
      %v3055 = vpop.f32.mrb[0].mxu0
      %v3056 = vadd.f32 0.0, %v3055
      %v3057 = vpop.f32.mrb[0].mxu0
      %3058 = vmatprep.mubr.f32.mxu0 0.0
      %3059 = vmatmul.mubr.f32.gmra.mrb[0].mxu0 %v1259
      %v3060 = vpop.f32.mrb[0].mxu0
      %v3061 = vadd.f32 0.0, %v3060
      %v3062 = vpop.f32.mrb[0].mxu0
      %3063 = vmatprep.mubr.f32.mxu0 0.0
      %3064 = vmatmul.mubr.f32.gmra.mrb[0].mxu0 %v1261
      %v3065 = vpop.f32.mrb[0].mxu0
      %v3066 = vadd.f32 0.0, %v3065
      %v3067 = vpop.f32.mrb[0].mxu0
      %3068 = vmatprep.mubr.f32.mxu0 0.0
      %3069 = vmatmul.mubr.f32.gmra.mrb[0].mxu0 %v1263
      %v3070 = vpop.f32.mrb[0].mxu0
      %v3071 = vadd.f32 0.0, %v3070
      %v3072 = vpop.f32.mrb[0].mxu0
      %3073 = vmatprep.mubr.f32.mxu0 0.0
      %3074 = vmatmul.mubr.f32.gmra.mrb[0].mxu0 %v1265
      %v3075 = vpop.f32.mrb[0].mxu0
      %v3076 = vadd.f32 0.0, %v3075
      %v3077 = vpop.f32.mrb[0].mxu0
      %3078 = vmatprep.mubr.f32.mxu0 0.0
      %3079 = vmatmul.mubr.f32.gmra.mrb[0].mxu0 %v1267
      %v3080 = vpop.f32.mrb[0].mxu0
      %v3081 = vadd.f32 0.0, %v3080
      %v3082 = vpop.f32.mrb[0].mxu0
      %3083 = vmatprep.mubr.f32.mxu0 0.0
      %3084 = vmatmul.mubr.f32.gmra.mrb[0].mxu0 %v1269
      %v3085 = vpop.f32.mrb[0].mxu0
      %v3086 = vadd.f32 0.0, %v3085
      %v3087 = vpop.f32.mrb[0].mxu0
      %3088 = vmatprep.mubr.f32.mxu0 0.0
      %3089 = vmatmul.mubr.f32.gmra.mrb[0].mxu0 %v2072
      %v3090 = vpop.f32.mrb[0].mxu0
      %v3091 = vadd.f32 0.0, %v3090
      %v3092 = vpop.f32.mrb[0].mxu0
      %3093 = vmatprep.mubr.f32.mxu0 0.0
      %3094 = vmatmul.mubr.f32.gmra.mrb[0].mxu0 %v2074
      %v3095 = vpop.f32.mrb[0].mxu0
      %v3096 = vadd.f32 0.0, %v3095
      %v3097 = vpop.f32.mrb[0].mxu0
      %3098 = vmatprep.mubr.f32.mxu0 0.0
      %3099 = vmatmul.mubr.f32.gmra.mrb[0].mxu0 %v2877
      %v3100 = vpop.f32.mrb[0].mxu0
      %v3101 = vadd.f32 0.0, %v3100
      %v3102 = vpop.f32.mrb[0].mxu0
      %3103 = vmatprep.mubr.f32.mxu0 0.0
      %3104 = vmatmul.mubr.f32.gmra.mrb[0].mxu0 %v2879
      %v3105 = vpop.f32.mrb[0].mxu0
      %v3106 = vadd.f32 0.0, %v3105
      %v3107 = vpop.f32.mrb[0].mxu0
      %3108 = vdwg.mxu0
      %v3109 = vadd.f32 %v2840, %v2951
      %v3110 = vadd.f32 %v2841, %v2956
      %v3111 = vadd.f32 %v2842, %v2961
      %v3112 = vadd.f32 %v2843, %v2966
      %v3113 = vadd.f32 %v2844, %v2971
      %v3114 = vadd.f32 %v2845, %v2976
      %v3115 = vadd.f32 %v2846, %v2981
      %v3116 = vadd.f32 %v2847, %v2986
      %v3117 = vadd.f32 %v2848, %v2991
      %v3118 = vadd.f32 %v2849, %v2996
      %v3119 = vadd.f32 %v2850, %v3001
      %v3120 = vadd.f32 %v2851, %v3006
      %v3121 = vadd.f32 %v2852, %v3011
      %v3122 = vadd.f32 %v2853, %v3016
      %v3123 = vadd.f32 %v2854, %v3021
      %v3124 = vadd.f32 %v2855, %v3026
      %v3125 = vadd.f32 %v2856, %v3031
      %v3126 = vadd.f32 %v2857, %v3036
      %v3127 = vadd.f32 %v2858, %v3041
      %v3128 = vadd.f32 %v2859, %v3046
      %v3129 = vadd.f32 %v2860, %v3051
      %v3130 = vadd.f32 %v2861, %v3056
      %v3131 = vadd.f32 %v2862, %v3061
      %v3132 = vadd.f32 %v2863, %v3066
      %v3133 = vadd.f32 %v2864, %v3071
      %v3134 = vadd.f32 %v2865, %v3076
      %v3135 = vadd.f32 %v2866, %v3081
      %v3136 = vadd.f32 %v2867, %v3086
      %v3137 = vadd.f32 %v2868, %v3091
      %v3138 = vadd.f32 %v2869, %v3096
      %v3139 = vadd.f32 %v2870, %v3101
      %v3140 = vadd.f32 %v2871, %v3106
      %v3142 = vlaneseq
      %v3143 = vshrl.u32 %v3142, 7
      %v3144 = vsub.s32 0, %v3143
      %v3145 = vrot.slane %v302, %v3144
      %v3147 = vadd.f32 %v3109, %v3145
      %v3148 = vadd.f32 %v3110, %v3145
      %v3149 = vadd.f32 %v3111, %v3145
      %v3150 = vadd.f32 %v3112, %v3145
      %v3151 = vadd.f32 %v3113, %v3145
      %v3152 = vadd.f32 %v3114, %v3145
      %v3153 = vadd.f32 %v3115, %v3145
      %v3154 = vadd.f32 %v3116, %v3145
      %v3155 = vadd.f32 %v3117, %v3145
      %v3156 = vadd.f32 %v3118, %v3145
      %v3157 = vadd.f32 %v3119, %v3145
      %v3158 = vadd.f32 %v3120, %v3145
      %v3159 = vadd.f32 %v3121, %v3145
      %v3160 = vadd.f32 %v3122, %v3145
      %v3161 = vadd.f32 %v3123, %v3145
      %v3162 = vadd.f32 %v3124, %v3145
      %v3163 = vadd.f32 %v3125, %v3145
      %v3164 = vadd.f32 %v3126, %v3145
      %v3165 = vadd.f32 %v3127, %v3145
      %v3166 = vadd.f32 %v3128, %v3145
      %v3167 = vadd.f32 %v3129, %v3145
      %v3168 = vadd.f32 %v3130, %v3145
      %v3169 = vadd.f32 %v3131, %v3145
      %v3170 = vadd.f32 %v3132, %v3145
      %v3171 = vadd.f32 %v3133, %v3145
      %v3172 = vadd.f32 %v3134, %v3145
      %v3173 = vadd.f32 %v3135, %v3145
      %v3174 = vadd.f32 %v3136, %v3145
      %v3175 = vadd.f32 %v3137, %v3145
      %v3176 = vadd.f32 %v3138, %v3145
      %v3177 = vadd.f32 %v3139, %v3145
      %v3178 = vadd.f32 %v3140, %v3145
      %v3179 = vmax.f32 %v3147, 0.0
      %v3180 = vmax.f32 %v3148, 0.0
      %v3181 = vmax.f32 %v3149, 0.0
      %v3182 = vmax.f32 %v3150, 0.0
      %v3183 = vmax.f32 %v3151, 0.0
      %v3184 = vmax.f32 %v3152, 0.0
      %v3185 = vmax.f32 %v3153, 0.0
      %v3186 = vmax.f32 %v3154, 0.0
      %v3187 = vmax.f32 %v3155, 0.0
      %v3188 = vmax.f32 %v3156, 0.0
      %v3189 = vmax.f32 %v3157, 0.0
      %v3190 = vmax.f32 %v3158, 0.0
      %v3191 = vmax.f32 %v3159, 0.0
      %v3192 = vmax.f32 %v3160, 0.0
      %v3193 = vmax.f32 %v3161, 0.0
      %v3194 = vmax.f32 %v3162, 0.0
      %v3195 = vmax.f32 %v3163, 0.0
      %v3196 = vmax.f32 %v3164, 0.0
      %v3197 = vmax.f32 %v3165, 0.0
      %v3198 = vmax.f32 %v3166, 0.0
      %v3199 = vmax.f32 %v3167, 0.0
      %v3200 = vmax.f32 %v3168, 0.0
      %v3201 = vmax.f32 %v3169, 0.0
      %v3202 = vmax.f32 %v3170, 0.0
      %v3203 = vmax.f32 %v3171, 0.0
      %v3204 = vmax.f32 %v3172, 0.0
      %v3205 = vmax.f32 %v3173, 0.0
      %v3206 = vmax.f32 %v3174, 0.0
      %v3207 = vmax.f32 %v3175, 0.0
      %v3208 = vmax.f32 %v3176, 0.0
      %v3209 = vmax.f32 %v3177, 0.0
      %v3210 = vmax.f32 %v3178, 0.0
      %v3211 = vld [vmem:[%s279] sm:$0xf]
      %v3212 = vld [vmem:[%s279 + $0x4] sm:$0xf]
      %v3213 = vld [vmem:[%s279 + $0x8] sm:$0x1]
      %v3214 = vld [vmem:[%s279 + $0xc] sm:$0xf]
      %v3215 = vld [vmem:[%s279 + $0x10] sm:$0xf]
      %v3216 = vld [vmem:[%s279 + $0x14] sm:$0x1]
      %v3217 = vld [vmem:[%s279 + $0x18] sm:$0xf]
      %v3218 = vld [vmem:[%s279 + $0x1c] sm:$0xf]
      %v3219 = vld [vmem:[%s279 + $0x20] sm:$0x1]
      %v3220 = vld [vmem:[%s279 + $0x24] sm:$0xf]
      %v3221 = vld [vmem:[%s279 + $0x28] sm:$0xf]
      %v3222 = vld [vmem:[%s279 + $0x2c] sm:$0x1]
      %v3223 = vld [vmem:[%s279 + $0x30] sm:$0xf]
      %v3224 = vld [vmem:[%s279 + $0x34] sm:$0xf]
      %v3225 = vld [vmem:[%s279 + $0x38] sm:$0x1]
      %v3226 = vld [vmem:[%s279 + $0x3c] sm:$0xf]
      %v3227 = vld [vmem:[%s279 + $0x40] sm:$0xf]
      %v3228 = vld [vmem:[%s279 + $0x44] sm:$0x1]
      %v3229 = vld [vmem:[%s279 + $0x48] sm:$0xf]
      %v3230 = vld [vmem:[%s279 + $0x4c] sm:$0xf]
      %v3231 = vld [vmem:[%s279 + $0x50] sm:$0x1]
      %v3232 = vld [vmem:[%s279 + $0x54] sm:$0xf]
      %v3233 = vld [vmem:[%s279 + $0x58] sm:$0xf]
      %v3234 = vld [vmem:[%s279 + $0x5c] sm:$0x1]
      %v3235 = vld [vmem:[%s279 + $0x60] sm:$0xf]
      %v3236 = vld [vmem:[%s279 + $0x64] sm:$0xf]
      %v3237 = vld [vmem:[%s279 + $0x68] sm:$0x1]
      %v3238 = vld [vmem:[%s279 + $0x6c] sm:$0xf]
      %v3239 = vld [vmem:[%s279 + $0x70] sm:$0xf]
      %v3240 = vld [vmem:[%s279 + $0x74] sm:$0x1]
      %v3241 = vld [vmem:[%s279 + $0x78] sm:$0xf]
      %v3242 = vld [vmem:[%s279 + $0x7c] sm:$0xf]
      %v3243 = vld [vmem:[%s279 + $0x80] sm:$0x1]
      %v3244 = vld [vmem:[%s279 + $0x84] sm:$0xf]
      %v3245 = vld [vmem:[%s279 + $0x88] sm:$0xf]
      %v3246 = vld [vmem:[%s279 + $0x8c] sm:$0x1]
      %v3247 = vld [vmem:[%s279 + $0x90] sm:$0xf]
      %v3248 = vld [vmem:[%s279 + $0x94] sm:$0xf]
      %v3249 = vld [vmem:[%s279 + $0x98] sm:$0x1]
      %v3250 = vld [vmem:[%s279 + $0x9c] sm:$0xf]
      %v3251 = vld [vmem:[%s279 + $0xa0] sm:$0xf]
      %v3252 = vld [vmem:[%s279 + $0xa4] sm:$0x1]
      %v3253 = vld [vmem:[%s279 + $0xa8] sm:$0xf]
      %v3254 = vld [vmem:[%s279 + $0xac] sm:$0xf]
      %v3255 = vld [vmem:[%s279 + $0xb0] sm:$0x1]
      %v3256 = vld [vmem:[%s279 + $0xb4] sm:$0xf]
      %v3257 = vld [vmem:[%s279 + $0xb8] sm:$0xf]
      %v3258 = vld [vmem:[%s279 + $0xbc] sm:$0x1]
      %v3259 = vld [vmem:[%s279 + $0xc0] sm:$0xf]
      %v3260 = vld [vmem:[%s279 + $0xc4] sm:$0xf]
      %v3261 = vld [vmem:[%s279 + $0xc8] sm:$0x1]
      %v3262 = vld [vmem:[%s279 + $0xcc] sm:$0xf]
      %v3263 = vld [vmem:[%s279 + $0xd0] sm:$0xf]
      %v3264 = vld [vmem:[%s279 + $0xd4] sm:$0x1]
      %v3265 = vunpack.c.l.bf16 %v3211
      %v3266 = vunpack.c.l.bf16 %v3212
      %v3267 = vunpack.c.l.bf16 %v3213
      %v3268 = vunpack.c.l.bf16 %v3214
      %v3269 = vunpack.c.l.bf16 %v3215
      %v3270 = vunpack.c.l.bf16 %v3216
      %v3271 = vunpack.c.l.bf16 %v3217
      %v3272 = vunpack.c.l.bf16 %v3218
      %v3273 = vunpack.c.l.bf16 %v3219
      %v3274 = vunpack.c.l.bf16 %v3220
      %v3275 = vunpack.c.l.bf16 %v3221
      %v3276 = vunpack.c.l.bf16 %v3222
      %v3277 = vunpack.c.l.bf16 %v3223
      %v3278 = vunpack.c.l.bf16 %v3224
      %v3279 = vunpack.c.l.bf16 %v3225
      %v3280 = vunpack.c.l.bf16 %v3226
      %v3281 = vunpack.c.l.bf16 %v3227
      %v3282 = vunpack.c.l.bf16 %v3228
      %v3283 = vunpack.c.l.bf16 %v3229
      %v3284 = vunpack.c.l.bf16 %v3230
      %v3285 = vunpack.c.l.bf16 %v3231
      %v3286 = vunpack.c.l.bf16 %v3232
      %v3287 = vunpack.c.l.bf16 %v3233
      %v3288 = vunpack.c.l.bf16 %v3234
      %v3289 = vunpack.c.l.bf16 %v3235
      %v3290 = vunpack.c.l.bf16 %v3236
      %v3291 = vunpack.c.l.bf16 %v3237
      %v3292 = vunpack.c.l.bf16 %v3238
      %v3293 = vunpack.c.l.bf16 %v3239
      %v3294 = vunpack.c.l.bf16 %v3240
      %v3295 = vunpack.c.l.bf16 %v3241
      %v3296 = vunpack.c.l.bf16 %v3242
      %v3297 = vunpack.c.l.bf16 %v3243
      %v3298 = vunpack.c.l.bf16 %v3244
      %v3299 = vunpack.c.l.bf16 %v3245
      %v3300 = vunpack.c.l.bf16 %v3246
      %v3301 = vunpack.c.l.bf16 %v3247
      %v3302 = vunpack.c.l.bf16 %v3248
      %v3303 = vunpack.c.l.bf16 %v3249
      %v3304 = vunpack.c.l.bf16 %v3250
      %v3305 = vunpack.c.l.bf16 %v3251
      %v3306 = vunpack.c.l.bf16 %v3252
      %v3307 = vunpack.c.l.bf16 %v3253
      %v3308 = vunpack.c.l.bf16 %v3254
      %v3309 = vunpack.c.l.bf16 %v3255
      %v3310 = vunpack.c.l.bf16 %v3256
      %v3311 = vunpack.c.l.bf16 %v3257
      %v3312 = vunpack.c.l.bf16 %v3258
      %v3313 = vunpack.c.l.bf16 %v3259
      %v3314 = vunpack.c.l.bf16 %v3260
      %v3315 = vunpack.c.l.bf16 %v3261
      %v3316 = vunpack.c.l.bf16 %v3262
      %v3317 = vunpack.c.l.bf16 %v3263
      %v3318 = vunpack.c.l.bf16 %v3264
      %v3367 = vrot.slane %v3265, 1
      %v3368 = vrot.slane %v3266, 1
      %v3369 = vsel %vm459, %v3367, %v3368
      %v3370 = vrot.slane %v3267, 1
      %v3371 = vsel %vm459, %v3368, %v3370
      %v3372 = vrot.slane %v3268, 1
      %v3373 = vrot.slane %v3269, 1
      %v3374 = vsel %vm459, %v3372, %v3373
      %v3375 = vrot.slane %v3270, 1
      %v3376 = vsel %vm459, %v3373, %v3375
      %v3377 = vrot.slane %v3271, 1
      %v3378 = vrot.slane %v3272, 1
      %v3379 = vsel %vm459, %v3377, %v3378
      %v3380 = vrot.slane %v3273, 1
      %v3381 = vsel %vm459, %v3378, %v3380
      %v3382 = vrot.slane %v3274, 1
      %v3383 = vrot.slane %v3275, 1
      %v3384 = vsel %vm459, %v3382, %v3383
      %v3385 = vrot.slane %v3276, 1
      %v3386 = vsel %vm459, %v3383, %v3385
      %v3387 = vrot.slane %v3277, 1
      %v3388 = vrot.slane %v3278, 1
      %v3389 = vsel %vm459, %v3387, %v3388
      %v3390 = vrot.slane %v3279, 1
      %v3391 = vsel %vm459, %v3388, %v3390
      %v3392 = vrot.slane %v3280, 1
      %v3393 = vrot.slane %v3281, 1
      %v3394 = vsel %vm459, %v3392, %v3393
      %v3395 = vrot.slane %v3282, 1
      %v3396 = vsel %vm459, %v3393, %v3395
      %v3397 = vrot.slane %v3283, 1
      %v3398 = vrot.slane %v3284, 1
      %v3399 = vsel %vm459, %v3397, %v3398
      %v3400 = vrot.slane %v3285, 1
      %v3401 = vsel %vm459, %v3398, %v3400
      %v3402 = vrot.slane %v3286, 1
      %v3403 = vrot.slane %v3287, 1
      %v3404 = vsel %vm459, %v3402, %v3403
      %v3405 = vrot.slane %v3288, 1
      %v3406 = vsel %vm459, %v3403, %v3405
      %v3407 = vrot.slane %v3289, 1
      %v3408 = vrot.slane %v3290, 1
      %v3409 = vsel %vm459, %v3407, %v3408
      %v3410 = vrot.slane %v3291, 1
      %v3411 = vsel %vm459, %v3408, %v3410
      %v3412 = vrot.slane %v3292, 1
      %v3413 = vrot.slane %v3293, 1
      %v3414 = vsel %vm459, %v3412, %v3413
      %v3415 = vrot.slane %v3294, 1
      %v3416 = vsel %vm459, %v3413, %v3415
      %v3417 = vrot.slane %v3295, 1
      %v3418 = vrot.slane %v3296, 1
      %v3419 = vsel %vm459, %v3417, %v3418
      %v3420 = vrot.slane %v3297, 1
      %v3421 = vsel %vm459, %v3418, %v3420
      %v3422 = vrot.slane %v3298, 1
      %v3423 = vrot.slane %v3299, 1
      %v3424 = vsel %vm459, %v3422, %v3423
      %v3425 = vrot.slane %v3300, 1
      %v3426 = vsel %vm459, %v3423, %v3425
      %v3427 = vrot.slane %v3301, 1
      %v3428 = vrot.slane %v3302, 1
      %v3429 = vsel %vm459, %v3427, %v3428
      %v3430 = vrot.slane %v3303, 1
      %v3431 = vsel %vm459, %v3428, %v3430
      %v3432 = vrot.slane %v3304, 1
      %v3433 = vrot.slane %v3305, 1
      %v3434 = vsel %vm459, %v3432, %v3433
      %v3435 = vrot.slane %v3306, 1
      %v3436 = vsel %vm459, %v3433, %v3435
      %v3437 = vrot.slane %v3307, 1
      %v3438 = vrot.slane %v3308, 1
      %v3439 = vsel %vm459, %v3437, %v3438
      %v3440 = vrot.slane %v3309, 1
      %v3441 = vsel %vm459, %v3438, %v3440
      %v3442 = vrot.slane %v3310, 1
      %v3443 = vrot.slane %v3311, 1
      %v3444 = vsel %vm459, %v3442, %v3443
      %v3445 = vrot.slane %v3312, 1
      %v3446 = vsel %vm459, %v3443, %v3445
      %v3447 = vsel %vm540, %v3369, 0
      %v3449 = vsel %vm540, %v3371, 0
      %v3451 = vsel %vm540, %v3374, 0
      %v3453 = vsel %vm540, %v3376, 0
      %v3455 = vsel %vm540, %v3379, 0
      %v3457 = vsel %vm540, %v3381, 0
      %v3459 = vsel %vm540, %v3384, 0
      %v3461 = vsel %vm540, %v3386, 0
      %v3463 = vsel %vm540, %v3389, 0
      %v3465 = vsel %vm540, %v3391, 0
      %v3467 = vsel %vm540, %v3394, 0
      %v3469 = vsel %vm540, %v3396, 0
      %v3471 = vsel %vm540, %v3399, 0
      %v3473 = vsel %vm540, %v3401, 0
      %v3475 = vsel %vm540, %v3404, 0
      %v3477 = vsel %vm540, %v3406, 0
      %v3479 = vsel %vm540, %v3409, 0
      %v3481 = vsel %vm540, %v3411, 0
      %v3483 = vsel %vm540, %v3414, 0
      %v3485 = vsel %vm540, %v3416, 0
      %v3487 = vsel %vm540, %v3419, 0
      %v3489 = vsel %vm540, %v3421, 0
      %v3491 = vsel %vm540, %v3424, 0
      %v3493 = vsel %vm540, %v3426, 0
      %v3495 = vsel %vm540, %v3429, 0
      %v3497 = vsel %vm540, %v3431, 0
      %v3499 = vsel %vm540, %v3434, 0
      %v3501 = vsel %vm540, %v3436, 0
      %v3503 = vsel %vm540, %v3439, 0
      %v3505 = vsel %vm540, %v3441, 0
      %v3507 = vsel %vm540, %v3444, 0
      %v3509 = vsel %vm540, %v3446, 0
      %3511 = vmatprep.subr.mxu0 0.0
      %3512 = vmatpush1.msra.mxu0 %v607
      %3513 = vmatprep.subr.mxu0 0.0
      %3514 = vmatpush1.msra.mxu0 0.0
      %3515 = vmatprep.subr.mxu0 0.0
      %3516 = vmatpush1.msra.mxu0 0.0
      %3517 = vmatprep.subr.mxu0 0.0
      %3518 = vmatpush1.msra.mxu0 0.0
      %3519 = vmatprep.subr.mxu0 0.0
      %3520 = vmatpush1.msra.mxu0 0.0
      %3521 = vmatprep.subr.mxu0 0.0
      %3522 = vmatpush1.msra.mxu0 0.0
      %3523 = vmatprep.subr.mxu0 0.0
      %3524 = vmatpush1.msra.mxu0 0.0
      %3525 = vmatprep.subr.mxu0 0.0
      %3526 = vmatpush1.msra.mxu0 0.0
      %3527 = vmatprep.subr.mxu0 0.0
      %3528 = vmatpush1.msra.mxu0 0.0
      %3529 = vmatprep.subr.mxu0 0.0
      %3530 = vmatpush1.msra.mxu0 0.0
      %3531 = vmatprep.subr.mxu0 0.0
      %3532 = vmatpush1.msra.mxu0 0.0
      %3533 = vmatprep.subr.mxu0 0.0
      %3534 = vmatpush1.msra.mxu0 0.0
      %3535 = vmatprep.subr.mxu0 0.0
      %3536 = vmatpush1.msra.mxu0 0.0
      %3537 = vmatprep.subr.mxu0 0.0
      %3538 = vmatpush1.msra.mxu0 0.0
      %3539 = vmatprep.subr.mxu0 0.0
      %3540 = vmatpush1.msra.mxu0 0.0
      %3541 = vmatprep.subr.mxu0 0.0
      %3542 = vmatpush1.msra.mxu0 0.0
      %3543 = vmatprep.subr.mxu0 0.0
      %3544 = vmatpush1.msra.mxu0 0.0
      %3545 = vmatprep.subr.mxu0 0.0
      %3546 = vmatpush1.msra.mxu0 0.0
      %3547 = vmatprep.subr.mxu0 0.0
      %3548 = vmatpush1.msra.mxu0 0.0
      %3549 = vmatprep.subr.mxu0 0.0
      %3550 = vmatpush1.msra.mxu0 0.0
      %3551 = vmatprep.subr.mxu0 0.0
      %3552 = vmatpush1.msra.mxu0 0.0
      %3553 = vmatprep.subr.mxu0 0.0
      %3554 = vmatpush1.msra.mxu0 0.0
      %3555 = vmatprep.subr.mxu0 0.0
      %3556 = vmatpush1.msra.mxu0 0.0
      %3557 = vmatprep.subr.mxu0 0.0
      %3558 = vmatpush1.msra.mxu0 0.0
      %3559 = vmatprep.subr.mxu0 0.0
      %3560 = vmatpush1.msra.mxu0 0.0
      %3561 = vmatprep.subr.mxu0 0.0
      %3562 = vmatpush1.msra.mxu0 0.0
      %3563 = vmatprep.subr.mxu0 0.0
      %3564 = vmatpush1.msra.mxu0 0.0
      %3565 = vmatprep.subr.mxu0 0.0
      %3566 = vmatpush1.msra.mxu0 0.0
      %3567 = vmatprep.subr.mxu0 0.0
      %3568 = vmatpush1.msra.mxu0 0.0
      %3569 = vmatprep.subr.mxu0 0.0
      %3570 = vmatpush1.msra.mxu0 0.0
      %3571 = vmatprep.subr.mxu0 0.0
      %3572 = vmatpush1.msra.mxu0 0.0
      %3573 = vmatprep.subr.mxu0 0.0
      %3574 = vmatpush1.msra.mxu0 0.0
      %3575 = vmatprep.mubr.f32.mxu0 0.0
      %3576 = vmatmul.mubr.f32.gmra.mrb[0].mxu0 %v3447
      %v3577 = vpop.f32.mrb[0].mxu0
      %v3578 = vadd.f32 0.0, %v3577
      %v3579 = vpop.f32.mrb[0].mxu0
      %3580 = vmatprep.mubr.f32.mxu0 0.0
      %3581 = vmatmul.mubr.f32.gmra.mrb[0].mxu0 %v3449
      %v3582 = vpop.f32.mrb[0].mxu0
      %v3583 = vadd.f32 0.0, %v3582
      %v3584 = vpop.f32.mrb[0].mxu0
      %3585 = vmatprep.mubr.f32.mxu0 0.0
      %3586 = vmatmul.mubr.f32.gmra.mrb[0].mxu0 %v3451
      %v3587 = vpop.f32.mrb[0].mxu0
      %v3588 = vadd.f32 0.0, %v3587
      %v3589 = vpop.f32.mrb[0].mxu0
      %3590 = vmatprep.mubr.f32.mxu0 0.0
      %3591 = vmatmul.mubr.f32.gmra.mrb[0].mxu0 %v3453
      %v3592 = vpop.f32.mrb[0].mxu0
      %v3593 = vadd.f32 0.0, %v3592
      %v3594 = vpop.f32.mrb[0].mxu0
      %3595 = vmatprep.mubr.f32.mxu0 0.0
      %3596 = vmatmul.mubr.f32.gmra.mrb[0].mxu0 %v3455
      %v3597 = vpop.f32.mrb[0].mxu0
      %v3598 = vadd.f32 0.0, %v3597
      %v3599 = vpop.f32.mrb[0].mxu0
      %3600 = vmatprep.mubr.f32.mxu0 0.0
      %3601 = vmatmul.mubr.f32.gmra.mrb[0].mxu0 %v3457
      %v3602 = vpop.f32.mrb[0].mxu0
      %v3603 = vadd.f32 0.0, %v3602
      %v3604 = vpop.f32.mrb[0].mxu0
      %3605 = vmatprep.mubr.f32.mxu0 0.0
      %3606 = vmatmul.mubr.f32.gmra.mrb[0].mxu0 %v3459
      %v3607 = vpop.f32.mrb[0].mxu0
      %v3608 = vadd.f32 0.0, %v3607
      %v3609 = vpop.f32.mrb[0].mxu0
      %3610 = vmatprep.mubr.f32.mxu0 0.0
      %3611 = vmatmul.mubr.f32.gmra.mrb[0].mxu0 %v3461
      %v3612 = vpop.f32.mrb[0].mxu0
      %v3613 = vadd.f32 0.0, %v3612
      %v3614 = vpop.f32.mrb[0].mxu0
      %3615 = vmatprep.mubr.f32.mxu0 0.0
      %3616 = vmatmul.mubr.f32.gmra.mrb[0].mxu0 %v3463
      %v3617 = vpop.f32.mrb[0].mxu0
      %v3618 = vadd.f32 0.0, %v3617
      %v3619 = vpop.f32.mrb[0].mxu0
      %3620 = vmatprep.mubr.f32.mxu0 0.0
      %3621 = vmatmul.mubr.f32.gmra.mrb[0].mxu0 %v3465
      %v3622 = vpop.f32.mrb[0].mxu0
      %v3623 = vadd.f32 0.0, %v3622
      %v3624 = vpop.f32.mrb[0].mxu0
      %3625 = vmatprep.mubr.f32.mxu0 0.0
      %3626 = vmatmul.mubr.f32.gmra.mrb[0].mxu0 %v3467
      %v3627 = vpop.f32.mrb[0].mxu0
      %v3628 = vadd.f32 0.0, %v3627
      %v3629 = vpop.f32.mrb[0].mxu0
      %3630 = vmatprep.mubr.f32.mxu0 0.0
      %3631 = vmatmul.mubr.f32.gmra.mrb[0].mxu0 %v3469
      %v3632 = vpop.f32.mrb[0].mxu0
      %v3633 = vadd.f32 0.0, %v3632
      %v3634 = vpop.f32.mrb[0].mxu0
      %3635 = vmatprep.mubr.f32.mxu0 0.0
      %3636 = vmatmul.mubr.f32.gmra.mrb[0].mxu0 %v3471
      %v3637 = vpop.f32.mrb[0].mxu0
      %v3638 = vadd.f32 0.0, %v3637
      %v3639 = vpop.f32.mrb[0].mxu0
      %3640 = vmatprep.mubr.f32.mxu0 0.0
      %3641 = vmatmul.mubr.f32.gmra.mrb[0].mxu0 %v3473
      %v3642 = vpop.f32.mrb[0].mxu0
      %v3643 = vadd.f32 0.0, %v3642
      %v3644 = vpop.f32.mrb[0].mxu0
      %3645 = vmatprep.mubr.f32.mxu0 0.0
      %3646 = vmatmul.mubr.f32.gmra.mrb[0].mxu0 %v3475
      %v3647 = vpop.f32.mrb[0].mxu0
      %v3648 = vadd.f32 0.0, %v3647
      %v3649 = vpop.f32.mrb[0].mxu0
      %3650 = vmatprep.mubr.f32.mxu0 0.0
      %3651 = vmatmul.mubr.f32.gmra.mrb[0].mxu0 %v3477
      %v3652 = vpop.f32.mrb[0].mxu0
      %v3653 = vadd.f32 0.0, %v3652
      %v3654 = vpop.f32.mrb[0].mxu0
      %3655 = vmatprep.mubr.f32.mxu0 0.0
      %3656 = vmatmul.mubr.f32.gmra.mrb[0].mxu0 %v3479
      %v3657 = vpop.f32.mrb[0].mxu0
      %v3658 = vadd.f32 0.0, %v3657
      %v3659 = vpop.f32.mrb[0].mxu0
      %3660 = vmatprep.mubr.f32.mxu0 0.0
      %3661 = vmatmul.mubr.f32.gmra.mrb[0].mxu0 %v3481
      %v3662 = vpop.f32.mrb[0].mxu0
      %v3663 = vadd.f32 0.0, %v3662
      %v3664 = vpop.f32.mrb[0].mxu0
      %3665 = vmatprep.mubr.f32.mxu0 0.0
      %3666 = vmatmul.mubr.f32.gmra.mrb[0].mxu0 %v3483
      %v3667 = vpop.f32.mrb[0].mxu0
      %v3668 = vadd.f32 0.0, %v3667
      %v3669 = vpop.f32.mrb[0].mxu0
      %3670 = vmatprep.mubr.f32.mxu0 0.0
      %3671 = vmatmul.mubr.f32.gmra.mrb[0].mxu0 %v3485
      %v3672 = vpop.f32.mrb[0].mxu0
      %v3673 = vadd.f32 0.0, %v3672
      %v3674 = vpop.f32.mrb[0].mxu0
      %3675 = vmatprep.mubr.f32.mxu0 0.0
      %3676 = vmatmul.mubr.f32.gmra.mrb[0].mxu0 %v3487
      %v3677 = vpop.f32.mrb[0].mxu0
      %v3678 = vadd.f32 0.0, %v3677
      %v3679 = vpop.f32.mrb[0].mxu0
      %3680 = vmatprep.mubr.f32.mxu0 0.0
      %3681 = vmatmul.mubr.f32.gmra.mrb[0].mxu0 %v3489
      %v3682 = vpop.f32.mrb[0].mxu0
      %v3683 = vadd.f32 0.0, %v3682
      %v3684 = vpop.f32.mrb[0].mxu0
      %3685 = vmatprep.mubr.f32.mxu0 0.0
      %3686 = vmatmul.mubr.f32.gmra.mrb[0].mxu0 %v3491
      %v3687 = vpop.f32.mrb[0].mxu0
      %v3688 = vadd.f32 0.0, %v3687
      %v3689 = vpop.f32.mrb[0].mxu0
      %3690 = vmatprep.mubr.f32.mxu0 0.0
      %3691 = vmatmul.mubr.f32.gmra.mrb[0].mxu0 %v3493
      %v3692 = vpop.f32.mrb[0].mxu0
      %v3693 = vadd.f32 0.0, %v3692
      %v3694 = vpop.f32.mrb[0].mxu0
      %3695 = vmatprep.mubr.f32.mxu0 0.0
      %3696 = vmatmul.mubr.f32.gmra.mrb[0].mxu0 %v3495
      %v3697 = vpop.f32.mrb[0].mxu0
      %v3698 = vadd.f32 0.0, %v3697
      %v3699 = vpop.f32.mrb[0].mxu0
      %3700 = vmatprep.mubr.f32.mxu0 0.0
      %3701 = vmatmul.mubr.f32.gmra.mrb[0].mxu0 %v3497
      %v3702 = vpop.f32.mrb[0].mxu0
      %v3703 = vadd.f32 0.0, %v3702
      %v3704 = vpop.f32.mrb[0].mxu0
      %3705 = vmatprep.mubr.f32.mxu0 0.0
      %3706 = vmatmul.mubr.f32.gmra.mrb[0].mxu0 %v3499
      %v3707 = vpop.f32.mrb[0].mxu0
      %v3708 = vadd.f32 0.0, %v3707
      %v3709 = vpop.f32.mrb[0].mxu0
      %3710 = vmatprep.mubr.f32.mxu0 0.0
      %3711 = vmatmul.mubr.f32.gmra.mrb[0].mxu0 %v3501
      %v3712 = vpop.f32.mrb[0].mxu0
      %v3713 = vadd.f32 0.0, %v3712
      %v3714 = vpop.f32.mrb[0].mxu0
      %3715 = vmatprep.mubr.f32.mxu0 0.0
      %3716 = vmatmul.mubr.f32.gmra.mrb[0].mxu0 %v3503
      %v3717 = vpop.f32.mrb[0].mxu0
      %v3718 = vadd.f32 0.0, %v3717
      %v3719 = vpop.f32.mrb[0].mxu0
      %3720 = vmatprep.mubr.f32.mxu0 0.0
      %3721 = vmatmul.mubr.f32.gmra.mrb[0].mxu0 %v3505
      %v3722 = vpop.f32.mrb[0].mxu0
      %v3723 = vadd.f32 0.0, %v3722
      %v3724 = vpop.f32.mrb[0].mxu0
      %3725 = vmatprep.mubr.f32.mxu0 0.0
      %3726 = vmatmul.mubr.f32.gmra.mrb[0].mxu0 %v3507
      %v3727 = vpop.f32.mrb[0].mxu0
      %v3728 = vadd.f32 0.0, %v3727
      %v3729 = vpop.f32.mrb[0].mxu0
      %3730 = vmatprep.mubr.f32.mxu0 0.0
      %3731 = vmatmul.mubr.f32.gmra.mrb[0].mxu0 %v3509
      %v3732 = vpop.f32.mrb[0].mxu0
      %v3733 = vadd.f32 0.0, %v3732
      %v3734 = vpop.f32.mrb[0].mxu0
      %3735 = vdwg.mxu0
      %v3736 = vsel %vm540, %v3265, 0
      %v3738 = vsel %vm540, %v3266, 0
      %v3740 = vsel %vm540, %v3268, 0
      %v3742 = vsel %vm540, %v3269, 0
      %v3744 = vsel %vm540, %v3271, 0
      %v3746 = vsel %vm540, %v3272, 0
      %v3748 = vsel %vm540, %v3274, 0
      %v3750 = vsel %vm540, %v3275, 0
      %v3752 = vsel %vm540, %v3277, 0
      %v3754 = vsel %vm540, %v3278, 0
      %v3756 = vsel %vm540, %v3280, 0
      %v3758 = vsel %vm540, %v3281, 0
      %v3760 = vsel %vm540, %v3283, 0
      %v3762 = vsel %vm540, %v3284, 0
      %v3764 = vsel %vm540, %v3286, 0
      %v3766 = vsel %vm540, %v3287, 0
      %v3768 = vsel %vm540, %v3289, 0
      %v3770 = vsel %vm540, %v3290, 0
      %v3772 = vsel %vm540, %v3292, 0
      %v3774 = vsel %vm540, %v3293, 0
      %v3776 = vsel %vm540, %v3295, 0
      %v3778 = vsel %vm540, %v3296, 0
      %v3780 = vsel %vm540, %v3298, 0
      %v3782 = vsel %vm540, %v3299, 0
      %v3784 = vsel %vm540, %v3301, 0
      %v3786 = vsel %vm540, %v3302, 0
      %v3788 = vsel %vm540, %v3304, 0
      %v3790 = vsel %vm540, %v3305, 0
      %v3792 = vsel %vm540, %v3307, 0
      %v3794 = vsel %vm540, %v3308, 0
      %v3796 = vsel %vm540, %v3310, 0
      %v3798 = vsel %vm540, %v3311, 0
      %3800 = vmatprep.subr.mxu0 0.0
      %3801 = vmatpush1.msra.mxu0 %v899
      %3802 = vmatprep.subr.mxu0 0.0
      %3803 = vmatpush1.msra.mxu0 0.0
      %3804 = vmatprep.subr.mxu0 0.0
      %3805 = vmatpush1.msra.mxu0 0.0
      %3806 = vmatprep.subr.mxu0 0.0
      %3807 = vmatpush1.msra.mxu0 0.0
      %3808 = vmatprep.subr.mxu0 0.0
      %3809 = vmatpush1.msra.mxu0 0.0
      %3810 = vmatprep.subr.mxu0 0.0
      %3811 = vmatpush1.msra.mxu0 0.0
      %3812 = vmatprep.subr.mxu0 0.0
      %3813 = vmatpush1.msra.mxu0 0.0
      %3814 = vmatprep.subr.mxu0 0.0
      %3815 = vmatpush1.msra.mxu0 0.0
      %3816 = vmatprep.subr.mxu0 0.0
      %3817 = vmatpush1.msra.mxu0 0.0
      %3818 = vmatprep.subr.mxu0 0.0
      %3819 = vmatpush1.msra.mxu0 0.0
      %3820 = vmatprep.subr.mxu0 0.0
      %3821 = vmatpush1.msra.mxu0 0.0
      %3822 = vmatprep.subr.mxu0 0.0
      %3823 = vmatpush1.msra.mxu0 0.0
      %3824 = vmatprep.subr.mxu0 0.0
      %3825 = vmatpush1.msra.mxu0 0.0
      %3826 = vmatprep.subr.mxu0 0.0
      %3827 = vmatpush1.msra.mxu0 0.0
      %3828 = vmatprep.subr.mxu0 0.0
      %3829 = vmatpush1.msra.mxu0 0.0
      %3830 = vmatprep.subr.mxu0 0.0
      %3831 = vmatpush1.msra.mxu0 0.0
      %3832 = vmatprep.subr.mxu0 0.0
      %3833 = vmatpush1.msra.mxu0 0.0
      %3834 = vmatprep.subr.mxu0 0.0
      %3835 = vmatpush1.msra.mxu0 0.0
      %3836 = vmatprep.subr.mxu0 0.0
      %3837 = vmatpush1.msra.mxu0 0.0
      %3838 = vmatprep.subr.mxu0 0.0
      %3839 = vmatpush1.msra.mxu0 0.0
      %3840 = vmatprep.subr.mxu0 0.0
      %3841 = vmatpush1.msra.mxu0 0.0
      %3842 = vmatprep.subr.mxu0 0.0
      %3843 = vmatpush1.msra.mxu0 0.0
      %3844 = vmatprep.subr.mxu0 0.0
      %3845 = vmatpush1.msra.mxu0 0.0
      %3846 = vmatprep.subr.mxu0 0.0
      %3847 = vmatpush1.msra.mxu0 0.0
      %3848 = vmatprep.subr.mxu0 0.0
      %3849 = vmatpush1.msra.mxu0 0.0
      %3850 = vmatprep.subr.mxu0 0.0
      %3851 = vmatpush1.msra.mxu0 0.0
      %3852 = vmatprep.subr.mxu0 0.0
      %3853 = vmatpush1.msra.mxu0 0.0
      %3854 = vmatprep.subr.mxu0 0.0
      %3855 = vmatpush1.msra.mxu0 0.0
      %3856 = vmatprep.subr.mxu0 0.0
      %3857 = vmatpush1.msra.mxu0 0.0
      %3858 = vmatprep.subr.mxu0 0.0
      %3859 = vmatpush1.msra.mxu0 0.0
      %3860 = vmatprep.subr.mxu0 0.0
      %3861 = vmatpush1.msra.mxu0 0.0
      %3862 = vmatprep.subr.mxu0 0.0
      %3863 = vmatpush1.msra.mxu0 0.0
      %3864 = vmatprep.mubr.f32.mxu0 0.0
      %3865 = vmatmul.mubr.f32.gmra.mrb[0].mxu0 %v3736
      %v3866 = vpop.f32.mrb[0].mxu0
      %v3867 = vadd.f32 %v3578, %v3866
      %v3868 = vpop.f32.mrb[0].mxu0
      %3869 = vmatprep.mubr.f32.mxu0 0.0
      %3870 = vmatmul.mubr.f32.gmra.mrb[0].mxu0 %v3738
      %v3871 = vpop.f32.mrb[0].mxu0
      %v3872 = vadd.f32 %v3583, %v3871
      %v3873 = vpop.f32.mrb[0].mxu0
      %3874 = vmatprep.mubr.f32.mxu0 0.0
      %3875 = vmatmul.mubr.f32.gmra.mrb[0].mxu0 %v3740
      %v3876 = vpop.f32.mrb[0].mxu0
      %v3877 = vadd.f32 %v3588, %v3876
      %v3878 = vpop.f32.mrb[0].mxu0
      %3879 = vmatprep.mubr.f32.mxu0 0.0
      %3880 = vmatmul.mubr.f32.gmra.mrb[0].mxu0 %v3742
      %v3881 = vpop.f32.mrb[0].mxu0
      %v3882 = vadd.f32 %v3593, %v3881
      %v3883 = vpop.f32.mrb[0].mxu0
      %3884 = vmatprep.mubr.f32.mxu0 0.0
      %3885 = vmatmul.mubr.f32.gmra.mrb[0].mxu0 %v3744
      %v3886 = vpop.f32.mrb[0].mxu0
      %v3887 = vadd.f32 %v3598, %v3886
      %v3888 = vpop.f32.mrb[0].mxu0
      %3889 = vmatprep.mubr.f32.mxu0 0.0
      %3890 = vmatmul.mubr.f32.gmra.mrb[0].mxu0 %v3746
      %v3891 = vpop.f32.mrb[0].mxu0
      %v3892 = vadd.f32 %v3603, %v3891
      %v3893 = vpop.f32.mrb[0].mxu0
      %3894 = vmatprep.mubr.f32.mxu0 0.0
      %3895 = vmatmul.mubr.f32.gmra.mrb[0].mxu0 %v3748
      %v3896 = vpop.f32.mrb[0].mxu0
      %v3897 = vadd.f32 %v3608, %v3896
      %v3898 = vpop.f32.mrb[0].mxu0
      %3899 = vmatprep.mubr.f32.mxu0 0.0
      %3900 = vmatmul.mubr.f32.gmra.mrb[0].mxu0 %v3750
      %v3901 = vpop.f32.mrb[0].mxu0
      %v3902 = vadd.f32 %v3613, %v3901
      %v3903 = vpop.f32.mrb[0].mxu0
      %3904 = vmatprep.mubr.f32.mxu0 0.0
      %3905 = vmatmul.mubr.f32.gmra.mrb[0].mxu0 %v3752
      %v3906 = vpop.f32.mrb[0].mxu0
      %v3907 = vadd.f32 %v3618, %v3906
      %v3908 = vpop.f32.mrb[0].mxu0
      %3909 = vmatprep.mubr.f32.mxu0 0.0
      %3910 = vmatmul.mubr.f32.gmra.mrb[0].mxu0 %v3754
      %v3911 = vpop.f32.mrb[0].mxu0
      %v3912 = vadd.f32 %v3623, %v3911
      %v3913 = vpop.f32.mrb[0].mxu0
      %3914 = vmatprep.mubr.f32.mxu0 0.0
      %3915 = vmatmul.mubr.f32.gmra.mrb[0].mxu0 %v3756
      %v3916 = vpop.f32.mrb[0].mxu0
      %v3917 = vadd.f32 %v3628, %v3916
      %v3918 = vpop.f32.mrb[0].mxu0
      %3919 = vmatprep.mubr.f32.mxu0 0.0
      %3920 = vmatmul.mubr.f32.gmra.mrb[0].mxu0 %v3758
      %v3921 = vpop.f32.mrb[0].mxu0
      %v3922 = vadd.f32 %v3633, %v3921
      %v3923 = vpop.f32.mrb[0].mxu0
      %3924 = vmatprep.mubr.f32.mxu0 0.0
      %3925 = vmatmul.mubr.f32.gmra.mrb[0].mxu0 %v3760
      %v3926 = vpop.f32.mrb[0].mxu0
      %v3927 = vadd.f32 %v3638, %v3926
      %v3928 = vpop.f32.mrb[0].mxu0
      %3929 = vmatprep.mubr.f32.mxu0 0.0
      %3930 = vmatmul.mubr.f32.gmra.mrb[0].mxu0 %v3762
      %v3931 = vpop.f32.mrb[0].mxu0
      %v3932 = vadd.f32 %v3643, %v3931
      %v3933 = vpop.f32.mrb[0].mxu0
      %3934 = vmatprep.mubr.f32.mxu0 0.0
      %3935 = vmatmul.mubr.f32.gmra.mrb[0].mxu0 %v3764
      %v3936 = vpop.f32.mrb[0].mxu0
      %v3937 = vadd.f32 %v3648, %v3936
      %v3938 = vpop.f32.mrb[0].mxu0
      %3939 = vmatprep.mubr.f32.mxu0 0.0
      %3940 = vmatmul.mubr.f32.gmra.mrb[0].mxu0 %v3766
      %v3941 = vpop.f32.mrb[0].mxu0
      %v3942 = vadd.f32 %v3653, %v3941
      %v3943 = vpop.f32.mrb[0].mxu0
      %3944 = vmatprep.mubr.f32.mxu0 0.0
      %3945 = vmatmul.mubr.f32.gmra.mrb[0].mxu0 %v3768
      %v3946 = vpop.f32.mrb[0].mxu0
      %v3947 = vadd.f32 %v3658, %v3946
      %v3948 = vpop.f32.mrb[0].mxu0
      %3949 = vmatprep.mubr.f32.mxu0 0.0
      %3950 = vmatmul.mubr.f32.gmra.mrb[0].mxu0 %v3770
      %v3951 = vpop.f32.mrb[0].mxu0
      %v3952 = vadd.f32 %v3663, %v3951
      %v3953 = vpop.f32.mrb[0].mxu0
      %3954 = vmatprep.mubr.f32.mxu0 0.0
      %3955 = vmatmul.mubr.f32.gmra.mrb[0].mxu0 %v3772
      %v3956 = vpop.f32.mrb[0].mxu0
      %v3957 = vadd.f32 %v3668, %v3956
      %v3958 = vpop.f32.mrb[0].mxu0
      %3959 = vmatprep.mubr.f32.mxu0 0.0
      %3960 = vmatmul.mubr.f32.gmra.mrb[0].mxu0 %v3774
      %v3961 = vpop.f32.mrb[0].mxu0
      %v3962 = vadd.f32 %v3673, %v3961
      %v3963 = vpop.f32.mrb[0].mxu0
      %3964 = vmatprep.mubr.f32.mxu0 0.0
      %3965 = vmatmul.mubr.f32.gmra.mrb[0].mxu0 %v3776
      %v3966 = vpop.f32.mrb[0].mxu0
      %v3967 = vadd.f32 %v3678, %v3966
      %v3968 = vpop.f32.mrb[0].mxu0
      %3969 = vmatprep.mubr.f32.mxu0 0.0
      %3970 = vmatmul.mubr.f32.gmra.mrb[0].mxu0 %v3778
      %v3971 = vpop.f32.mrb[0].mxu0
      %v3972 = vadd.f32 %v3683, %v3971
      %v3973 = vpop.f32.mrb[0].mxu0
      %3974 = vmatprep.mubr.f32.mxu0 0.0
      %3975 = vmatmul.mubr.f32.gmra.mrb[0].mxu0 %v3780
      %v3976 = vpop.f32.mrb[0].mxu0
      %v3977 = vadd.f32 %v3688, %v3976
      %v3978 = vpop.f32.mrb[0].mxu0
      %3979 = vmatprep.mubr.f32.mxu0 0.0
      %3980 = vmatmul.mubr.f32.gmra.mrb[0].mxu0 %v3782
      %v3981 = vpop.f32.mrb[0].mxu0
      %v3982 = vadd.f32 %v3693, %v3981
      %v3983 = vpop.f32.mrb[0].mxu0
      %3984 = vmatprep.mubr.f32.mxu0 0.0
      %3985 = vmatmul.mubr.f32.gmra.mrb[0].mxu0 %v3784
      %v3986 = vpop.f32.mrb[0].mxu0
      %v3987 = vadd.f32 %v3698, %v3986
      %v3988 = vpop.f32.mrb[0].mxu0
      %3989 = vmatprep.mubr.f32.mxu0 0.0
      %3990 = vmatmul.mubr.f32.gmra.mrb[0].mxu0 %v3786
      %v3991 = vpop.f32.mrb[0].mxu0
      %v3992 = vadd.f32 %v3703, %v3991
      %v3993 = vpop.f32.mrb[0].mxu0
      %3994 = vmatprep.mubr.f32.mxu0 0.0
      %3995 = vmatmul.mubr.f32.gmra.mrb[0].mxu0 %v3788
      %v3996 = vpop.f32.mrb[0].mxu0
      %v3997 = vadd.f32 %v3708, %v3996
      %v3998 = vpop.f32.mrb[0].mxu0
      %3999 = vmatprep.mubr.f32.mxu0 0.0
      %4000 = vmatmul.mubr.f32.gmra.mrb[0].mxu0 %v3790
      %v4001 = vpop.f32.mrb[0].mxu0
      %v4002 = vadd.f32 %v3713, %v4001
      %v4003 = vpop.f32.mrb[0].mxu0
      %4004 = vmatprep.mubr.f32.mxu0 0.0
      %4005 = vmatmul.mubr.f32.gmra.mrb[0].mxu0 %v3792
      %v4006 = vpop.f32.mrb[0].mxu0
      %v4007 = vadd.f32 %v3718, %v4006
      %v4008 = vpop.f32.mrb[0].mxu0
      %4009 = vmatprep.mubr.f32.mxu0 0.0
      %4010 = vmatmul.mubr.f32.gmra.mrb[0].mxu0 %v3794
      %v4011 = vpop.f32.mrb[0].mxu0
      %v4012 = vadd.f32 %v3723, %v4011
      %v4013 = vpop.f32.mrb[0].mxu0
      %4014 = vmatprep.mubr.f32.mxu0 0.0
      %4015 = vmatmul.mubr.f32.gmra.mrb[0].mxu0 %v3796
      %v4016 = vpop.f32.mrb[0].mxu0
      %v4017 = vadd.f32 %v3728, %v4016
      %v4018 = vpop.f32.mrb[0].mxu0
      %4019 = vmatprep.mubr.f32.mxu0 0.0
      %4020 = vmatmul.mubr.f32.gmra.mrb[0].mxu0 %v3798
      %v4021 = vpop.f32.mrb[0].mxu0
      %v4022 = vadd.f32 %v3733, %v4021
      %v4023 = vpop.f32.mrb[0].mxu0
      %4024 = vdwg.mxu0
      %v4025 = vrot.slane %v3265, 2
      %v4026 = vrot.slane %v3266, 2
      %v4027 = vsel %vm1126, %v4025, %v4026
      %v4028 = vrot.slane %v3267, 2
      %v4029 = vsel %vm1126, %v4026, %v4028
      %v4030 = vrot.slane %v3268, 2
      %v4031 = vrot.slane %v3269, 2
      %v4032 = vsel %vm1126, %v4030, %v4031
      %v4033 = vrot.slane %v3270, 2
      %v4034 = vsel %vm1126, %v4031, %v4033
      %v4035 = vrot.slane %v3271, 2
      %v4036 = vrot.slane %v3272, 2
      %v4037 = vsel %vm1126, %v4035, %v4036
      %v4038 = vrot.slane %v3273, 2
      %v4039 = vsel %vm1126, %v4036, %v4038
      %v4040 = vrot.slane %v3274, 2
      %v4041 = vrot.slane %v3275, 2
      %v4042 = vsel %vm1126, %v4040, %v4041
      %v4043 = vrot.slane %v3276, 2
      %v4044 = vsel %vm1126, %v4041, %v4043
      %v4045 = vrot.slane %v3277, 2
      %v4046 = vrot.slane %v3278, 2
      %v4047 = vsel %vm1126, %v4045, %v4046
      %v4048 = vrot.slane %v3279, 2
      %v4049 = vsel %vm1126, %v4046, %v4048
      %v4050 = vrot.slane %v3280, 2
      %v4051 = vrot.slane %v3281, 2
      %v4052 = vsel %vm1126, %v4050, %v4051
      %v4053 = vrot.slane %v3282, 2
      %v4054 = vsel %vm1126, %v4051, %v4053
      %v4055 = vrot.slane %v3283, 2
      %v4056 = vrot.slane %v3284, 2
      %v4057 = vsel %vm1126, %v4055, %v4056
      %v4058 = vrot.slane %v3285, 2
      %v4059 = vsel %vm1126, %v4056, %v4058
      %v4060 = vrot.slane %v3286, 2
      %v4061 = vrot.slane %v3287, 2
      %v4062 = vsel %vm1126, %v4060, %v4061
      %v4063 = vrot.slane %v3288, 2
      %v4064 = vsel %vm1126, %v4061, %v4063
      %v4065 = vrot.slane %v3289, 2
      %v4066 = vrot.slane %v3290, 2
      %v4067 = vsel %vm1126, %v4065, %v4066
      %v4068 = vrot.slane %v3291, 2
      %v4069 = vsel %vm1126, %v4066, %v4068
      %v4070 = vrot.slane %v3292, 2
      %v4071 = vrot.slane %v3293, 2
      %v4072 = vsel %vm1126, %v4070, %v4071
      %v4073 = vrot.slane %v3294, 2
      %v4074 = vsel %vm1126, %v4071, %v4073
      %v4075 = vrot.slane %v3295, 2
      %v4076 = vrot.slane %v3296, 2
      %v4077 = vsel %vm1126, %v4075, %v4076
      %v4078 = vrot.slane %v3297, 2
      %v4079 = vsel %vm1126, %v4076, %v4078
      %v4080 = vrot.slane %v3298, 2
      %v4081 = vrot.slane %v3299, 2
      %v4082 = vsel %vm1126, %v4080, %v4081
      %v4083 = vrot.slane %v3300, 2
      %v4084 = vsel %vm1126, %v4081, %v4083
      %v4085 = vrot.slane %v3301, 2
      %v4086 = vrot.slane %v3302, 2
      %v4087 = vsel %vm1126, %v4085, %v4086
      %v4088 = vrot.slane %v3303, 2
      %v4089 = vsel %vm1126, %v4086, %v4088
      %v4090 = vrot.slane %v3304, 2
      %v4091 = vrot.slane %v3305, 2
      %v4092 = vsel %vm1126, %v4090, %v4091
      %v4093 = vrot.slane %v3306, 2
      %v4094 = vsel %vm1126, %v4091, %v4093
      %v4095 = vrot.slane %v3307, 2
      %v4096 = vrot.slane %v3308, 2
      %v4097 = vsel %vm1126, %v4095, %v4096
      %v4098 = vrot.slane %v3309, 2
      %v4099 = vsel %vm1126, %v4096, %v4098
      %v4100 = vrot.slane %v3310, 2
      %v4101 = vrot.slane %v3311, 2
      %v4102 = vsel %vm1126, %v4100, %v4101
      %v4103 = vrot.slane %v3312, 2
      %v4104 = vsel %vm1126, %v4101, %v4103
      %v4105 = vsel %vm540, %v4027, 0
      %v4107 = vsel %vm540, %v4029, 0
      %v4109 = vsel %vm540, %v4032, 0
      %v4111 = vsel %vm540, %v4034, 0
      %v4113 = vsel %vm540, %v4037, 0
      %v4115 = vsel %vm540, %v4039, 0
      %v4117 = vsel %vm540, %v4042, 0
      %v4119 = vsel %vm540, %v4044, 0
      %v4121 = vsel %vm540, %v4047, 0
      %v4123 = vsel %vm540, %v4049, 0
      %v4125 = vsel %vm540, %v4052, 0
      %v4127 = vsel %vm540, %v4054, 0
      %v4129 = vsel %vm540, %v4057, 0
      %v4131 = vsel %vm540, %v4059, 0
      %v4133 = vsel %vm540, %v4062, 0
      %v4135 = vsel %vm540, %v4064, 0
      %v4137 = vsel %vm540, %v4067, 0
      %v4139 = vsel %vm540, %v4069, 0
      %v4141 = vsel %vm540, %v4072, 0
      %v4143 = vsel %vm540, %v4074, 0
      %v4145 = vsel %vm540, %v4077, 0
      %v4147 = vsel %vm540, %v4079, 0
      %v4149 = vsel %vm540, %v4082, 0
      %v4151 = vsel %vm540, %v4084, 0
      %v4153 = vsel %vm540, %v4087, 0
      %v4155 = vsel %vm540, %v4089, 0
      %v4157 = vsel %vm540, %v4092, 0
      %v4159 = vsel %vm540, %v4094, 0
      %v4161 = vsel %vm540, %v4097, 0
      %v4163 = vsel %vm540, %v4099, 0
      %v4165 = vsel %vm540, %v4102, 0
      %v4167 = vsel %vm540, %v4104, 0
      %4169 = vmatprep.subr.mxu0 0.0
      %4170 = vmatpush1.msra.mxu0 %v1272
      %4171 = vmatprep.subr.mxu0 0.0
      %4172 = vmatpush1.msra.mxu0 0.0
      %4173 = vmatprep.subr.mxu0 0.0
      %4174 = vmatpush1.msra.mxu0 0.0
      %4175 = vmatprep.subr.mxu0 0.0
      %4176 = vmatpush1.msra.mxu0 0.0
      %4177 = vmatprep.subr.mxu0 0.0
      %4178 = vmatpush1.msra.mxu0 0.0
      %4179 = vmatprep.subr.mxu0 0.0
      %4180 = vmatpush1.msra.mxu0 0.0
      %4181 = vmatprep.subr.mxu0 0.0
      %4182 = vmatpush1.msra.mxu0 0.0
      %4183 = vmatprep.subr.mxu0 0.0
      %4184 = vmatpush1.msra.mxu0 0.0
      %4185 = vmatprep.subr.mxu0 0.0
      %4186 = vmatpush1.msra.mxu0 0.0
      %4187 = vmatprep.subr.mxu0 0.0
      %4188 = vmatpush1.msra.mxu0 0.0
      %4189 = vmatprep.subr.mxu0 0.0
      %4190 = vmatpush1.msra.mxu0 0.0
      %4191 = vmatprep.subr.mxu0 0.0
      %4192 = vmatpush1.msra.mxu0 0.0
      %4193 = vmatprep.subr.mxu0 0.0
      %4194 = vmatpush1.msra.mxu0 0.0
      %4195 = vmatprep.subr.mxu0 0.0
      %4196 = vmatpush1.msra.mxu0 0.0
      %4197 = vmatprep.subr.mxu0 0.0
      %4198 = vmatpush1.msra.mxu0 0.0
      %4199 = vmatprep.subr.mxu0 0.0
      %4200 = vmatpush1.msra.mxu0 0.0
      %4201 = vmatprep.subr.mxu0 0.0
      %4202 = vmatpush1.msra.mxu0 0.0
      %4203 = vmatprep.subr.mxu0 0.0
      %4204 = vmatpush1.msra.mxu0 0.0
      %4205 = vmatprep.subr.mxu0 0.0
      %4206 = vmatpush1.msra.mxu0 0.0
      %4207 = vmatprep.subr.mxu0 0.0
      %4208 = vmatpush1.msra.mxu0 0.0
      %4209 = vmatprep.subr.mxu0 0.0
      %4210 = vmatpush1.msra.mxu0 0.0
      %4211 = vmatprep.subr.mxu0 0.0
      %4212 = vmatpush1.msra.mxu0 0.0
      %4213 = vmatprep.subr.mxu0 0.0
      %4214 = vmatpush1.msra.mxu0 0.0
      %4215 = vmatprep.subr.mxu0 0.0
      %4216 = vmatpush1.msra.mxu0 0.0
      %4217 = vmatprep.subr.mxu0 0.0
      %4218 = vmatpush1.msra.mxu0 0.0
      %4219 = vmatprep.subr.mxu0 0.0
      %4220 = vmatpush1.msra.mxu0 0.0
      %4221 = vmatprep.subr.mxu0 0.0
      %4222 = vmatpush1.msra.mxu0 0.0
      %4223 = vmatprep.subr.mxu0 0.0
      %4224 = vmatpush1.msra.mxu0 0.0
      %4225 = vmatprep.subr.mxu0 0.0
      %4226 = vmatpush1.msra.mxu0 0.0
      %4227 = vmatprep.subr.mxu0 0.0
      %4228 = vmatpush1.msra.mxu0 0.0
      %4229 = vmatprep.subr.mxu0 0.0
      %4230 = vmatpush1.msra.mxu0 0.0
      %4231 = vmatprep.subr.mxu0 0.0
      %4232 = vmatpush1.msra.mxu0 0.0
      %4233 = vmatprep.mubr.f32.mxu0 0.0
      %4234 = vmatmul.mubr.f32.gmra.mrb[0].mxu0 %v4105
      %v4235 = vpop.f32.mrb[0].mxu0
      %v4236 = vadd.f32 0.0, %v4235
      %v4237 = vpop.f32.mrb[0].mxu0
      %4238 = vmatprep.mubr.f32.mxu0 0.0
      %4239 = vmatmul.mubr.f32.gmra.mrb[0].mxu0 %v4107
      %v4240 = vpop.f32.mrb[0].mxu0
      %v4241 = vadd.f32 0.0, %v4240
      %v4242 = vpop.f32.mrb[0].mxu0
      %4243 = vmatprep.mubr.f32.mxu0 0.0
      %4244 = vmatmul.mubr.f32.gmra.mrb[0].mxu0 %v4109
      %v4245 = vpop.f32.mrb[0].mxu0
      %v4246 = vadd.f32 0.0, %v4245
      %v4247 = vpop.f32.mrb[0].mxu0
      %4248 = vmatprep.mubr.f32.mxu0 0.0
      %4249 = vmatmul.mubr.f32.gmra.mrb[0].mxu0 %v4111
      %v4250 = vpop.f32.mrb[0].mxu0
      %v4251 = vadd.f32 0.0, %v4250
      %v4252 = vpop.f32.mrb[0].mxu0
      %4253 = vmatprep.mubr.f32.mxu0 0.0
      %4254 = vmatmul.mubr.f32.gmra.mrb[0].mxu0 %v4113
      %v4255 = vpop.f32.mrb[0].mxu0
      %v4256 = vadd.f32 0.0, %v4255
      %v4257 = vpop.f32.mrb[0].mxu0
      %4258 = vmatprep.mubr.f32.mxu0 0.0
      %4259 = vmatmul.mubr.f32.gmra.mrb[0].mxu0 %v4115
      %v4260 = vpop.f32.mrb[0].mxu0
      %v4261 = vadd.f32 0.0, %v4260
      %v4262 = vpop.f32.mrb[0].mxu0
      %4263 = vmatprep.mubr.f32.mxu0 0.0
      %4264 = vmatmul.mubr.f32.gmra.mrb[0].mxu0 %v4117
      %v4265 = vpop.f32.mrb[0].mxu0
      %v4266 = vadd.f32 0.0, %v4265
      %v4267 = vpop.f32.mrb[0].mxu0
      %4268 = vmatprep.mubr.f32.mxu0 0.0
      %4269 = vmatmul.mubr.f32.gmra.mrb[0].mxu0 %v4119
      %v4270 = vpop.f32.mrb[0].mxu0
      %v4271 = vadd.f32 0.0, %v4270
      %v4272 = vpop.f32.mrb[0].mxu0
      %4273 = vmatprep.mubr.f32.mxu0 0.0
      %4274 = vmatmul.mubr.f32.gmra.mrb[0].mxu0 %v4121
      %v4275 = vpop.f32.mrb[0].mxu0
      %v4276 = vadd.f32 0.0, %v4275
      %v4277 = vpop.f32.mrb[0].mxu0
      %4278 = vmatprep.mubr.f32.mxu0 0.0
      %4279 = vmatmul.mubr.f32.gmra.mrb[0].mxu0 %v4123
      %v4280 = vpop.f32.mrb[0].mxu0
      %v4281 = vadd.f32 0.0, %v4280
      %v4282 = vpop.f32.mrb[0].mxu0
      %4283 = vmatprep.mubr.f32.mxu0 0.0
      %4284 = vmatmul.mubr.f32.gmra.mrb[0].mxu0 %v4125
      %v4285 = vpop.f32.mrb[0].mxu0
      %v4286 = vadd.f32 0.0, %v4285
      %v4287 = vpop.f32.mrb[0].mxu0
      %4288 = vmatprep.mubr.f32.mxu0 0.0
      %4289 = vmatmul.mubr.f32.gmra.mrb[0].mxu0 %v4127
      %v4290 = vpop.f32.mrb[0].mxu0
      %v4291 = vadd.f32 0.0, %v4290
      %v4292 = vpop.f32.mrb[0].mxu0
      %4293 = vmatprep.mubr.f32.mxu0 0.0
      %4294 = vmatmul.mubr.f32.gmra.mrb[0].mxu0 %v4129
      %v4295 = vpop.f32.mrb[0].mxu0
      %v4296 = vadd.f32 0.0, %v4295
      %v4297 = vpop.f32.mrb[0].mxu0
      %4298 = vmatprep.mubr.f32.mxu0 0.0
      %4299 = vmatmul.mubr.f32.gmra.mrb[0].mxu0 %v4131
      %v4300 = vpop.f32.mrb[0].mxu0
      %v4301 = vadd.f32 0.0, %v4300
      %v4302 = vpop.f32.mrb[0].mxu0
      %4303 = vmatprep.mubr.f32.mxu0 0.0
      %4304 = vmatmul.mubr.f32.gmra.mrb[0].mxu0 %v4133
      %v4305 = vpop.f32.mrb[0].mxu0
      %v4306 = vadd.f32 0.0, %v4305
      %v4307 = vpop.f32.mrb[0].mxu0
      %4308 = vmatprep.mubr.f32.mxu0 0.0
      %4309 = vmatmul.mubr.f32.gmra.mrb[0].mxu0 %v4135
      %v4310 = vpop.f32.mrb[0].mxu0
      %v4311 = vadd.f32 0.0, %v4310
      %v4312 = vpop.f32.mrb[0].mxu0
      %4313 = vmatprep.mubr.f32.mxu0 0.0
      %4314 = vmatmul.mubr.f32.gmra.mrb[0].mxu0 %v4137
      %v4315 = vpop.f32.mrb[0].mxu0
      %v4316 = vadd.f32 0.0, %v4315
      %v4317 = vpop.f32.mrb[0].mxu0
      %4318 = vmatprep.mubr.f32.mxu0 0.0
      %4319 = vmatmul.mubr.f32.gmra.mrb[0].mxu0 %v4139
      %v4320 = vpop.f32.mrb[0].mxu0
      %v4321 = vadd.f32 0.0, %v4320
      %v4322 = vpop.f32.mrb[0].mxu0
      %4323 = vmatprep.mubr.f32.mxu0 0.0
      %4324 = vmatmul.mubr.f32.gmra.mrb[0].mxu0 %v4141
      %v4325 = vpop.f32.mrb[0].mxu0
      %v4326 = vadd.f32 0.0, %v4325
      %v4327 = vpop.f32.mrb[0].mxu0
      %4328 = vmatprep.mubr.f32.mxu0 0.0
      %4329 = vmatmul.mubr.f32.gmra.mrb[0].mxu0 %v4143
      %v4330 = vpop.f32.mrb[0].mxu0
      %v4331 = vadd.f32 0.0, %v4330
      %v4332 = vpop.f32.mrb[0].mxu0
      %4333 = vmatprep.mubr.f32.mxu0 0.0
      %4334 = vmatmul.mubr.f32.gmra.mrb[0].mxu0 %v4145
      %v4335 = vpop.f32.mrb[0].mxu0
      %v4336 = vadd.f32 0.0, %v4335
      %v4337 = vpop.f32.mrb[0].mxu0
      %4338 = vmatprep.mubr.f32.mxu0 0.0
      %4339 = vmatmul.mubr.f32.gmra.mrb[0].mxu0 %v4147
      %v4340 = vpop.f32.mrb[0].mxu0
      %v4341 = vadd.f32 0.0, %v4340
      %v4342 = vpop.f32.mrb[0].mxu0
      %4343 = vmatprep.mubr.f32.mxu0 0.0
      %4344 = vmatmul.mubr.f32.gmra.mrb[0].mxu0 %v4149
      %v4345 = vpop.f32.mrb[0].mxu0
      %v4346 = vadd.f32 0.0, %v4345
      %v4347 = vpop.f32.mrb[0].mxu0
      %4348 = vmatprep.mubr.f32.mxu0 0.0
      %4349 = vmatmul.mubr.f32.gmra.mrb[0].mxu0 %v4151
      %v4350 = vpop.f32.mrb[0].mxu0
      %v4351 = vadd.f32 0.0, %v4350
      %v4352 = vpop.f32.mrb[0].mxu0
      %4353 = vmatprep.mubr.f32.mxu0 0.0
      %4354 = vmatmul.mubr.f32.gmra.mrb[0].mxu0 %v4153
      %v4355 = vpop.f32.mrb[0].mxu0
      %v4356 = vadd.f32 0.0, %v4355
      %v4357 = vpop.f32.mrb[0].mxu0
      %4358 = vmatprep.mubr.f32.mxu0 0.0
      %4359 = vmatmul.mubr.f32.gmra.mrb[0].mxu0 %v4155
      %v4360 = vpop.f32.mrb[0].mxu0
      %v4361 = vadd.f32 0.0, %v4360
      %v4362 = vpop.f32.mrb[0].mxu0
      %4363 = vmatprep.mubr.f32.mxu0 0.0
      %4364 = vmatmul.mubr.f32.gmra.mrb[0].mxu0 %v4157
      %v4365 = vpop.f32.mrb[0].mxu0
      %v4366 = vadd.f32 0.0, %v4365
      %v4367 = vpop.f32.mrb[0].mxu0
      %4368 = vmatprep.mubr.f32.mxu0 0.0
      %4369 = vmatmul.mubr.f32.gmra.mrb[0].mxu0 %v4159
      %v4370 = vpop.f32.mrb[0].mxu0
      %v4371 = vadd.f32 0.0, %v4370
      %v4372 = vpop.f32.mrb[0].mxu0
      %4373 = vmatprep.mubr.f32.mxu0 0.0
      %4374 = vmatmul.mubr.f32.gmra.mrb[0].mxu0 %v4161
      %v4375 = vpop.f32.mrb[0].mxu0
      %v4376 = vadd.f32 0.0, %v4375
      %v4377 = vpop.f32.mrb[0].mxu0
      %4378 = vmatprep.mubr.f32.mxu0 0.0
      %4379 = vmatmul.mubr.f32.gmra.mrb[0].mxu0 %v4163
      %v4380 = vpop.f32.mrb[0].mxu0
      %v4381 = vadd.f32 0.0, %v4380
      %v4382 = vpop.f32.mrb[0].mxu0
      %4383 = vmatprep.mubr.f32.mxu0 0.0
      %4384 = vmatmul.mubr.f32.gmra.mrb[0].mxu0 %v4165
      %v4385 = vpop.f32.mrb[0].mxu0
      %v4386 = vadd.f32 0.0, %v4385
      %v4387 = vpop.f32.mrb[0].mxu0
      %4388 = vmatprep.mubr.f32.mxu0 0.0
      %4389 = vmatmul.mubr.f32.gmra.mrb[0].mxu0 %v4167
      %v4390 = vpop.f32.mrb[0].mxu0
      %v4391 = vadd.f32 0.0, %v4390
      %v4392 = vpop.f32.mrb[0].mxu0
      %4393 = vdwg.mxu0
      %v4394 = vadd.f32 %v3867, %v4236
      %v4395 = vadd.f32 %v3872, %v4241
      %v4396 = vadd.f32 %v3877, %v4246
      %v4397 = vadd.f32 %v3882, %v4251
      %v4398 = vadd.f32 %v3887, %v4256
      %v4399 = vadd.f32 %v3892, %v4261
      %v4400 = vadd.f32 %v3897, %v4266
      %v4401 = vadd.f32 %v3902, %v4271
      %v4402 = vadd.f32 %v3907, %v4276
      %v4403 = vadd.f32 %v3912, %v4281
      %v4404 = vadd.f32 %v3917, %v4286
      %v4405 = vadd.f32 %v3922, %v4291
      %v4406 = vadd.f32 %v3927, %v4296
      %v4407 = vadd.f32 %v3932, %v4301
      %v4408 = vadd.f32 %v3937, %v4306
      %v4409 = vadd.f32 %v3942, %v4311
      %v4410 = vadd.f32 %v3947, %v4316
      %v4411 = vadd.f32 %v3952, %v4321
      %v4412 = vadd.f32 %v3957, %v4326
      %v4413 = vadd.f32 %v3962, %v4331
      %v4414 = vadd.f32 %v3967, %v4336
      %v4415 = vadd.f32 %v3972, %v4341
      %v4416 = vadd.f32 %v3977, %v4346
      %v4417 = vadd.f32 %v3982, %v4351
      %v4418 = vadd.f32 %v3987, %v4356
      %v4419 = vadd.f32 %v3992, %v4361
      %v4420 = vadd.f32 %v3997, %v4366
      %v4421 = vadd.f32 %v4002, %v4371
      %v4422 = vadd.f32 %v4007, %v4376
      %v4423 = vadd.f32 %v4012, %v4381
      %v4424 = vadd.f32 %v4017, %v4386
      %v4425 = vadd.f32 %v4022, %v4391
      %v4427 = vsel %vm540, %v3313, 0
      %v4430 = vsel %vm540, %v3314, 0
      %4432 = vmatprep.subr.mxu0 0.0
      %4433 = vmatpush1.msra.mxu0 %v1538
      %4434 = vmatprep.subr.mxu0 0.0
      %4435 = vmatpush1.msra.mxu0 0.0
      %4436 = vmatprep.subr.mxu0 0.0
      %4437 = vmatpush1.msra.mxu0 0.0
      %4438 = vmatprep.subr.mxu0 0.0
      %4439 = vmatpush1.msra.mxu0 0.0
      %4440 = vmatprep.subr.mxu0 0.0
      %4441 = vmatpush1.msra.mxu0 0.0
      %4442 = vmatprep.subr.mxu0 0.0
      %4443 = vmatpush1.msra.mxu0 0.0
      %4444 = vmatprep.subr.mxu0 0.0
      %4445 = vmatpush1.msra.mxu0 0.0
      %4446 = vmatprep.subr.mxu0 0.0
      %4447 = vmatpush1.msra.mxu0 0.0
      %4448 = vmatprep.subr.mxu0 0.0
      %4449 = vmatpush1.msra.mxu0 0.0
      %4450 = vmatprep.subr.mxu0 0.0
      %4451 = vmatpush1.msra.mxu0 0.0
      %4452 = vmatprep.subr.mxu0 0.0
      %4453 = vmatpush1.msra.mxu0 0.0
      %4454 = vmatprep.subr.mxu0 0.0
      %4455 = vmatpush1.msra.mxu0 0.0
      %4456 = vmatprep.subr.mxu0 0.0
      %4457 = vmatpush1.msra.mxu0 0.0
      %4458 = vmatprep.subr.mxu0 0.0
      %4459 = vmatpush1.msra.mxu0 0.0
      %4460 = vmatprep.subr.mxu0 0.0
      %4461 = vmatpush1.msra.mxu0 0.0
      %4462 = vmatprep.subr.mxu0 0.0
      %4463 = vmatpush1.msra.mxu0 0.0
      %4464 = vmatprep.subr.mxu0 0.0
      %4465 = vmatpush1.msra.mxu0 0.0
      %4466 = vmatprep.subr.mxu0 0.0
      %4467 = vmatpush1.msra.mxu0 0.0
      %4468 = vmatprep.subr.mxu0 0.0
      %4469 = vmatpush1.msra.mxu0 0.0
      %4470 = vmatprep.subr.mxu0 0.0
      %4471 = vmatpush1.msra.mxu0 0.0
      %4472 = vmatprep.subr.mxu0 0.0
      %4473 = vmatpush1.msra.mxu0 0.0
      %4474 = vmatprep.subr.mxu0 0.0
      %4475 = vmatpush1.msra.mxu0 0.0
      %4476 = vmatprep.subr.mxu0 0.0
      %4477 = vmatpush1.msra.mxu0 0.0
      %4478 = vmatprep.subr.mxu0 0.0
      %4479 = vmatpush1.msra.mxu0 0.0
      %4480 = vmatprep.subr.mxu0 0.0
      %4481 = vmatpush1.msra.mxu0 0.0
      %4482 = vmatprep.subr.mxu0 0.0
      %4483 = vmatpush1.msra.mxu0 0.0
      %4484 = vmatprep.subr.mxu0 0.0
      %4485 = vmatpush1.msra.mxu0 0.0
      %4486 = vmatprep.subr.mxu0 0.0
      %4487 = vmatpush1.msra.mxu0 0.0
      %4488 = vmatprep.subr.mxu0 0.0
      %4489 = vmatpush1.msra.mxu0 0.0
      %4490 = vmatprep.subr.mxu0 0.0
      %4491 = vmatpush1.msra.mxu0 0.0
      %4492 = vmatprep.subr.mxu0 0.0
      %4493 = vmatpush1.msra.mxu0 0.0
      %4494 = vmatprep.subr.mxu0 0.0
      %4495 = vmatpush1.msra.mxu0 0.0
      %4496 = vmatprep.mubr.f32.mxu0 0.0
      %4497 = vmatmul.mubr.f32.gmra.mrb[0].mxu0 %v3740
      %v4498 = vpop.f32.mrb[0].mxu0
      %v4499 = vadd.f32 0.0, %v4498
      %v4500 = vpop.f32.mrb[0].mxu0
      %4501 = vmatprep.mubr.f32.mxu0 0.0
      %4502 = vmatmul.mubr.f32.gmra.mrb[0].mxu0 %v3742
      %v4503 = vpop.f32.mrb[0].mxu0
      %v4504 = vadd.f32 0.0, %v4503
      %v4505 = vpop.f32.mrb[0].mxu0
      %4506 = vmatprep.mubr.f32.mxu0 0.0
      %4507 = vmatmul.mubr.f32.gmra.mrb[0].mxu0 %v3744
      %v4508 = vpop.f32.mrb[0].mxu0
      %v4509 = vadd.f32 0.0, %v4508
      %v4510 = vpop.f32.mrb[0].mxu0
      %4511 = vmatprep.mubr.f32.mxu0 0.0
      %4512 = vmatmul.mubr.f32.gmra.mrb[0].mxu0 %v3746
      %v4513 = vpop.f32.mrb[0].mxu0
      %v4514 = vadd.f32 0.0, %v4513
      %v4515 = vpop.f32.mrb[0].mxu0
      %4516 = vmatprep.mubr.f32.mxu0 0.0
      %4517 = vmatmul.mubr.f32.gmra.mrb[0].mxu0 %v3748
      %v4518 = vpop.f32.mrb[0].mxu0
      %v4519 = vadd.f32 0.0, %v4518
      %v4520 = vpop.f32.mrb[0].mxu0
      %4521 = vmatprep.mubr.f32.mxu0 0.0
      %4522 = vmatmul.mubr.f32.gmra.mrb[0].mxu0 %v3750
      %v4523 = vpop.f32.mrb[0].mxu0
      %v4524 = vadd.f32 0.0, %v4523
      %v4525 = vpop.f32.mrb[0].mxu0
      %4526 = vmatprep.mubr.f32.mxu0 0.0
      %4527 = vmatmul.mubr.f32.gmra.mrb[0].mxu0 %v3752
      %v4528 = vpop.f32.mrb[0].mxu0
      %v4529 = vadd.f32 0.0, %v4528
      %v4530 = vpop.f32.mrb[0].mxu0
      %4531 = vmatprep.mubr.f32.mxu0 0.0
      %4532 = vmatmul.mubr.f32.gmra.mrb[0].mxu0 %v3754
      %v4533 = vpop.f32.mrb[0].mxu0
      %v4534 = vadd.f32 0.0, %v4533
      %v4535 = vpop.f32.mrb[0].mxu0
      %4536 = vmatprep.mubr.f32.mxu0 0.0
      %4537 = vmatmul.mubr.f32.gmra.mrb[0].mxu0 %v3756
      %v4538 = vpop.f32.mrb[0].mxu0
      %v4539 = vadd.f32 0.0, %v4538
      %v4540 = vpop.f32.mrb[0].mxu0
      %4541 = vmatprep.mubr.f32.mxu0 0.0
      %4542 = vmatmul.mubr.f32.gmra.mrb[0].mxu0 %v3758
      %v4543 = vpop.f32.mrb[0].mxu0
      %v4544 = vadd.f32 0.0, %v4543
      %v4545 = vpop.f32.mrb[0].mxu0
      %4546 = vmatprep.mubr.f32.mxu0 0.0
      %4547 = vmatmul.mubr.f32.gmra.mrb[0].mxu0 %v3760
      %v4548 = vpop.f32.mrb[0].mxu0
      %v4549 = vadd.f32 0.0, %v4548
      %v4550 = vpop.f32.mrb[0].mxu0
      %4551 = vmatprep.mubr.f32.mxu0 0.0
      %4552 = vmatmul.mubr.f32.gmra.mrb[0].mxu0 %v3762
      %v4553 = vpop.f32.mrb[0].mxu0
      %v4554 = vadd.f32 0.0, %v4553
      %v4555 = vpop.f32.mrb[0].mxu0
      %4556 = vmatprep.mubr.f32.mxu0 0.0
      %4557 = vmatmul.mubr.f32.gmra.mrb[0].mxu0 %v3764
      %v4558 = vpop.f32.mrb[0].mxu0
      %v4559 = vadd.f32 0.0, %v4558
      %v4560 = vpop.f32.mrb[0].mxu0
      %4561 = vmatprep.mubr.f32.mxu0 0.0
      %4562 = vmatmul.mubr.f32.gmra.mrb[0].mxu0 %v3766
      %v4563 = vpop.f32.mrb[0].mxu0
      %v4564 = vadd.f32 0.0, %v4563
      %v4565 = vpop.f32.mrb[0].mxu0
      %4566 = vmatprep.mubr.f32.mxu0 0.0
      %4567 = vmatmul.mubr.f32.gmra.mrb[0].mxu0 %v3768
      %v4568 = vpop.f32.mrb[0].mxu0
      %v4569 = vadd.f32 0.0, %v4568
      %v4570 = vpop.f32.mrb[0].mxu0
      %4571 = vmatprep.mubr.f32.mxu0 0.0
      %4572 = vmatmul.mubr.f32.gmra.mrb[0].mxu0 %v3770
      %v4573 = vpop.f32.mrb[0].mxu0
      %v4574 = vadd.f32 0.0, %v4573
      %v4575 = vpop.f32.mrb[0].mxu0
      %4576 = vmatprep.mubr.f32.mxu0 0.0
      %4577 = vmatmul.mubr.f32.gmra.mrb[0].mxu0 %v3772
      %v4578 = vpop.f32.mrb[0].mxu0
      %v4579 = vadd.f32 0.0, %v4578
      %v4580 = vpop.f32.mrb[0].mxu0
      %4581 = vmatprep.mubr.f32.mxu0 0.0
      %4582 = vmatmul.mubr.f32.gmra.mrb[0].mxu0 %v3774
      %v4583 = vpop.f32.mrb[0].mxu0
      %v4584 = vadd.f32 0.0, %v4583
      %v4585 = vpop.f32.mrb[0].mxu0
      %4586 = vmatprep.mubr.f32.mxu0 0.0
      %4587 = vmatmul.mubr.f32.gmra.mrb[0].mxu0 %v3776
      %v4588 = vpop.f32.mrb[0].mxu0
      %v4589 = vadd.f32 0.0, %v4588
      %v4590 = vpop.f32.mrb[0].mxu0
      %4591 = vmatprep.mubr.f32.mxu0 0.0
      %4592 = vmatmul.mubr.f32.gmra.mrb[0].mxu0 %v3778
      %v4593 = vpop.f32.mrb[0].mxu0
      %v4594 = vadd.f32 0.0, %v4593
      %v4595 = vpop.f32.mrb[0].mxu0
      %4596 = vmatprep.mubr.f32.mxu0 0.0
      %4597 = vmatmul.mubr.f32.gmra.mrb[0].mxu0 %v3780
      %v4598 = vpop.f32.mrb[0].mxu0
      %v4599 = vadd.f32 0.0, %v4598
      %v4600 = vpop.f32.mrb[0].mxu0
      %4601 = vmatprep.mubr.f32.mxu0 0.0
      %4602 = vmatmul.mubr.f32.gmra.mrb[0].mxu0 %v3782
      %v4603 = vpop.f32.mrb[0].mxu0
      %v4604 = vadd.f32 0.0, %v4603
      %v4605 = vpop.f32.mrb[0].mxu0
      %4606 = vmatprep.mubr.f32.mxu0 0.0
      %4607 = vmatmul.mubr.f32.gmra.mrb[0].mxu0 %v3784
      %v4608 = vpop.f32.mrb[0].mxu0
      %v4609 = vadd.f32 0.0, %v4608
      %v4610 = vpop.f32.mrb[0].mxu0
      %4611 = vmatprep.mubr.f32.mxu0 0.0
      %4612 = vmatmul.mubr.f32.gmra.mrb[0].mxu0 %v3786
      %v4613 = vpop.f32.mrb[0].mxu0
      %v4614 = vadd.f32 0.0, %v4613
      %v4615 = vpop.f32.mrb[0].mxu0
      %4616 = vmatprep.mubr.f32.mxu0 0.0
      %4617 = vmatmul.mubr.f32.gmra.mrb[0].mxu0 %v3788
      %v4618 = vpop.f32.mrb[0].mxu0
      %v4619 = vadd.f32 0.0, %v4618
      %v4620 = vpop.f32.mrb[0].mxu0
      %4621 = vmatprep.mubr.f32.mxu0 0.0
      %4622 = vmatmul.mubr.f32.gmra.mrb[0].mxu0 %v3790
      %v4623 = vpop.f32.mrb[0].mxu0
      %v4624 = vadd.f32 0.0, %v4623
      %v4625 = vpop.f32.mrb[0].mxu0
      %4626 = vmatprep.mubr.f32.mxu0 0.0
      %4627 = vmatmul.mubr.f32.gmra.mrb[0].mxu0 %v3792
      %v4628 = vpop.f32.mrb[0].mxu0
      %v4629 = vadd.f32 0.0, %v4628
      %v4630 = vpop.f32.mrb[0].mxu0
      %4631 = vmatprep.mubr.f32.mxu0 0.0
      %4632 = vmatmul.mubr.f32.gmra.mrb[0].mxu0 %v3794
      %v4633 = vpop.f32.mrb[0].mxu0
      %v4634 = vadd.f32 0.0, %v4633
      %v4635 = vpop.f32.mrb[0].mxu0
      %4636 = vmatprep.mubr.f32.mxu0 0.0
      %4637 = vmatmul.mubr.f32.gmra.mrb[0].mxu0 %v3796
      %v4638 = vpop.f32.mrb[0].mxu0
      %v4639 = vadd.f32 0.0, %v4638
      %v4640 = vpop.f32.mrb[0].mxu0
      %4641 = vmatprep.mubr.f32.mxu0 0.0
      %4642 = vmatmul.mubr.f32.gmra.mrb[0].mxu0 %v3798
      %v4643 = vpop.f32.mrb[0].mxu0
      %v4644 = vadd.f32 0.0, %v4643
      %v4645 = vpop.f32.mrb[0].mxu0
      %4646 = vmatprep.mubr.f32.mxu0 0.0
      %4647 = vmatmul.mubr.f32.gmra.mrb[0].mxu0 %v4427
      %v4648 = vpop.f32.mrb[0].mxu0
      %v4649 = vadd.f32 0.0, %v4648
      %v4650 = vpop.f32.mrb[0].mxu0
      %4651 = vmatprep.mubr.f32.mxu0 0.0
      %4652 = vmatmul.mubr.f32.gmra.mrb[0].mxu0 %v4430
      %v4653 = vpop.f32.mrb[0].mxu0
      %v4654 = vadd.f32 0.0, %v4653
      %v4655 = vpop.f32.mrb[0].mxu0
      %4656 = vdwg.mxu0
      %v4657 = vadd.f32 %v4394, %v4499
      %v4658 = vadd.f32 %v4395, %v4504
      %v4659 = vadd.f32 %v4396, %v4509
      %v4660 = vadd.f32 %v4397, %v4514
      %v4661 = vadd.f32 %v4398, %v4519
      %v4662 = vadd.f32 %v4399, %v4524
      %v4663 = vadd.f32 %v4400, %v4529
      %v4664 = vadd.f32 %v4401, %v4534
      %v4665 = vadd.f32 %v4402, %v4539
      %v4666 = vadd.f32 %v4403, %v4544
      %v4667 = vadd.f32 %v4404, %v4549
      %v4668 = vadd.f32 %v4405, %v4554
      %v4669 = vadd.f32 %v4406, %v4559
      %v4670 = vadd.f32 %v4407, %v4564
      %v4671 = vadd.f32 %v4408, %v4569
      %v4672 = vadd.f32 %v4409, %v4574
      %v4673 = vadd.f32 %v4410, %v4579
      %v4674 = vadd.f32 %v4411, %v4584
      %v4675 = vadd.f32 %v4412, %v4589
      %v4676 = vadd.f32 %v4413, %v4594
      %v4677 = vadd.f32 %v4414, %v4599
      %v4678 = vadd.f32 %v4415, %v4604
      %v4679 = vadd.f32 %v4416, %v4609
      %v4680 = vadd.f32 %v4417, %v4614
      %v4681 = vadd.f32 %v4418, %v4619
      %v4682 = vadd.f32 %v4419, %v4624
      %v4683 = vadd.f32 %v4420, %v4629
      %v4684 = vadd.f32 %v4421, %v4634
      %v4685 = vadd.f32 %v4422, %v4639
      %v4686 = vadd.f32 %v4423, %v4644
      %v4687 = vadd.f32 %v4424, %v4649
      %v4688 = vadd.f32 %v4425, %v4654
      %v4690 = vrot.slane %v3313, 1
      %v4691 = vrot.slane %v3314, 1
      %v4692 = vsel %vm459, %v4690, %v4691
      %v4693 = vrot.slane %v3315, 1
      %v4694 = vsel %vm459, %v4691, %v4693
      %v4695 = vsel %vm540, %v4692, 0
      %v4697 = vsel %vm540, %v4694, 0
      %4699 = vmatprep.subr.mxu0 0.0
      %4700 = vmatpush1.msra.mxu0 %v1808
      %4701 = vmatprep.subr.mxu0 0.0
      %4702 = vmatpush1.msra.mxu0 0.0
      %4703 = vmatprep.subr.mxu0 0.0
      %4704 = vmatpush1.msra.mxu0 0.0
      %4705 = vmatprep.subr.mxu0 0.0
      %4706 = vmatpush1.msra.mxu0 0.0
      %4707 = vmatprep.subr.mxu0 0.0
      %4708 = vmatpush1.msra.mxu0 0.0
      %4709 = vmatprep.subr.mxu0 0.0
      %4710 = vmatpush1.msra.mxu0 0.0
      %4711 = vmatprep.subr.mxu0 0.0
      %4712 = vmatpush1.msra.mxu0 0.0
      %4713 = vmatprep.subr.mxu0 0.0
      %4714 = vmatpush1.msra.mxu0 0.0
      %4715 = vmatprep.subr.mxu0 0.0
      %4716 = vmatpush1.msra.mxu0 0.0
      %4717 = vmatprep.subr.mxu0 0.0
      %4718 = vmatpush1.msra.mxu0 0.0
      %4719 = vmatprep.subr.mxu0 0.0
      %4720 = vmatpush1.msra.mxu0 0.0
      %4721 = vmatprep.subr.mxu0 0.0
      %4722 = vmatpush1.msra.mxu0 0.0
      %4723 = vmatprep.subr.mxu0 0.0
      %4724 = vmatpush1.msra.mxu0 0.0
      %4725 = vmatprep.subr.mxu0 0.0
      %4726 = vmatpush1.msra.mxu0 0.0
      %4727 = vmatprep.subr.mxu0 0.0
      %4728 = vmatpush1.msra.mxu0 0.0
      %4729 = vmatprep.subr.mxu0 0.0
      %4730 = vmatpush1.msra.mxu0 0.0
      %4731 = vmatprep.subr.mxu0 0.0
      %4732 = vmatpush1.msra.mxu0 0.0
      %4733 = vmatprep.subr.mxu0 0.0
      %4734 = vmatpush1.msra.mxu0 0.0
      %4735 = vmatprep.subr.mxu0 0.0
      %4736 = vmatpush1.msra.mxu0 0.0
      %4737 = vmatprep.subr.mxu0 0.0
      %4738 = vmatpush1.msra.mxu0 0.0
      %4739 = vmatprep.subr.mxu0 0.0
      %4740 = vmatpush1.msra.mxu0 0.0
      %4741 = vmatprep.subr.mxu0 0.0
      %4742 = vmatpush1.msra.mxu0 0.0
      %4743 = vmatprep.subr.mxu0 0.0
      %4744 = vmatpush1.msra.mxu0 0.0
      %4745 = vmatprep.subr.mxu0 0.0
      %4746 = vmatpush1.msra.mxu0 0.0
      %4747 = vmatprep.subr.mxu0 0.0
      %4748 = vmatpush1.msra.mxu0 0.0
      %4749 = vmatprep.subr.mxu0 0.0
      %4750 = vmatpush1.msra.mxu0 0.0
      %4751 = vmatprep.subr.mxu0 0.0
      %4752 = vmatpush1.msra.mxu0 0.0
      %4753 = vmatprep.subr.mxu0 0.0
      %4754 = vmatpush1.msra.mxu0 0.0
      %4755 = vmatprep.subr.mxu0 0.0
      %4756 = vmatpush1.msra.mxu0 0.0
      %4757 = vmatprep.subr.mxu0 0.0
      %4758 = vmatpush1.msra.mxu0 0.0
      %4759 = vmatprep.subr.mxu0 0.0
      %4760 = vmatpush1.msra.mxu0 0.0
      %4761 = vmatprep.subr.mxu0 0.0
      %4762 = vmatpush1.msra.mxu0 0.0
      %4763 = vmatprep.mubr.f32.mxu0 0.0
      %4764 = vmatmul.mubr.f32.gmra.mrb[0].mxu0 %v3451
      %v4765 = vpop.f32.mrb[0].mxu0
      %v4766 = vadd.f32 0.0, %v4765
      %v4767 = vpop.f32.mrb[0].mxu0
      %4768 = vmatprep.mubr.f32.mxu0 0.0
      %4769 = vmatmul.mubr.f32.gmra.mrb[0].mxu0 %v3453
      %v4770 = vpop.f32.mrb[0].mxu0
      %v4771 = vadd.f32 0.0, %v4770
      %v4772 = vpop.f32.mrb[0].mxu0
      %4773 = vmatprep.mubr.f32.mxu0 0.0
      %4774 = vmatmul.mubr.f32.gmra.mrb[0].mxu0 %v3455
      %v4775 = vpop.f32.mrb[0].mxu0
      %v4776 = vadd.f32 0.0, %v4775
      %v4777 = vpop.f32.mrb[0].mxu0
      %4778 = vmatprep.mubr.f32.mxu0 0.0
      %4779 = vmatmul.mubr.f32.gmra.mrb[0].mxu0 %v3457
      %v4780 = vpop.f32.mrb[0].mxu0
      %v4781 = vadd.f32 0.0, %v4780
      %v4782 = vpop.f32.mrb[0].mxu0
      %4783 = vmatprep.mubr.f32.mxu0 0.0
      %4784 = vmatmul.mubr.f32.gmra.mrb[0].mxu0 %v3459
      %v4785 = vpop.f32.mrb[0].mxu0
      %v4786 = vadd.f32 0.0, %v4785
      %v4787 = vpop.f32.mrb[0].mxu0
      %4788 = vmatprep.mubr.f32.mxu0 0.0
      %4789 = vmatmul.mubr.f32.gmra.mrb[0].mxu0 %v3461
      %v4790 = vpop.f32.mrb[0].mxu0
      %v4791 = vadd.f32 0.0, %v4790
      %v4792 = vpop.f32.mrb[0].mxu0
      %4793 = vmatprep.mubr.f32.mxu0 0.0
      %4794 = vmatmul.mubr.f32.gmra.mrb[0].mxu0 %v3463
      %v4795 = vpop.f32.mrb[0].mxu0
      %v4796 = vadd.f32 0.0, %v4795
      %v4797 = vpop.f32.mrb[0].mxu0
      %4798 = vmatprep.mubr.f32.mxu0 0.0
      %4799 = vmatmul.mubr.f32.gmra.mrb[0].mxu0 %v3465
      %v4800 = vpop.f32.mrb[0].mxu0
      %v4801 = vadd.f32 0.0, %v4800
      %v4802 = vpop.f32.mrb[0].mxu0
      %4803 = vmatprep.mubr.f32.mxu0 0.0
      %4804 = vmatmul.mubr.f32.gmra.mrb[0].mxu0 %v3467
      %v4805 = vpop.f32.mrb[0].mxu0
      %v4806 = vadd.f32 0.0, %v4805
      %v4807 = vpop.f32.mrb[0].mxu0
      %4808 = vmatprep.mubr.f32.mxu0 0.0
      %4809 = vmatmul.mubr.f32.gmra.mrb[0].mxu0 %v3469
      %v4810 = vpop.f32.mrb[0].mxu0
      %v4811 = vadd.f32 0.0, %v4810
      %v4812 = vpop.f32.mrb[0].mxu0
      %4813 = vmatprep.mubr.f32.mxu0 0.0
      %4814 = vmatmul.mubr.f32.gmra.mrb[0].mxu0 %v3471
      %v4815 = vpop.f32.mrb[0].mxu0
      %v4816 = vadd.f32 0.0, %v4815
      %v4817 = vpop.f32.mrb[0].mxu0
      %4818 = vmatprep.mubr.f32.mxu0 0.0
      %4819 = vmatmul.mubr.f32.gmra.mrb[0].mxu0 %v3473
      %v4820 = vpop.f32.mrb[0].mxu0
      %v4821 = vadd.f32 0.0, %v4820
      %v4822 = vpop.f32.mrb[0].mxu0
      %4823 = vmatprep.mubr.f32.mxu0 0.0
      %4824 = vmatmul.mubr.f32.gmra.mrb[0].mxu0 %v3475
      %v4825 = vpop.f32.mrb[0].mxu0
      %v4826 = vadd.f32 0.0, %v4825
      %v4827 = vpop.f32.mrb[0].mxu0
      %4828 = vmatprep.mubr.f32.mxu0 0.0
      %4829 = vmatmul.mubr.f32.gmra.mrb[0].mxu0 %v3477
      %v4830 = vpop.f32.mrb[0].mxu0
      %v4831 = vadd.f32 0.0, %v4830
      %v4832 = vpop.f32.mrb[0].mxu0
      %4833 = vmatprep.mubr.f32.mxu0 0.0
      %4834 = vmatmul.mubr.f32.gmra.mrb[0].mxu0 %v3479
      %v4835 = vpop.f32.mrb[0].mxu0
      %v4836 = vadd.f32 0.0, %v4835
      %v4837 = vpop.f32.mrb[0].mxu0
      %4838 = vmatprep.mubr.f32.mxu0 0.0
      %4839 = vmatmul.mubr.f32.gmra.mrb[0].mxu0 %v3481
      %v4840 = vpop.f32.mrb[0].mxu0
      %v4841 = vadd.f32 0.0, %v4840
      %v4842 = vpop.f32.mrb[0].mxu0
      %4843 = vmatprep.mubr.f32.mxu0 0.0
      %4844 = vmatmul.mubr.f32.gmra.mrb[0].mxu0 %v3483
      %v4845 = vpop.f32.mrb[0].mxu0
      %v4846 = vadd.f32 0.0, %v4845
      %v4847 = vpop.f32.mrb[0].mxu0
      %4848 = vmatprep.mubr.f32.mxu0 0.0
      %4849 = vmatmul.mubr.f32.gmra.mrb[0].mxu0 %v3485
      %v4850 = vpop.f32.mrb[0].mxu0
      %v4851 = vadd.f32 0.0, %v4850
      %v4852 = vpop.f32.mrb[0].mxu0
      %4853 = vmatprep.mubr.f32.mxu0 0.0
      %4854 = vmatmul.mubr.f32.gmra.mrb[0].mxu0 %v3487
      %v4855 = vpop.f32.mrb[0].mxu0
      %v4856 = vadd.f32 0.0, %v4855
      %v4857 = vpop.f32.mrb[0].mxu0
      %4858 = vmatprep.mubr.f32.mxu0 0.0
      %4859 = vmatmul.mubr.f32.gmra.mrb[0].mxu0 %v3489
      %v4860 = vpop.f32.mrb[0].mxu0
      %v4861 = vadd.f32 0.0, %v4860
      %v4862 = vpop.f32.mrb[0].mxu0
      %4863 = vmatprep.mubr.f32.mxu0 0.0
      %4864 = vmatmul.mubr.f32.gmra.mrb[0].mxu0 %v3491
      %v4865 = vpop.f32.mrb[0].mxu0
      %v4866 = vadd.f32 0.0, %v4865
      %v4867 = vpop.f32.mrb[0].mxu0
      %4868 = vmatprep.mubr.f32.mxu0 0.0
      %4869 = vmatmul.mubr.f32.gmra.mrb[0].mxu0 %v3493
      %v4870 = vpop.f32.mrb[0].mxu0
      %v4871 = vadd.f32 0.0, %v4870
      %v4872 = vpop.f32.mrb[0].mxu0
      %4873 = vmatprep.mubr.f32.mxu0 0.0
      %4874 = vmatmul.mubr.f32.gmra.mrb[0].mxu0 %v3495
      %v4875 = vpop.f32.mrb[0].mxu0
      %v4876 = vadd.f32 0.0, %v4875
      %v4877 = vpop.f32.mrb[0].mxu0
      %4878 = vmatprep.mubr.f32.mxu0 0.0
      %4879 = vmatmul.mubr.f32.gmra.mrb[0].mxu0 %v3497
      %v4880 = vpop.f32.mrb[0].mxu0
      %v4881 = vadd.f32 0.0, %v4880
      %v4882 = vpop.f32.mrb[0].mxu0
      %4883 = vmatprep.mubr.f32.mxu0 0.0
      %4884 = vmatmul.mubr.f32.gmra.mrb[0].mxu0 %v3499
      %v4885 = vpop.f32.mrb[0].mxu0
      %v4886 = vadd.f32 0.0, %v4885
      %v4887 = vpop.f32.mrb[0].mxu0
      %4888 = vmatprep.mubr.f32.mxu0 0.0
      %4889 = vmatmul.mubr.f32.gmra.mrb[0].mxu0 %v3501
      %v4890 = vpop.f32.mrb[0].mxu0
      %v4891 = vadd.f32 0.0, %v4890
      %v4892 = vpop.f32.mrb[0].mxu0
      %4893 = vmatprep.mubr.f32.mxu0 0.0
      %4894 = vmatmul.mubr.f32.gmra.mrb[0].mxu0 %v3503
      %v4895 = vpop.f32.mrb[0].mxu0
      %v4896 = vadd.f32 0.0, %v4895
      %v4897 = vpop.f32.mrb[0].mxu0
      %4898 = vmatprep.mubr.f32.mxu0 0.0
      %4899 = vmatmul.mubr.f32.gmra.mrb[0].mxu0 %v3505
      %v4900 = vpop.f32.mrb[0].mxu0
      %v4901 = vadd.f32 0.0, %v4900
      %v4902 = vpop.f32.mrb[0].mxu0
      %4903 = vmatprep.mubr.f32.mxu0 0.0
      %4904 = vmatmul.mubr.f32.gmra.mrb[0].mxu0 %v3507
      %v4905 = vpop.f32.mrb[0].mxu0
      %v4906 = vadd.f32 0.0, %v4905
      %v4907 = vpop.f32.mrb[0].mxu0
      %4908 = vmatprep.mubr.f32.mxu0 0.0
      %4909 = vmatmul.mubr.f32.gmra.mrb[0].mxu0 %v3509
      %v4910 = vpop.f32.mrb[0].mxu0
      %v4911 = vadd.f32 0.0, %v4910
      %v4912 = vpop.f32.mrb[0].mxu0
      %4913 = vmatprep.mubr.f32.mxu0 0.0
      %4914 = vmatmul.mubr.f32.gmra.mrb[0].mxu0 %v4695
      %v4915 = vpop.f32.mrb[0].mxu0
      %v4916 = vadd.f32 0.0, %v4915
      %v4917 = vpop.f32.mrb[0].mxu0
      %4918 = vmatprep.mubr.f32.mxu0 0.0
      %4919 = vmatmul.mubr.f32.gmra.mrb[0].mxu0 %v4697
      %v4920 = vpop.f32.mrb[0].mxu0
      %v4921 = vadd.f32 0.0, %v4920
      %v4922 = vpop.f32.mrb[0].mxu0
      %4923 = vdwg.mxu0
      %v4924 = vadd.f32 %v4657, %v4766
      %v4925 = vadd.f32 %v4658, %v4771
      %v4926 = vadd.f32 %v4659, %v4776
      %v4927 = vadd.f32 %v4660, %v4781
      %v4928 = vadd.f32 %v4661, %v4786
      %v4929 = vadd.f32 %v4662, %v4791
      %v4930 = vadd.f32 %v4663, %v4796
      %v4931 = vadd.f32 %v4664, %v4801
      %v4932 = vadd.f32 %v4665, %v4806
      %v4933 = vadd.f32 %v4666, %v4811
      %v4934 = vadd.f32 %v4667, %v4816
      %v4935 = vadd.f32 %v4668, %v4821
      %v4936 = vadd.f32 %v4669, %v4826
      %v4937 = vadd.f32 %v4670, %v4831
      %v4938 = vadd.f32 %v4671, %v4836
      %v4939 = vadd.f32 %v4672, %v4841
      %v4940 = vadd.f32 %v4673, %v4846
      %v4941 = vadd.f32 %v4674, %v4851
      %v4942 = vadd.f32 %v4675, %v4856
      %v4943 = vadd.f32 %v4676, %v4861
      %v4944 = vadd.f32 %v4677, %v4866
      %v4945 = vadd.f32 %v4678, %v4871
      %v4946 = vadd.f32 %v4679, %v4876
      %v4947 = vadd.f32 %v4680, %v4881
      %v4948 = vadd.f32 %v4681, %v4886
      %v4949 = vadd.f32 %v4682, %v4891
      %v4950 = vadd.f32 %v4683, %v4896
      %v4951 = vadd.f32 %v4684, %v4901
      %v4952 = vadd.f32 %v4685, %v4906
      %v4953 = vadd.f32 %v4686, %v4911
      %v4954 = vadd.f32 %v4687, %v4916
      %v4955 = vadd.f32 %v4688, %v4921
      %v4956 = vrot.slane %v3313, 2
      %v4957 = vrot.slane %v3314, 2
      %v4958 = vsel %vm1126, %v4956, %v4957
      %v4959 = vrot.slane %v3315, 2
      %v4960 = vsel %vm1126, %v4957, %v4959
      %v4961 = vsel %vm540, %v4958, 0
      %v4963 = vsel %vm540, %v4960, 0
      %4965 = vmatprep.subr.mxu0 0.0
      %4966 = vmatpush1.msra.mxu0 %v2077
      %4967 = vmatprep.subr.mxu0 0.0
      %4968 = vmatpush1.msra.mxu0 0.0
      %4969 = vmatprep.subr.mxu0 0.0
      %4970 = vmatpush1.msra.mxu0 0.0
      %4971 = vmatprep.subr.mxu0 0.0
      %4972 = vmatpush1.msra.mxu0 0.0
      %4973 = vmatprep.subr.mxu0 0.0
      %4974 = vmatpush1.msra.mxu0 0.0
      %4975 = vmatprep.subr.mxu0 0.0
      %4976 = vmatpush1.msra.mxu0 0.0
      %4977 = vmatprep.subr.mxu0 0.0
      %4978 = vmatpush1.msra.mxu0 0.0
      %4979 = vmatprep.subr.mxu0 0.0
      %4980 = vmatpush1.msra.mxu0 0.0
      %4981 = vmatprep.subr.mxu0 0.0
      %4982 = vmatpush1.msra.mxu0 0.0
      %4983 = vmatprep.subr.mxu0 0.0
      %4984 = vmatpush1.msra.mxu0 0.0
      %4985 = vmatprep.subr.mxu0 0.0
      %4986 = vmatpush1.msra.mxu0 0.0
      %4987 = vmatprep.subr.mxu0 0.0
      %4988 = vmatpush1.msra.mxu0 0.0
      %4989 = vmatprep.subr.mxu0 0.0
      %4990 = vmatpush1.msra.mxu0 0.0
      %4991 = vmatprep.subr.mxu0 0.0
      %4992 = vmatpush1.msra.mxu0 0.0
      %4993 = vmatprep.subr.mxu0 0.0
      %4994 = vmatpush1.msra.mxu0 0.0
      %4995 = vmatprep.subr.mxu0 0.0
      %4996 = vmatpush1.msra.mxu0 0.0
      %4997 = vmatprep.subr.mxu0 0.0
      %4998 = vmatpush1.msra.mxu0 0.0
      %4999 = vmatprep.subr.mxu0 0.0
      %5000 = vmatpush1.msra.mxu0 0.0
      %5001 = vmatprep.subr.mxu0 0.0
      %5002 = vmatpush1.msra.mxu0 0.0
      %5003 = vmatprep.subr.mxu0 0.0
      %5004 = vmatpush1.msra.mxu0 0.0
      %5005 = vmatprep.subr.mxu0 0.0
      %5006 = vmatpush1.msra.mxu0 0.0
      %5007 = vmatprep.subr.mxu0 0.0
      %5008 = vmatpush1.msra.mxu0 0.0
      %5009 = vmatprep.subr.mxu0 0.0
      %5010 = vmatpush1.msra.mxu0 0.0
      %5011 = vmatprep.subr.mxu0 0.0
      %5012 = vmatpush1.msra.mxu0 0.0
      %5013 = vmatprep.subr.mxu0 0.0
      %5014 = vmatpush1.msra.mxu0 0.0
      %5015 = vmatprep.subr.mxu0 0.0
      %5016 = vmatpush1.msra.mxu0 0.0
      %5017 = vmatprep.subr.mxu0 0.0
      %5018 = vmatpush1.msra.mxu0 0.0
      %5019 = vmatprep.subr.mxu0 0.0
      %5020 = vmatpush1.msra.mxu0 0.0
      %5021 = vmatprep.subr.mxu0 0.0
      %5022 = vmatpush1.msra.mxu0 0.0
      %5023 = vmatprep.subr.mxu0 0.0
      %5024 = vmatpush1.msra.mxu0 0.0
      %5025 = vmatprep.subr.mxu0 0.0
      %5026 = vmatpush1.msra.mxu0 0.0
      %5027 = vmatprep.subr.mxu0 0.0
      %5028 = vmatpush1.msra.mxu0 0.0
      %5029 = vmatprep.mubr.f32.mxu0 0.0
      %5030 = vmatmul.mubr.f32.gmra.mrb[0].mxu0 %v4109
      %v5031 = vpop.f32.mrb[0].mxu0
      %v5032 = vadd.f32 0.0, %v5031
      %v5033 = vpop.f32.mrb[0].mxu0
      %5034 = vmatprep.mubr.f32.mxu0 0.0
      %5035 = vmatmul.mubr.f32.gmra.mrb[0].mxu0 %v4111
      %v5036 = vpop.f32.mrb[0].mxu0
      %v5037 = vadd.f32 0.0, %v5036
      %v5038 = vpop.f32.mrb[0].mxu0
      %5039 = vmatprep.mubr.f32.mxu0 0.0
      %5040 = vmatmul.mubr.f32.gmra.mrb[0].mxu0 %v4113
      %v5041 = vpop.f32.mrb[0].mxu0
      %v5042 = vadd.f32 0.0, %v5041
      %v5043 = vpop.f32.mrb[0].mxu0
      %5044 = vmatprep.mubr.f32.mxu0 0.0
      %5045 = vmatmul.mubr.f32.gmra.mrb[0].mxu0 %v4115
      %v5046 = vpop.f32.mrb[0].mxu0
      %v5047 = vadd.f32 0.0, %v5046
      %v5048 = vpop.f32.mrb[0].mxu0
      %5049 = vmatprep.mubr.f32.mxu0 0.0
      %5050 = vmatmul.mubr.f32.gmra.mrb[0].mxu0 %v4117
      %v5051 = vpop.f32.mrb[0].mxu0
      %v5052 = vadd.f32 0.0, %v5051
      %v5053 = vpop.f32.mrb[0].mxu0
      %5054 = vmatprep.mubr.f32.mxu0 0.0
      %5055 = vmatmul.mubr.f32.gmra.mrb[0].mxu0 %v4119
      %v5056 = vpop.f32.mrb[0].mxu0
      %v5057 = vadd.f32 0.0, %v5056
      %v5058 = vpop.f32.mrb[0].mxu0
      %5059 = vmatprep.mubr.f32.mxu0 0.0
      %5060 = vmatmul.mubr.f32.gmra.mrb[0].mxu0 %v4121
      %v5061 = vpop.f32.mrb[0].mxu0
      %v5062 = vadd.f32 0.0, %v5061
      %v5063 = vpop.f32.mrb[0].mxu0
      %5064 = vmatprep.mubr.f32.mxu0 0.0
      %5065 = vmatmul.mubr.f32.gmra.mrb[0].mxu0 %v4123
      %v5066 = vpop.f32.mrb[0].mxu0
      %v5067 = vadd.f32 0.0, %v5066
      %v5068 = vpop.f32.mrb[0].mxu0
      %5069 = vmatprep.mubr.f32.mxu0 0.0
      %5070 = vmatmul.mubr.f32.gmra.mrb[0].mxu0 %v4125
      %v5071 = vpop.f32.mrb[0].mxu0
      %v5072 = vadd.f32 0.0, %v5071
      %v5073 = vpop.f32.mrb[0].mxu0
      %5074 = vmatprep.mubr.f32.mxu0 0.0
      %5075 = vmatmul.mubr.f32.gmra.mrb[0].mxu0 %v4127
      %v5076 = vpop.f32.mrb[0].mxu0
      %v5077 = vadd.f32 0.0, %v5076
      %v5078 = vpop.f32.mrb[0].mxu0
      %5079 = vmatprep.mubr.f32.mxu0 0.0
      %5080 = vmatmul.mubr.f32.gmra.mrb[0].mxu0 %v4129
      %v5081 = vpop.f32.mrb[0].mxu0
      %v5082 = vadd.f32 0.0, %v5081
      %v5083 = vpop.f32.mrb[0].mxu0
      %5084 = vmatprep.mubr.f32.mxu0 0.0
      %5085 = vmatmul.mubr.f32.gmra.mrb[0].mxu0 %v4131
      %v5086 = vpop.f32.mrb[0].mxu0
      %v5087 = vadd.f32 0.0, %v5086
      %v5088 = vpop.f32.mrb[0].mxu0
      %5089 = vmatprep.mubr.f32.mxu0 0.0
      %5090 = vmatmul.mubr.f32.gmra.mrb[0].mxu0 %v4133
      %v5091 = vpop.f32.mrb[0].mxu0
      %v5092 = vadd.f32 0.0, %v5091
      %v5093 = vpop.f32.mrb[0].mxu0
      %5094 = vmatprep.mubr.f32.mxu0 0.0
      %5095 = vmatmul.mubr.f32.gmra.mrb[0].mxu0 %v4135
      %v5096 = vpop.f32.mrb[0].mxu0
      %v5097 = vadd.f32 0.0, %v5096
      %v5098 = vpop.f32.mrb[0].mxu0
      %5099 = vmatprep.mubr.f32.mxu0 0.0
      %5100 = vmatmul.mubr.f32.gmra.mrb[0].mxu0 %v4137
      %v5101 = vpop.f32.mrb[0].mxu0
      %v5102 = vadd.f32 0.0, %v5101
      %v5103 = vpop.f32.mrb[0].mxu0
      %5104 = vmatprep.mubr.f32.mxu0 0.0
      %5105 = vmatmul.mubr.f32.gmra.mrb[0].mxu0 %v4139
      %v5106 = vpop.f32.mrb[0].mxu0
      %v5107 = vadd.f32 0.0, %v5106
      %v5108 = vpop.f32.mrb[0].mxu0
      %5109 = vmatprep.mubr.f32.mxu0 0.0
      %5110 = vmatmul.mubr.f32.gmra.mrb[0].mxu0 %v4141
      %v5111 = vpop.f32.mrb[0].mxu0
      %v5112 = vadd.f32 0.0, %v5111
      %v5113 = vpop.f32.mrb[0].mxu0
      %5114 = vmatprep.mubr.f32.mxu0 0.0
      %5115 = vmatmul.mubr.f32.gmra.mrb[0].mxu0 %v4143
      %v5116 = vpop.f32.mrb[0].mxu0
      %v5117 = vadd.f32 0.0, %v5116
      %v5118 = vpop.f32.mrb[0].mxu0
      %5119 = vmatprep.mubr.f32.mxu0 0.0
      %5120 = vmatmul.mubr.f32.gmra.mrb[0].mxu0 %v4145
      %v5121 = vpop.f32.mrb[0].mxu0
      %v5122 = vadd.f32 0.0, %v5121
      %v5123 = vpop.f32.mrb[0].mxu0
      %5124 = vmatprep.mubr.f32.mxu0 0.0
      %5125 = vmatmul.mubr.f32.gmra.mrb[0].mxu0 %v4147
      %v5126 = vpop.f32.mrb[0].mxu0
      %v5127 = vadd.f32 0.0, %v5126
      %v5128 = vpop.f32.mrb[0].mxu0
      %5129 = vmatprep.mubr.f32.mxu0 0.0
      %5130 = vmatmul.mubr.f32.gmra.mrb[0].mxu0 %v4149
      %v5131 = vpop.f32.mrb[0].mxu0
      %v5132 = vadd.f32 0.0, %v5131
      %v5133 = vpop.f32.mrb[0].mxu0
      %5134 = vmatprep.mubr.f32.mxu0 0.0
      %5135 = vmatmul.mubr.f32.gmra.mrb[0].mxu0 %v4151
      %v5136 = vpop.f32.mrb[0].mxu0
      %v5137 = vadd.f32 0.0, %v5136
      %v5138 = vpop.f32.mrb[0].mxu0
      %5139 = vmatprep.mubr.f32.mxu0 0.0
      %5140 = vmatmul.mubr.f32.gmra.mrb[0].mxu0 %v4153
      %v5141 = vpop.f32.mrb[0].mxu0
      %v5142 = vadd.f32 0.0, %v5141
      %v5143 = vpop.f32.mrb[0].mxu0
      %5144 = vmatprep.mubr.f32.mxu0 0.0
      %5145 = vmatmul.mubr.f32.gmra.mrb[0].mxu0 %v4155
      %v5146 = vpop.f32.mrb[0].mxu0
      %v5147 = vadd.f32 0.0, %v5146
      %v5148 = vpop.f32.mrb[0].mxu0
      %5149 = vmatprep.mubr.f32.mxu0 0.0
      %5150 = vmatmul.mubr.f32.gmra.mrb[0].mxu0 %v4157
      %v5151 = vpop.f32.mrb[0].mxu0
      %v5152 = vadd.f32 0.0, %v5151
      %v5153 = vpop.f32.mrb[0].mxu0
      %5154 = vmatprep.mubr.f32.mxu0 0.0
      %5155 = vmatmul.mubr.f32.gmra.mrb[0].mxu0 %v4159
      %v5156 = vpop.f32.mrb[0].mxu0
      %v5157 = vadd.f32 0.0, %v5156
      %v5158 = vpop.f32.mrb[0].mxu0
      %5159 = vmatprep.mubr.f32.mxu0 0.0
      %5160 = vmatmul.mubr.f32.gmra.mrb[0].mxu0 %v4161
      %v5161 = vpop.f32.mrb[0].mxu0
      %v5162 = vadd.f32 0.0, %v5161
      %v5163 = vpop.f32.mrb[0].mxu0
      %5164 = vmatprep.mubr.f32.mxu0 0.0
      %5165 = vmatmul.mubr.f32.gmra.mrb[0].mxu0 %v4163
      %v5166 = vpop.f32.mrb[0].mxu0
      %v5167 = vadd.f32 0.0, %v5166
      %v5168 = vpop.f32.mrb[0].mxu0
      %5169 = vmatprep.mubr.f32.mxu0 0.0
      %5170 = vmatmul.mubr.f32.gmra.mrb[0].mxu0 %v4165
      %v5171 = vpop.f32.mrb[0].mxu0
      %v5172 = vadd.f32 0.0, %v5171
      %v5173 = vpop.f32.mrb[0].mxu0
      %5174 = vmatprep.mubr.f32.mxu0 0.0
      %5175 = vmatmul.mubr.f32.gmra.mrb[0].mxu0 %v4167
      %v5176 = vpop.f32.mrb[0].mxu0
      %v5177 = vadd.f32 0.0, %v5176
      %v5178 = vpop.f32.mrb[0].mxu0
      %5179 = vmatprep.mubr.f32.mxu0 0.0
      %5180 = vmatmul.mubr.f32.gmra.mrb[0].mxu0 %v4961
      %v5181 = vpop.f32.mrb[0].mxu0
      %v5182 = vadd.f32 0.0, %v5181
      %v5183 = vpop.f32.mrb[0].mxu0
      %5184 = vmatprep.mubr.f32.mxu0 0.0
      %5185 = vmatmul.mubr.f32.gmra.mrb[0].mxu0 %v4963
      %v5186 = vpop.f32.mrb[0].mxu0
      %v5187 = vadd.f32 0.0, %v5186
      %v5188 = vpop.f32.mrb[0].mxu0
      %5189 = vdwg.mxu0
      %v5190 = vadd.f32 %v4924, %v5032
      %v5191 = vadd.f32 %v4925, %v5037
      %v5192 = vadd.f32 %v4926, %v5042
      %v5193 = vadd.f32 %v4927, %v5047
      %v5194 = vadd.f32 %v4928, %v5052
      %v5195 = vadd.f32 %v4929, %v5057
      %v5196 = vadd.f32 %v4930, %v5062
      %v5197 = vadd.f32 %v4931, %v5067
      %v5198 = vadd.f32 %v4932, %v5072
      %v5199 = vadd.f32 %v4933, %v5077
      %v5200 = vadd.f32 %v4934, %v5082
      %v5201 = vadd.f32 %v4935, %v5087
      %v5202 = vadd.f32 %v4936, %v5092
      %v5203 = vadd.f32 %v4937, %v5097
      %v5204 = vadd.f32 %v4938, %v5102
      %v5205 = vadd.f32 %v4939, %v5107
      %v5206 = vadd.f32 %v4940, %v5112
      %v5207 = vadd.f32 %v4941, %v5117
      %v5208 = vadd.f32 %v4942, %v5122
      %v5209 = vadd.f32 %v4943, %v5127
      %v5210 = vadd.f32 %v4944, %v5132
      %v5211 = vadd.f32 %v4945, %v5137
      %v5212 = vadd.f32 %v4946, %v5142
      %v5213 = vadd.f32 %v4947, %v5147
      %v5214 = vadd.f32 %v4948, %v5152
      %v5215 = vadd.f32 %v4949, %v5157
      %v5216 = vadd.f32 %v4950, %v5162
      %v5217 = vadd.f32 %v4951, %v5167
      %v5218 = vadd.f32 %v4952, %v5172
      %v5219 = vadd.f32 %v4953, %v5177
      %v5220 = vadd.f32 %v4954, %v5182
      %v5221 = vadd.f32 %v4955, %v5187
      %v5223 = vsel %vm540, %v3316, 0
      %v5226 = vsel %vm540, %v3317, 0
      %5228 = vmatprep.subr.mxu0 0.0
      %5229 = vmatpush1.msra.mxu0 %v2343
      %5230 = vmatprep.subr.mxu0 0.0
      %5231 = vmatpush1.msra.mxu0 0.0
      %5232 = vmatprep.subr.mxu0 0.0
      %5233 = vmatpush1.msra.mxu0 0.0
      %5234 = vmatprep.subr.mxu0 0.0
      %5235 = vmatpush1.msra.mxu0 0.0
      %5236 = vmatprep.subr.mxu0 0.0
      %5237 = vmatpush1.msra.mxu0 0.0
      %5238 = vmatprep.subr.mxu0 0.0
      %5239 = vmatpush1.msra.mxu0 0.0
      %5240 = vmatprep.subr.mxu0 0.0
      %5241 = vmatpush1.msra.mxu0 0.0
      %5242 = vmatprep.subr.mxu0 0.0
      %5243 = vmatpush1.msra.mxu0 0.0
      %5244 = vmatprep.subr.mxu0 0.0
      %5245 = vmatpush1.msra.mxu0 0.0
      %5246 = vmatprep.subr.mxu0 0.0
      %5247 = vmatpush1.msra.mxu0 0.0
      %5248 = vmatprep.subr.mxu0 0.0
      %5249 = vmatpush1.msra.mxu0 0.0
      %5250 = vmatprep.subr.mxu0 0.0
      %5251 = vmatpush1.msra.mxu0 0.0
      %5252 = vmatprep.subr.mxu0 0.0
      %5253 = vmatpush1.msra.mxu0 0.0
      %5254 = vmatprep.subr.mxu0 0.0
      %5255 = vmatpush1.msra.mxu0 0.0
      %5256 = vmatprep.subr.mxu0 0.0
      %5257 = vmatpush1.msra.mxu0 0.0
      %5258 = vmatprep.subr.mxu0 0.0
      %5259 = vmatpush1.msra.mxu0 0.0
      %5260 = vmatprep.subr.mxu0 0.0
      %5261 = vmatpush1.msra.mxu0 0.0
      %5262 = vmatprep.subr.mxu0 0.0
      %5263 = vmatpush1.msra.mxu0 0.0
      %5264 = vmatprep.subr.mxu0 0.0
      %5265 = vmatpush1.msra.mxu0 0.0
      %5266 = vmatprep.subr.mxu0 0.0
      %5267 = vmatpush1.msra.mxu0 0.0
      %5268 = vmatprep.subr.mxu0 0.0
      %5269 = vmatpush1.msra.mxu0 0.0
      %5270 = vmatprep.subr.mxu0 0.0
      %5271 = vmatpush1.msra.mxu0 0.0
      %5272 = vmatprep.subr.mxu0 0.0
      %5273 = vmatpush1.msra.mxu0 0.0
      %5274 = vmatprep.subr.mxu0 0.0
      %5275 = vmatpush1.msra.mxu0 0.0
      %5276 = vmatprep.subr.mxu0 0.0
      %5277 = vmatpush1.msra.mxu0 0.0
      %5278 = vmatprep.subr.mxu0 0.0
      %5279 = vmatpush1.msra.mxu0 0.0
      %5280 = vmatprep.subr.mxu0 0.0
      %5281 = vmatpush1.msra.mxu0 0.0
      %5282 = vmatprep.subr.mxu0 0.0
      %5283 = vmatpush1.msra.mxu0 0.0
      %5284 = vmatprep.subr.mxu0 0.0
      %5285 = vmatpush1.msra.mxu0 0.0
      %5286 = vmatprep.subr.mxu0 0.0
      %5287 = vmatpush1.msra.mxu0 0.0
      %5288 = vmatprep.subr.mxu0 0.0
      %5289 = vmatpush1.msra.mxu0 0.0
      %5290 = vmatprep.subr.mxu0 0.0
      %5291 = vmatpush1.msra.mxu0 0.0
      %5292 = vmatprep.mubr.f32.mxu0 0.0
      %5293 = vmatmul.mubr.f32.gmra.mrb[0].mxu0 %v3744
      %v5294 = vpop.f32.mrb[0].mxu0
      %v5295 = vadd.f32 0.0, %v5294
      %v5296 = vpop.f32.mrb[0].mxu0
      %5297 = vmatprep.mubr.f32.mxu0 0.0
      %5298 = vmatmul.mubr.f32.gmra.mrb[0].mxu0 %v3746
      %v5299 = vpop.f32.mrb[0].mxu0
      %v5300 = vadd.f32 0.0, %v5299
      %v5301 = vpop.f32.mrb[0].mxu0
      %5302 = vmatprep.mubr.f32.mxu0 0.0
      %5303 = vmatmul.mubr.f32.gmra.mrb[0].mxu0 %v3748
      %v5304 = vpop.f32.mrb[0].mxu0
      %v5305 = vadd.f32 0.0, %v5304
      %v5306 = vpop.f32.mrb[0].mxu0
      %5307 = vmatprep.mubr.f32.mxu0 0.0
      %5308 = vmatmul.mubr.f32.gmra.mrb[0].mxu0 %v3750
      %v5309 = vpop.f32.mrb[0].mxu0
      %v5310 = vadd.f32 0.0, %v5309
      %v5311 = vpop.f32.mrb[0].mxu0
      %5312 = vmatprep.mubr.f32.mxu0 0.0
      %5313 = vmatmul.mubr.f32.gmra.mrb[0].mxu0 %v3752
      %v5314 = vpop.f32.mrb[0].mxu0
      %v5315 = vadd.f32 0.0, %v5314
      %v5316 = vpop.f32.mrb[0].mxu0
      %5317 = vmatprep.mubr.f32.mxu0 0.0
      %5318 = vmatmul.mubr.f32.gmra.mrb[0].mxu0 %v3754
      %v5319 = vpop.f32.mrb[0].mxu0
      %v5320 = vadd.f32 0.0, %v5319
      %v5321 = vpop.f32.mrb[0].mxu0
      %5322 = vmatprep.mubr.f32.mxu0 0.0
      %5323 = vmatmul.mubr.f32.gmra.mrb[0].mxu0 %v3756
      %v5324 = vpop.f32.mrb[0].mxu0
      %v5325 = vadd.f32 0.0, %v5324
      %v5326 = vpop.f32.mrb[0].mxu0
      %5327 = vmatprep.mubr.f32.mxu0 0.0
      %5328 = vmatmul.mubr.f32.gmra.mrb[0].mxu0 %v3758
      %v5329 = vpop.f32.mrb[0].mxu0
      %v5330 = vadd.f32 0.0, %v5329
      %v5331 = vpop.f32.mrb[0].mxu0
      %5332 = vmatprep.mubr.f32.mxu0 0.0
      %5333 = vmatmul.mubr.f32.gmra.mrb[0].mxu0 %v3760
      %v5334 = vpop.f32.mrb[0].mxu0
      %v5335 = vadd.f32 0.0, %v5334
      %v5336 = vpop.f32.mrb[0].mxu0
      %5337 = vmatprep.mubr.f32.mxu0 0.0
      %5338 = vmatmul.mubr.f32.gmra.mrb[0].mxu0 %v3762
      %v5339 = vpop.f32.mrb[0].mxu0
      %v5340 = vadd.f32 0.0, %v5339
      %v5341 = vpop.f32.mrb[0].mxu0
      %5342 = vmatprep.mubr.f32.mxu0 0.0
      %5343 = vmatmul.mubr.f32.gmra.mrb[0].mxu0 %v3764
      %v5344 = vpop.f32.mrb[0].mxu0
      %v5345 = vadd.f32 0.0, %v5344
      %v5346 = vpop.f32.mrb[0].mxu0
      %5347 = vmatprep.mubr.f32.mxu0 0.0
      %5348 = vmatmul.mubr.f32.gmra.mrb[0].mxu0 %v3766
      %v5349 = vpop.f32.mrb[0].mxu0
      %v5350 = vadd.f32 0.0, %v5349
      %v5351 = vpop.f32.mrb[0].mxu0
      %5352 = vmatprep.mubr.f32.mxu0 0.0
      %5353 = vmatmul.mubr.f32.gmra.mrb[0].mxu0 %v3768
      %v5354 = vpop.f32.mrb[0].mxu0
      %v5355 = vadd.f32 0.0, %v5354
      %v5356 = vpop.f32.mrb[0].mxu0
      %5357 = vmatprep.mubr.f32.mxu0 0.0
      %5358 = vmatmul.mubr.f32.gmra.mrb[0].mxu0 %v3770
      %v5359 = vpop.f32.mrb[0].mxu0
      %v5360 = vadd.f32 0.0, %v5359
      %v5361 = vpop.f32.mrb[0].mxu0
      %5362 = vmatprep.mubr.f32.mxu0 0.0
      %5363 = vmatmul.mubr.f32.gmra.mrb[0].mxu0 %v3772
      %v5364 = vpop.f32.mrb[0].mxu0
      %v5365 = vadd.f32 0.0, %v5364
      %v5366 = vpop.f32.mrb[0].mxu0
      %5367 = vmatprep.mubr.f32.mxu0 0.0
      %5368 = vmatmul.mubr.f32.gmra.mrb[0].mxu0 %v3774
      %v5369 = vpop.f32.mrb[0].mxu0
      %v5370 = vadd.f32 0.0, %v5369
      %v5371 = vpop.f32.mrb[0].mxu0
      %5372 = vmatprep.mubr.f32.mxu0 0.0
      %5373 = vmatmul.mubr.f32.gmra.mrb[0].mxu0 %v3776
      %v5374 = vpop.f32.mrb[0].mxu0
      %v5375 = vadd.f32 0.0, %v5374
      %v5376 = vpop.f32.mrb[0].mxu0
      %5377 = vmatprep.mubr.f32.mxu0 0.0
      %5378 = vmatmul.mubr.f32.gmra.mrb[0].mxu0 %v3778
      %v5379 = vpop.f32.mrb[0].mxu0
      %v5380 = vadd.f32 0.0, %v5379
      %v5381 = vpop.f32.mrb[0].mxu0
      %5382 = vmatprep.mubr.f32.mxu0 0.0
      %5383 = vmatmul.mubr.f32.gmra.mrb[0].mxu0 %v3780
      %v5384 = vpop.f32.mrb[0].mxu0
      %v5385 = vadd.f32 0.0, %v5384
      %v5386 = vpop.f32.mrb[0].mxu0
      %5387 = vmatprep.mubr.f32.mxu0 0.0
      %5388 = vmatmul.mubr.f32.gmra.mrb[0].mxu0 %v3782
      %v5389 = vpop.f32.mrb[0].mxu0
      %v5390 = vadd.f32 0.0, %v5389
      %v5391 = vpop.f32.mrb[0].mxu0
      %5392 = vmatprep.mubr.f32.mxu0 0.0
      %5393 = vmatmul.mubr.f32.gmra.mrb[0].mxu0 %v3784
      %v5394 = vpop.f32.mrb[0].mxu0
      %v5395 = vadd.f32 0.0, %v5394
      %v5396 = vpop.f32.mrb[0].mxu0
      %5397 = vmatprep.mubr.f32.mxu0 0.0
      %5398 = vmatmul.mubr.f32.gmra.mrb[0].mxu0 %v3786
      %v5399 = vpop.f32.mrb[0].mxu0
      %v5400 = vadd.f32 0.0, %v5399
      %v5401 = vpop.f32.mrb[0].mxu0
      %5402 = vmatprep.mubr.f32.mxu0 0.0
      %5403 = vmatmul.mubr.f32.gmra.mrb[0].mxu0 %v3788
      %v5404 = vpop.f32.mrb[0].mxu0
      %v5405 = vadd.f32 0.0, %v5404
      %v5406 = vpop.f32.mrb[0].mxu0
      %5407 = vmatprep.mubr.f32.mxu0 0.0
      %5408 = vmatmul.mubr.f32.gmra.mrb[0].mxu0 %v3790
      %v5409 = vpop.f32.mrb[0].mxu0
      %v5410 = vadd.f32 0.0, %v5409
      %v5411 = vpop.f32.mrb[0].mxu0
      %5412 = vmatprep.mubr.f32.mxu0 0.0
      %5413 = vmatmul.mubr.f32.gmra.mrb[0].mxu0 %v3792
      %v5414 = vpop.f32.mrb[0].mxu0
      %v5415 = vadd.f32 0.0, %v5414
      %v5416 = vpop.f32.mrb[0].mxu0
      %5417 = vmatprep.mubr.f32.mxu0 0.0
      %5418 = vmatmul.mubr.f32.gmra.mrb[0].mxu0 %v3794
      %v5419 = vpop.f32.mrb[0].mxu0
      %v5420 = vadd.f32 0.0, %v5419
      %v5421 = vpop.f32.mrb[0].mxu0
      %5422 = vmatprep.mubr.f32.mxu0 0.0
      %5423 = vmatmul.mubr.f32.gmra.mrb[0].mxu0 %v3796
      %v5424 = vpop.f32.mrb[0].mxu0
      %v5425 = vadd.f32 0.0, %v5424
      %v5426 = vpop.f32.mrb[0].mxu0
      %5427 = vmatprep.mubr.f32.mxu0 0.0
      %5428 = vmatmul.mubr.f32.gmra.mrb[0].mxu0 %v3798
      %v5429 = vpop.f32.mrb[0].mxu0
      %v5430 = vadd.f32 0.0, %v5429
      %v5431 = vpop.f32.mrb[0].mxu0
      %5432 = vmatprep.mubr.f32.mxu0 0.0
      %5433 = vmatmul.mubr.f32.gmra.mrb[0].mxu0 %v4427
      %v5434 = vpop.f32.mrb[0].mxu0
      %v5435 = vadd.f32 0.0, %v5434
      %v5436 = vpop.f32.mrb[0].mxu0
      %5437 = vmatprep.mubr.f32.mxu0 0.0
      %5438 = vmatmul.mubr.f32.gmra.mrb[0].mxu0 %v4430
      %v5439 = vpop.f32.mrb[0].mxu0
      %v5440 = vadd.f32 0.0, %v5439
      %v5441 = vpop.f32.mrb[0].mxu0
      %5442 = vmatprep.mubr.f32.mxu0 0.0
      %5443 = vmatmul.mubr.f32.gmra.mrb[0].mxu0 %v5223
      %v5444 = vpop.f32.mrb[0].mxu0
      %v5445 = vadd.f32 0.0, %v5444
      %v5446 = vpop.f32.mrb[0].mxu0
      %5447 = vmatprep.mubr.f32.mxu0 0.0
      %5448 = vmatmul.mubr.f32.gmra.mrb[0].mxu0 %v5226
      %v5449 = vpop.f32.mrb[0].mxu0
      %v5450 = vadd.f32 0.0, %v5449
      %v5451 = vpop.f32.mrb[0].mxu0
      %5452 = vdwg.mxu0
      %v5453 = vadd.f32 %v5190, %v5295
      %v5454 = vadd.f32 %v5191, %v5300
      %v5455 = vadd.f32 %v5192, %v5305
      %v5456 = vadd.f32 %v5193, %v5310
      %v5457 = vadd.f32 %v5194, %v5315
      %v5458 = vadd.f32 %v5195, %v5320
      %v5459 = vadd.f32 %v5196, %v5325
      %v5460 = vadd.f32 %v5197, %v5330
      %v5461 = vadd.f32 %v5198, %v5335
      %v5462 = vadd.f32 %v5199, %v5340
      %v5463 = vadd.f32 %v5200, %v5345
      %v5464 = vadd.f32 %v5201, %v5350
      %v5465 = vadd.f32 %v5202, %v5355
      %v5466 = vadd.f32 %v5203, %v5360
      %v5467 = vadd.f32 %v5204, %v5365
      %v5468 = vadd.f32 %v5205, %v5370
      %v5469 = vadd.f32 %v5206, %v5375
      %v5470 = vadd.f32 %v5207, %v5380
      %v5471 = vadd.f32 %v5208, %v5385
      %v5472 = vadd.f32 %v5209, %v5390
      %v5473 = vadd.f32 %v5210, %v5395
      %v5474 = vadd.f32 %v5211, %v5400
      %v5475 = vadd.f32 %v5212, %v5405
      %v5476 = vadd.f32 %v5213, %v5410
      %v5477 = vadd.f32 %v5214, %v5415
      %v5478 = vadd.f32 %v5215, %v5420
      %v5479 = vadd.f32 %v5216, %v5425
      %v5480 = vadd.f32 %v5217, %v5430
      %v5481 = vadd.f32 %v5218, %v5435
      %v5482 = vadd.f32 %v5219, %v5440
      %v5483 = vadd.f32 %v5220, %v5445
      %v5484 = vadd.f32 %v5221, %v5450
      %v5486 = vrot.slane %v3316, 1
      %v5487 = vrot.slane %v3317, 1
      %v5488 = vsel %vm459, %v5486, %v5487
      %v5489 = vrot.slane %v3318, 1
      %v5490 = vsel %vm459, %v5487, %v5489
      %v5491 = vsel %vm540, %v5488, 0
      %v5493 = vsel %vm540, %v5490, 0
      %5495 = vmatprep.subr.mxu0 0.0
      %5496 = vmatpush1.msra.mxu0 %v2613
      %5497 = vmatprep.subr.mxu0 0.0
      %5498 = vmatpush1.msra.mxu0 0.0
      %5499 = vmatprep.subr.mxu0 0.0
      %5500 = vmatpush1.msra.mxu0 0.0
      %5501 = vmatprep.subr.mxu0 0.0
      %5502 = vmatpush1.msra.mxu0 0.0
      %5503 = vmatprep.subr.mxu0 0.0
      %5504 = vmatpush1.msra.mxu0 0.0
      %5505 = vmatprep.subr.mxu0 0.0
      %5506 = vmatpush1.msra.mxu0 0.0
      %5507 = vmatprep.subr.mxu0 0.0
      %5508 = vmatpush1.msra.mxu0 0.0
      %5509 = vmatprep.subr.mxu0 0.0
      %5510 = vmatpush1.msra.mxu0 0.0
      %5511 = vmatprep.subr.mxu0 0.0
      %5512 = vmatpush1.msra.mxu0 0.0
      %5513 = vmatprep.subr.mxu0 0.0
      %5514 = vmatpush1.msra.mxu0 0.0
      %5515 = vmatprep.subr.mxu0 0.0
      %5516 = vmatpush1.msra.mxu0 0.0
      %5517 = vmatprep.subr.mxu0 0.0
      %5518 = vmatpush1.msra.mxu0 0.0
      %5519 = vmatprep.subr.mxu0 0.0
      %5520 = vmatpush1.msra.mxu0 0.0
      %5521 = vmatprep.subr.mxu0 0.0
      %5522 = vmatpush1.msra.mxu0 0.0
      %5523 = vmatprep.subr.mxu0 0.0
      %5524 = vmatpush1.msra.mxu0 0.0
      %5525 = vmatprep.subr.mxu0 0.0
      %5526 = vmatpush1.msra.mxu0 0.0
      %5527 = vmatprep.subr.mxu0 0.0
      %5528 = vmatpush1.msra.mxu0 0.0
      %5529 = vmatprep.subr.mxu0 0.0
      %5530 = vmatpush1.msra.mxu0 0.0
      %5531 = vmatprep.subr.mxu0 0.0
      %5532 = vmatpush1.msra.mxu0 0.0
      %5533 = vmatprep.subr.mxu0 0.0
      %5534 = vmatpush1.msra.mxu0 0.0
      %5535 = vmatprep.subr.mxu0 0.0
      %5536 = vmatpush1.msra.mxu0 0.0
      %5537 = vmatprep.subr.mxu0 0.0
      %5538 = vmatpush1.msra.mxu0 0.0
      %5539 = vmatprep.subr.mxu0 0.0
      %5540 = vmatpush1.msra.mxu0 0.0
      %5541 = vmatprep.subr.mxu0 0.0
      %5542 = vmatpush1.msra.mxu0 0.0
      %5543 = vmatprep.subr.mxu0 0.0
      %5544 = vmatpush1.msra.mxu0 0.0
      %5545 = vmatprep.subr.mxu0 0.0
      %5546 = vmatpush1.msra.mxu0 0.0
      %5547 = vmatprep.subr.mxu0 0.0
      %5548 = vmatpush1.msra.mxu0 0.0
      %5549 = vmatprep.subr.mxu0 0.0
      %5550 = vmatpush1.msra.mxu0 0.0
      %5551 = vmatprep.subr.mxu0 0.0
      %5552 = vmatpush1.msra.mxu0 0.0
      %5553 = vmatprep.subr.mxu0 0.0
      %5554 = vmatpush1.msra.mxu0 0.0
      %5555 = vmatprep.subr.mxu0 0.0
      %5556 = vmatpush1.msra.mxu0 0.0
      %5557 = vmatprep.subr.mxu0 0.0
      %5558 = vmatpush1.msra.mxu0 0.0
      %5559 = vmatprep.mubr.f32.mxu0 0.0
      %5560 = vmatmul.mubr.f32.gmra.mrb[0].mxu0 %v3455
      %v5561 = vpop.f32.mrb[0].mxu0
      %v5562 = vadd.f32 0.0, %v5561
      %v5563 = vpop.f32.mrb[0].mxu0
      %5564 = vmatprep.mubr.f32.mxu0 0.0
      %5565 = vmatmul.mubr.f32.gmra.mrb[0].mxu0 %v3457
      %v5566 = vpop.f32.mrb[0].mxu0
      %v5567 = vadd.f32 0.0, %v5566
      %v5568 = vpop.f32.mrb[0].mxu0
      %5569 = vmatprep.mubr.f32.mxu0 0.0
      %5570 = vmatmul.mubr.f32.gmra.mrb[0].mxu0 %v3459
      %v5571 = vpop.f32.mrb[0].mxu0
      %v5572 = vadd.f32 0.0, %v5571
      %v5573 = vpop.f32.mrb[0].mxu0
      %5574 = vmatprep.mubr.f32.mxu0 0.0
      %5575 = vmatmul.mubr.f32.gmra.mrb[0].mxu0 %v3461
      %v5576 = vpop.f32.mrb[0].mxu0
      %v5577 = vadd.f32 0.0, %v5576
      %v5578 = vpop.f32.mrb[0].mxu0
      %5579 = vmatprep.mubr.f32.mxu0 0.0
      %5580 = vmatmul.mubr.f32.gmra.mrb[0].mxu0 %v3463
      %v5581 = vpop.f32.mrb[0].mxu0
      %v5582 = vadd.f32 0.0, %v5581
      %v5583 = vpop.f32.mrb[0].mxu0
      %5584 = vmatprep.mubr.f32.mxu0 0.0
      %5585 = vmatmul.mubr.f32.gmra.mrb[0].mxu0 %v3465
      %v5586 = vpop.f32.mrb[0].mxu0
      %v5587 = vadd.f32 0.0, %v5586
      %v5588 = vpop.f32.mrb[0].mxu0
      %5589 = vmatprep.mubr.f32.mxu0 0.0
      %5590 = vmatmul.mubr.f32.gmra.mrb[0].mxu0 %v3467
      %v5591 = vpop.f32.mrb[0].mxu0
      %v5592 = vadd.f32 0.0, %v5591
      %v5593 = vpop.f32.mrb[0].mxu0
      %5594 = vmatprep.mubr.f32.mxu0 0.0
      %5595 = vmatmul.mubr.f32.gmra.mrb[0].mxu0 %v3469
      %v5596 = vpop.f32.mrb[0].mxu0
      %v5597 = vadd.f32 0.0, %v5596
      %v5598 = vpop.f32.mrb[0].mxu0
      %5599 = vmatprep.mubr.f32.mxu0 0.0
      %5600 = vmatmul.mubr.f32.gmra.mrb[0].mxu0 %v3471
      %v5601 = vpop.f32.mrb[0].mxu0
      %v5602 = vadd.f32 0.0, %v5601
      %v5603 = vpop.f32.mrb[0].mxu0
      %5604 = vmatprep.mubr.f32.mxu0 0.0
      %5605 = vmatmul.mubr.f32.gmra.mrb[0].mxu0 %v3473
      %v5606 = vpop.f32.mrb[0].mxu0
      %v5607 = vadd.f32 0.0, %v5606
      %v5608 = vpop.f32.mrb[0].mxu0
      %5609 = vmatprep.mubr.f32.mxu0 0.0
      %5610 = vmatmul.mubr.f32.gmra.mrb[0].mxu0 %v3475
      %v5611 = vpop.f32.mrb[0].mxu0
      %v5612 = vadd.f32 0.0, %v5611
      %v5613 = vpop.f32.mrb[0].mxu0
      %5614 = vmatprep.mubr.f32.mxu0 0.0
      %5615 = vmatmul.mubr.f32.gmra.mrb[0].mxu0 %v3477
      %v5616 = vpop.f32.mrb[0].mxu0
      %v5617 = vadd.f32 0.0, %v5616
      %v5618 = vpop.f32.mrb[0].mxu0
      %5619 = vmatprep.mubr.f32.mxu0 0.0
      %5620 = vmatmul.mubr.f32.gmra.mrb[0].mxu0 %v3479
      %v5621 = vpop.f32.mrb[0].mxu0
      %v5622 = vadd.f32 0.0, %v5621
      %v5623 = vpop.f32.mrb[0].mxu0
      %5624 = vmatprep.mubr.f32.mxu0 0.0
      %5625 = vmatmul.mubr.f32.gmra.mrb[0].mxu0 %v3481
      %v5626 = vpop.f32.mrb[0].mxu0
      %v5627 = vadd.f32 0.0, %v5626
      %v5628 = vpop.f32.mrb[0].mxu0
      %5629 = vmatprep.mubr.f32.mxu0 0.0
      %5630 = vmatmul.mubr.f32.gmra.mrb[0].mxu0 %v3483
      %v5631 = vpop.f32.mrb[0].mxu0
      %v5632 = vadd.f32 0.0, %v5631
      %v5633 = vpop.f32.mrb[0].mxu0
      %5634 = vmatprep.mubr.f32.mxu0 0.0
      %5635 = vmatmul.mubr.f32.gmra.mrb[0].mxu0 %v3485
      %v5636 = vpop.f32.mrb[0].mxu0
      %v5637 = vadd.f32 0.0, %v5636
      %v5638 = vpop.f32.mrb[0].mxu0
      %5639 = vmatprep.mubr.f32.mxu0 0.0
      %5640 = vmatmul.mubr.f32.gmra.mrb[0].mxu0 %v3487
      %v5641 = vpop.f32.mrb[0].mxu0
      %v5642 = vadd.f32 0.0, %v5641
      %v5643 = vpop.f32.mrb[0].mxu0
      %5644 = vmatprep.mubr.f32.mxu0 0.0
      %5645 = vmatmul.mubr.f32.gmra.mrb[0].mxu0 %v3489
      %v5646 = vpop.f32.mrb[0].mxu0
      %v5647 = vadd.f32 0.0, %v5646
      %v5648 = vpop.f32.mrb[0].mxu0
      %5649 = vmatprep.mubr.f32.mxu0 0.0
      %5650 = vmatmul.mubr.f32.gmra.mrb[0].mxu0 %v3491
      %v5651 = vpop.f32.mrb[0].mxu0
      %v5652 = vadd.f32 0.0, %v5651
      %v5653 = vpop.f32.mrb[0].mxu0
      %5654 = vmatprep.mubr.f32.mxu0 0.0
      %5655 = vmatmul.mubr.f32.gmra.mrb[0].mxu0 %v3493
      %v5656 = vpop.f32.mrb[0].mxu0
      %v5657 = vadd.f32 0.0, %v5656
      %v5658 = vpop.f32.mrb[0].mxu0
      %5659 = vmatprep.mubr.f32.mxu0 0.0
      %5660 = vmatmul.mubr.f32.gmra.mrb[0].mxu0 %v3495
      %v5661 = vpop.f32.mrb[0].mxu0
      %v5662 = vadd.f32 0.0, %v5661
      %v5663 = vpop.f32.mrb[0].mxu0
      %5664 = vmatprep.mubr.f32.mxu0 0.0
      %5665 = vmatmul.mubr.f32.gmra.mrb[0].mxu0 %v3497
      %v5666 = vpop.f32.mrb[0].mxu0
      %v5667 = vadd.f32 0.0, %v5666
      %v5668 = vpop.f32.mrb[0].mxu0
      %5669 = vmatprep.mubr.f32.mxu0 0.0
      %5670 = vmatmul.mubr.f32.gmra.mrb[0].mxu0 %v3499
      %v5671 = vpop.f32.mrb[0].mxu0
      %v5672 = vadd.f32 0.0, %v5671
      %v5673 = vpop.f32.mrb[0].mxu0
      %5674 = vmatprep.mubr.f32.mxu0 0.0
      %5675 = vmatmul.mubr.f32.gmra.mrb[0].mxu0 %v3501
      %v5676 = vpop.f32.mrb[0].mxu0
      %v5677 = vadd.f32 0.0, %v5676
      %v5678 = vpop.f32.mrb[0].mxu0
      %5679 = vmatprep.mubr.f32.mxu0 0.0
      %5680 = vmatmul.mubr.f32.gmra.mrb[0].mxu0 %v3503
      %v5681 = vpop.f32.mrb[0].mxu0
      %v5682 = vadd.f32 0.0, %v5681
      %v5683 = vpop.f32.mrb[0].mxu0
      %5684 = vmatprep.mubr.f32.mxu0 0.0
      %5685 = vmatmul.mubr.f32.gmra.mrb[0].mxu0 %v3505
      %v5686 = vpop.f32.mrb[0].mxu0
      %v5687 = vadd.f32 0.0, %v5686
      %v5688 = vpop.f32.mrb[0].mxu0
      %5689 = vmatprep.mubr.f32.mxu0 0.0
      %5690 = vmatmul.mubr.f32.gmra.mrb[0].mxu0 %v3507
      %v5691 = vpop.f32.mrb[0].mxu0
      %v5692 = vadd.f32 0.0, %v5691
      %v5693 = vpop.f32.mrb[0].mxu0
      %5694 = vmatprep.mubr.f32.mxu0 0.0
      %5695 = vmatmul.mubr.f32.gmra.mrb[0].mxu0 %v3509
      %v5696 = vpop.f32.mrb[0].mxu0
      %v5697 = vadd.f32 0.0, %v5696
      %v5698 = vpop.f32.mrb[0].mxu0
      %5699 = vmatprep.mubr.f32.mxu0 0.0
      %5700 = vmatmul.mubr.f32.gmra.mrb[0].mxu0 %v4695
      %v5701 = vpop.f32.mrb[0].mxu0
      %v5702 = vadd.f32 0.0, %v5701
      %v5703 = vpop.f32.mrb[0].mxu0
      %5704 = vmatprep.mubr.f32.mxu0 0.0
      %5705 = vmatmul.mubr.f32.gmra.mrb[0].mxu0 %v4697
      %v5706 = vpop.f32.mrb[0].mxu0
      %v5707 = vadd.f32 0.0, %v5706
      %v5708 = vpop.f32.mrb[0].mxu0
      %5709 = vmatprep.mubr.f32.mxu0 0.0
      %5710 = vmatmul.mubr.f32.gmra.mrb[0].mxu0 %v5491
      %v5711 = vpop.f32.mrb[0].mxu0
      %v5712 = vadd.f32 0.0, %v5711
      %v5713 = vpop.f32.mrb[0].mxu0
      %5714 = vmatprep.mubr.f32.mxu0 0.0
      %5715 = vmatmul.mubr.f32.gmra.mrb[0].mxu0 %v5493
      %v5716 = vpop.f32.mrb[0].mxu0
      %v5717 = vadd.f32 0.0, %v5716
      %v5718 = vpop.f32.mrb[0].mxu0
      %5719 = vdwg.mxu0
      %v5720 = vadd.f32 %v5453, %v5562
      %v5721 = vadd.f32 %v5454, %v5567
      %v5722 = vadd.f32 %v5455, %v5572
      %v5723 = vadd.f32 %v5456, %v5577
      %v5724 = vadd.f32 %v5457, %v5582
      %v5725 = vadd.f32 %v5458, %v5587
      %v5726 = vadd.f32 %v5459, %v5592
      %v5727 = vadd.f32 %v5460, %v5597
      %v5728 = vadd.f32 %v5461, %v5602
      %v5729 = vadd.f32 %v5462, %v5607
      %v5730 = vadd.f32 %v5463, %v5612
      %v5731 = vadd.f32 %v5464, %v5617
      %v5732 = vadd.f32 %v5465, %v5622
      %v5733 = vadd.f32 %v5466, %v5627
      %v5734 = vadd.f32 %v5467, %v5632
      %v5735 = vadd.f32 %v5468, %v5637
      %v5736 = vadd.f32 %v5469, %v5642
      %v5737 = vadd.f32 %v5470, %v5647
      %v5738 = vadd.f32 %v5471, %v5652
      %v5739 = vadd.f32 %v5472, %v5657
      %v5740 = vadd.f32 %v5473, %v5662
      %v5741 = vadd.f32 %v5474, %v5667
      %v5742 = vadd.f32 %v5475, %v5672
      %v5743 = vadd.f32 %v5476, %v5677
      %v5744 = vadd.f32 %v5477, %v5682
      %v5745 = vadd.f32 %v5478, %v5687
      %v5746 = vadd.f32 %v5479, %v5692
      %v5747 = vadd.f32 %v5480, %v5697
      %v5748 = vadd.f32 %v5481, %v5702
      %v5749 = vadd.f32 %v5482, %v5707
      %v5750 = vadd.f32 %v5483, %v5712
      %v5751 = vadd.f32 %v5484, %v5717
      %v5752 = vrot.slane %v3316, 2
      %v5753 = vrot.slane %v3317, 2
      %v5754 = vsel %vm1126, %v5752, %v5753
      %v5755 = vrot.slane %v3318, 2
      %v5756 = vsel %vm1126, %v5753, %v5755
      %v5757 = vsel %vm540, %v5754, 0
      %v5759 = vsel %vm540, %v5756, 0
      %5761 = vmatprep.subr.mxu0 0.0
      %5762 = vmatpush1.msra.mxu0 %v2882
      %5763 = vmatprep.subr.mxu0 0.0
      %5764 = vmatpush1.msra.mxu0 0.0
      %5765 = vmatprep.subr.mxu0 0.0
      %5766 = vmatpush1.msra.mxu0 0.0
      %5767 = vmatprep.subr.mxu0 0.0
      %5768 = vmatpush1.msra.mxu0 0.0
      %5769 = vmatprep.subr.mxu0 0.0
      %5770 = vmatpush1.msra.mxu0 0.0
      %5771 = vmatprep.subr.mxu0 0.0
      %5772 = vmatpush1.msra.mxu0 0.0
      %5773 = vmatprep.subr.mxu0 0.0
      %5774 = vmatpush1.msra.mxu0 0.0
      %5775 = vmatprep.subr.mxu0 0.0
      %5776 = vmatpush1.msra.mxu0 0.0
      %5777 = vmatprep.subr.mxu0 0.0
      %5778 = vmatpush1.msra.mxu0 0.0
      %5779 = vmatprep.subr.mxu0 0.0
      %5780 = vmatpush1.msra.mxu0 0.0
      %5781 = vmatprep.subr.mxu0 0.0
      %5782 = vmatpush1.msra.mxu0 0.0
      %5783 = vmatprep.subr.mxu0 0.0
      %5784 = vmatpush1.msra.mxu0 0.0
      %5785 = vmatprep.subr.mxu0 0.0
      %5786 = vmatpush1.msra.mxu0 0.0
      %5787 = vmatprep.subr.mxu0 0.0
      %5788 = vmatpush1.msra.mxu0 0.0
      %5789 = vmatprep.subr.mxu0 0.0
      %5790 = vmatpush1.msra.mxu0 0.0
      %5791 = vmatprep.subr.mxu0 0.0
      %5792 = vmatpush1.msra.mxu0 0.0
      %5793 = vmatprep.subr.mxu0 0.0
      %5794 = vmatpush1.msra.mxu0 0.0
      %5795 = vmatprep.subr.mxu0 0.0
      %5796 = vmatpush1.msra.mxu0 0.0
      %5797 = vmatprep.subr.mxu0 0.0
      %5798 = vmatpush1.msra.mxu0 0.0
      %5799 = vmatprep.subr.mxu0 0.0
      %5800 = vmatpush1.msra.mxu0 0.0
      %5801 = vmatprep.subr.mxu0 0.0
      %5802 = vmatpush1.msra.mxu0 0.0
      %5803 = vmatprep.subr.mxu0 0.0
      %5804 = vmatpush1.msra.mxu0 0.0
      %5805 = vmatprep.subr.mxu0 0.0
      %5806 = vmatpush1.msra.mxu0 0.0
      %5807 = vmatprep.subr.mxu0 0.0
      %5808 = vmatpush1.msra.mxu0 0.0
      %5809 = vmatprep.subr.mxu0 0.0
      %5810 = vmatpush1.msra.mxu0 0.0
      %5811 = vmatprep.subr.mxu0 0.0
      %5812 = vmatpush1.msra.mxu0 0.0
      %5813 = vmatprep.subr.mxu0 0.0
      %5814 = vmatpush1.msra.mxu0 0.0
      %5815 = vmatprep.subr.mxu0 0.0
      %5816 = vmatpush1.msra.mxu0 0.0
      %5817 = vmatprep.subr.mxu0 0.0
      %5818 = vmatpush1.msra.mxu0 0.0
      %5819 = vmatprep.subr.mxu0 0.0
      %5820 = vmatpush1.msra.mxu0 0.0
      %5821 = vmatprep.subr.mxu0 0.0
      %5822 = vmatpush1.msra.mxu0 0.0
      %5823 = vmatprep.subr.mxu0 0.0
      %5824 = vmatpush1.msra.mxu0 0.0
      %5825 = vmatprep.mubr.f32.mxu0 0.0
      %5826 = vmatmul.mubr.f32.gmra.mrb[0].mxu0 %v4113
      %v5827 = vpop.f32.mrb[0].mxu0
      %v5828 = vadd.f32 0.0, %v5827
      %v5829 = vpop.f32.mrb[0].mxu0
      %5830 = vmatprep.mubr.f32.mxu0 0.0
      %5831 = vmatmul.mubr.f32.gmra.mrb[0].mxu0 %v4115
      %v5832 = vpop.f32.mrb[0].mxu0
      %v5833 = vadd.f32 0.0, %v5832
      %v5834 = vpop.f32.mrb[0].mxu0
      %5835 = vmatprep.mubr.f32.mxu0 0.0
      %5836 = vmatmul.mubr.f32.gmra.mrb[0].mxu0 %v4117
      %v5837 = vpop.f32.mrb[0].mxu0
      %v5838 = vadd.f32 0.0, %v5837
      %v5839 = vpop.f32.mrb[0].mxu0
      %5840 = vmatprep.mubr.f32.mxu0 0.0
      %5841 = vmatmul.mubr.f32.gmra.mrb[0].mxu0 %v4119
      %v5842 = vpop.f32.mrb[0].mxu0
      %v5843 = vadd.f32 0.0, %v5842
      %v5844 = vpop.f32.mrb[0].mxu0
      %5845 = vmatprep.mubr.f32.mxu0 0.0
      %5846 = vmatmul.mubr.f32.gmra.mrb[0].mxu0 %v4121
      %v5847 = vpop.f32.mrb[0].mxu0
      %v5848 = vadd.f32 0.0, %v5847
      %v5849 = vpop.f32.mrb[0].mxu0
      %5850 = vmatprep.mubr.f32.mxu0 0.0
      %5851 = vmatmul.mubr.f32.gmra.mrb[0].mxu0 %v4123
      %v5852 = vpop.f32.mrb[0].mxu0
      %v5853 = vadd.f32 0.0, %v5852
      %v5854 = vpop.f32.mrb[0].mxu0
      %5855 = vmatprep.mubr.f32.mxu0 0.0
      %5856 = vmatmul.mubr.f32.gmra.mrb[0].mxu0 %v4125
      %v5857 = vpop.f32.mrb[0].mxu0
      %v5858 = vadd.f32 0.0, %v5857
      %v5859 = vpop.f32.mrb[0].mxu0
      %5860 = vmatprep.mubr.f32.mxu0 0.0
      %5861 = vmatmul.mubr.f32.gmra.mrb[0].mxu0 %v4127
      %v5862 = vpop.f32.mrb[0].mxu0
      %v5863 = vadd.f32 0.0, %v5862
      %v5864 = vpop.f32.mrb[0].mxu0
      %5865 = vmatprep.mubr.f32.mxu0 0.0
      %5866 = vmatmul.mubr.f32.gmra.mrb[0].mxu0 %v4129
      %v5867 = vpop.f32.mrb[0].mxu0
      %v5868 = vadd.f32 0.0, %v5867
      %v5869 = vpop.f32.mrb[0].mxu0
      %5870 = vmatprep.mubr.f32.mxu0 0.0
      %5871 = vmatmul.mubr.f32.gmra.mrb[0].mxu0 %v4131
      %v5872 = vpop.f32.mrb[0].mxu0
      %v5873 = vadd.f32 0.0, %v5872
      %v5874 = vpop.f32.mrb[0].mxu0
      %5875 = vmatprep.mubr.f32.mxu0 0.0
      %5876 = vmatmul.mubr.f32.gmra.mrb[0].mxu0 %v4133
      %v5877 = vpop.f32.mrb[0].mxu0
      %v5878 = vadd.f32 0.0, %v5877
      %v5879 = vpop.f32.mrb[0].mxu0
      %5880 = vmatprep.mubr.f32.mxu0 0.0
      %5881 = vmatmul.mubr.f32.gmra.mrb[0].mxu0 %v4135
      %v5882 = vpop.f32.mrb[0].mxu0
      %v5883 = vadd.f32 0.0, %v5882
      %v5884 = vpop.f32.mrb[0].mxu0
      %5885 = vmatprep.mubr.f32.mxu0 0.0
      %5886 = vmatmul.mubr.f32.gmra.mrb[0].mxu0 %v4137
      %v5887 = vpop.f32.mrb[0].mxu0
      %v5888 = vadd.f32 0.0, %v5887
      %v5889 = vpop.f32.mrb[0].mxu0
      %5890 = vmatprep.mubr.f32.mxu0 0.0
      %5891 = vmatmul.mubr.f32.gmra.mrb[0].mxu0 %v4139
      %v5892 = vpop.f32.mrb[0].mxu0
      %v5893 = vadd.f32 0.0, %v5892
      %v5894 = vpop.f32.mrb[0].mxu0
      %5895 = vmatprep.mubr.f32.mxu0 0.0
      %5896 = vmatmul.mubr.f32.gmra.mrb[0].mxu0 %v4141
      %v5897 = vpop.f32.mrb[0].mxu0
      %v5898 = vadd.f32 0.0, %v5897
      %v5899 = vpop.f32.mrb[0].mxu0
      %5900 = vmatprep.mubr.f32.mxu0 0.0
      %5901 = vmatmul.mubr.f32.gmra.mrb[0].mxu0 %v4143
      %v5902 = vpop.f32.mrb[0].mxu0
      %v5903 = vadd.f32 0.0, %v5902
      %v5904 = vpop.f32.mrb[0].mxu0
      %5905 = vmatprep.mubr.f32.mxu0 0.0
      %5906 = vmatmul.mubr.f32.gmra.mrb[0].mxu0 %v4145
      %v5907 = vpop.f32.mrb[0].mxu0
      %v5908 = vadd.f32 0.0, %v5907
      %v5909 = vpop.f32.mrb[0].mxu0
      %5910 = vmatprep.mubr.f32.mxu0 0.0
      %5911 = vmatmul.mubr.f32.gmra.mrb[0].mxu0 %v4147
      %v5912 = vpop.f32.mrb[0].mxu0
      %v5913 = vadd.f32 0.0, %v5912
      %v5914 = vpop.f32.mrb[0].mxu0
      %5915 = vmatprep.mubr.f32.mxu0 0.0
      %5916 = vmatmul.mubr.f32.gmra.mrb[0].mxu0 %v4149
      %v5917 = vpop.f32.mrb[0].mxu0
      %v5918 = vadd.f32 0.0, %v5917
      %v5919 = vpop.f32.mrb[0].mxu0
      %5920 = vmatprep.mubr.f32.mxu0 0.0
      %5921 = vmatmul.mubr.f32.gmra.mrb[0].mxu0 %v4151
      %v5922 = vpop.f32.mrb[0].mxu0
      %v5923 = vadd.f32 0.0, %v5922
      %v5924 = vpop.f32.mrb[0].mxu0
      %5925 = vmatprep.mubr.f32.mxu0 0.0
      %5926 = vmatmul.mubr.f32.gmra.mrb[0].mxu0 %v4153
      %v5927 = vpop.f32.mrb[0].mxu0
      %v5928 = vadd.f32 0.0, %v5927
      %v5929 = vpop.f32.mrb[0].mxu0
      %5930 = vmatprep.mubr.f32.mxu0 0.0
      %5931 = vmatmul.mubr.f32.gmra.mrb[0].mxu0 %v4155
      %v5932 = vpop.f32.mrb[0].mxu0
      %v5933 = vadd.f32 0.0, %v5932
      %v5934 = vpop.f32.mrb[0].mxu0
      %5935 = vmatprep.mubr.f32.mxu0 0.0
      %5936 = vmatmul.mubr.f32.gmra.mrb[0].mxu0 %v4157
      %v5937 = vpop.f32.mrb[0].mxu0
      %v5938 = vadd.f32 0.0, %v5937
      %v5939 = vpop.f32.mrb[0].mxu0
      %5940 = vmatprep.mubr.f32.mxu0 0.0
      %5941 = vmatmul.mubr.f32.gmra.mrb[0].mxu0 %v4159
      %v5942 = vpop.f32.mrb[0].mxu0
      %v5943 = vadd.f32 0.0, %v5942
      %v5944 = vpop.f32.mrb[0].mxu0
      %5945 = vmatprep.mubr.f32.mxu0 0.0
      %5946 = vmatmul.mubr.f32.gmra.mrb[0].mxu0 %v4161
      %v5947 = vpop.f32.mrb[0].mxu0
      %v5948 = vadd.f32 0.0, %v5947
      %v5949 = vpop.f32.mrb[0].mxu0
      %5950 = vmatprep.mubr.f32.mxu0 0.0
      %5951 = vmatmul.mubr.f32.gmra.mrb[0].mxu0 %v4163
      %v5952 = vpop.f32.mrb[0].mxu0
      %v5953 = vadd.f32 0.0, %v5952
      %v5954 = vpop.f32.mrb[0].mxu0
      %5955 = vmatprep.mubr.f32.mxu0 0.0
      %5956 = vmatmul.mubr.f32.gmra.mrb[0].mxu0 %v4165
      %v5957 = vpop.f32.mrb[0].mxu0
      %v5958 = vadd.f32 0.0, %v5957
      %v5959 = vpop.f32.mrb[0].mxu0
      %5960 = vmatprep.mubr.f32.mxu0 0.0
      %5961 = vmatmul.mubr.f32.gmra.mrb[0].mxu0 %v4167
      %v5962 = vpop.f32.mrb[0].mxu0
      %v5963 = vadd.f32 0.0, %v5962
      %v5964 = vpop.f32.mrb[0].mxu0
      %5965 = vmatprep.mubr.f32.mxu0 0.0
      %5966 = vmatmul.mubr.f32.gmra.mrb[0].mxu0 %v4961
      %v5967 = vpop.f32.mrb[0].mxu0
      %v5968 = vadd.f32 0.0, %v5967
      %v5969 = vpop.f32.mrb[0].mxu0
      %5970 = vmatprep.mubr.f32.mxu0 0.0
      %5971 = vmatmul.mubr.f32.gmra.mrb[0].mxu0 %v4963
      %v5972 = vpop.f32.mrb[0].mxu0
      %v5973 = vadd.f32 0.0, %v5972
      %v5974 = vpop.f32.mrb[0].mxu0
      %5975 = vmatprep.mubr.f32.mxu0 0.0
      %5976 = vmatmul.mubr.f32.gmra.mrb[0].mxu0 %v5757
      %v5977 = vpop.f32.mrb[0].mxu0
      %v5978 = vadd.f32 0.0, %v5977
      %v5979 = vpop.f32.mrb[0].mxu0
      %5980 = vmatprep.mubr.f32.mxu0 0.0
      %5981 = vmatmul.mubr.f32.gmra.mrb[0].mxu0 %v5759
      %v5982 = vpop.f32.mrb[0].mxu0
      %v5983 = vadd.f32 0.0, %v5982
      %v5984 = vpop.f32.mrb[0].mxu0
      %5985 = vdwg.mxu0
      %v5986 = vadd.f32 %v5720, %v5828
      %v5987 = vadd.f32 %v5721, %v5833
      %v5988 = vadd.f32 %v5722, %v5838
      %v5989 = vadd.f32 %v5723, %v5843
      %v5990 = vadd.f32 %v5724, %v5848
      %v5991 = vadd.f32 %v5725, %v5853
      %v5992 = vadd.f32 %v5726, %v5858
      %v5993 = vadd.f32 %v5727, %v5863
      %v5994 = vadd.f32 %v5728, %v5868
      %v5995 = vadd.f32 %v5729, %v5873
      %v5996 = vadd.f32 %v5730, %v5878
      %v5997 = vadd.f32 %v5731, %v5883
      %v5998 = vadd.f32 %v5732, %v5888
      %v5999 = vadd.f32 %v5733, %v5893
      %v6000 = vadd.f32 %v5734, %v5898
      %v6001 = vadd.f32 %v5735, %v5903
      %v6002 = vadd.f32 %v5736, %v5908
      %v6003 = vadd.f32 %v5737, %v5913
      %v6004 = vadd.f32 %v5738, %v5918
      %v6005 = vadd.f32 %v5739, %v5923
      %v6006 = vadd.f32 %v5740, %v5928
      %v6007 = vadd.f32 %v5741, %v5933
      %v6008 = vadd.f32 %v5742, %v5938
      %v6009 = vadd.f32 %v5743, %v5943
      %v6010 = vadd.f32 %v5744, %v5948
      %v6011 = vadd.f32 %v5745, %v5953
      %v6012 = vadd.f32 %v5746, %v5958
      %v6013 = vadd.f32 %v5747, %v5963
      %v6014 = vadd.f32 %v5748, %v5968
      %v6015 = vadd.f32 %v5749, %v5973
      %v6016 = vadd.f32 %v5750, %v5978
      %v6017 = vadd.f32 %v5751, %v5983
      %v6018 = vadd.f32 %v5986, %v3145
      %v6019 = vadd.f32 %v5987, %v3145
      %v6020 = vadd.f32 %v5988, %v3145
      %v6021 = vadd.f32 %v5989, %v3145
      %v6022 = vadd.f32 %v5990, %v3145
      %v6023 = vadd.f32 %v5991, %v3145
      %v6024 = vadd.f32 %v5992, %v3145
      %v6025 = vadd.f32 %v5993, %v3145
      %v6026 = vadd.f32 %v5994, %v3145
      %v6027 = vadd.f32 %v5995, %v3145
      %v6028 = vadd.f32 %v5996, %v3145
      %v6029 = vadd.f32 %v5997, %v3145
      %v6030 = vadd.f32 %v5998, %v3145
      %v6031 = vadd.f32 %v5999, %v3145
      %v6032 = vadd.f32 %v6000, %v3145
      %v6033 = vadd.f32 %v6001, %v3145
      %v6034 = vadd.f32 %v6002, %v3145
      %v6035 = vadd.f32 %v6003, %v3145
      %v6036 = vadd.f32 %v6004, %v3145
      %v6037 = vadd.f32 %v6005, %v3145
      %v6038 = vadd.f32 %v6006, %v3145
      %v6039 = vadd.f32 %v6007, %v3145
      %v6040 = vadd.f32 %v6008, %v3145
      %v6041 = vadd.f32 %v6009, %v3145
      %v6042 = vadd.f32 %v6010, %v3145
      %v6043 = vadd.f32 %v6011, %v3145
      %v6044 = vadd.f32 %v6012, %v3145
      %v6045 = vadd.f32 %v6013, %v3145
      %v6046 = vadd.f32 %v6014, %v3145
      %v6047 = vadd.f32 %v6015, %v3145
      %v6048 = vadd.f32 %v6016, %v3145
      %v6049 = vadd.f32 %v6017, %v3145
      %v6050 = vmax.f32 %v6018, 0.0
      %v6051 = vmax.f32 %v6019, 0.0
      %v6052 = vmax.f32 %v6020, 0.0
      %v6053 = vmax.f32 %v6021, 0.0
      %v6054 = vmax.f32 %v6022, 0.0
      %v6055 = vmax.f32 %v6023, 0.0
      %v6056 = vmax.f32 %v6024, 0.0
      %v6057 = vmax.f32 %v6025, 0.0
      %v6058 = vmax.f32 %v6026, 0.0
      %v6059 = vmax.f32 %v6027, 0.0
      %v6060 = vmax.f32 %v6028, 0.0
      %v6061 = vmax.f32 %v6029, 0.0
      %v6062 = vmax.f32 %v6030, 0.0
      %v6063 = vmax.f32 %v6031, 0.0
      %v6064 = vmax.f32 %v6032, 0.0
      %v6065 = vmax.f32 %v6033, 0.0
      %v6066 = vmax.f32 %v6034, 0.0
      %v6067 = vmax.f32 %v6035, 0.0
      %v6068 = vmax.f32 %v6036, 0.0
      %v6069 = vmax.f32 %v6037, 0.0
      %v6070 = vmax.f32 %v6038, 0.0
      %v6071 = vmax.f32 %v6039, 0.0
      %v6072 = vmax.f32 %v6040, 0.0
      %v6073 = vmax.f32 %v6041, 0.0
      %v6074 = vmax.f32 %v6042, 0.0
      %v6075 = vmax.f32 %v6043, 0.0
      %v6076 = vmax.f32 %v6044, 0.0
      %v6077 = vmax.f32 %v6045, 0.0
      %v6078 = vmax.f32 %v6046, 0.0
      %v6079 = vmax.f32 %v6047, 0.0
      %v6080 = vmax.f32 %v6048, 0.0
      %v6081 = vmax.f32 %v6049, 0.0
      %v6082 = vpack.c.bf16 %v3180, %v3179
      %v6083 = vpack.c.bf16 %v3182, %v3181
      %v6084 = vpack.c.bf16 %v3184, %v3183
      %v6085 = vpack.c.bf16 %v3186, %v3185
      %v6086 = vpack.c.bf16 %v3188, %v3187
      %v6087 = vpack.c.bf16 %v3190, %v3189
      %v6088 = vpack.c.bf16 %v3192, %v3191
      %v6089 = vpack.c.bf16 %v3194, %v3193
      %v6090 = vpack.c.bf16 %v3196, %v3195
      %v6091 = vpack.c.bf16 %v3198, %v3197
      %v6092 = vpack.c.bf16 %v3200, %v3199
      %v6093 = vpack.c.bf16 %v3202, %v3201
      %v6094 = vpack.c.bf16 %v3204, %v3203
      %v6095 = vpack.c.bf16 %v3206, %v3205
      %v6096 = vpack.c.bf16 %v3208, %v3207
      %v6097 = vpack.c.bf16 %v3210, %v3209
      %v6114 = vunpack.c.l.b16 %v6082
      %v6115 = vunpack.c.h.b16 %v6082
      %v6116 = vunpack.c.l.b16 %v6083
      %v6117 = vunpack.c.h.b16 %v6083
      %v6118 = vunpack.c.l.b16 %v6084
      %v6119 = vunpack.c.h.b16 %v6084
      %v6120 = vunpack.c.l.b16 %v6085
      %v6121 = vunpack.c.h.b16 %v6085
      %v6122 = vunpack.c.l.b16 %v6086
      %v6123 = vunpack.c.h.b16 %v6086
      %v6124 = vunpack.c.l.b16 %v6087
      %v6125 = vunpack.c.h.b16 %v6087
      %v6126 = vunpack.c.l.b16 %v6088
      %v6127 = vunpack.c.h.b16 %v6088
      %v6128 = vunpack.c.l.b16 %v6089
      %v6129 = vunpack.c.h.b16 %v6089
      %v6130 = vunpack.c.l.b16 %v6090
      %v6131 = vunpack.c.h.b16 %v6090
      %v6132 = vunpack.c.l.b16 %v6091
      %v6133 = vunpack.c.h.b16 %v6091
      %v6134 = vunpack.c.l.b16 %v6092
      %v6135 = vunpack.c.h.b16 %v6092
      %v6136 = vunpack.c.l.b16 %v6093
      %v6137 = vunpack.c.h.b16 %v6093
      %v6138 = vunpack.c.l.b16 %v6094
      %v6139 = vunpack.c.h.b16 %v6094
      %v6140 = vunpack.c.l.b16 %v6095
      %v6141 = vunpack.c.h.b16 %v6095
      %v6142 = vunpack.c.l.b16 %v6096
      %v6143 = vunpack.c.h.b16 %v6096
      %v6144 = vunpack.c.l.b16 %v6097
      %v6145 = vunpack.c.h.b16 %v6097
      %v6146 = vpack.c.b16 %v6114, %v6114
      %v6147 = vpack.c.b16 %v6115, %v6115
      %v6148 = vpack.c.b16 %v6116, %v6116
      %v6149 = vpack.c.b16 %v6117, %v6117
      %v6150 = vpack.c.b16 %v6118, %v6118
      %v6151 = vpack.c.b16 %v6119, %v6119
      %v6152 = vpack.c.b16 %v6120, %v6120
      %v6153 = vpack.c.b16 %v6121, %v6121
      %v6154 = vpack.c.b16 %v6122, %v6122
      %v6155 = vpack.c.b16 %v6123, %v6123
      %v6156 = vpack.c.b16 %v6124, %v6124
      %v6157 = vpack.c.b16 %v6125, %v6125
      %v6158 = vpack.c.b16 %v6126, %v6126
      %v6159 = vpack.c.b16 %v6127, %v6127
      %v6160 = vpack.c.b16 %v6128, %v6128
      %v6161 = vpack.c.b16 %v6129, %v6129
      %v6162 = vpack.c.b16 %v6130, %v6130
      %v6163 = vpack.c.b16 %v6131, %v6131
      %v6164 = vpack.c.b16 %v6132, %v6132
      %v6165 = vpack.c.b16 %v6133, %v6133
      %v6166 = vpack.c.b16 %v6134, %v6134
      %v6167 = vpack.c.b16 %v6135, %v6135
      %v6168 = vpack.c.b16 %v6136, %v6136
      %v6169 = vpack.c.b16 %v6137, %v6137
      %v6170 = vpack.c.b16 %v6138, %v6138
      %v6171 = vpack.c.b16 %v6139, %v6139
      %v6172 = vpack.c.b16 %v6140, %v6140
      %v6173 = vpack.c.b16 %v6141, %v6141
      %v6174 = vpack.c.b16 %v6142, %v6142
      %v6175 = vpack.c.b16 %v6143, %v6143
      %v6176 = vpack.c.b16 %v6144, %v6144
      %v6177 = vpack.c.b16 %v6145, %v6145
      %vm6210 = vcmask 60416
      %6211 = vst.msk [vmem:[%s284] sm:$0xf] %vm6210, %v6146
      %6212 = vst.msk [vmem:[%s284 + $0x4] sm:$0xf] %vm6210, %v6147
      %6213 = vst.msk [vmem:[%s284 + $0x8] sm:$0xf] %vm6210, %v6148
      %6214 = vst.msk [vmem:[%s284 + $0xc] sm:$0xf] %vm6210, %v6149
      %6215 = vst.msk [vmem:[%s284 + $0x10] sm:$0xf] %vm6210, %v6150
      %6216 = vst.msk [vmem:[%s284 + $0x14] sm:$0xf] %vm6210, %v6151
      %6217 = vst.msk [vmem:[%s284 + $0x18] sm:$0xf] %vm6210, %v6152
      %6218 = vst.msk [vmem:[%s284 + $0x1c] sm:$0xf] %vm6210, %v6153
      %6219 = vst.msk [vmem:[%s284 + $0x20] sm:$0xf] %vm6210, %v6154
      %6220 = vst.msk [vmem:[%s284 + $0x24] sm:$0xf] %vm6210, %v6155
      %6221 = vst.msk [vmem:[%s284 + $0x28] sm:$0xf] %vm6210, %v6156
      %6222 = vst.msk [vmem:[%s284 + $0x2c] sm:$0xf] %vm6210, %v6157
      %6223 = vst.msk [vmem:[%s284 + $0x30] sm:$0xf] %vm6210, %v6158
      %6224 = vst.msk [vmem:[%s284 + $0x34] sm:$0xf] %vm6210, %v6159
      %6225 = vst.msk [vmem:[%s284 + $0x38] sm:$0xf] %vm6210, %v6160
      %6226 = vst.msk [vmem:[%s284 + $0x3c] sm:$0xf] %vm6210, %v6161
      %6227 = vst.msk [vmem:[%s284 + $0x40] sm:$0xf] %vm6210, %v6162
      %6228 = vst.msk [vmem:[%s284 + $0x44] sm:$0xf] %vm6210, %v6163
      %6229 = vst.msk [vmem:[%s284 + $0x48] sm:$0xf] %vm6210, %v6164
      %6230 = vst.msk [vmem:[%s284 + $0x4c] sm:$0xf] %vm6210, %v6165
      %6231 = vst.msk [vmem:[%s284 + $0x50] sm:$0xf] %vm6210, %v6166
      %6232 = vst.msk [vmem:[%s284 + $0x54] sm:$0xf] %vm6210, %v6167
      %6233 = vst.msk [vmem:[%s284 + $0x58] sm:$0xf] %vm6210, %v6168
      %6234 = vst.msk [vmem:[%s284 + $0x5c] sm:$0xf] %vm6210, %v6169
      %6235 = vst.msk [vmem:[%s284 + $0x60] sm:$0xf] %vm6210, %v6170
      %6236 = vst.msk [vmem:[%s284 + $0x64] sm:$0xf] %vm6210, %v6171
      %6237 = vst.msk [vmem:[%s284 + $0x68] sm:$0xf] %vm6210, %v6172
      %6238 = vst.msk [vmem:[%s284 + $0x6c] sm:$0xf] %vm6210, %v6173
      %6239 = vst.msk [vmem:[%s284 + $0x70] sm:$0xf] %vm6210, %v6174
      %6240 = vst.msk [vmem:[%s284 + $0x74] sm:$0xf] %vm6210, %v6175
      %6241 = vst.msk [vmem:[%s284 + $0x78] sm:$0xf] %vm6210, %v6176
      %6242 = vst.msk [vmem:[%s284 + $0x7c] sm:$0xf] %vm6210, %v6177
      %v6243 = vpack.c.bf16 %v6051, %v6050
      %v6244 = vpack.c.bf16 %v6053, %v6052
      %v6245 = vpack.c.bf16 %v6055, %v6054
      %v6246 = vpack.c.bf16 %v6057, %v6056
      %v6247 = vpack.c.bf16 %v6059, %v6058
      %v6248 = vpack.c.bf16 %v6061, %v6060
      %v6249 = vpack.c.bf16 %v6063, %v6062
      %v6250 = vpack.c.bf16 %v6065, %v6064
      %v6251 = vpack.c.bf16 %v6067, %v6066
      %v6252 = vpack.c.bf16 %v6069, %v6068
      %v6253 = vpack.c.bf16 %v6071, %v6070
      %v6254 = vpack.c.bf16 %v6073, %v6072
      %v6255 = vpack.c.bf16 %v6075, %v6074
      %v6256 = vpack.c.bf16 %v6077, %v6076
      %v6257 = vpack.c.bf16 %v6079, %v6078
      %v6258 = vpack.c.bf16 %v6081, %v6080
      %v6275 = vunpack.c.l.b16 %v6243
      %v6276 = vunpack.c.h.b16 %v6243
      %v6277 = vunpack.c.l.b16 %v6244
      %v6278 = vunpack.c.h.b16 %v6244
      %v6279 = vunpack.c.l.b16 %v6245
      %v6280 = vunpack.c.h.b16 %v6245
      %v6281 = vunpack.c.l.b16 %v6246
      %v6282 = vunpack.c.h.b16 %v6246
      %v6283 = vunpack.c.l.b16 %v6247
      %v6284 = vunpack.c.h.b16 %v6247
      %v6285 = vunpack.c.l.b16 %v6248
      %v6286 = vunpack.c.h.b16 %v6248
      %v6287 = vunpack.c.l.b16 %v6249
      %v6288 = vunpack.c.h.b16 %v6249
      %v6289 = vunpack.c.l.b16 %v6250
      %v6290 = vunpack.c.h.b16 %v6250
      %v6291 = vunpack.c.l.b16 %v6251
      %v6292 = vunpack.c.h.b16 %v6251
      %v6293 = vunpack.c.l.b16 %v6252
      %v6294 = vunpack.c.h.b16 %v6252
      %v6295 = vunpack.c.l.b16 %v6253
      %v6296 = vunpack.c.h.b16 %v6253
      %v6297 = vunpack.c.l.b16 %v6254
      %v6298 = vunpack.c.h.b16 %v6254
      %v6299 = vunpack.c.l.b16 %v6255
      %v6300 = vunpack.c.h.b16 %v6255
      %v6301 = vunpack.c.l.b16 %v6256
      %v6302 = vunpack.c.h.b16 %v6256
      %v6303 = vunpack.c.l.b16 %v6257
      %v6304 = vunpack.c.h.b16 %v6257
      %v6305 = vunpack.c.l.b16 %v6258
      %v6306 = vunpack.c.h.b16 %v6258
      %v6307 = vpack.c.b16 %v6275, %v6275
      %v6308 = vpack.c.b16 %v6276, %v6276
      %v6309 = vpack.c.b16 %v6277, %v6277
      %v6310 = vpack.c.b16 %v6278, %v6278
      %v6311 = vpack.c.b16 %v6279, %v6279
      %v6312 = vpack.c.b16 %v6280, %v6280
      %v6313 = vpack.c.b16 %v6281, %v6281
      %v6314 = vpack.c.b16 %v6282, %v6282
      %v6315 = vpack.c.b16 %v6283, %v6283
      %v6316 = vpack.c.b16 %v6284, %v6284
      %v6317 = vpack.c.b16 %v6285, %v6285
      %v6318 = vpack.c.b16 %v6286, %v6286
      %v6319 = vpack.c.b16 %v6287, %v6287
      %v6320 = vpack.c.b16 %v6288, %v6288
      %v6321 = vpack.c.b16 %v6289, %v6289
      %v6322 = vpack.c.b16 %v6290, %v6290
      %v6323 = vpack.c.b16 %v6291, %v6291
      %v6324 = vpack.c.b16 %v6292, %v6292
      %v6325 = vpack.c.b16 %v6293, %v6293
      %v6326 = vpack.c.b16 %v6294, %v6294
      %v6327 = vpack.c.b16 %v6295, %v6295
      %v6328 = vpack.c.b16 %v6296, %v6296
      %v6329 = vpack.c.b16 %v6297, %v6297
      %v6330 = vpack.c.b16 %v6298, %v6298
      %v6331 = vpack.c.b16 %v6299, %v6299
      %v6332 = vpack.c.b16 %v6300, %v6300
      %v6333 = vpack.c.b16 %v6301, %v6301
      %v6334 = vpack.c.b16 %v6302, %v6302
      %v6335 = vpack.c.b16 %v6303, %v6303
      %v6336 = vpack.c.b16 %v6304, %v6304
      %v6337 = vpack.c.b16 %v6305, %v6305
      %v6338 = vpack.c.b16 %v6306, %v6306
      %6371 = vst.msk [vmem:[%s289] sm:$0xf] %vm6210, %v6307
      %6372 = vst.msk [vmem:[%s289 + $0x4] sm:$0xf] %vm6210, %v6308
      %6373 = vst.msk [vmem:[%s289 + $0x8] sm:$0xf] %vm6210, %v6309
      %6374 = vst.msk [vmem:[%s289 + $0xc] sm:$0xf] %vm6210, %v6310
      %6375 = vst.msk [vmem:[%s289 + $0x10] sm:$0xf] %vm6210, %v6311
      %6376 = vst.msk [vmem:[%s289 + $0x14] sm:$0xf] %vm6210, %v6312
      %6377 = vst.msk [vmem:[%s289 + $0x18] sm:$0xf] %vm6210, %v6313
      %6378 = vst.msk [vmem:[%s289 + $0x1c] sm:$0xf] %vm6210, %v6314
      %6379 = vst.msk [vmem:[%s289 + $0x20] sm:$0xf] %vm6210, %v6315
      %6380 = vst.msk [vmem:[%s289 + $0x24] sm:$0xf] %vm6210, %v6316
      %6381 = vst.msk [vmem:[%s289 + $0x28] sm:$0xf] %vm6210, %v6317
      %6382 = vst.msk [vmem:[%s289 + $0x2c] sm:$0xf] %vm6210, %v6318
      %6383 = vst.msk [vmem:[%s289 + $0x30] sm:$0xf] %vm6210, %v6319
      %6384 = vst.msk [vmem:[%s289 + $0x34] sm:$0xf] %vm6210, %v6320
      %6385 = vst.msk [vmem:[%s289 + $0x38] sm:$0xf] %vm6210, %v6321
      %6386 = vst.msk [vmem:[%s289 + $0x3c] sm:$0xf] %vm6210, %v6322
      %6387 = vst.msk [vmem:[%s289 + $0x40] sm:$0xf] %vm6210, %v6323
      %6388 = vst.msk [vmem:[%s289 + $0x44] sm:$0xf] %vm6210, %v6324
      %6389 = vst.msk [vmem:[%s289 + $0x48] sm:$0xf] %vm6210, %v6325
      %6390 = vst.msk [vmem:[%s289 + $0x4c] sm:$0xf] %vm6210, %v6326
      %6391 = vst.msk [vmem:[%s289 + $0x50] sm:$0xf] %vm6210, %v6327
      %6392 = vst.msk [vmem:[%s289 + $0x54] sm:$0xf] %vm6210, %v6328
      %6393 = vst.msk [vmem:[%s289 + $0x58] sm:$0xf] %vm6210, %v6329
      %6394 = vst.msk [vmem:[%s289 + $0x5c] sm:$0xf] %vm6210, %v6330
      %6395 = vst.msk [vmem:[%s289 + $0x60] sm:$0xf] %vm6210, %v6331
      %6396 = vst.msk [vmem:[%s289 + $0x64] sm:$0xf] %vm6210, %v6332
      %6397 = vst.msk [vmem:[%s289 + $0x68] sm:$0xf] %vm6210, %v6333
      %6398 = vst.msk [vmem:[%s289 + $0x6c] sm:$0xf] %vm6210, %v6334
      %6399 = vst.msk [vmem:[%s289 + $0x70] sm:$0xf] %vm6210, %v6335
      %6400 = vst.msk [vmem:[%s289 + $0x74] sm:$0xf] %vm6210, %v6336
      %6401 = vst.msk [vmem:[%s289 + $0x78] sm:$0xf] %vm6210, %v6337
      %6402 = vst.msk [vmem:[%s289 + $0x7c] sm:$0xf] %vm6210, %v6338
      %v6403 = vsub.f32 %v3179, %v6050
      %v6404 = vsub.f32 %v3180, %v6051
      %v6405 = vsub.f32 %v3181, %v6052
      %v6406 = vsub.f32 %v3182, %v6053
      %v6407 = vsub.f32 %v3183, %v6054
      %v6408 = vsub.f32 %v3184, %v6055
      %v6409 = vsub.f32 %v3185, %v6056
      %v6410 = vsub.f32 %v3186, %v6057
      %v6411 = vsub.f32 %v3187, %v6058
      %v6412 = vsub.f32 %v3188, %v6059
      %v6413 = vsub.f32 %v3189, %v6060
      %v6414 = vsub.f32 %v3190, %v6061
      %v6415 = vsub.f32 %v3191, %v6062
      %v6416 = vsub.f32 %v3192, %v6063
      %v6417 = vsub.f32 %v3193, %v6064
      %v6418 = vsub.f32 %v3194, %v6065
      %v6419 = vsub.f32 %v3195, %v6066
      %v6420 = vsub.f32 %v3196, %v6067
      %v6421 = vsub.f32 %v3197, %v6068
      %v6422 = vsub.f32 %v3198, %v6069
      %v6423 = vsub.f32 %v3199, %v6070
      %v6424 = vsub.f32 %v3200, %v6071
      %v6425 = vsub.f32 %v3201, %v6072
      %v6426 = vsub.f32 %v3202, %v6073
      %v6427 = vsub.f32 %v3203, %v6074
      %v6428 = vsub.f32 %v3204, %v6075
      %v6429 = vsub.f32 %v3205, %v6076
      %v6430 = vsub.f32 %v3206, %v6077
      %v6431 = vsub.f32 %v3207, %v6078
      %v6432 = vsub.f32 %v3208, %v6079
      %v6433 = vsub.f32 %v3209, %v6080
      %v6434 = vsub.f32 %v3210, %v6081
      %v6435 = vand.u32 2147483647, %v6403
      %v6436 = vand.u32 2147483647, %v6404
      %v6437 = vand.u32 2147483647, %v6405
      %v6438 = vand.u32 2147483647, %v6406
      %v6439 = vand.u32 2147483647, %v6407
      %v6440 = vand.u32 2147483647, %v6408
      %v6441 = vand.u32 2147483647, %v6409
      %v6442 = vand.u32 2147483647, %v6410
      %v6443 = vand.u32 2147483647, %v6411
      %v6444 = vand.u32 2147483647, %v6412
      %v6445 = vand.u32 2147483647, %v6413
      %v6446 = vand.u32 2147483647, %v6414
      %v6447 = vand.u32 2147483647, %v6415
      %v6448 = vand.u32 2147483647, %v6416
      %v6449 = vand.u32 2147483647, %v6417
      %v6450 = vand.u32 2147483647, %v6418
      %v6451 = vand.u32 2147483647, %v6419
      %v6452 = vand.u32 2147483647, %v6420
      %v6453 = vand.u32 2147483647, %v6421
      %v6454 = vand.u32 2147483647, %v6422
      %v6455 = vand.u32 2147483647, %v6423
      %v6456 = vand.u32 2147483647, %v6424
      %v6457 = vand.u32 2147483647, %v6425
      %v6458 = vand.u32 2147483647, %v6426
      %v6459 = vand.u32 2147483647, %v6427
      %v6460 = vand.u32 2147483647, %v6428
      %v6461 = vand.u32 2147483647, %v6429
      %v6462 = vand.u32 2147483647, %v6430
      %v6463 = vand.u32 2147483647, %v6431
      %v6464 = vand.u32 2147483647, %v6432
      %v6465 = vand.u32 2147483647, %v6433
      %v6466 = vand.u32 2147483647, %v6434
      %vm6467 = vcmask 64512
      %v6468 = vsel %vm6467, %v6435, 0.0
      %v6469 = vsel %vm6467, %v6436, 0.0
      %v6470 = vadd.f32 %v6468, %v6469
      %v6471 = vsel %vm6467, %v6437, 0.0
      %v6472 = vadd.f32 %v6470, %v6471
      %v6473 = vsel %vm6467, %v6438, 0.0
      %v6474 = vadd.f32 %v6472, %v6473
      %v6475 = vsel %vm6467, %v6439, 0.0
      %v6476 = vadd.f32 %v6474, %v6475
      %v6477 = vsel %vm6467, %v6440, 0.0
      %v6478 = vadd.f32 %v6476, %v6477
      %v6479 = vsel %vm6467, %v6441, 0.0
      %v6480 = vadd.f32 %v6478, %v6479
      %v6481 = vsel %vm6467, %v6442, 0.0
      %v6482 = vadd.f32 %v6480, %v6481
      %v6483 = vsel %vm6467, %v6443, 0.0
      %v6484 = vadd.f32 %v6482, %v6483
      %v6485 = vsel %vm6467, %v6444, 0.0
      %v6486 = vadd.f32 %v6484, %v6485
      %v6487 = vsel %vm6467, %v6445, 0.0
      %v6488 = vadd.f32 %v6486, %v6487
      %v6489 = vsel %vm6467, %v6446, 0.0
      %v6490 = vadd.f32 %v6488, %v6489
      %v6491 = vsel %vm6467, %v6447, 0.0
      %v6492 = vadd.f32 %v6490, %v6491
      %v6493 = vsel %vm6467, %v6448, 0.0
      %v6494 = vadd.f32 %v6492, %v6493
      %v6495 = vsel %vm6467, %v6449, 0.0
      %v6496 = vadd.f32 %v6494, %v6495
      %v6497 = vsel %vm6467, %v6450, 0.0
      %v6498 = vadd.f32 %v6496, %v6497
      %v6499 = vsel %vm6467, %v6451, 0.0
      %v6500 = vadd.f32 %v6498, %v6499
      %v6501 = vsel %vm6467, %v6452, 0.0
      %v6502 = vadd.f32 %v6500, %v6501
      %v6503 = vsel %vm6467, %v6453, 0.0
      %v6504 = vadd.f32 %v6502, %v6503
      %v6505 = vsel %vm6467, %v6454, 0.0
      %v6506 = vadd.f32 %v6504, %v6505
      %v6507 = vsel %vm6467, %v6455, 0.0
      %v6508 = vadd.f32 %v6506, %v6507
      %v6509 = vsel %vm6467, %v6456, 0.0
      %v6510 = vadd.f32 %v6508, %v6509
      %v6511 = vsel %vm6467, %v6457, 0.0
      %v6512 = vadd.f32 %v6510, %v6511
      %v6513 = vsel %vm6467, %v6458, 0.0
      %v6514 = vadd.f32 %v6512, %v6513
      %v6515 = vsel %vm6467, %v6459, 0.0
      %v6516 = vadd.f32 %v6514, %v6515
      %v6517 = vsel %vm6467, %v6460, 0.0
      %v6518 = vadd.f32 %v6516, %v6517
      %v6519 = vsel %vm6467, %v6461, 0.0
      %v6520 = vadd.f32 %v6518, %v6519
      %v6521 = vsel %vm6467, %v6462, 0.0
      %v6522 = vadd.f32 %v6520, %v6521
      %v6523 = vsel %vm6467, %v6463, 0.0
      %v6524 = vadd.f32 %v6522, %v6523
      %v6525 = vsel %vm6467, %v6464, 0.0
      %v6526 = vadd.f32 %v6524, %v6525
      %v6527 = vsel %vm6467, %v6465, 0.0
      %v6528 = vadd.f32 %v6526, %v6527
      %v6529 = vsel %vm6467, %v6466, 0.0
      %v6530 = vadd.f32 %v6528, %v6529
      %v6531 = vrot.slane %v6530, 4
      %v6532 = vadd.f32 %v6530, %v6531
      %v6533 = vrot.slane %v6532, 2
      %v6534 = vadd.f32 %v6532, %v6533
      %v6535 = vrot.slane %v6534, 1
      %v6536 = vadd.f32 %v6534, %v6535
      %vm6537 = vcmask 57344
      %6538 = vst.msk [vmem:[%s292] sm:$0x1] %vm6537, %v6536
      %p6539 = scmp.lt.s32.totalorder %s18, 1
      %s6540 = scalar_select %p6539, %s18, 1
      %s6541 = smul.addr %s6540, 32
      %s6542 = smul.addr %s6541, 4
      %s6543 = scalar_lea.vmem %s4, %s6542
      %p6544 = scmp.lt.s32.totalorder %s18, 1
      %s6545 = scalar_select %p6544, %s18, 1
      %s6546 = smul.addr %s6545, 32
      %s6547 = smul.addr %s6546, 4
      %s6548 = scalar_lea.vmem %s5, %s6547
      %p6549 = scmp.lt.s32.totalorder %s18, 1
      %s6550 = scalar_select %p6549, %s18, 1
      %s6551 = scalar_lea.vmem %s6, %s6550
      // Predicated region
      $region37: #{perceptual_loss.2} parent=35 // pred_check
        %p6552 = pneg %p130
      $region38: #{perceptual_loss.2} parent=35 // pred_check_branch
        %6554 = sbr.rel (%p6552) target = $region40
      $region39: #{perceptual_loss.2} parent=35 // pred_region
        _
      $region40: #{perceptual_loss.2} parent=35 // pred_fallthru
        _
      // Predicated region
      $region41: #{perceptual_loss.2} parent=35 // pred_check
        %p6555 = pneg %p156
      $region42: #{perceptual_loss.2} parent=35 // pred_check_branch
        %6557 = sbr.rel (%p6555) target = $region44
      $region43: #{perceptual_loss.2} parent=35 // pred_region
        _
      $region44: #{perceptual_loss.2} parent=35 // pred_fallthru
        _
      // Predicated region
      $region45: #{perceptual_loss.2} parent=35 // pred_check
        %p6558 = pneg %p182
      $region46: #{perceptual_loss.2} parent=35 // pred_check_branch
        %6560 = sbr.rel (%p6558) target = $region48
      $region47: #{perceptual_loss.2} parent=35 // pred_region
        _
      $region48: #{perceptual_loss.2} parent=35 // pred_fallthru
        _
    $region36: #{perceptual_loss.2} parent=5 // pred_fallthru
      _
    %p6561 = scmp.le.s32.totalorder 2, %s13
    // Predicated region
    $region49: #{perceptual_loss.2} parent=5 // pred_check
      %p6562 = pneg %p6561
    $region50: #{perceptual_loss.2} parent=5 // pred_check_branch
      %6564 = sbr.rel (%p6562) target = $region52
    $region51: #{perceptual_loss.2} parent=5 // pred_region
      %s6565 = ssub.s32 %s13, 2
      // Predicated region
      $region53: #{perceptual_loss.2} parent=51 // pred_check
        %p6566 = pneg %p136
      $region54: #{perceptual_loss.2} parent=51 // pred_check_branch
        %6568 = sbr.rel (%p6566) target = $region56
      $region55: #{perceptual_loss.2} parent=51 // pred_region
        %p6569 = scmp.lt.s32.totalorder %s19, 1
        %s6570 = scalar_select %p6569, %s19, 1
        %s6571 = smul.addr %s6570, 32
        %s6572 = smul.addr %s6571, 4
        %s6573 = scalar_lea.vmem %s4, %s6572
      $region56: #{perceptual_loss.2} parent=51 // pred_fallthru
        _
      // Predicated region
      $region57: #{perceptual_loss.2} parent=51 // pred_check
        %p6574 = pneg %p162
      $region58: #{perceptual_loss.2} parent=51 // pred_check_branch
        %6576 = sbr.rel (%p6574) target = $region60
      $region59: #{perceptual_loss.2} parent=51 // pred_region
        %p6577 = scmp.lt.s32.totalorder %s19, 1
        %s6578 = scalar_select %p6577, %s19, 1
        %s6579 = smul.addr %s6578, 32
        %s6580 = smul.addr %s6579, 4
        %s6581 = scalar_lea.vmem %s5, %s6580
      $region60: #{perceptual_loss.2} parent=51 // pred_fallthru
        _
      // Predicated region
      $region61: #{perceptual_loss.2} parent=51 // pred_check
        %p6582 = pneg %p188
      $region62: #{perceptual_loss.2} parent=51 // pred_check_branch
        %6584 = sbr.rel (%p6582) target = $region64
      $region63: #{perceptual_loss.2} parent=51 // pred_region
        %p6585 = scmp.lt.s32.totalorder %s19, 1
        %s6586 = scalar_select %p6585, %s19, 1
        %s6587 = scalar_lea.vmem %s6, %s6586
      $region64: #{perceptual_loss.2} parent=51 // pred_fallthru
        _
    $region52: #{perceptual_loss.2} parent=5 // pred_fallthru
      _
  $region6: #{perceptual_loss.2} parent=0 // loop_footer
    %s17 = sadd.s32 1, %s13
  $region7: #{perceptual_loss.2} parent=0 // loop_footer_branch
    %12 = sbr.rel target = $region3
  $region8: #{perceptual_loss.2} parent=0 // loop_exit
    _

</llo_original>
